<compile_context>
chip_gen: v7x
topology: tpu7x:2x2x1
jax: 0.10.0
libtpu: 0.0.40
codegen_flags: <defaults>
</compile_context>

<pallas_src>
import jax
import jax.numpy as jnp
from jax.experimental import pallas as pl
from jax.experimental.pallas import tpu as pltpu

FC_TK = 3200   # 128-aligned divisor of K=16000; 3.125 MiB bf16 per (tk, tn) tile
FC_TN = 512    # nn=2 N tiles -> "parallel" axis feeds both v7x TensorCores


# -----------------------------------------------------------------------------
# Pallas kernel 1: single-shot  out = relu(A @ W + b)   (used for both convs)
# -----------------------------------------------------------------------------
def _mm_bias_relu_kernel(a_ref, w_ref, b_ref, o_ref):
    r = jnp.dot(a_ref[...], w_ref[...], preferred_element_type=jnp.float32)
    o_ref[...] = jnp.maximum(r + b_ref[...], 0.0).astype(o_ref.dtype)


def matmul_bias_relu(a, w, b, out_dtype=jnp.float32):
    """a: (M, K), w: (K, N), b: (N,) -> relu(a @ w + b).

    The conv problems are tiny (<= 2000x144 patches, <= 144x64 weights), so
    everything is brought into VMEM whole: no grid, no accumulator scratch.
    """
    M, K = a.shape
    K2, N = w.shape
    assert K == K2, (K, K2)
    return pl.pallas_call(
        _mm_bias_relu_kernel,
        out_shape=jax.ShapeDtypeStruct((M, N), out_dtype),
        in_specs=[pl.BlockSpec(memory_space=pltpu.MemorySpace.VMEM)] * 3,
        out_specs=pl.BlockSpec(memory_space=pltpu.MemorySpace.VMEM),
    )(a.astype(jnp.float32), w.astype(jnp.float32),
      b.reshape(1, N).astype(jnp.float32))


# -----------------------------------------------------------------------------
# Pallas kernel 2: fused FC1(+ReLU)+FC2, K-streamed (bf16), N-parallel.
#   partial[n] = relu(A @ W1[:, nslice] + b1[nslice]) @ W2[nslice, :]
# Final result = sum_n partial[n] + b2 (tiny, done outside).
# -----------------------------------------------------------------------------
def _fc_fused_kernel(a_ref, w1_ref, b1_ref, w2_ref, o_ref, acc_ref):
    k = pl.program_id(1)

    @pl.when(k == 0)
    def _():
        acc_ref[...] = jnp.zeros_like(acc_ref)

    # a_ref is the full resident (nk, M, tk) activation; w1_ref is one
    # contiguous (1, tk, tn) bf16 weight tile.  Accumulate in f32.
    acc_ref[...] += jnp.dot(a_ref[k], w1_ref[0],
                            preferred_element_type=jnp.float32)

    @pl.when(k == pl.num_programs(1) - 1)
    def _():
        h = jnp.maximum(acc_ref[...] + b1_ref[...], 0.0)
        o_ref[...] = jnp.dot(h, w2_ref[...],
                             preferred_element_type=jnp.float32)[None]


def fc_fused(a, w1p, b1, w2, b2, *, tk=FC_TK):
    """relu(a @ W1 + b1) @ W2 + b2 with W1 streamed from HBM in bf16.

    a:   (M, K)        flattened conv activations (tiny, M=2)
    w1p: (nn, K, tn)   pre-packed bf16 fc1 weight (contiguous per grid block)
    b1:  (N1,) f32
    w2:  (N1, N2) f32  pre-packed fc2 weight
    b2:  (N2,) f32
    """
    M, K = a.shape
    nn, K2, tn = w1p.shape
    N1 = nn * tn
    N1b, N2 = w2.shape
    assert K == K2 and N1 == N1b, (K, K2, N1, N1b)
    assert K % tk == 0, (K, tk)
    nk = K // tk

    # A is only ~64 KiB in bf16: make it fully resident (constant index_map).
    a_resh = a.astype(jnp.bfloat16).reshape(M, nk, tk).transpose(1, 0, 2)

    # TODO(synk): pl.Buffered(3) on the w1 BlockSpec would hide a little
    # prologue/N-boundary DMA jitter; skipped to keep lowering conservative.
    partials = pl.pallas_call(
        _fc_fused_kernel,
        out_shape=jax.ShapeDtypeStruct((nn, M, N2), jnp.float32),
        grid_spec=pltpu.PrefetchScalarGridSpec(
            num_scalar_prefetch=0,
            grid=(nn, nk),
            in_specs=[
                pl.BlockSpec((nk, M, tk), lambda n, k: (0, 0, 0)),  # resident A
                pl.BlockSpec((1, tk, tn), lambda n, k: (n, k, 0)),  # bf16 W1 stream
                pl.BlockSpec((1, tn), lambda n, k: (0, n)),
                pl.BlockSpec((tn, N2), lambda n, k: (n, 0)),
            ],
            out_specs=pl.BlockSpec((1, M, N2), lambda n, k: (n, 0, 0)),
            scratch_shapes=[pltpu.VMEM((M, tn), jnp.float32)],
        ),
        compiler_params=pltpu.CompilerParams(
            dimension_semantics=("parallel", "arbitrary"),
            vmem_limit_bytes=32 * 1024 * 1024,
        ),
        cost_estimate=pl.CostEstimate(
            flops=2 * M * K * N1 + 2 * M * N1 * N2,
            transcendentals=0,
            bytes_accessed=(2 * K * N1          # bf16 W1
                            + 2 * M * K         # bf16 A
                            + 4 * N1            # f32 b1
                            + 4 * N1 * N2       # f32 W2
                            + 4 * nn * M * N2), # f32 partials
        ),
    )(a_resh, w1p, b1.reshape(1, N1).astype(jnp.float32), w2)
    return partials.sum(axis=0) + b2


# -----------------------------------------------------------------------------
# Conv layer = im2col (plain-JAX glue) + Pallas matmul kernel
# -----------------------------------------------------------------------------
def _im2col(x_nhwc, k=3, stride=2, pad=1):
    N, H, W, C = x_nhwc.shape
    Ho = (H + 2 * pad - k) // stride + 1
    Wo = (W + 2 * pad - k) // stride + 1
    xp = jnp.pad(x_nhwc, ((0, 0), (pad, pad), (pad, pad), (0, 0)))
    cols = []
    for kh in range(k):
        for kw in range(k):
            cols.append(xp[:,
                           kh:kh + stride * (Ho - 1) + 1:stride,
                           kw:kw + stride * (Wo - 1) + 1:stride,
                           :])
    patches = jnp.stack(cols, axis=3)              # (N, Ho, Wo, k*k, C)
    return patches.reshape(N * Ho * Wo, k * k * C), Ho, Wo


def conv2d_relu(x_nhwc, w_mat, b, k=3, stride=2, pad=1, out_dtype=jnp.float32):
    """x_nhwc: (N,H,W,C); w_mat pre-packed to (k*k*C, O)."""
    N = x_nhwc.shape[0]
    out_c = w_mat.shape[1]
    patches, Ho, Wo = _im2col(x_nhwc, k=k, stride=stride, pad=pad)
    # TODO(synk): the stride-2 im2col stays as XLA glue; fusing it in-kernel
    # needs strided VMEM slicing (or a parity split) and the convs are only
    # ~10 MFLOP.  Conv outputs also keep 16/64 lanes (<128), so their stores
    # are masked; accepted at this size.
    y = matmul_bias_relu(patches, w_mat, b, out_dtype=out_dtype)
    return y.reshape(N, Ho, Wo, out_c)


# -----------------------------------------------------------------------------
# Parameters: torch-layout init + one-time packing into kernel layout
# -----------------------------------------------------------------------------
def init_params(key):
    ks = jax.random.split(key, 8)

    def u(k, shape, fan_in):
        bound = 1.0 / jnp.sqrt(jnp.float32(fan_in))
        return jax.random.uniform(k, shape, jnp.float32, -bound, bound)

    fc_in = 64 * 10 * 25  # 16000, as the torch module computes from (2, 40, 100)
    return {
        "conv1_w": u(ks[0], (16, 2, 3, 3), 2 * 9),
        "conv1_b": u(ks[1], (16,), 2 * 9),
        "conv2_w": u(ks[2], (64, 16, 3, 3), 16 * 9),
        "conv2_b": u(ks[3], (64,), 16 * 9),
        "fc1_w":   u(ks[4], (1024, fc_in), fc_in),
        "fc1_b":   u(ks[5], (1024,), fc_in),
        "fc2_w":   u(ks[6], (3, 1024), 1024),
        "fc2_b":   u(ks[7], (3,), 1024),
    }


def pack_params(p, conv2_hwc=(10, 25, 64), *, tn=FC_TN):
    """One-time (outside jit) repack of torch-layout params into kernel layout.

    * conv weights (O, I, kh, kw) -> (kh*kw*I, O) to match im2col columns.
    * fc1_w (1024, C*H*W) -> (H*W*C, 1024): the transpose AND the torch
      NCHW-flatten -> NHWC-flatten permutation are baked in, then the matrix is
      tiled N-major into (nn, K, tn) and cast to bf16 so every (tk, tn) grid
      block is one contiguous bf16 HBM region.
    * fc2_w (3, 1024) -> (1024, 3).
    """
    def conv_pack(w):
        o, i, kh, kw = w.shape
        return jnp.transpose(w, (2, 3, 1, 0)).reshape(kh * kw * i, o)

    H, W, C = conv2_hwc
    n_hidden = p["fc1_w"].shape[0]
    assert n_hidden % tn == 0, (n_hidden, tn)
    fc1 = p["fc1_w"].reshape(n_hidden, C, H, W)
    fc1 = jnp.transpose(fc1, (2, 3, 1, 0)).reshape(H * W * C, n_hidden)  # (K, N1)
    K = fc1.shape[0]
    fc1 = fc1.reshape(K, n_hidden // tn, tn).transpose(1, 0, 2)          # (nn, K, tn)
    fc1 = fc1.astype(jnp.bfloat16)
    # TODO(synk): int8 fc1 weights + per-output-channel scales would further
    # halve the stream on v5e/v6e; skipped to stay generation-agnostic.
    return {
        "conv1_w": conv_pack(p["conv1_w"]), "conv1_b": p["conv1_b"],
        "conv2_w": conv_pack(p["conv2_w"]), "conv2_b": p["conv2_b"],
        "fc1_w": fc1, "fc1_b": p["fc1_b"],
        "fc2_w": p["fc2_w"].T, "fc2_b": p["fc2_b"],
    }


# -----------------------------------------------------------------------------
# SimpleCNN forward (takes pre-packed params)
# -----------------------------------------------------------------------------
def simple_cnn_forward(x_nchw, kp):
    x = jnp.transpose(x_nchw, (0, 2, 3, 1))                   # NCHW -> NHWC
    x = conv2d_relu(x, kp["conv1_w"], kp["conv1_b"])          # (N, 20, 50, 16) f32
    x = conv2d_relu(x, kp["conv2_w"], kp["conv2_b"],
                    out_dtype=jnp.bfloat16)                   # (N, 10, 25, 64) bf16
    a = x.reshape(x.shape[0], -1)          # NHWC flatten; matches packed fc1_w
    return fc_fused(a, kp["fc1_w"], kp["fc1_b"], kp["fc2_w"], kp["fc2_b"])


# Pure-JAX (XLA) reference of the torch forward pass for a correctness check.
def reference_forward(x, p):
    dn = ("NCHW", "OIHW", "NCHW")
    y = jax.lax.conv_general_dilated(x, p["conv1_w"], (2, 2),
                                     ((1, 1), (1, 1)), dimension_numbers=dn)
    y = jax.nn.relu(y + p["conv1_b"][None, :, None, None])
    y = jax.lax.conv_general_dilated(y, p["conv2_w"], (2, 2),
                                     ((1, 1), (1, 1)), dimension_numbers=dn)
    y = jax.nn.relu(y + p["conv2_b"][None, :, None, None])
    y = y.reshape(y.shape[0], -1)
    y = jax.nn.relu(y @ p["fc1_w"].T + p["fc1_b"])
    return y @ p["fc2_w"].T + p["fc2_b"]


if __name__ == "__main__":
    key = jax.random.PRNGKey(0)
    k_x, k_p = jax.random.split(key)

    # Input shape implied by the module: (N, 2, 40, 100); small batch of 2.
    x = jax.random.normal(k_x, (2, 2, 40, 100), dtype=jnp.float32)
    params = init_params(k_p)
    kparams = pack_params(params)          # one-time repack, outside jit

    fwd = jax.jit(simple_cnn_forward)
    out = jax.block_until_ready(fwd(x, kparams))
    assert out.shape == (2, 3), out.shape

    ref = jax.block_until_ready(reference_forward(x, params))
    # Tolerance loosened slightly for the bf16 fc1 weight/activation stream.
    assert jnp.allclose(out, ref, rtol=2e-2, atol=2e-2), (out, ref)

    print("KERNEL_OK")
</pallas_src>

<mosaic_0001>
module attributes {stable_mosaic.version = 11 : i64} {
  func.func @_mm_bias_relu_kernel(%arg0: memref<2000x18xf32, #tpu.memory_space<vmem>>, %arg1: memref<18x16xf32, #tpu.memory_space<vmem>>, %arg2: memref<1x16xf32, #tpu.memory_space<vmem>>, %arg3: memref<2000x16xf32, #tpu.memory_space<vmem>>) attributes {dimension_semantics = [], scalar_prefetch = 0 : i64, scratch_operands = 0 : i64, tpu.core_type = #tpu.core_type<tc>} {
    %c0 = arith.constant 0 : index
    %c0_0 = arith.constant 0 : index
    %0 = vector.load %arg0[%c0, %c0_0] : memref<2000x18xf32, #tpu.memory_space<vmem>>, vector<2000x18xf32>
    %c0_1 = arith.constant 0 : index
    %c0_2 = arith.constant 0 : index
    %1 = vector.load %arg1[%c0_1, %c0_2] : memref<18x16xf32, #tpu.memory_space<vmem>>, vector<18x16xf32>
    %cst = arith.constant dense<0.000000e+00> : vector<2000x16xf32>
    %2 = tpu.matmul %0, %1, %cst {dimension_numbers = #tpu.dot_dimension_numbers<[1], [0], [0], [1], [0, 0, 1, 1], [], []>} : vector<2000x18xf32>, vector<18x16xf32>, vector<2000x16xf32> -> vector<2000x16xf32>
    %c0_3 = arith.constant 0 : index
    %c0_4 = arith.constant 0 : index
    %3 = vector.load %arg2[%c0_3, %c0_4] : memref<1x16xf32, #tpu.memory_space<vmem>>, vector<1x16xf32>
    %4 = vector.broadcast %3 : vector<1x16xf32> to vector<2000x16xf32>
    %5 = arith.addf %2, %4 : vector<2000x16xf32>
    %cst_5 = arith.constant 0.000000e+00 : f32
    %6 = vector.broadcast %cst_5 : f32 to vector<2000x16xf32>
    %7 = arith.maximumf %5, %6 : vector<2000x16xf32>
    %c0_6 = arith.constant 0 : index
    %c0_7 = arith.constant 0 : index
    %8 = vector.load %arg3[%c0_6, %c0_7] : memref<2000x16xf32, #tpu.memory_space<vmem>>, vector<2000x16xf32>
    tpu.vector_store %arg3[%c0_6, %c0_7], %7 {strides = array<i32>} : memref<2000x16xf32, #tpu.memory_space<vmem>>, vector<2000x16xf32>,
    return
  }
}

module attributes {stable_mosaic.version = 11 : i64} {
  func.func @_mm_bias_relu_kernel(%arg0: memref<500x144xf32, #tpu.memory_space<vmem>>, %arg1: memref<144x64xf32, #tpu.memory_space<vmem>>, %arg2: memref<1x64xf32, #tpu.memory_space<vmem>>, %arg3: memref<500x64xbf16, #tpu.memory_space<vmem>>) attributes {dimension_semantics = [], scalar_prefetch = 0 : i64, scratch_operands = 0 : i64, tpu.core_type = #tpu.core_type<tc>} {
    %c0 = arith.constant 0 : index
    %c0_0 = arith.constant 0 : index
    %0 = vector.load %arg0[%c0, %c0_0] : memref<500x144xf32, #tpu.memory_space<vmem>>, vector<500x144xf32>
    %c0_1 = arith.constant 0 : index
    %c0_2 = arith.constant 0 : index
    %1 = vector.load %arg1[%c0_1, %c0_2] : memref<144x64xf32, #tpu.memory_space<vmem>>, vector<144x64xf32>
    %cst = arith.constant dense<0.000000e+00> : vector<500x64xf32>
    %2 = tpu.matmul %0, %1, %cst {dimension_numbers = #tpu.dot_dimension_numbers<[1], [0], [0], [1], [0, 0, 1, 1], [], []>} : vector<500x144xf32>, vector<144x64xf32>, vector<500x64xf32> -> vector<500x64xf32>
    %c0_3 = arith.constant 0 : index
    %c0_4 = arith.constant 0 : index
    %3 = vector.load %arg2[%c0_3, %c0_4] : memref<1x64xf32, #tpu.memory_space<vmem>>, vector<1x64xf32>
    %4 = vector.broadcast %3 : vector<1x64xf32> to vector<500x64xf32>
    %5 = arith.addf %2, %4 : vector<500x64xf32>
    %cst_5 = arith.constant 0.000000e+00 : f32
    %6 = vector.broadcast %cst_5 : f32 to vector<500x64xf32>
    %7 = arith.maximumf %5, %6 : vector<500x64xf32>
    %8 = arith.truncf %7 : vector<500x64xf32> to vector<500x64xbf16>
    %c0_6 = arith.constant 0 : index
    %c0_7 = arith.constant 0 : index
    %9 = vector.load %arg3[%c0_6, %c0_7] : memref<500x64xbf16, #tpu.memory_space<vmem>>, vector<500x64xbf16>
    tpu.vector_store %arg3[%c0_6, %c0_7], %8 {strides = array<i32>} : memref<500x64xbf16, #tpu.memory_space<vmem>>, vector<500x64xbf16>,
    return
  }
}

module attributes {stable_mosaic.version = 11 : i64} {
  func.func @_fc_fused_kernel(%arg0: i32, %arg1: i32, %arg2: memref<5x2x3200xbf16, #tpu.memory_space<vmem>>, %arg3: memref<1x3200x512xbf16, #tpu.memory_space<vmem>>, %arg4: memref<1x512xf32, #tpu.memory_space<vmem>>, %arg5: memref<512x3xf32, #tpu.memory_space<vmem>>, %arg6: memref<1x2x3xf32, #tpu.memory_space<vmem>>, %arg7: memref<2x512xf32, #tpu.memory_space<vmem>>) attributes {dimension_semantics = [#tpu.dimension_semantics<parallel>, #tpu.dimension_semantics<arbitrary>], iteration_bounds = array<i64: 2, 5>, scalar_prefetch = 0 : i64, scratch_operands = 1 : i64, tpu.core_type = #tpu.core_type<tc>, window_params = [{pipeline_mode = #tpu.pipeline_mode<synchronous>, transform_indices = @transform_0, window_bounds = array<i64: 5, 2, 3200>}, {transform_indices = @transform_1, window_bounds = array<i64: 1, 3200, 512>}, {transform_indices = @transform_2, window_bounds = array<i64: 1, 512>}, {transform_indices = @transform_3, window_bounds = array<i64: 512, 3>}, {transform_indices = @transform_4, window_bounds = array<i64: 1, 2, 3>}]} {
    %c0_i32 = arith.constant 0 : i32
    %0 = arith.cmpi eq, %arg1, %c0_i32 : i32
    %1 = arith.extui %0 : i1 to i32
    %c0_i32_0 = arith.constant 0 : i32
    %2 = arith.cmpi ne, %1, %c0_i32_0 : i32
    scf.if %2 {
      %cst_10 = arith.constant 0.000000e+00 : f32
      %15 = vector.broadcast %cst_10 : f32 to vector<2x512xf32>
      %c0_11 = arith.constant 0 : index
      %c0_12 = arith.constant 0 : index
      %16 = vector.load %arg7[%c0_11, %c0_12] : memref<2x512xf32, #tpu.memory_space<vmem>>, vector<2x512xf32>
      tpu.vector_store %arg7[%c0_11, %c0_12], %15 {strides = array<i32>} : memref<2x512xf32, #tpu.memory_space<vmem>>, vector<2x512xf32>,
    } else {
    }
    %c0 = arith.constant 0 : index
    %c0_1 = arith.constant 0 : index
    %3 = vector.load %arg7[%c0, %c0_1] : memref<2x512xf32, #tpu.memory_space<vmem>>, vector<2x512xf32>
    %4 = arith.index_cast %arg1 : i32 to index
    %c0_2 = arith.constant 0 : index
    %c0_3 = arith.constant 0 : index
    %5 = vector.load %arg2[%4, %c0_2, %c0_3] : memref<5x2x3200xbf16, #tpu.memory_space<vmem>>, vector<1x2x3200xbf16>
    %6 = vector.shape_cast %5 : vector<1x2x3200xbf16> to vector<2x3200xbf16>
    %c0_4 = arith.constant 0 : index
    %c0_5 = arith.constant 0 : index
    %c0_6 = arith.constant 0 : index
    %7 = vector.load %arg3[%c0_4, %c0_5, %c0_6] : memref<1x3200x512xbf16, #tpu.memory_space<vmem>>, vector<1x3200x512xbf16>
    %8 = vector.shape_cast %7 : vector<1x3200x512xbf16> to vector<3200x512xbf16>
    %cst = arith.constant dense<0.000000e+00> : vector<2x512xf32>
    %9 = tpu.matmul %6, %8, %cst {dimension_numbers = #tpu.dot_dimension_numbers<[1], [0], [0], [1], [0, 0, 1, 1], [], []>} : vector<2x3200xbf16>, vector<3200x512xbf16>, vector<2x512xf32> -> vector<2x512xf32>
    %10 = arith.addf %3, %9 : vector<2x512xf32>
    %c0_7 = arith.constant 0 : index
    %c0_8 = arith.constant 0 : index
    %11 = vector.load %arg7[%c0_7, %c0_8] : memref<2x512xf32, #tpu.memory_space<vmem>>, vector<2x512xf32>
    tpu.vector_store %arg7[%c0_7, %c0_8], %10 {strides = array<i32>} : memref<2x512xf32, #tpu.memory_space<vmem>>, vector<2x512xf32>,
    %c4_i32 = arith.constant 4 : i32
    %12 = arith.cmpi eq, %arg1, %c4_i32 : i32
    %13 = arith.extui %12 : i1 to i32
    %c0_i32_9 = arith.constant 0 : i32
    %14 = arith.cmpi ne, %13, %c0_i32_9 : i32
    scf.if %14 {
      %c0_10 = arith.constant 0 : index
      %c0_11 = arith.constant 0 : index
      %15 = vector.load %arg7[%c0_10, %c0_11] : memref<2x512xf32, #tpu.memory_space<vmem>>, vector<2x512xf32>
      %c0_12 = arith.constant 0 : index
      %c0_13 = arith.constant 0 : index
      %16 = vector.load %arg4[%c0_12, %c0_13] : memref<1x512xf32, #tpu.memory_space<vmem>>, vector<1x512xf32>
      %17 = vector.broadcast %16 : vector<1x512xf32> to vector<2x512xf32>
      %18 = arith.addf %15, %17 : vector<2x512xf32>
      %cst_14 = arith.constant 0.000000e+00 : f32
      %19 = vector.broadcast %cst_14 : f32 to vector<2x512xf32>
      %20 = arith.maximumf %18, %19 : vector<2x512xf32>
      %c0_15 = arith.constant 0 : index
      %c0_16 = arith.constant 0 : index
      %21 = vector.load %arg5[%c0_15, %c0_16] : memref<512x3xf32, #tpu.memory_space<vmem>>, vector<512x3xf32>
      %cst_17 = arith.constant dense<0.000000e+00> : vector<2x3xf32>
      %22 = tpu.matmul %20, %21, %cst_17 {dimension_numbers = #tpu.dot_dimension_numbers<[1], [0], [0], [1], [0, 0, 1, 1], [], []>} : vector<2x512xf32>, vector<512x3xf32>, vector<2x3xf32> -> vector<2x3xf32>
      %23 = vector.shape_cast %22 : vector<2x3xf32> to vector<1x2x3xf32>
      %c0_18 = arith.constant 0 : index
      %c0_19 = arith.constant 0 : index
      %c0_20 = arith.constant 0 : index
      %24 = vector.load %arg6[%c0_18, %c0_19, %c0_20] : memref<1x2x3xf32, #tpu.memory_space<vmem>>, vector<1x2x3xf32>
      tpu.vector_store %arg6[%c0_18, %c0_19, %c0_20], %23 {strides = array<i32>} : memref<1x2x3xf32, #tpu.memory_space<vmem>>, vector<1x2x3xf32>,
    } else {
    }
    return
  }
  func.func @transform_0(%arg0: i32, %arg1: i32) -> (i32, i32, i32) {
    %c0_i32 = arith.constant 0 : i32
    %c0_i32_0 = arith.constant 0 : i32
    %c0_i32_1 = arith.constant 0 : i32
    %c0_i32_2 = arith.constant 0 : i32
    return %c0_i32, %c0_i32_0, %c0_i32_1 : i32, i32, i32
  }
  func.func @transform_1(%arg0: i32, %arg1: i32) -> (i32, i32, i32) {
    %c0_i32 = arith.constant 0 : i32
    %c0_i32_0 = arith.constant 0 : i32
    return %arg0, %arg1, %c0_i32 : i32, i32, i32
  }
  func.func @transform_2(%arg0: i32, %arg1: i32) -> (i32, i32) {
    %c0_i32 = arith.constant 0 : i32
    %c0_i32_0 = arith.constant 0 : i32
    return %c0_i32, %arg0 : i32, i32
  }
  func.func @transform_3(%arg0: i32, %arg1: i32) -> (i32, i32) {
    %c0_i32 = arith.constant 0 : i32
    %c0_i32_0 = arith.constant 0 : i32
    return %arg0, %c0_i32 : i32, i32
  }
  func.func @transform_4(%arg0: i32, %arg1: i32) -> (i32, i32, i32) {
    %c0_i32 = arith.constant 0 : i32
    %c0_i32_0 = arith.constant 0 : i32
    %c0_i32_1 = arith.constant 0 : i32
    return %arg0, %c0_i32, %c0_i32_0 : i32, i32, i32
  }
}

</mosaic_0001>

<llo_original>
// kernel: simple_cnn_forward.3
$region0: #{simple_cnn_forward.3}
  #allocation0 [shape = 'u32[]', space=smem, size = 0x4, offset = 0x4, fixed_abs, tag = 'smem constant byte address 0x4 - core index']
  #allocation1 [shape = 'u32[144,128]{1,0:T(1,128)}', space=vmem, size = 0x12000, scoped, tag = 'internal scratch']
  %s0 = inlined_call_operand.vmem [shape: f32[2000,18], index: 0, kind: input, shape index: {}]
  %s1 = inlined_call_operand.vmem [shape: f32[18,16], index: 1, kind: input, shape index: {}]
  %s2 = inlined_call_operand.vmem [shape: f32[1,16], index: 2, kind: input, shape index: {}]
  %s3 = inlined_call_operand.vmem [shape: f32[2000,16], index: 3, kind: output, shape index: {}]
  %s4 = sld [smem:[#allocation0]]
  $region22: #{simple_cnn_forward.3} parent=0
    _
  %s6 = ssub.s32 1, %s4
  %s7 = scalar_select 0, %s6, %s4
  // Predicated region
  $region2: #{simple_cnn_forward.3} parent=0 // pred_check
    _
  $region3: #{simple_cnn_forward.3} parent=0 // pred_check_branch
    %9 = sbr.rel (0) target = $region5
  $region4: #{simple_cnn_forward.3} parent=0 // pred_region
    _
  $region5: #{simple_cnn_forward.3} parent=0 // pred_fallthru
    _
  // Predicated region
  $region6: #{simple_cnn_forward.3} parent=0 // pred_check
    _
  $region7: #{simple_cnn_forward.3} parent=0 // pred_check_branch
    %11 = sbr.rel (0) target = $region9
  $region8: #{simple_cnn_forward.3} parent=0 // pred_region
    _
  $region9: #{simple_cnn_forward.3} parent=0 // pred_fallthru
    _
  // Predicated region
  $region10: #{simple_cnn_forward.3} parent=0 // pred_check
    _
  $region11: #{simple_cnn_forward.3} parent=0 // pred_check_branch
    %13 = sbr.rel (0) target = $region13
  $region12: #{simple_cnn_forward.3} parent=0 // pred_region
    _
  $region13: #{simple_cnn_forward.3} parent=0 // pred_fallthru
    _
  %v14 = vld [vmem:[%s0] sm:$0xff]
  %v15 = vld [vmem:[%s0 + $0x8] sm:$0xff]
  %v16 = vld [vmem:[%s0 + $0x10] sm:$0xff]
  %v17 = vld [vmem:[%s0 + $0x18] sm:$0xff]
  %v18 = vld [vmem:[%s0 + $0x20] sm:$0xff]
  %v19 = vld [vmem:[%s0 + $0x28] sm:$0xff]
  %v20 = vld [vmem:[%s0 + $0x30] sm:$0xff]
  %v21 = vld [vmem:[%s0 + $0x38] sm:$0xff]
  %v22 = vld [vmem:[%s0 + $0x40] sm:$0xff]
  %v23 = vld [vmem:[%s0 + $0x48] sm:$0xff]
  %v24 = vld [vmem:[%s0 + $0x50] sm:$0xff]
  %v25 = vld [vmem:[%s0 + $0x58] sm:$0xff]
  %v26 = vld [vmem:[%s0 + $0x60] sm:$0xff]
  %v27 = vld [vmem:[%s0 + $0x68] sm:$0xff]
  %v28 = vld [vmem:[%s0 + $0x70] sm:$0xff]
  %v29 = vld [vmem:[%s0 + $0x78] sm:$0xff]
  %v30 = vld [vmem:[%s0 + $0x80] sm:$0xff]
  %v31 = vld [vmem:[%s0 + $0x88] sm:$0xff]
  %v32 = vld [vmem:[%s0 + $0x90] sm:$0xff]
  %v33 = vld [vmem:[%s0 + $0x98] sm:$0xff]
  %v34 = vld [vmem:[%s0 + $0xa0] sm:$0xff]
  %v35 = vld [vmem:[%s0 + $0xa8] sm:$0xff]
  %v36 = vld [vmem:[%s0 + $0xb0] sm:$0xff]
  %v37 = vld [vmem:[%s0 + $0xb8] sm:$0xff]
  %v38 = vld [vmem:[%s0 + $0xc0] sm:$0xff]
  %v39 = vld [vmem:[%s0 + $0xc8] sm:$0xff]
  %v40 = vld [vmem:[%s0 + $0xd0] sm:$0xff]
  %v41 = vld [vmem:[%s0 + $0xd8] sm:$0xff]
  %v42 = vld [vmem:[%s0 + $0xe0] sm:$0xff]
  %v43 = vld [vmem:[%s0 + $0xe8] sm:$0xff]
  %v44 = vld [vmem:[%s0 + $0xf0] sm:$0xff]
  %v45 = vld [vmem:[%s0 + $0xf8] sm:$0xff]
  %v46 = vld [vmem:[%s0 + $0x100] sm:$0xff]
  %v47 = vld [vmem:[%s0 + $0x108] sm:$0xff]
  %v48 = vld [vmem:[%s0 + $0x110] sm:$0xff]
  %v49 = vld [vmem:[%s0 + $0x118] sm:$0xff]
  %v50 = vld [vmem:[%s0 + $0x120] sm:$0xff]
  %v51 = vld [vmem:[%s0 + $0x128] sm:$0xff]
  %v52 = vld [vmem:[%s0 + $0x130] sm:$0xff]
  %v53 = vld [vmem:[%s0 + $0x138] sm:$0xff]
  %v54 = vld [vmem:[%s0 + $0x140] sm:$0xff]
  %v55 = vld [vmem:[%s0 + $0x148] sm:$0xff]
  %v56 = vld [vmem:[%s0 + $0x150] sm:$0xff]
  %v57 = vld [vmem:[%s0 + $0x158] sm:$0xff]
  %v58 = vld [vmem:[%s0 + $0x160] sm:$0xff]
  %v59 = vld [vmem:[%s0 + $0x168] sm:$0xff]
  %v60 = vld [vmem:[%s0 + $0x170] sm:$0xff]
  %v61 = vld [vmem:[%s0 + $0x178] sm:$0xff]
  %v62 = vld [vmem:[%s0 + $0x180] sm:$0xff]
  %v63 = vld [vmem:[%s0 + $0x188] sm:$0xff]
  %v64 = vld [vmem:[%s0 + $0x190] sm:$0xff]
  %v65 = vld [vmem:[%s0 + $0x198] sm:$0xff]
  %v66 = vld [vmem:[%s0 + $0x1a0] sm:$0xff]
  %v67 = vld [vmem:[%s0 + $0x1a8] sm:$0xff]
  %v68 = vld [vmem:[%s0 + $0x1b0] sm:$0xff]
  %v69 = vld [vmem:[%s0 + $0x1b8] sm:$0xff]
  %v70 = vld [vmem:[%s0 + $0x1c0] sm:$0xff]
  %v71 = vld [vmem:[%s0 + $0x1c8] sm:$0xff]
  %v72 = vld [vmem:[%s0 + $0x1d0] sm:$0xff]
  %v73 = vld [vmem:[%s0 + $0x1d8] sm:$0xff]
  %v74 = vld [vmem:[%s0 + $0x1e0] sm:$0xff]
  %v75 = vld [vmem:[%s0 + $0x1e8] sm:$0xff]
  %v76 = vld [vmem:[%s0 + $0x1f0] sm:$0xff]
  %v77 = vld [vmem:[%s0 + $0x1f8] sm:$0xff]
  %v78 = vld [vmem:[%s0 + $0x200] sm:$0xff]
  %v79 = vld [vmem:[%s0 + $0x208] sm:$0xff]
  %v80 = vld [vmem:[%s0 + $0x210] sm:$0xff]
  %v81 = vld [vmem:[%s0 + $0x218] sm:$0xff]
  %v82 = vld [vmem:[%s0 + $0x220] sm:$0xff]
  %v83 = vld [vmem:[%s0 + $0x228] sm:$0xff]
  %v84 = vld [vmem:[%s0 + $0x230] sm:$0xff]
  %v85 = vld [vmem:[%s0 + $0x238] sm:$0xff]
  %v86 = vld [vmem:[%s0 + $0x240] sm:$0xff]
  %v87 = vld [vmem:[%s0 + $0x248] sm:$0xff]
  %v88 = vld [vmem:[%s0 + $0x250] sm:$0xff]
  %v89 = vld [vmem:[%s0 + $0x258] sm:$0xff]
  %v90 = vld [vmem:[%s0 + $0x260] sm:$0xff]
  %v91 = vld [vmem:[%s0 + $0x268] sm:$0xff]
  %v92 = vld [vmem:[%s0 + $0x270] sm:$0xff]
  %v93 = vld [vmem:[%s0 + $0x278] sm:$0xff]
  %v94 = vld [vmem:[%s0 + $0x280] sm:$0xff]
  %v95 = vld [vmem:[%s0 + $0x288] sm:$0xff]
  %v96 = vld [vmem:[%s0 + $0x290] sm:$0xff]
  %v97 = vld [vmem:[%s0 + $0x298] sm:$0xff]
  %v98 = vld [vmem:[%s0 + $0x2a0] sm:$0xff]
  %v99 = vld [vmem:[%s0 + $0x2a8] sm:$0xff]
  %v100 = vld [vmem:[%s0 + $0x2b0] sm:$0xff]
  %v101 = vld [vmem:[%s0 + $0x2b8] sm:$0xff]
  %v102 = vld [vmem:[%s0 + $0x2c0] sm:$0xff]
  %v103 = vld [vmem:[%s0 + $0x2c8] sm:$0xff]
  %v104 = vld [vmem:[%s0 + $0x2d0] sm:$0xff]
  %v105 = vld [vmem:[%s0 + $0x2d8] sm:$0xff]
  %v106 = vld [vmem:[%s0 + $0x2e0] sm:$0xff]
  %v107 = vld [vmem:[%s0 + $0x2e8] sm:$0xff]
  %v108 = vld [vmem:[%s0 + $0x2f0] sm:$0xff]
  %v109 = vld [vmem:[%s0 + $0x2f8] sm:$0xff]
  %v110 = vld [vmem:[%s0 + $0x300] sm:$0xff]
  %v111 = vld [vmem:[%s0 + $0x308] sm:$0xff]
  %v112 = vld [vmem:[%s0 + $0x310] sm:$0xff]
  %v113 = vld [vmem:[%s0 + $0x318] sm:$0xff]
  %v114 = vld [vmem:[%s0 + $0x320] sm:$0xff]
  %v115 = vld [vmem:[%s0 + $0x328] sm:$0xff]
  %v116 = vld [vmem:[%s0 + $0x330] sm:$0xff]
  %v117 = vld [vmem:[%s0 + $0x338] sm:$0xff]
  %v118 = vld [vmem:[%s0 + $0x340] sm:$0xff]
  %v119 = vld [vmem:[%s0 + $0x348] sm:$0xff]
  %v120 = vld [vmem:[%s0 + $0x350] sm:$0xff]
  %v121 = vld [vmem:[%s0 + $0x358] sm:$0xff]
  %v122 = vld [vmem:[%s0 + $0x360] sm:$0xff]
  %v123 = vld [vmem:[%s0 + $0x368] sm:$0xff]
  %v124 = vld [vmem:[%s0 + $0x370] sm:$0xff]
  %v125 = vld [vmem:[%s0 + $0x378] sm:$0xff]
  %v126 = vld [vmem:[%s0 + $0x380] sm:$0xff]
  %v127 = vld [vmem:[%s0 + $0x388] sm:$0xff]
  %v128 = vld [vmem:[%s0 + $0x390] sm:$0xff]
  %v129 = vld [vmem:[%s0 + $0x398] sm:$0xff]
  %v130 = vld [vmem:[%s0 + $0x3a0] sm:$0xff]
  %v131 = vld [vmem:[%s0 + $0x3a8] sm:$0xff]
  %v132 = vld [vmem:[%s0 + $0x3b0] sm:$0xff]
  %v133 = vld [vmem:[%s0 + $0x3b8] sm:$0xff]
  %v134 = vld [vmem:[%s0 + $0x3c0] sm:$0xff]
  %v135 = vld [vmem:[%s0 + $0x3c8] sm:$0xff]
  %v136 = vld [vmem:[%s0 + $0x3d0] sm:$0xff]
  %v137 = vld [vmem:[%s0 + $0x3d8] sm:$0xff]
  %v138 = vld [vmem:[%s0 + $0x3e0] sm:$0xff]
  %v139 = vld [vmem:[%s0 + $0x3e8] sm:$0xff]
  %v140 = vld [vmem:[%s0 + $0x3f0] sm:$0xff]
  %v141 = vld [vmem:[%s0 + $0x3f8] sm:$0xff]
  %v142 = vld [vmem:[%s0 + $0x400] sm:$0xff]
  %v143 = vld [vmem:[%s0 + $0x408] sm:$0xff]
  %v144 = vld [vmem:[%s0 + $0x410] sm:$0xff]
  %v145 = vld [vmem:[%s0 + $0x418] sm:$0xff]
  %v146 = vld [vmem:[%s0 + $0x420] sm:$0xff]
  %v147 = vld [vmem:[%s0 + $0x428] sm:$0xff]
  %v148 = vld [vmem:[%s0 + $0x430] sm:$0xff]
  %v149 = vld [vmem:[%s0 + $0x438] sm:$0xff]
  %v150 = vld [vmem:[%s0 + $0x440] sm:$0xff]
  %v151 = vld [vmem:[%s0 + $0x448] sm:$0xff]
  %v152 = vld [vmem:[%s0 + $0x450] sm:$0xff]
  %v153 = vld [vmem:[%s0 + $0x458] sm:$0xff]
  %v154 = vld [vmem:[%s0 + $0x460] sm:$0xff]
  %v155 = vld [vmem:[%s0 + $0x468] sm:$0xff]
  %v156 = vld [vmem:[%s0 + $0x470] sm:$0xff]
  %v157 = vld [vmem:[%s0 + $0x478] sm:$0xff]
  %v158 = vld [vmem:[%s0 + $0x480] sm:$0xff]
  %v159 = vld [vmem:[%s0 + $0x488] sm:$0xff]
  %v160 = vld [vmem:[%s0 + $0x490] sm:$0xff]
  %v161 = vld [vmem:[%s0 + $0x498] sm:$0xff]
  %v162 = vld [vmem:[%s0 + $0x4a0] sm:$0xff]
  %v163 = vld [vmem:[%s0 + $0x4a8] sm:$0xff]
  %v164 = vld [vmem:[%s0 + $0x4b0] sm:$0xff]
  %v165 = vld [vmem:[%s0 + $0x4b8] sm:$0xff]
  %v166 = vld [vmem:[%s0 + $0x4c0] sm:$0xff]
  %v167 = vld [vmem:[%s0 + $0x4c8] sm:$0xff]
  %v168 = vld [vmem:[%s0 + $0x4d0] sm:$0xff]
  %v169 = vld [vmem:[%s0 + $0x4d8] sm:$0xff]
  %v170 = vld [vmem:[%s0 + $0x4e0] sm:$0xff]
  %v171 = vld [vmem:[%s0 + $0x4e8] sm:$0xff]
  %v172 = vld [vmem:[%s0 + $0x4f0] sm:$0xff]
  %v173 = vld [vmem:[%s0 + $0x4f8] sm:$0xff]
  %v174 = vld [vmem:[%s0 + $0x500] sm:$0xff]
  %v175 = vld [vmem:[%s0 + $0x508] sm:$0xff]
  %v176 = vld [vmem:[%s0 + $0x510] sm:$0xff]
  %v177 = vld [vmem:[%s0 + $0x518] sm:$0xff]
  %v178 = vld [vmem:[%s0 + $0x520] sm:$0xff]
  %v179 = vld [vmem:[%s0 + $0x528] sm:$0xff]
  %v180 = vld [vmem:[%s0 + $0x530] sm:$0xff]
  %v181 = vld [vmem:[%s0 + $0x538] sm:$0xff]
  %v182 = vld [vmem:[%s0 + $0x540] sm:$0xff]
  %v183 = vld [vmem:[%s0 + $0x548] sm:$0xff]
  %v184 = vld [vmem:[%s0 + $0x550] sm:$0xff]
  %v185 = vld [vmem:[%s0 + $0x558] sm:$0xff]
  %v186 = vld [vmem:[%s0 + $0x560] sm:$0xff]
  %v187 = vld [vmem:[%s0 + $0x568] sm:$0xff]
  %v188 = vld [vmem:[%s0 + $0x570] sm:$0xff]
  %v189 = vld [vmem:[%s0 + $0x578] sm:$0xff]
  %v190 = vld [vmem:[%s0 + $0x580] sm:$0xff]
  %v191 = vld [vmem:[%s0 + $0x588] sm:$0xff]
  %v192 = vld [vmem:[%s0 + $0x590] sm:$0xff]
  %v193 = vld [vmem:[%s0 + $0x598] sm:$0xff]
  %v194 = vld [vmem:[%s0 + $0x5a0] sm:$0xff]
  %v195 = vld [vmem:[%s0 + $0x5a8] sm:$0xff]
  %v196 = vld [vmem:[%s0 + $0x5b0] sm:$0xff]
  %v197 = vld [vmem:[%s0 + $0x5b8] sm:$0xff]
  %v198 = vld [vmem:[%s0 + $0x5c0] sm:$0xff]
  %v199 = vld [vmem:[%s0 + $0x5c8] sm:$0xff]
  %v200 = vld [vmem:[%s0 + $0x5d0] sm:$0xff]
  %v201 = vld [vmem:[%s0 + $0x5d8] sm:$0xff]
  %v202 = vld [vmem:[%s0 + $0x5e0] sm:$0xff]
  %v203 = vld [vmem:[%s0 + $0x5e8] sm:$0xff]
  %v204 = vld [vmem:[%s0 + $0x5f0] sm:$0xff]
  %v205 = vld [vmem:[%s0 + $0x5f8] sm:$0xff]
  %v206 = vld [vmem:[%s0 + $0x600] sm:$0xff]
  %v207 = vld [vmem:[%s0 + $0x608] sm:$0xff]
  %v208 = vld [vmem:[%s0 + $0x610] sm:$0xff]
  %v209 = vld [vmem:[%s0 + $0x618] sm:$0xff]
  %v210 = vld [vmem:[%s0 + $0x620] sm:$0xff]
  %v211 = vld [vmem:[%s0 + $0x628] sm:$0xff]
  %v212 = vld [vmem:[%s0 + $0x630] sm:$0xff]
  %v213 = vld [vmem:[%s0 + $0x638] sm:$0xff]
  %v214 = vld [vmem:[%s0 + $0x640] sm:$0xff]
  %v215 = vld [vmem:[%s0 + $0x648] sm:$0xff]
  %v216 = vld [vmem:[%s0 + $0x650] sm:$0xff]
  %v217 = vld [vmem:[%s0 + $0x658] sm:$0xff]
  %v218 = vld [vmem:[%s0 + $0x660] sm:$0xff]
  %v219 = vld [vmem:[%s0 + $0x668] sm:$0xff]
  %v220 = vld [vmem:[%s0 + $0x670] sm:$0xff]
  %v221 = vld [vmem:[%s0 + $0x678] sm:$0xff]
  %v222 = vld [vmem:[%s0 + $0x680] sm:$0xff]
  %v223 = vld [vmem:[%s0 + $0x688] sm:$0xff]
  %v224 = vld [vmem:[%s0 + $0x690] sm:$0xff]
  %v225 = vld [vmem:[%s0 + $0x698] sm:$0xff]
  %v226 = vld [vmem:[%s0 + $0x6a0] sm:$0xff]
  %v227 = vld [vmem:[%s0 + $0x6a8] sm:$0xff]
  %v228 = vld [vmem:[%s0 + $0x6b0] sm:$0xff]
  %v229 = vld [vmem:[%s0 + $0x6b8] sm:$0xff]
  %v230 = vld [vmem:[%s0 + $0x6c0] sm:$0xff]
  %v231 = vld [vmem:[%s0 + $0x6c8] sm:$0xff]
  %v232 = vld [vmem:[%s0 + $0x6d0] sm:$0xff]
  %v233 = vld [vmem:[%s0 + $0x6d8] sm:$0xff]
  %v234 = vld [vmem:[%s0 + $0x6e0] sm:$0xff]
  %v235 = vld [vmem:[%s0 + $0x6e8] sm:$0xff]
  %v236 = vld [vmem:[%s0 + $0x6f0] sm:$0xff]
  %v237 = vld [vmem:[%s0 + $0x6f8] sm:$0xff]
  %v238 = vld [vmem:[%s0 + $0x700] sm:$0xff]
  %v239 = vld [vmem:[%s0 + $0x708] sm:$0xff]
  %v240 = vld [vmem:[%s0 + $0x710] sm:$0xff]
  %v241 = vld [vmem:[%s0 + $0x718] sm:$0xff]
  %v242 = vld [vmem:[%s0 + $0x720] sm:$0xff]
  %v243 = vld [vmem:[%s0 + $0x728] sm:$0xff]
  %v244 = vld [vmem:[%s0 + $0x730] sm:$0xff]
  %v245 = vld [vmem:[%s0 + $0x738] sm:$0xff]
  %v246 = vld [vmem:[%s0 + $0x740] sm:$0xff]
  %v247 = vld [vmem:[%s0 + $0x748] sm:$0xff]
  %v248 = vld [vmem:[%s0 + $0x750] sm:$0xff]
  %v249 = vld [vmem:[%s0 + $0x758] sm:$0xff]
  %v250 = vld [vmem:[%s0 + $0x760] sm:$0xff]
  %v251 = vld [vmem:[%s0 + $0x768] sm:$0xff]
  %v252 = vld [vmem:[%s0 + $0x770] sm:$0xff]
  %v253 = vld [vmem:[%s0 + $0x778] sm:$0xff]
  %v254 = vld [vmem:[%s0 + $0x780] sm:$0xff]
  %v255 = vld [vmem:[%s0 + $0x788] sm:$0xff]
  %v256 = vld [vmem:[%s0 + $0x790] sm:$0xff]
  %v257 = vld [vmem:[%s0 + $0x798] sm:$0xff]
  %v258 = vld [vmem:[%s0 + $0x7a0] sm:$0xff]
  %v259 = vld [vmem:[%s0 + $0x7a8] sm:$0xff]
  %v260 = vld [vmem:[%s0 + $0x7b0] sm:$0xff]
  %v261 = vld [vmem:[%s0 + $0x7b8] sm:$0xff]
  %v262 = vld [vmem:[%s0 + $0x7c0] sm:$0xff]
  %v263 = vld [vmem:[%s0 + $0x7c8] sm:$0xff]
  %v264 = vld [vmem:[%s1] sm:$0xff]
  %v265 = vld [vmem:[%s1 + $0x8] sm:$0xff]
  %v266 = vld [vmem:[%s1 + $0x10] sm:$0x3]
  %v267 = vld [vmem:[%s2] sm:$0x1]
  %v269 = vlaneseq
  %v270 = vshrl.u32 %v269, 7
  %v271 = vsub.s32 0, %v270
  %v272 = vrot.slane %v267, %v271
  %vm274 = vcmask 146432
  %v276 = vsel %vm274, %v14, 0
  %v279 = vsel %vm274, %v15, 0
  %v282 = vsel %vm274, %v16, 0
  %v285 = vsel %vm274, %v17, 0
  %v288 = vsel %vm274, %v18, 0
  %v291 = vsel %vm274, %v19, 0
  %v294 = vsel %vm274, %v20, 0
  %v297 = vsel %vm274, %v21, 0
  %v300 = vsel %vm274, %v22, 0
  %v303 = vsel %vm274, %v23, 0
  %v306 = vsel %vm274, %v24, 0
  %v309 = vsel %vm274, %v25, 0
  %v312 = vsel %vm274, %v26, 0
  %v315 = vsel %vm274, %v27, 0
  %v318 = vsel %vm274, %v28, 0
  %v321 = vsel %vm274, %v29, 0
  %v324 = vsel %vm274, %v30, 0
  %v327 = vsel %vm274, %v31, 0
  %v330 = vsel %vm274, %v32, 0
  %v333 = vsel %vm274, %v33, 0
  %v336 = vsel %vm274, %v34, 0
  %v339 = vsel %vm274, %v35, 0
  %v342 = vsel %vm274, %v36, 0
  %v345 = vsel %vm274, %v37, 0
  %v348 = vsel %vm274, %v38, 0
  %v351 = vsel %vm274, %v39, 0
  %v354 = vsel %vm274, %v40, 0
  %v357 = vsel %vm274, %v41, 0
  %v360 = vsel %vm274, %v42, 0
  %v363 = vsel %vm274, %v43, 0
  %v366 = vsel %vm274, %v44, 0
  %v369 = vsel %vm274, %v45, 0
  %v372 = vsel %vm274, %v46, 0
  %v375 = vsel %vm274, %v47, 0
  %v378 = vsel %vm274, %v48, 0
  %v381 = vsel %vm274, %v49, 0
  %v384 = vsel %vm274, %v50, 0
  %v387 = vsel %vm274, %v51, 0
  %v390 = vsel %vm274, %v52, 0
  %v393 = vsel %vm274, %v53, 0
  %v396 = vsel %vm274, %v54, 0
  %v399 = vsel %vm274, %v55, 0
  %v402 = vsel %vm274, %v56, 0
  %v405 = vsel %vm274, %v57, 0
  %v408 = vsel %vm274, %v58, 0
  %v411 = vsel %vm274, %v59, 0
  %v414 = vsel %vm274, %v60, 0
  %v417 = vsel %vm274, %v61, 0
  %v420 = vsel %vm274, %v62, 0
  %v423 = vsel %vm274, %v63, 0
  %v426 = vsel %vm274, %v64, 0
  %v429 = vsel %vm274, %v65, 0
  %v432 = vsel %vm274, %v66, 0
  %v435 = vsel %vm274, %v67, 0
  %v438 = vsel %vm274, %v68, 0
  %v441 = vsel %vm274, %v69, 0
  %v444 = vsel %vm274, %v70, 0
  %v447 = vsel %vm274, %v71, 0
  %v450 = vsel %vm274, %v72, 0
  %v453 = vsel %vm274, %v73, 0
  %v456 = vsel %vm274, %v74, 0
  %v459 = vsel %vm274, %v75, 0
  %v462 = vsel %vm274, %v76, 0
  %v465 = vsel %vm274, %v77, 0
  %v468 = vsel %vm274, %v78, 0
  %v471 = vsel %vm274, %v79, 0
  %v474 = vsel %vm274, %v80, 0
  %v477 = vsel %vm274, %v81, 0
  %v480 = vsel %vm274, %v82, 0
  %v483 = vsel %vm274, %v83, 0
  %v486 = vsel %vm274, %v84, 0
  %v489 = vsel %vm274, %v85, 0
  %v492 = vsel %vm274, %v86, 0
  %v495 = vsel %vm274, %v87, 0
  %v498 = vsel %vm274, %v88, 0
  %v501 = vsel %vm274, %v89, 0
  %v504 = vsel %vm274, %v90, 0
  %v507 = vsel %vm274, %v91, 0
  %v510 = vsel %vm274, %v92, 0
  %v513 = vsel %vm274, %v93, 0
  %v516 = vsel %vm274, %v94, 0
  %v519 = vsel %vm274, %v95, 0
  %v522 = vsel %vm274, %v96, 0
  %v525 = vsel %vm274, %v97, 0
  %v528 = vsel %vm274, %v98, 0
  %v531 = vsel %vm274, %v99, 0
  %v534 = vsel %vm274, %v100, 0
  %v537 = vsel %vm274, %v101, 0
  %v540 = vsel %vm274, %v102, 0
  %v543 = vsel %vm274, %v103, 0
  %v546 = vsel %vm274, %v104, 0
  %v549 = vsel %vm274, %v105, 0
  %v552 = vsel %vm274, %v106, 0
  %v555 = vsel %vm274, %v107, 0
  %v558 = vsel %vm274, %v108, 0
  %v561 = vsel %vm274, %v109, 0
  %v564 = vsel %vm274, %v110, 0
  %v567 = vsel %vm274, %v111, 0
  %v570 = vsel %vm274, %v112, 0
  %v573 = vsel %vm274, %v113, 0
  %v576 = vsel %vm274, %v114, 0
  %v579 = vsel %vm274, %v115, 0
  %v582 = vsel %vm274, %v116, 0
  %v585 = vsel %vm274, %v117, 0
  %v588 = vsel %vm274, %v118, 0
  %v591 = vsel %vm274, %v119, 0
  %v594 = vsel %vm274, %v120, 0
  %v597 = vsel %vm274, %v121, 0
  %v600 = vsel %vm274, %v122, 0
  %v603 = vsel %vm274, %v123, 0
  %v606 = vsel %vm274, %v124, 0
  %v609 = vsel %vm274, %v125, 0
  %v612 = vsel %vm274, %v126, 0
  %v615 = vsel %vm274, %v127, 0
  %v618 = vsel %vm274, %v128, 0
  %v621 = vsel %vm274, %v129, 0
  %v624 = vsel %vm274, %v130, 0
  %v627 = vsel %vm274, %v131, 0
  %v630 = vsel %vm274, %v132, 0
  %v633 = vsel %vm274, %v133, 0
  %v636 = vsel %vm274, %v134, 0
  %v639 = vsel %vm274, %v135, 0
  %v642 = vsel %vm274, %v136, 0
  %v645 = vsel %vm274, %v137, 0
  %v648 = vsel %vm274, %v138, 0
  %v651 = vsel %vm274, %v139, 0
  %v654 = vsel %vm274, %v140, 0
  %v657 = vsel %vm274, %v141, 0
  %v660 = vsel %vm274, %v142, 0
  %v663 = vsel %vm274, %v143, 0
  %v666 = vsel %vm274, %v144, 0
  %v669 = vsel %vm274, %v145, 0
  %v672 = vsel %vm274, %v146, 0
  %v675 = vsel %vm274, %v147, 0
  %v678 = vsel %vm274, %v148, 0
  %v681 = vsel %vm274, %v149, 0
  %v684 = vsel %vm274, %v150, 0
  %v687 = vsel %vm274, %v151, 0
  %v690 = vsel %vm274, %v152, 0
  %v693 = vsel %vm274, %v153, 0
  %v696 = vsel %vm274, %v154, 0
  %v699 = vsel %vm274, %v155, 0
  %v702 = vsel %vm274, %v156, 0
  %v705 = vsel %vm274, %v157, 0
  %v708 = vsel %vm274, %v158, 0
  %v711 = vsel %vm274, %v159, 0
  %v714 = vsel %vm274, %v160, 0
  %v717 = vsel %vm274, %v161, 0
  %v720 = vsel %vm274, %v162, 0
  %v723 = vsel %vm274, %v163, 0
  %v726 = vsel %vm274, %v164, 0
  %v729 = vsel %vm274, %v165, 0
  %v732 = vsel %vm274, %v166, 0
  %v735 = vsel %vm274, %v167, 0
  %v738 = vsel %vm274, %v168, 0
  %v741 = vsel %vm274, %v169, 0
  %v744 = vsel %vm274, %v170, 0
  %v747 = vsel %vm274, %v171, 0
  %v750 = vsel %vm274, %v172, 0
  %v753 = vsel %vm274, %v173, 0
  %v756 = vsel %vm274, %v174, 0
  %v759 = vsel %vm274, %v175, 0
  %v762 = vsel %vm274, %v176, 0
  %v765 = vsel %vm274, %v177, 0
  %v768 = vsel %vm274, %v178, 0
  %v771 = vsel %vm274, %v179, 0
  %v774 = vsel %vm274, %v180, 0
  %v777 = vsel %vm274, %v181, 0
  %v780 = vsel %vm274, %v182, 0
  %v783 = vsel %vm274, %v183, 0
  %v786 = vsel %vm274, %v184, 0
  %v789 = vsel %vm274, %v185, 0
  %v792 = vsel %vm274, %v186, 0
  %v795 = vsel %vm274, %v187, 0
  %v798 = vsel %vm274, %v188, 0
  %v801 = vsel %vm274, %v189, 0
  %v804 = vsel %vm274, %v190, 0
  %v807 = vsel %vm274, %v191, 0
  %v810 = vsel %vm274, %v192, 0
  %v813 = vsel %vm274, %v193, 0
  %v816 = vsel %vm274, %v194, 0
  %v819 = vsel %vm274, %v195, 0
  %v822 = vsel %vm274, %v196, 0
  %v825 = vsel %vm274, %v197, 0
  %v828 = vsel %vm274, %v198, 0
  %v831 = vsel %vm274, %v199, 0
  %v834 = vsel %vm274, %v200, 0
  %v837 = vsel %vm274, %v201, 0
  %v840 = vsel %vm274, %v202, 0
  %v843 = vsel %vm274, %v203, 0
  %v846 = vsel %vm274, %v204, 0
  %v849 = vsel %vm274, %v205, 0
  %v852 = vsel %vm274, %v206, 0
  %v855 = vsel %vm274, %v207, 0
  %v858 = vsel %vm274, %v208, 0
  %v861 = vsel %vm274, %v209, 0
  %v864 = vsel %vm274, %v210, 0
  %v867 = vsel %vm274, %v211, 0
  %v870 = vsel %vm274, %v212, 0
  %v873 = vsel %vm274, %v213, 0
  %v876 = vsel %vm274, %v214, 0
  %v879 = vsel %vm274, %v215, 0
  %v882 = vsel %vm274, %v216, 0
  %v885 = vsel %vm274, %v217, 0
  %v888 = vsel %vm274, %v218, 0
  %v891 = vsel %vm274, %v219, 0
  %v894 = vsel %vm274, %v220, 0
  %v897 = vsel %vm274, %v221, 0
  %v900 = vsel %vm274, %v222, 0
  %v903 = vsel %vm274, %v223, 0
  %v906 = vsel %vm274, %v224, 0
  %v909 = vsel %vm274, %v225, 0
  %v912 = vsel %vm274, %v226, 0
  %v915 = vsel %vm274, %v227, 0
  %v918 = vsel %vm274, %v228, 0
  %v921 = vsel %vm274, %v229, 0
  %v924 = vsel %vm274, %v230, 0
  %v927 = vsel %vm274, %v231, 0
  %v930 = vsel %vm274, %v232, 0
  %v933 = vsel %vm274, %v233, 0
  %v936 = vsel %vm274, %v234, 0
  %v939 = vsel %vm274, %v235, 0
  %v942 = vsel %vm274, %v236, 0
  %v945 = vsel %vm274, %v237, 0
  %v948 = vsel %vm274, %v238, 0
  %v951 = vsel %vm274, %v239, 0
  %v954 = vsel %vm274, %v240, 0
  %v957 = vsel %vm274, %v241, 0
  %v960 = vsel %vm274, %v242, 0
  %v963 = vsel %vm274, %v243, 0
  %v966 = vsel %vm274, %v244, 0
  %v969 = vsel %vm274, %v245, 0
  %v972 = vsel %vm274, %v246, 0
  %v975 = vsel %vm274, %v247, 0
  %v978 = vsel %vm274, %v248, 0
  %v981 = vsel %vm274, %v249, 0
  %v984 = vsel %vm274, %v250, 0
  %v987 = vsel %vm274, %v251, 0
  %v990 = vsel %vm274, %v252, 0
  %v993 = vsel %vm274, %v253, 0
  %v996 = vsel %vm274, %v254, 0
  %v999 = vsel %vm274, %v255, 0
  %v1002 = vsel %vm274, %v256, 0
  %v1005 = vsel %vm274, %v257, 0
  %v1008 = vsel %vm274, %v258, 0
  %v1011 = vsel %vm274, %v259, 0
  %v1014 = vsel %vm274, %v260, 0
  %v1017 = vsel %vm274, %v261, 0
  %v1020 = vsel %vm274, %v262, 0
  %v1023 = vsel %vm274, %v263, 0
  %vm1025 = vcmask 1041408
  %v1027 = vsel %vm1025, %v266, 0
  %1029 = vmatprep.subr.mxu0 0.0
  %1030 = vmatpush1.msra.mxu0 %v264
  %1031 = vmatprep.subr.mxu0 0.0
  %1032 = vmatpush1.msra.mxu0 %v265
  %1033 = vmatprep.subr.mxu0 0.0
  %1034 = vmatpush1.msra.mxu0 %v1027
  %1035 = vmatprep.subr.mxu0 0.0
  %1036 = vmatpush1.msra.mxu0 0.0
  %1037 = vmatprep.subr.mxu0 0.0
  %1038 = vmatpush1.msra.mxu0 0.0
  %1039 = vmatprep.subr.mxu0 0.0
  %1040 = vmatpush1.msra.mxu0 0.0
  %1041 = vmatprep.subr.mxu0 0.0
  %1042 = vmatpush1.msra.mxu0 0.0
  %1043 = vmatprep.subr.mxu0 0.0
  %1044 = vmatpush1.msra.mxu0 0.0
  %1045 = vmatprep.subr.mxu0 0.0
  %1046 = vmatpush1.msra.mxu0 0.0
  %1047 = vmatprep.subr.mxu0 0.0
  %1048 = vmatpush1.msra.mxu0 0.0
  %1049 = vmatprep.subr.mxu0 0.0
  %1050 = vmatpush1.msra.mxu0 0.0
  %1051 = vmatprep.subr.mxu0 0.0
  %1052 = vmatpush1.msra.mxu0 0.0
  %1053 = vmatprep.subr.mxu0 0.0
  %1054 = vmatpush1.msra.mxu0 0.0
  %1055 = vmatprep.subr.mxu0 0.0
  %1056 = vmatpush1.msra.mxu0 0.0
  %1057 = vmatprep.subr.mxu0 0.0
  %1058 = vmatpush1.msra.mxu0 0.0
  %1059 = vmatprep.subr.mxu0 0.0
  %1060 = vmatpush1.msra.mxu0 0.0
  %1061 = vmatprep.subr.mxu0 0.0
  %1062 = vmatpush1.msra.mxu0 0.0
  %1063 = vmatprep.subr.mxu0 0.0
  %1064 = vmatpush1.msra.mxu0 0.0
  %1065 = vmatprep.subr.mxu0 0.0
  %1066 = vmatpush1.msra.mxu0 0.0
  %1067 = vmatprep.subr.mxu0 0.0
  %1068 = vmatpush1.msra.mxu0 0.0
  %1069 = vmatprep.subr.mxu0 0.0
  %1070 = vmatpush1.msra.mxu0 0.0
  %1071 = vmatprep.subr.mxu0 0.0
  %1072 = vmatpush1.msra.mxu0 0.0
  %1073 = vmatprep.subr.mxu0 0.0
  %1074 = vmatpush1.msra.mxu0 0.0
  %1075 = vmatprep.subr.mxu0 0.0
  %1076 = vmatpush1.msra.mxu0 0.0
  %1077 = vmatprep.subr.mxu0 0.0
  %1078 = vmatpush1.msra.mxu0 0.0
  %1079 = vmatprep.subr.mxu0 0.0
  %1080 = vmatpush1.msra.mxu0 0.0
  %1081 = vmatprep.subr.mxu0 0.0
  %1082 = vmatpush1.msra.mxu0 0.0
  %1083 = vmatprep.subr.mxu0 0.0
  %1084 = vmatpush1.msra.mxu0 0.0
  %1085 = vmatprep.subr.mxu0 0.0
  %1086 = vmatpush1.msra.mxu0 0.0
  %1087 = vmatprep.subr.mxu0 0.0
  %1088 = vmatpush1.msra.mxu0 0.0
  %1089 = vmatprep.subr.mxu0 0.0
  %1090 = vmatpush1.msra.mxu0 0.0
  %1091 = vmatprep.subr.mxu0 0.0
  %1092 = vmatpush1.msra.mxu0 0.0
  %1093 = vmatprep.mubr.f32.mxu0 0.0
  %1094 = vmatmul.mubr.f32.gmra.mrb[0].mxu0 %v276
  %v1095 = vpop.f32.mrb[0].mxu0
  %v1096 = vadd.f32 %v272, %v1095
  %v1097 = vpop.f32.mrb[0].mxu0
  %1098 = vmatprep.mubr.f32.mxu0 0.0
  %1099 = vmatmul.mubr.f32.gmra.mrb[0].mxu0 %v279
  %v1100 = vpop.f32.mrb[0].mxu0
  %v1101 = vadd.f32 %v272, %v1100
  %v1102 = vpop.f32.mrb[0].mxu0
  %1103 = vmatprep.mubr.f32.mxu0 0.0
  %1104 = vmatmul.mubr.f32.gmra.mrb[0].mxu0 %v282
  %v1105 = vpop.f32.mrb[0].mxu0
  %v1106 = vadd.f32 %v272, %v1105
  %v1107 = vpop.f32.mrb[0].mxu0
  %1108 = vmatprep.mubr.f32.mxu0 0.0
  %1109 = vmatmul.mubr.f32.gmra.mrb[0].mxu0 %v285
  %v1110 = vpop.f32.mrb[0].mxu0
  %v1111 = vadd.f32 %v272, %v1110
  %v1112 = vpop.f32.mrb[0].mxu0
  %1113 = vmatprep.mubr.f32.mxu0 0.0
  %1114 = vmatmul.mubr.f32.gmra.mrb[0].mxu0 %v288
  %v1115 = vpop.f32.mrb[0].mxu0
  %v1116 = vadd.f32 %v272, %v1115
  %v1117 = vpop.f32.mrb[0].mxu0
  %1118 = vmatprep.mubr.f32.mxu0 0.0
  %1119 = vmatmul.mubr.f32.gmra.mrb[0].mxu0 %v291
  %v1120 = vpop.f32.mrb[0].mxu0
  %v1121 = vadd.f32 %v272, %v1120
  %v1122 = vpop.f32.mrb[0].mxu0
  %1123 = vmatprep.mubr.f32.mxu0 0.0
  %1124 = vmatmul.mubr.f32.gmra.mrb[0].mxu0 %v294
  %v1125 = vpop.f32.mrb[0].mxu0
  %v1126 = vadd.f32 %v272, %v1125
  %v1127 = vpop.f32.mrb[0].mxu0
  %1128 = vmatprep.mubr.f32.mxu0 0.0
  %1129 = vmatmul.mubr.f32.gmra.mrb[0].mxu0 %v297
  %v1130 = vpop.f32.mrb[0].mxu0
  %v1131 = vadd.f32 %v272, %v1130
  %v1132 = vpop.f32.mrb[0].mxu0
  %1133 = vmatprep.mubr.f32.mxu0 0.0
  %1134 = vmatmul.mubr.f32.gmra.mrb[0].mxu0 %v300
  %v1135 = vpop.f32.mrb[0].mxu0
  %v1136 = vadd.f32 %v272, %v1135
  %v1137 = vpop.f32.mrb[0].mxu0
  %1138 = vmatprep.mubr.f32.mxu0 0.0
  %1139 = vmatmul.mubr.f32.gmra.mrb[0].mxu0 %v303
  %v1140 = vpop.f32.mrb[0].mxu0
  %v1141 = vadd.f32 %v272, %v1140
  %v1142 = vpop.f32.mrb[0].mxu0
  %1143 = vmatprep.mubr.f32.mxu0 0.0
  %1144 = vmatmul.mubr.f32.gmra.mrb[0].mxu0 %v306
  %v1145 = vpop.f32.mrb[0].mxu0
  %v1146 = vadd.f32 %v272, %v1145
  %v1147 = vpop.f32.mrb[0].mxu0
  %1148 = vmatprep.mubr.f32.mxu0 0.0
  %1149 = vmatmul.mubr.f32.gmra.mrb[0].mxu0 %v309
  %v1150 = vpop.f32.mrb[0].mxu0
  %v1151 = vadd.f32 %v272, %v1150
  %v1152 = vpop.f32.mrb[0].mxu0
  %1153 = vmatprep.mubr.f32.mxu0 0.0
  %1154 = vmatmul.mubr.f32.gmra.mrb[0].mxu0 %v312
  %v1155 = vpop.f32.mrb[0].mxu0
  %v1156 = vadd.f32 %v272, %v1155
  %v1157 = vpop.f32.mrb[0].mxu0
  %1158 = vmatprep.mubr.f32.mxu0 0.0
  %1159 = vmatmul.mubr.f32.gmra.mrb[0].mxu0 %v315
  %v1160 = vpop.f32.mrb[0].mxu0
  %v1161 = vadd.f32 %v272, %v1160
  %v1162 = vpop.f32.mrb[0].mxu0
  %1163 = vmatprep.mubr.f32.mxu0 0.0
  %1164 = vmatmul.mubr.f32.gmra.mrb[0].mxu0 %v318
  %v1165 = vpop.f32.mrb[0].mxu0
  %v1166 = vadd.f32 %v272, %v1165
  %v1167 = vpop.f32.mrb[0].mxu0
  %1168 = vmatprep.mubr.f32.mxu0 0.0
  %1169 = vmatmul.mubr.f32.gmra.mrb[0].mxu0 %v321
  %v1170 = vpop.f32.mrb[0].mxu0
  %v1171 = vadd.f32 %v272, %v1170
  %v1172 = vpop.f32.mrb[0].mxu0
  %1173 = vmatprep.mubr.f32.mxu0 0.0
  %1174 = vmatmul.mubr.f32.gmra.mrb[0].mxu0 %v324
  %v1175 = vpop.f32.mrb[0].mxu0
  %v1176 = vadd.f32 %v272, %v1175
  %v1177 = vpop.f32.mrb[0].mxu0
  %1178 = vmatprep.mubr.f32.mxu0 0.0
  %1179 = vmatmul.mubr.f32.gmra.mrb[0].mxu0 %v327
  %v1180 = vpop.f32.mrb[0].mxu0
  %v1181 = vadd.f32 %v272, %v1180
  %v1182 = vpop.f32.mrb[0].mxu0
  %1183 = vmatprep.mubr.f32.mxu0 0.0
  %1184 = vmatmul.mubr.f32.gmra.mrb[0].mxu0 %v330
  %v1185 = vpop.f32.mrb[0].mxu0
  %v1186 = vadd.f32 %v272, %v1185
  %v1187 = vpop.f32.mrb[0].mxu0
  %1188 = vmatprep.mubr.f32.mxu0 0.0
  %1189 = vmatmul.mubr.f32.gmra.mrb[0].mxu0 %v333
  %v1190 = vpop.f32.mrb[0].mxu0
  %v1191 = vadd.f32 %v272, %v1190
  %v1192 = vpop.f32.mrb[0].mxu0
  %1193 = vmatprep.mubr.f32.mxu0 0.0
  %1194 = vmatmul.mubr.f32.gmra.mrb[0].mxu0 %v336
  %v1195 = vpop.f32.mrb[0].mxu0
  %v1196 = vadd.f32 %v272, %v1195
  %v1197 = vpop.f32.mrb[0].mxu0
  %1198 = vmatprep.mubr.f32.mxu0 0.0
  %1199 = vmatmul.mubr.f32.gmra.mrb[0].mxu0 %v339
  %v1200 = vpop.f32.mrb[0].mxu0
  %v1201 = vadd.f32 %v272, %v1200
  %v1202 = vpop.f32.mrb[0].mxu0
  %1203 = vmatprep.mubr.f32.mxu0 0.0
  %1204 = vmatmul.mubr.f32.gmra.mrb[0].mxu0 %v342
  %v1205 = vpop.f32.mrb[0].mxu0
  %v1206 = vadd.f32 %v272, %v1205
  %v1207 = vpop.f32.mrb[0].mxu0
  %1208 = vmatprep.mubr.f32.mxu0 0.0
  %1209 = vmatmul.mubr.f32.gmra.mrb[0].mxu0 %v345
  %v1210 = vpop.f32.mrb[0].mxu0
  %v1211 = vadd.f32 %v272, %v1210
  %v1212 = vpop.f32.mrb[0].mxu0
  %1213 = vmatprep.mubr.f32.mxu0 0.0
  %1214 = vmatmul.mubr.f32.gmra.mrb[0].mxu0 %v348
  %v1215 = vpop.f32.mrb[0].mxu0
  %v1216 = vadd.f32 %v272, %v1215
  %v1217 = vpop.f32.mrb[0].mxu0
  %1218 = vmatprep.mubr.f32.mxu0 0.0
  %1219 = vmatmul.mubr.f32.gmra.mrb[0].mxu0 %v351
  %v1220 = vpop.f32.mrb[0].mxu0
  %v1221 = vadd.f32 %v272, %v1220
  %v1222 = vpop.f32.mrb[0].mxu0
  %1223 = vmatprep.mubr.f32.mxu0 0.0
  %1224 = vmatmul.mubr.f32.gmra.mrb[0].mxu0 %v354
  %v1225 = vpop.f32.mrb[0].mxu0
  %v1226 = vadd.f32 %v272, %v1225
  %v1227 = vpop.f32.mrb[0].mxu0
  %1228 = vmatprep.mubr.f32.mxu0 0.0
  %1229 = vmatmul.mubr.f32.gmra.mrb[0].mxu0 %v357
  %v1230 = vpop.f32.mrb[0].mxu0
  %v1231 = vadd.f32 %v272, %v1230
  %v1232 = vpop.f32.mrb[0].mxu0
  %1233 = vmatprep.mubr.f32.mxu0 0.0
  %1234 = vmatmul.mubr.f32.gmra.mrb[0].mxu0 %v360
  %v1235 = vpop.f32.mrb[0].mxu0
  %v1236 = vadd.f32 %v272, %v1235
  %v1237 = vpop.f32.mrb[0].mxu0
  %1238 = vmatprep.mubr.f32.mxu0 0.0
  %1239 = vmatmul.mubr.f32.gmra.mrb[0].mxu0 %v363
  %v1240 = vpop.f32.mrb[0].mxu0
  %v1241 = vadd.f32 %v272, %v1240
  %v1242 = vpop.f32.mrb[0].mxu0
  %1243 = vmatprep.mubr.f32.mxu0 0.0
  %1244 = vmatmul.mubr.f32.gmra.mrb[0].mxu0 %v366
  %v1245 = vpop.f32.mrb[0].mxu0
  %v1246 = vadd.f32 %v272, %v1245
  %v1247 = vpop.f32.mrb[0].mxu0
  %1248 = vmatprep.mubr.f32.mxu0 0.0
  %1249 = vmatmul.mubr.f32.gmra.mrb[0].mxu0 %v369
  %v1250 = vpop.f32.mrb[0].mxu0
  %v1251 = vadd.f32 %v272, %v1250
  %v1252 = vpop.f32.mrb[0].mxu0
  %1253 = vmatprep.mubr.f32.mxu0 0.0
  %1254 = vmatmul.mubr.f32.gmra.mrb[0].mxu0 %v372
  %v1255 = vpop.f32.mrb[0].mxu0
  %v1256 = vadd.f32 %v272, %v1255
  %v1257 = vpop.f32.mrb[0].mxu0
  %1258 = vmatprep.mubr.f32.mxu0 0.0
  %1259 = vmatmul.mubr.f32.gmra.mrb[0].mxu0 %v375
  %v1260 = vpop.f32.mrb[0].mxu0
  %v1261 = vadd.f32 %v272, %v1260
  %v1262 = vpop.f32.mrb[0].mxu0
  %1263 = vmatprep.mubr.f32.mxu0 0.0
  %1264 = vmatmul.mubr.f32.gmra.mrb[0].mxu0 %v378
  %v1265 = vpop.f32.mrb[0].mxu0
  %v1266 = vadd.f32 %v272, %v1265
  %v1267 = vpop.f32.mrb[0].mxu0
  %1268 = vmatprep.mubr.f32.mxu0 0.0
  %1269 = vmatmul.mubr.f32.gmra.mrb[0].mxu0 %v381
  %v1270 = vpop.f32.mrb[0].mxu0
  %v1271 = vadd.f32 %v272, %v1270
  %v1272 = vpop.f32.mrb[0].mxu0
  %1273 = vmatprep.mubr.f32.mxu0 0.0
  %1274 = vmatmul.mubr.f32.gmra.mrb[0].mxu0 %v384
  %v1275 = vpop.f32.mrb[0].mxu0
  %v1276 = vadd.f32 %v272, %v1275
  %v1277 = vpop.f32.mrb[0].mxu0
  %1278 = vmatprep.mubr.f32.mxu0 0.0
  %1279 = vmatmul.mubr.f32.gmra.mrb[0].mxu0 %v387
  %v1280 = vpop.f32.mrb[0].mxu0
  %v1281 = vadd.f32 %v272, %v1280
  %v1282 = vpop.f32.mrb[0].mxu0
  %1283 = vmatprep.mubr.f32.mxu0 0.0
  %1284 = vmatmul.mubr.f32.gmra.mrb[0].mxu0 %v390
  %v1285 = vpop.f32.mrb[0].mxu0
  %v1286 = vadd.f32 %v272, %v1285
  %v1287 = vpop.f32.mrb[0].mxu0
  %1288 = vmatprep.mubr.f32.mxu0 0.0
  %1289 = vmatmul.mubr.f32.gmra.mrb[0].mxu0 %v393
  %v1290 = vpop.f32.mrb[0].mxu0
  %v1291 = vadd.f32 %v272, %v1290
  %v1292 = vpop.f32.mrb[0].mxu0
  %1293 = vmatprep.mubr.f32.mxu0 0.0
  %1294 = vmatmul.mubr.f32.gmra.mrb[0].mxu0 %v396
  %v1295 = vpop.f32.mrb[0].mxu0
  %v1296 = vadd.f32 %v272, %v1295
  %v1297 = vpop.f32.mrb[0].mxu0
  %1298 = vmatprep.mubr.f32.mxu0 0.0
  %1299 = vmatmul.mubr.f32.gmra.mrb[0].mxu0 %v399
  %v1300 = vpop.f32.mrb[0].mxu0
  %v1301 = vadd.f32 %v272, %v1300
  %v1302 = vpop.f32.mrb[0].mxu0
  %1303 = vmatprep.mubr.f32.mxu0 0.0
  %1304 = vmatmul.mubr.f32.gmra.mrb[0].mxu0 %v402
  %v1305 = vpop.f32.mrb[0].mxu0
  %v1306 = vadd.f32 %v272, %v1305
  %v1307 = vpop.f32.mrb[0].mxu0
  %1308 = vmatprep.mubr.f32.mxu0 0.0
  %1309 = vmatmul.mubr.f32.gmra.mrb[0].mxu0 %v405
  %v1310 = vpop.f32.mrb[0].mxu0
  %v1311 = vadd.f32 %v272, %v1310
  %v1312 = vpop.f32.mrb[0].mxu0
  %1313 = vmatprep.mubr.f32.mxu0 0.0
  %1314 = vmatmul.mubr.f32.gmra.mrb[0].mxu0 %v408
  %v1315 = vpop.f32.mrb[0].mxu0
  %v1316 = vadd.f32 %v272, %v1315
  %v1317 = vpop.f32.mrb[0].mxu0
  %1318 = vmatprep.mubr.f32.mxu0 0.0
  %1319 = vmatmul.mubr.f32.gmra.mrb[0].mxu0 %v411
  %v1320 = vpop.f32.mrb[0].mxu0
  %v1321 = vadd.f32 %v272, %v1320
  %v1322 = vpop.f32.mrb[0].mxu0
  %1323 = vmatprep.mubr.f32.mxu0 0.0
  %1324 = vmatmul.mubr.f32.gmra.mrb[0].mxu0 %v414
  %v1325 = vpop.f32.mrb[0].mxu0
  %v1326 = vadd.f32 %v272, %v1325
  %v1327 = vpop.f32.mrb[0].mxu0
  %1328 = vmatprep.mubr.f32.mxu0 0.0
  %1329 = vmatmul.mubr.f32.gmra.mrb[0].mxu0 %v417
  %v1330 = vpop.f32.mrb[0].mxu0
  %v1331 = vadd.f32 %v272, %v1330
  %v1332 = vpop.f32.mrb[0].mxu0
  %1333 = vmatprep.mubr.f32.mxu0 0.0
  %1334 = vmatmul.mubr.f32.gmra.mrb[0].mxu0 %v420
  %v1335 = vpop.f32.mrb[0].mxu0
  %v1336 = vadd.f32 %v272, %v1335
  %v1337 = vpop.f32.mrb[0].mxu0
  %1338 = vmatprep.mubr.f32.mxu0 0.0
  %1339 = vmatmul.mubr.f32.gmra.mrb[0].mxu0 %v423
  %v1340 = vpop.f32.mrb[0].mxu0
  %v1341 = vadd.f32 %v272, %v1340
  %v1342 = vpop.f32.mrb[0].mxu0
  %1343 = vmatprep.mubr.f32.mxu0 0.0
  %1344 = vmatmul.mubr.f32.gmra.mrb[0].mxu0 %v426
  %v1345 = vpop.f32.mrb[0].mxu0
  %v1346 = vadd.f32 %v272, %v1345
  %v1347 = vpop.f32.mrb[0].mxu0
  %1348 = vmatprep.mubr.f32.mxu0 0.0
  %1349 = vmatmul.mubr.f32.gmra.mrb[0].mxu0 %v429
  %v1350 = vpop.f32.mrb[0].mxu0
  %v1351 = vadd.f32 %v272, %v1350
  %v1352 = vpop.f32.mrb[0].mxu0
  %1353 = vmatprep.mubr.f32.mxu0 0.0
  %1354 = vmatmul.mubr.f32.gmra.mrb[0].mxu0 %v432
  %v1355 = vpop.f32.mrb[0].mxu0
  %v1356 = vadd.f32 %v272, %v1355
  %v1357 = vpop.f32.mrb[0].mxu0
  %1358 = vmatprep.mubr.f32.mxu0 0.0
  %1359 = vmatmul.mubr.f32.gmra.mrb[0].mxu0 %v435
  %v1360 = vpop.f32.mrb[0].mxu0
  %v1361 = vadd.f32 %v272, %v1360
  %v1362 = vpop.f32.mrb[0].mxu0
  %1363 = vmatprep.mubr.f32.mxu0 0.0
  %1364 = vmatmul.mubr.f32.gmra.mrb[0].mxu0 %v438
  %v1365 = vpop.f32.mrb[0].mxu0
  %v1366 = vadd.f32 %v272, %v1365
  %v1367 = vpop.f32.mrb[0].mxu0
  %1368 = vmatprep.mubr.f32.mxu0 0.0
  %1369 = vmatmul.mubr.f32.gmra.mrb[0].mxu0 %v441
  %v1370 = vpop.f32.mrb[0].mxu0
  %v1371 = vadd.f32 %v272, %v1370
  %v1372 = vpop.f32.mrb[0].mxu0
  %1373 = vmatprep.mubr.f32.mxu0 0.0
  %1374 = vmatmul.mubr.f32.gmra.mrb[0].mxu0 %v444
  %v1375 = vpop.f32.mrb[0].mxu0
  %v1376 = vadd.f32 %v272, %v1375
  %v1377 = vpop.f32.mrb[0].mxu0
  %1378 = vmatprep.mubr.f32.mxu0 0.0
  %1379 = vmatmul.mubr.f32.gmra.mrb[0].mxu0 %v447
  %v1380 = vpop.f32.mrb[0].mxu0
  %v1381 = vadd.f32 %v272, %v1380
  %v1382 = vpop.f32.mrb[0].mxu0
  %1383 = vmatprep.mubr.f32.mxu0 0.0
  %1384 = vmatmul.mubr.f32.gmra.mrb[0].mxu0 %v450
  %v1385 = vpop.f32.mrb[0].mxu0
  %v1386 = vadd.f32 %v272, %v1385
  %v1387 = vpop.f32.mrb[0].mxu0
  %1388 = vmatprep.mubr.f32.mxu0 0.0
  %1389 = vmatmul.mubr.f32.gmra.mrb[0].mxu0 %v453
  %v1390 = vpop.f32.mrb[0].mxu0
  %v1391 = vadd.f32 %v272, %v1390
  %v1392 = vpop.f32.mrb[0].mxu0
  %1393 = vmatprep.mubr.f32.mxu0 0.0
  %1394 = vmatmul.mubr.f32.gmra.mrb[0].mxu0 %v456
  %v1395 = vpop.f32.mrb[0].mxu0
  %v1396 = vadd.f32 %v272, %v1395
  %v1397 = vpop.f32.mrb[0].mxu0
  %1398 = vmatprep.mubr.f32.mxu0 0.0
  %1399 = vmatmul.mubr.f32.gmra.mrb[0].mxu0 %v459
  %v1400 = vpop.f32.mrb[0].mxu0
  %v1401 = vadd.f32 %v272, %v1400
  %v1402 = vpop.f32.mrb[0].mxu0
  %1403 = vmatprep.mubr.f32.mxu0 0.0
  %1404 = vmatmul.mubr.f32.gmra.mrb[0].mxu0 %v462
  %v1405 = vpop.f32.mrb[0].mxu0
  %v1406 = vadd.f32 %v272, %v1405
  %v1407 = vpop.f32.mrb[0].mxu0
  %1408 = vmatprep.mubr.f32.mxu0 0.0
  %1409 = vmatmul.mubr.f32.gmra.mrb[0].mxu0 %v465
  %v1410 = vpop.f32.mrb[0].mxu0
  %v1411 = vadd.f32 %v272, %v1410
  %v1412 = vpop.f32.mrb[0].mxu0
  %1413 = vmatprep.mubr.f32.mxu0 0.0
  %1414 = vmatmul.mubr.f32.gmra.mrb[0].mxu0 %v468
  %v1415 = vpop.f32.mrb[0].mxu0
  %v1416 = vadd.f32 %v272, %v1415
  %v1417 = vpop.f32.mrb[0].mxu0
  %1418 = vmatprep.mubr.f32.mxu0 0.0
  %1419 = vmatmul.mubr.f32.gmra.mrb[0].mxu0 %v471
  %v1420 = vpop.f32.mrb[0].mxu0
  %v1421 = vadd.f32 %v272, %v1420
  %v1422 = vpop.f32.mrb[0].mxu0
  %1423 = vmatprep.mubr.f32.mxu0 0.0
  %1424 = vmatmul.mubr.f32.gmra.mrb[0].mxu0 %v474
  %v1425 = vpop.f32.mrb[0].mxu0
  %v1426 = vadd.f32 %v272, %v1425
  %v1427 = vpop.f32.mrb[0].mxu0
  %1428 = vmatprep.mubr.f32.mxu0 0.0
  %1429 = vmatmul.mubr.f32.gmra.mrb[0].mxu0 %v477
  %v1430 = vpop.f32.mrb[0].mxu0
  %v1431 = vadd.f32 %v272, %v1430
  %v1432 = vpop.f32.mrb[0].mxu0
  %1433 = vmatprep.mubr.f32.mxu0 0.0
  %1434 = vmatmul.mubr.f32.gmra.mrb[0].mxu0 %v480
  %v1435 = vpop.f32.mrb[0].mxu0
  %v1436 = vadd.f32 %v272, %v1435
  %v1437 = vpop.f32.mrb[0].mxu0
  %1438 = vmatprep.mubr.f32.mxu0 0.0
  %1439 = vmatmul.mubr.f32.gmra.mrb[0].mxu0 %v483
  %v1440 = vpop.f32.mrb[0].mxu0
  %v1441 = vadd.f32 %v272, %v1440
  %v1442 = vpop.f32.mrb[0].mxu0
  %1443 = vmatprep.mubr.f32.mxu0 0.0
  %1444 = vmatmul.mubr.f32.gmra.mrb[0].mxu0 %v486
  %v1445 = vpop.f32.mrb[0].mxu0
  %v1446 = vadd.f32 %v272, %v1445
  %v1447 = vpop.f32.mrb[0].mxu0
  %1448 = vmatprep.mubr.f32.mxu0 0.0
  %1449 = vmatmul.mubr.f32.gmra.mrb[0].mxu0 %v489
  %v1450 = vpop.f32.mrb[0].mxu0
  %v1451 = vadd.f32 %v272, %v1450
  %v1452 = vpop.f32.mrb[0].mxu0
  %1453 = vmatprep.mubr.f32.mxu0 0.0
  %1454 = vmatmul.mubr.f32.gmra.mrb[0].mxu0 %v492
  %v1455 = vpop.f32.mrb[0].mxu0
  %v1456 = vadd.f32 %v272, %v1455
  %v1457 = vpop.f32.mrb[0].mxu0
  %1458 = vmatprep.mubr.f32.mxu0 0.0
  %1459 = vmatmul.mubr.f32.gmra.mrb[0].mxu0 %v495
  %v1460 = vpop.f32.mrb[0].mxu0
  %v1461 = vadd.f32 %v272, %v1460
  %v1462 = vpop.f32.mrb[0].mxu0
  %1463 = vmatprep.mubr.f32.mxu0 0.0
  %1464 = vmatmul.mubr.f32.gmra.mrb[0].mxu0 %v498
  %v1465 = vpop.f32.mrb[0].mxu0
  %v1466 = vadd.f32 %v272, %v1465
  %v1467 = vpop.f32.mrb[0].mxu0
  %1468 = vmatprep.mubr.f32.mxu0 0.0
  %1469 = vmatmul.mubr.f32.gmra.mrb[0].mxu0 %v501
  %v1470 = vpop.f32.mrb[0].mxu0
  %v1471 = vadd.f32 %v272, %v1470
  %v1472 = vpop.f32.mrb[0].mxu0
  %1473 = vmatprep.mubr.f32.mxu0 0.0
  %1474 = vmatmul.mubr.f32.gmra.mrb[0].mxu0 %v504
  %v1475 = vpop.f32.mrb[0].mxu0
  %v1476 = vadd.f32 %v272, %v1475
  %v1477 = vpop.f32.mrb[0].mxu0
  %1478 = vmatprep.mubr.f32.mxu0 0.0
  %1479 = vmatmul.mubr.f32.gmra.mrb[0].mxu0 %v507
  %v1480 = vpop.f32.mrb[0].mxu0
  %v1481 = vadd.f32 %v272, %v1480
  %v1482 = vpop.f32.mrb[0].mxu0
  %1483 = vmatprep.mubr.f32.mxu0 0.0
  %1484 = vmatmul.mubr.f32.gmra.mrb[0].mxu0 %v510
  %v1485 = vpop.f32.mrb[0].mxu0
  %v1486 = vadd.f32 %v272, %v1485
  %v1487 = vpop.f32.mrb[0].mxu0
  %1488 = vmatprep.mubr.f32.mxu0 0.0
  %1489 = vmatmul.mubr.f32.gmra.mrb[0].mxu0 %v513
  %v1490 = vpop.f32.mrb[0].mxu0
  %v1491 = vadd.f32 %v272, %v1490
  %v1492 = vpop.f32.mrb[0].mxu0
  %1493 = vmatprep.mubr.f32.mxu0 0.0
  %1494 = vmatmul.mubr.f32.gmra.mrb[0].mxu0 %v516
  %v1495 = vpop.f32.mrb[0].mxu0
  %v1496 = vadd.f32 %v272, %v1495
  %v1497 = vpop.f32.mrb[0].mxu0
  %1498 = vmatprep.mubr.f32.mxu0 0.0
  %1499 = vmatmul.mubr.f32.gmra.mrb[0].mxu0 %v519
  %v1500 = vpop.f32.mrb[0].mxu0
  %v1501 = vadd.f32 %v272, %v1500
  %v1502 = vpop.f32.mrb[0].mxu0
  %1503 = vmatprep.mubr.f32.mxu0 0.0
  %1504 = vmatmul.mubr.f32.gmra.mrb[0].mxu0 %v522
  %v1505 = vpop.f32.mrb[0].mxu0
  %v1506 = vadd.f32 %v272, %v1505
  %v1507 = vpop.f32.mrb[0].mxu0
  %1508 = vmatprep.mubr.f32.mxu0 0.0
  %1509 = vmatmul.mubr.f32.gmra.mrb[0].mxu0 %v525
  %v1510 = vpop.f32.mrb[0].mxu0
  %v1511 = vadd.f32 %v272, %v1510
  %v1512 = vpop.f32.mrb[0].mxu0
  %1513 = vmatprep.mubr.f32.mxu0 0.0
  %1514 = vmatmul.mubr.f32.gmra.mrb[0].mxu0 %v528
  %v1515 = vpop.f32.mrb[0].mxu0
  %v1516 = vadd.f32 %v272, %v1515
  %v1517 = vpop.f32.mrb[0].mxu0
  %1518 = vmatprep.mubr.f32.mxu0 0.0
  %1519 = vmatmul.mubr.f32.gmra.mrb[0].mxu0 %v531
  %v1520 = vpop.f32.mrb[0].mxu0
  %v1521 = vadd.f32 %v272, %v1520
  %v1522 = vpop.f32.mrb[0].mxu0
  %1523 = vmatprep.mubr.f32.mxu0 0.0
  %1524 = vmatmul.mubr.f32.gmra.mrb[0].mxu0 %v534
  %v1525 = vpop.f32.mrb[0].mxu0
  %v1526 = vadd.f32 %v272, %v1525
  %v1527 = vpop.f32.mrb[0].mxu0
  %1528 = vmatprep.mubr.f32.mxu0 0.0
  %1529 = vmatmul.mubr.f32.gmra.mrb[0].mxu0 %v537
  %v1530 = vpop.f32.mrb[0].mxu0
  %v1531 = vadd.f32 %v272, %v1530
  %v1532 = vpop.f32.mrb[0].mxu0
  %1533 = vmatprep.mubr.f32.mxu0 0.0
  %1534 = vmatmul.mubr.f32.gmra.mrb[0].mxu0 %v540
  %v1535 = vpop.f32.mrb[0].mxu0
  %v1536 = vadd.f32 %v272, %v1535
  %v1537 = vpop.f32.mrb[0].mxu0
  %1538 = vmatprep.mubr.f32.mxu0 0.0
  %1539 = vmatmul.mubr.f32.gmra.mrb[0].mxu0 %v543
  %v1540 = vpop.f32.mrb[0].mxu0
  %v1541 = vadd.f32 %v272, %v1540
  %v1542 = vpop.f32.mrb[0].mxu0
  %1543 = vmatprep.mubr.f32.mxu0 0.0
  %1544 = vmatmul.mubr.f32.gmra.mrb[0].mxu0 %v546
  %v1545 = vpop.f32.mrb[0].mxu0
  %v1546 = vadd.f32 %v272, %v1545
  %v1547 = vpop.f32.mrb[0].mxu0
  %1548 = vmatprep.mubr.f32.mxu0 0.0
  %1549 = vmatmul.mubr.f32.gmra.mrb[0].mxu0 %v549
  %v1550 = vpop.f32.mrb[0].mxu0
  %v1551 = vadd.f32 %v272, %v1550
  %v1552 = vpop.f32.mrb[0].mxu0
  %1553 = vmatprep.mubr.f32.mxu0 0.0
  %1554 = vmatmul.mubr.f32.gmra.mrb[0].mxu0 %v552
  %v1555 = vpop.f32.mrb[0].mxu0
  %v1556 = vadd.f32 %v272, %v1555
  %v1557 = vpop.f32.mrb[0].mxu0
  %1558 = vmatprep.mubr.f32.mxu0 0.0
  %1559 = vmatmul.mubr.f32.gmra.mrb[0].mxu0 %v555
  %v1560 = vpop.f32.mrb[0].mxu0
  %v1561 = vadd.f32 %v272, %v1560
  %v1562 = vpop.f32.mrb[0].mxu0
  %1563 = vmatprep.mubr.f32.mxu0 0.0
  %1564 = vmatmul.mubr.f32.gmra.mrb[0].mxu0 %v558
  %v1565 = vpop.f32.mrb[0].mxu0
  %v1566 = vadd.f32 %v272, %v1565
  %v1567 = vpop.f32.mrb[0].mxu0
  %1568 = vmatprep.mubr.f32.mxu0 0.0
  %1569 = vmatmul.mubr.f32.gmra.mrb[0].mxu0 %v561
  %v1570 = vpop.f32.mrb[0].mxu0
  %v1571 = vadd.f32 %v272, %v1570
  %v1572 = vpop.f32.mrb[0].mxu0
  %1573 = vmatprep.mubr.f32.mxu0 0.0
  %1574 = vmatmul.mubr.f32.gmra.mrb[0].mxu0 %v564
  %v1575 = vpop.f32.mrb[0].mxu0
  %v1576 = vadd.f32 %v272, %v1575
  %v1577 = vpop.f32.mrb[0].mxu0
  %1578 = vmatprep.mubr.f32.mxu0 0.0
  %1579 = vmatmul.mubr.f32.gmra.mrb[0].mxu0 %v567
  %v1580 = vpop.f32.mrb[0].mxu0
  %v1581 = vadd.f32 %v272, %v1580
  %v1582 = vpop.f32.mrb[0].mxu0
  %1583 = vmatprep.mubr.f32.mxu0 0.0
  %1584 = vmatmul.mubr.f32.gmra.mrb[0].mxu0 %v570
  %v1585 = vpop.f32.mrb[0].mxu0
  %v1586 = vadd.f32 %v272, %v1585
  %v1587 = vpop.f32.mrb[0].mxu0
  %1588 = vmatprep.mubr.f32.mxu0 0.0
  %1589 = vmatmul.mubr.f32.gmra.mrb[0].mxu0 %v573
  %v1590 = vpop.f32.mrb[0].mxu0
  %v1591 = vadd.f32 %v272, %v1590
  %v1592 = vpop.f32.mrb[0].mxu0
  %1593 = vmatprep.mubr.f32.mxu0 0.0
  %1594 = vmatmul.mubr.f32.gmra.mrb[0].mxu0 %v576
  %v1595 = vpop.f32.mrb[0].mxu0
  %v1596 = vadd.f32 %v272, %v1595
  %v1597 = vpop.f32.mrb[0].mxu0
  %1598 = vmatprep.mubr.f32.mxu0 0.0
  %1599 = vmatmul.mubr.f32.gmra.mrb[0].mxu0 %v579
  %v1600 = vpop.f32.mrb[0].mxu0
  %v1601 = vadd.f32 %v272, %v1600
  %v1602 = vpop.f32.mrb[0].mxu0
  %1603 = vmatprep.mubr.f32.mxu0 0.0
  %1604 = vmatmul.mubr.f32.gmra.mrb[0].mxu0 %v582
  %v1605 = vpop.f32.mrb[0].mxu0
  %v1606 = vadd.f32 %v272, %v1605
  %v1607 = vpop.f32.mrb[0].mxu0
  %1608 = vmatprep.mubr.f32.mxu0 0.0
  %1609 = vmatmul.mubr.f32.gmra.mrb[0].mxu0 %v585
  %v1610 = vpop.f32.mrb[0].mxu0
  %v1611 = vadd.f32 %v272, %v1610
  %v1612 = vpop.f32.mrb[0].mxu0
  %1613 = vmatprep.mubr.f32.mxu0 0.0
  %1614 = vmatmul.mubr.f32.gmra.mrb[0].mxu0 %v588
  %v1615 = vpop.f32.mrb[0].mxu0
  %v1616 = vadd.f32 %v272, %v1615
  %v1617 = vpop.f32.mrb[0].mxu0
  %1618 = vmatprep.mubr.f32.mxu0 0.0
  %1619 = vmatmul.mubr.f32.gmra.mrb[0].mxu0 %v591
  %v1620 = vpop.f32.mrb[0].mxu0
  %v1621 = vadd.f32 %v272, %v1620
  %v1622 = vpop.f32.mrb[0].mxu0
  %1623 = vmatprep.mubr.f32.mxu0 0.0
  %1624 = vmatmul.mubr.f32.gmra.mrb[0].mxu0 %v594
  %v1625 = vpop.f32.mrb[0].mxu0
  %v1626 = vadd.f32 %v272, %v1625
  %v1627 = vpop.f32.mrb[0].mxu0
  %1628 = vmatprep.mubr.f32.mxu0 0.0
  %1629 = vmatmul.mubr.f32.gmra.mrb[0].mxu0 %v597
  %v1630 = vpop.f32.mrb[0].mxu0
  %v1631 = vadd.f32 %v272, %v1630
  %v1632 = vpop.f32.mrb[0].mxu0
  %1633 = vmatprep.mubr.f32.mxu0 0.0
  %1634 = vmatmul.mubr.f32.gmra.mrb[0].mxu0 %v600
  %v1635 = vpop.f32.mrb[0].mxu0
  %v1636 = vadd.f32 %v272, %v1635
  %v1637 = vpop.f32.mrb[0].mxu0
  %1638 = vmatprep.mubr.f32.mxu0 0.0
  %1639 = vmatmul.mubr.f32.gmra.mrb[0].mxu0 %v603
  %v1640 = vpop.f32.mrb[0].mxu0
  %v1641 = vadd.f32 %v272, %v1640
  %v1642 = vpop.f32.mrb[0].mxu0
  %1643 = vmatprep.mubr.f32.mxu0 0.0
  %1644 = vmatmul.mubr.f32.gmra.mrb[0].mxu0 %v606
  %v1645 = vpop.f32.mrb[0].mxu0
  %v1646 = vadd.f32 %v272, %v1645
  %v1647 = vpop.f32.mrb[0].mxu0
  %1648 = vmatprep.mubr.f32.mxu0 0.0
  %1649 = vmatmul.mubr.f32.gmra.mrb[0].mxu0 %v609
  %v1650 = vpop.f32.mrb[0].mxu0
  %v1651 = vadd.f32 %v272, %v1650
  %v1652 = vpop.f32.mrb[0].mxu0
  %1653 = vmatprep.mubr.f32.mxu0 0.0
  %1654 = vmatmul.mubr.f32.gmra.mrb[0].mxu0 %v612
  %v1655 = vpop.f32.mrb[0].mxu0
  %v1656 = vadd.f32 %v272, %v1655
  %v1657 = vpop.f32.mrb[0].mxu0
  %1658 = vmatprep.mubr.f32.mxu0 0.0
  %1659 = vmatmul.mubr.f32.gmra.mrb[0].mxu0 %v615
  %v1660 = vpop.f32.mrb[0].mxu0
  %v1661 = vadd.f32 %v272, %v1660
  %v1662 = vpop.f32.mrb[0].mxu0
  %1663 = vmatprep.mubr.f32.mxu0 0.0
  %1664 = vmatmul.mubr.f32.gmra.mrb[0].mxu0 %v618
  %v1665 = vpop.f32.mrb[0].mxu0
  %v1666 = vadd.f32 %v272, %v1665
  %v1667 = vpop.f32.mrb[0].mxu0
  %1668 = vmatprep.mubr.f32.mxu0 0.0
  %1669 = vmatmul.mubr.f32.gmra.mrb[0].mxu0 %v621
  %v1670 = vpop.f32.mrb[0].mxu0
  %v1671 = vadd.f32 %v272, %v1670
  %v1672 = vpop.f32.mrb[0].mxu0
  %1673 = vmatprep.mubr.f32.mxu0 0.0
  %1674 = vmatmul.mubr.f32.gmra.mrb[0].mxu0 %v624
  %v1675 = vpop.f32.mrb[0].mxu0
  %v1676 = vadd.f32 %v272, %v1675
  %v1677 = vpop.f32.mrb[0].mxu0
  %1678 = vmatprep.mubr.f32.mxu0 0.0
  %1679 = vmatmul.mubr.f32.gmra.mrb[0].mxu0 %v627
  %v1680 = vpop.f32.mrb[0].mxu0
  %v1681 = vadd.f32 %v272, %v1680
  %v1682 = vpop.f32.mrb[0].mxu0
  %1683 = vmatprep.mubr.f32.mxu0 0.0
  %1684 = vmatmul.mubr.f32.gmra.mrb[0].mxu0 %v630
  %v1685 = vpop.f32.mrb[0].mxu0
  %v1686 = vadd.f32 %v272, %v1685
  %v1687 = vpop.f32.mrb[0].mxu0
  %1688 = vmatprep.mubr.f32.mxu0 0.0
  %1689 = vmatmul.mubr.f32.gmra.mrb[0].mxu0 %v633
  %v1690 = vpop.f32.mrb[0].mxu0
  %v1691 = vadd.f32 %v272, %v1690
  %v1692 = vpop.f32.mrb[0].mxu0
  %1693 = vmatprep.mubr.f32.mxu0 0.0
  %1694 = vmatmul.mubr.f32.gmra.mrb[0].mxu0 %v636
  %v1695 = vpop.f32.mrb[0].mxu0
  %v1696 = vadd.f32 %v272, %v1695
  %v1697 = vpop.f32.mrb[0].mxu0
  %1698 = vmatprep.mubr.f32.mxu0 0.0
  %1699 = vmatmul.mubr.f32.gmra.mrb[0].mxu0 %v639
  %v1700 = vpop.f32.mrb[0].mxu0
  %v1701 = vadd.f32 %v272, %v1700
  %v1702 = vpop.f32.mrb[0].mxu0
  %1703 = vmatprep.mubr.f32.mxu0 0.0
  %1704 = vmatmul.mubr.f32.gmra.mrb[0].mxu0 %v642
  %v1705 = vpop.f32.mrb[0].mxu0
  %v1706 = vadd.f32 %v272, %v1705
  %v1707 = vpop.f32.mrb[0].mxu0
  %1708 = vmatprep.mubr.f32.mxu0 0.0
  %1709 = vmatmul.mubr.f32.gmra.mrb[0].mxu0 %v645
  %v1710 = vpop.f32.mrb[0].mxu0
  %v1711 = vadd.f32 %v272, %v1710
  %v1712 = vpop.f32.mrb[0].mxu0
  %1713 = vmatprep.mubr.f32.mxu0 0.0
  %1714 = vmatmul.mubr.f32.gmra.mrb[0].mxu0 %v648
  %v1715 = vpop.f32.mrb[0].mxu0
  %v1716 = vadd.f32 %v272, %v1715
  %v1717 = vpop.f32.mrb[0].mxu0
  %1718 = vmatprep.mubr.f32.mxu0 0.0
  %1719 = vmatmul.mubr.f32.gmra.mrb[0].mxu0 %v651
  %v1720 = vpop.f32.mrb[0].mxu0
  %v1721 = vadd.f32 %v272, %v1720
  %v1722 = vpop.f32.mrb[0].mxu0
  %1723 = vmatprep.mubr.f32.mxu0 0.0
  %1724 = vmatmul.mubr.f32.gmra.mrb[0].mxu0 %v654
  %v1725 = vpop.f32.mrb[0].mxu0
  %v1726 = vadd.f32 %v272, %v1725
  %v1727 = vpop.f32.mrb[0].mxu0
  %1728 = vmatprep.mubr.f32.mxu0 0.0
  %1729 = vmatmul.mubr.f32.gmra.mrb[0].mxu0 %v657
  %v1730 = vpop.f32.mrb[0].mxu0
  %v1731 = vadd.f32 %v272, %v1730
  %v1732 = vpop.f32.mrb[0].mxu0
  %1733 = vmatprep.mubr.f32.mxu0 0.0
  %1734 = vmatmul.mubr.f32.gmra.mrb[0].mxu0 %v660
  %v1735 = vpop.f32.mrb[0].mxu0
  %v1736 = vadd.f32 %v272, %v1735
  %v1737 = vpop.f32.mrb[0].mxu0
  %1738 = vmatprep.mubr.f32.mxu0 0.0
  %1739 = vmatmul.mubr.f32.gmra.mrb[0].mxu0 %v663
  %v1740 = vpop.f32.mrb[0].mxu0
  %v1741 = vadd.f32 %v272, %v1740
  %v1742 = vpop.f32.mrb[0].mxu0
  %1743 = vmatprep.mubr.f32.mxu0 0.0
  %1744 = vmatmul.mubr.f32.gmra.mrb[0].mxu0 %v666
  %v1745 = vpop.f32.mrb[0].mxu0
  %v1746 = vadd.f32 %v272, %v1745
  %v1747 = vpop.f32.mrb[0].mxu0
  %1748 = vmatprep.mubr.f32.mxu0 0.0
  %1749 = vmatmul.mubr.f32.gmra.mrb[0].mxu0 %v669
  %v1750 = vpop.f32.mrb[0].mxu0
  %v1751 = vadd.f32 %v272, %v1750
  %v1752 = vpop.f32.mrb[0].mxu0
  %1753 = vmatprep.mubr.f32.mxu0 0.0
  %1754 = vmatmul.mubr.f32.gmra.mrb[0].mxu0 %v672
  %v1755 = vpop.f32.mrb[0].mxu0
  %v1756 = vadd.f32 %v272, %v1755
  %v1757 = vpop.f32.mrb[0].mxu0
  %1758 = vmatprep.mubr.f32.mxu0 0.0
  %1759 = vmatmul.mubr.f32.gmra.mrb[0].mxu0 %v675
  %v1760 = vpop.f32.mrb[0].mxu0
  %v1761 = vadd.f32 %v272, %v1760
  %v1762 = vpop.f32.mrb[0].mxu0
  %1763 = vmatprep.mubr.f32.mxu0 0.0
  %1764 = vmatmul.mubr.f32.gmra.mrb[0].mxu0 %v678
  %v1765 = vpop.f32.mrb[0].mxu0
  %v1766 = vadd.f32 %v272, %v1765
  %v1767 = vpop.f32.mrb[0].mxu0
  %1768 = vmatprep.mubr.f32.mxu0 0.0
  %1769 = vmatmul.mubr.f32.gmra.mrb[0].mxu0 %v681
  %v1770 = vpop.f32.mrb[0].mxu0
  %v1771 = vadd.f32 %v272, %v1770
  %v1772 = vpop.f32.mrb[0].mxu0
  %1773 = vmatprep.mubr.f32.mxu0 0.0
  %1774 = vmatmul.mubr.f32.gmra.mrb[0].mxu0 %v684
  %v1775 = vpop.f32.mrb[0].mxu0
  %v1776 = vadd.f32 %v272, %v1775
  %v1777 = vpop.f32.mrb[0].mxu0
  %1778 = vmatprep.mubr.f32.mxu0 0.0
  %1779 = vmatmul.mubr.f32.gmra.mrb[0].mxu0 %v687
  %v1780 = vpop.f32.mrb[0].mxu0
  %v1781 = vadd.f32 %v272, %v1780
  %v1782 = vpop.f32.mrb[0].mxu0
  %1783 = vmatprep.mubr.f32.mxu0 0.0
  %1784 = vmatmul.mubr.f32.gmra.mrb[0].mxu0 %v690
  %v1785 = vpop.f32.mrb[0].mxu0
  %v1786 = vadd.f32 %v272, %v1785
  %v1787 = vpop.f32.mrb[0].mxu0
  %1788 = vmatprep.mubr.f32.mxu0 0.0
  %1789 = vmatmul.mubr.f32.gmra.mrb[0].mxu0 %v693
  %v1790 = vpop.f32.mrb[0].mxu0
  %v1791 = vadd.f32 %v272, %v1790
  %v1792 = vpop.f32.mrb[0].mxu0
  %1793 = vmatprep.mubr.f32.mxu0 0.0
  %1794 = vmatmul.mubr.f32.gmra.mrb[0].mxu0 %v696
  %v1795 = vpop.f32.mrb[0].mxu0
  %v1796 = vadd.f32 %v272, %v1795
  %v1797 = vpop.f32.mrb[0].mxu0
  %1798 = vmatprep.mubr.f32.mxu0 0.0
  %1799 = vmatmul.mubr.f32.gmra.mrb[0].mxu0 %v699
  %v1800 = vpop.f32.mrb[0].mxu0
  %v1801 = vadd.f32 %v272, %v1800
  %v1802 = vpop.f32.mrb[0].mxu0
  %1803 = vmatprep.mubr.f32.mxu0 0.0
  %1804 = vmatmul.mubr.f32.gmra.mrb[0].mxu0 %v702
  %v1805 = vpop.f32.mrb[0].mxu0
  %v1806 = vadd.f32 %v272, %v1805
  %v1807 = vpop.f32.mrb[0].mxu0
  %1808 = vmatprep.mubr.f32.mxu0 0.0
  %1809 = vmatmul.mubr.f32.gmra.mrb[0].mxu0 %v705
  %v1810 = vpop.f32.mrb[0].mxu0
  %v1811 = vadd.f32 %v272, %v1810
  %v1812 = vpop.f32.mrb[0].mxu0
  %1813 = vmatprep.mubr.f32.mxu0 0.0
  %1814 = vmatmul.mubr.f32.gmra.mrb[0].mxu0 %v708
  %v1815 = vpop.f32.mrb[0].mxu0
  %v1816 = vadd.f32 %v272, %v1815
  %v1817 = vpop.f32.mrb[0].mxu0
  %1818 = vmatprep.mubr.f32.mxu0 0.0
  %1819 = vmatmul.mubr.f32.gmra.mrb[0].mxu0 %v711
  %v1820 = vpop.f32.mrb[0].mxu0
  %v1821 = vadd.f32 %v272, %v1820
  %v1822 = vpop.f32.mrb[0].mxu0
  %1823 = vmatprep.mubr.f32.mxu0 0.0
  %1824 = vmatmul.mubr.f32.gmra.mrb[0].mxu0 %v714
  %v1825 = vpop.f32.mrb[0].mxu0
  %v1826 = vadd.f32 %v272, %v1825
  %v1827 = vpop.f32.mrb[0].mxu0
  %1828 = vmatprep.mubr.f32.mxu0 0.0
  %1829 = vmatmul.mubr.f32.gmra.mrb[0].mxu0 %v717
  %v1830 = vpop.f32.mrb[0].mxu0
  %v1831 = vadd.f32 %v272, %v1830
  %v1832 = vpop.f32.mrb[0].mxu0
  %1833 = vmatprep.mubr.f32.mxu0 0.0
  %1834 = vmatmul.mubr.f32.gmra.mrb[0].mxu0 %v720
  %v1835 = vpop.f32.mrb[0].mxu0
  %v1836 = vadd.f32 %v272, %v1835
  %v1837 = vpop.f32.mrb[0].mxu0
  %1838 = vmatprep.mubr.f32.mxu0 0.0
  %1839 = vmatmul.mubr.f32.gmra.mrb[0].mxu0 %v723
  %v1840 = vpop.f32.mrb[0].mxu0
  %v1841 = vadd.f32 %v272, %v1840
  %v1842 = vpop.f32.mrb[0].mxu0
  %1843 = vmatprep.mubr.f32.mxu0 0.0
  %1844 = vmatmul.mubr.f32.gmra.mrb[0].mxu0 %v726
  %v1845 = vpop.f32.mrb[0].mxu0
  %v1846 = vadd.f32 %v272, %v1845
  %v1847 = vpop.f32.mrb[0].mxu0
  %1848 = vmatprep.mubr.f32.mxu0 0.0
  %1849 = vmatmul.mubr.f32.gmra.mrb[0].mxu0 %v729
  %v1850 = vpop.f32.mrb[0].mxu0
  %v1851 = vadd.f32 %v272, %v1850
  %v1852 = vpop.f32.mrb[0].mxu0
  %1853 = vmatprep.mubr.f32.mxu0 0.0
  %1854 = vmatmul.mubr.f32.gmra.mrb[0].mxu0 %v732
  %v1855 = vpop.f32.mrb[0].mxu0
  %v1856 = vadd.f32 %v272, %v1855
  %v1857 = vpop.f32.mrb[0].mxu0
  %1858 = vmatprep.mubr.f32.mxu0 0.0
  %1859 = vmatmul.mubr.f32.gmra.mrb[0].mxu0 %v735
  %v1860 = vpop.f32.mrb[0].mxu0
  %v1861 = vadd.f32 %v272, %v1860
  %v1862 = vpop.f32.mrb[0].mxu0
  %1863 = vmatprep.mubr.f32.mxu0 0.0
  %1864 = vmatmul.mubr.f32.gmra.mrb[0].mxu0 %v738
  %v1865 = vpop.f32.mrb[0].mxu0
  %v1866 = vadd.f32 %v272, %v1865
  %v1867 = vpop.f32.mrb[0].mxu0
  %1868 = vmatprep.mubr.f32.mxu0 0.0
  %1869 = vmatmul.mubr.f32.gmra.mrb[0].mxu0 %v741
  %v1870 = vpop.f32.mrb[0].mxu0
  %v1871 = vadd.f32 %v272, %v1870
  %v1872 = vpop.f32.mrb[0].mxu0
  %1873 = vmatprep.mubr.f32.mxu0 0.0
  %1874 = vmatmul.mubr.f32.gmra.mrb[0].mxu0 %v744
  %v1875 = vpop.f32.mrb[0].mxu0
  %v1876 = vadd.f32 %v272, %v1875
  %v1877 = vpop.f32.mrb[0].mxu0
  %1878 = vmatprep.mubr.f32.mxu0 0.0
  %1879 = vmatmul.mubr.f32.gmra.mrb[0].mxu0 %v747
  %v1880 = vpop.f32.mrb[0].mxu0
  %v1881 = vadd.f32 %v272, %v1880
  %v1882 = vpop.f32.mrb[0].mxu0
  %1883 = vmatprep.mubr.f32.mxu0 0.0
  %1884 = vmatmul.mubr.f32.gmra.mrb[0].mxu0 %v750
  %v1885 = vpop.f32.mrb[0].mxu0
  %v1886 = vadd.f32 %v272, %v1885
  %v1887 = vpop.f32.mrb[0].mxu0
  %1888 = vmatprep.mubr.f32.mxu0 0.0
  %1889 = vmatmul.mubr.f32.gmra.mrb[0].mxu0 %v753
  %v1890 = vpop.f32.mrb[0].mxu0
  %v1891 = vadd.f32 %v272, %v1890
  %v1892 = vpop.f32.mrb[0].mxu0
  %1893 = vmatprep.mubr.f32.mxu0 0.0
  %1894 = vmatmul.mubr.f32.gmra.mrb[0].mxu0 %v756
  %v1895 = vpop.f32.mrb[0].mxu0
  %v1896 = vadd.f32 %v272, %v1895
  %v1897 = vpop.f32.mrb[0].mxu0
  %1898 = vmatprep.mubr.f32.mxu0 0.0
  %1899 = vmatmul.mubr.f32.gmra.mrb[0].mxu0 %v759
  %v1900 = vpop.f32.mrb[0].mxu0
  %v1901 = vadd.f32 %v272, %v1900
  %v1902 = vpop.f32.mrb[0].mxu0
  %1903 = vmatprep.mubr.f32.mxu0 0.0
  %1904 = vmatmul.mubr.f32.gmra.mrb[0].mxu0 %v762
  %v1905 = vpop.f32.mrb[0].mxu0
  %v1906 = vadd.f32 %v272, %v1905
  %v1907 = vpop.f32.mrb[0].mxu0
  %1908 = vmatprep.mubr.f32.mxu0 0.0
  %1909 = vmatmul.mubr.f32.gmra.mrb[0].mxu0 %v765
  %v1910 = vpop.f32.mrb[0].mxu0
  %v1911 = vadd.f32 %v272, %v1910
  %v1912 = vpop.f32.mrb[0].mxu0
  %1913 = vmatprep.mubr.f32.mxu0 0.0
  %1914 = vmatmul.mubr.f32.gmra.mrb[0].mxu0 %v768
  %v1915 = vpop.f32.mrb[0].mxu0
  %v1916 = vadd.f32 %v272, %v1915
  %v1917 = vpop.f32.mrb[0].mxu0
  %1918 = vmatprep.mubr.f32.mxu0 0.0
  %1919 = vmatmul.mubr.f32.gmra.mrb[0].mxu0 %v771
  %v1920 = vpop.f32.mrb[0].mxu0
  %v1921 = vadd.f32 %v272, %v1920
  %v1922 = vpop.f32.mrb[0].mxu0
  %1923 = vmatprep.mubr.f32.mxu0 0.0
  %1924 = vmatmul.mubr.f32.gmra.mrb[0].mxu0 %v774
  %v1925 = vpop.f32.mrb[0].mxu0
  %v1926 = vadd.f32 %v272, %v1925
  %v1927 = vpop.f32.mrb[0].mxu0
  %1928 = vmatprep.mubr.f32.mxu0 0.0
  %1929 = vmatmul.mubr.f32.gmra.mrb[0].mxu0 %v777
  %v1930 = vpop.f32.mrb[0].mxu0
  %v1931 = vadd.f32 %v272, %v1930
  %v1932 = vpop.f32.mrb[0].mxu0
  %1933 = vmatprep.mubr.f32.mxu0 0.0
  %1934 = vmatmul.mubr.f32.gmra.mrb[0].mxu0 %v780
  %v1935 = vpop.f32.mrb[0].mxu0
  %v1936 = vadd.f32 %v272, %v1935
  %v1937 = vpop.f32.mrb[0].mxu0
  %1938 = vmatprep.mubr.f32.mxu0 0.0
  %1939 = vmatmul.mubr.f32.gmra.mrb[0].mxu0 %v783
  %v1940 = vpop.f32.mrb[0].mxu0
  %v1941 = vadd.f32 %v272, %v1940
  %v1942 = vpop.f32.mrb[0].mxu0
  %1943 = vmatprep.mubr.f32.mxu0 0.0
  %1944 = vmatmul.mubr.f32.gmra.mrb[0].mxu0 %v786
  %v1945 = vpop.f32.mrb[0].mxu0
  %v1946 = vadd.f32 %v272, %v1945
  %v1947 = vpop.f32.mrb[0].mxu0
  %1948 = vmatprep.mubr.f32.mxu0 0.0
  %1949 = vmatmul.mubr.f32.gmra.mrb[0].mxu0 %v789
  %v1950 = vpop.f32.mrb[0].mxu0
  %v1951 = vadd.f32 %v272, %v1950
  %v1952 = vpop.f32.mrb[0].mxu0
  %1953 = vmatprep.mubr.f32.mxu0 0.0
  %1954 = vmatmul.mubr.f32.gmra.mrb[0].mxu0 %v792
  %v1955 = vpop.f32.mrb[0].mxu0
  %v1956 = vadd.f32 %v272, %v1955
  %v1957 = vpop.f32.mrb[0].mxu0
  %1958 = vmatprep.mubr.f32.mxu0 0.0
  %1959 = vmatmul.mubr.f32.gmra.mrb[0].mxu0 %v795
  %v1960 = vpop.f32.mrb[0].mxu0
  %v1961 = vadd.f32 %v272, %v1960
  %v1962 = vpop.f32.mrb[0].mxu0
  %1963 = vmatprep.mubr.f32.mxu0 0.0
  %1964 = vmatmul.mubr.f32.gmra.mrb[0].mxu0 %v798
  %v1965 = vpop.f32.mrb[0].mxu0
  %v1966 = vadd.f32 %v272, %v1965
  %v1967 = vpop.f32.mrb[0].mxu0
  %1968 = vmatprep.mubr.f32.mxu0 0.0
  %1969 = vmatmul.mubr.f32.gmra.mrb[0].mxu0 %v801
  %v1970 = vpop.f32.mrb[0].mxu0
  %v1971 = vadd.f32 %v272, %v1970
  %v1972 = vpop.f32.mrb[0].mxu0
  %1973 = vmatprep.mubr.f32.mxu0 0.0
  %1974 = vmatmul.mubr.f32.gmra.mrb[0].mxu0 %v804
  %v1975 = vpop.f32.mrb[0].mxu0
  %v1976 = vadd.f32 %v272, %v1975
  %v1977 = vpop.f32.mrb[0].mxu0
  %1978 = vmatprep.mubr.f32.mxu0 0.0
  %1979 = vmatmul.mubr.f32.gmra.mrb[0].mxu0 %v807
  %v1980 = vpop.f32.mrb[0].mxu0
  %v1981 = vadd.f32 %v272, %v1980
  %v1982 = vpop.f32.mrb[0].mxu0
  %1983 = vmatprep.mubr.f32.mxu0 0.0
  %1984 = vmatmul.mubr.f32.gmra.mrb[0].mxu0 %v810
  %v1985 = vpop.f32.mrb[0].mxu0
  %v1986 = vadd.f32 %v272, %v1985
  %v1987 = vpop.f32.mrb[0].mxu0
  %1988 = vmatprep.mubr.f32.mxu0 0.0
  %1989 = vmatmul.mubr.f32.gmra.mrb[0].mxu0 %v813
  %v1990 = vpop.f32.mrb[0].mxu0
  %v1991 = vadd.f32 %v272, %v1990
  %v1992 = vpop.f32.mrb[0].mxu0
  %1993 = vmatprep.mubr.f32.mxu0 0.0
  %1994 = vmatmul.mubr.f32.gmra.mrb[0].mxu0 %v816
  %v1995 = vpop.f32.mrb[0].mxu0
  %v1996 = vadd.f32 %v272, %v1995
  %v1997 = vpop.f32.mrb[0].mxu0
  %1998 = vmatprep.mubr.f32.mxu0 0.0
  %1999 = vmatmul.mubr.f32.gmra.mrb[0].mxu0 %v819
  %v2000 = vpop.f32.mrb[0].mxu0
  %v2001 = vadd.f32 %v272, %v2000
  %v2002 = vpop.f32.mrb[0].mxu0
  %2003 = vmatprep.mubr.f32.mxu0 0.0
  %2004 = vmatmul.mubr.f32.gmra.mrb[0].mxu0 %v822
  %v2005 = vpop.f32.mrb[0].mxu0
  %v2006 = vadd.f32 %v272, %v2005
  %v2007 = vpop.f32.mrb[0].mxu0
  %2008 = vmatprep.mubr.f32.mxu0 0.0
  %2009 = vmatmul.mubr.f32.gmra.mrb[0].mxu0 %v825
  %v2010 = vpop.f32.mrb[0].mxu0
  %v2011 = vadd.f32 %v272, %v2010
  %v2012 = vpop.f32.mrb[0].mxu0
  %2013 = vmatprep.mubr.f32.mxu0 0.0
  %2014 = vmatmul.mubr.f32.gmra.mrb[0].mxu0 %v828
  %v2015 = vpop.f32.mrb[0].mxu0
  %v2016 = vadd.f32 %v272, %v2015
  %v2017 = vpop.f32.mrb[0].mxu0
  %2018 = vmatprep.mubr.f32.mxu0 0.0
  %2019 = vmatmul.mubr.f32.gmra.mrb[0].mxu0 %v831
  %v2020 = vpop.f32.mrb[0].mxu0
  %v2021 = vadd.f32 %v272, %v2020
  %v2022 = vpop.f32.mrb[0].mxu0
  %2023 = vmatprep.mubr.f32.mxu0 0.0
  %2024 = vmatmul.mubr.f32.gmra.mrb[0].mxu0 %v834
  %v2025 = vpop.f32.mrb[0].mxu0
  %v2026 = vadd.f32 %v272, %v2025
  %v2027 = vpop.f32.mrb[0].mxu0
  %2028 = vmatprep.mubr.f32.mxu0 0.0
  %2029 = vmatmul.mubr.f32.gmra.mrb[0].mxu0 %v837
  %v2030 = vpop.f32.mrb[0].mxu0
  %v2031 = vadd.f32 %v272, %v2030
  %v2032 = vpop.f32.mrb[0].mxu0
  %2033 = vmatprep.mubr.f32.mxu0 0.0
  %2034 = vmatmul.mubr.f32.gmra.mrb[0].mxu0 %v840
  %v2035 = vpop.f32.mrb[0].mxu0
  %v2036 = vadd.f32 %v272, %v2035
  %v2037 = vpop.f32.mrb[0].mxu0
  %2038 = vmatprep.mubr.f32.mxu0 0.0
  %2039 = vmatmul.mubr.f32.gmra.mrb[0].mxu0 %v843
  %v2040 = vpop.f32.mrb[0].mxu0
  %v2041 = vadd.f32 %v272, %v2040
  %v2042 = vpop.f32.mrb[0].mxu0
  %2043 = vmatprep.mubr.f32.mxu0 0.0
  %2044 = vmatmul.mubr.f32.gmra.mrb[0].mxu0 %v846
  %v2045 = vpop.f32.mrb[0].mxu0
  %v2046 = vadd.f32 %v272, %v2045
  %v2047 = vpop.f32.mrb[0].mxu0
  %2048 = vmatprep.mubr.f32.mxu0 0.0
  %2049 = vmatmul.mubr.f32.gmra.mrb[0].mxu0 %v849
  %v2050 = vpop.f32.mrb[0].mxu0
  %v2051 = vadd.f32 %v272, %v2050
  %v2052 = vpop.f32.mrb[0].mxu0
  %2053 = vmatprep.mubr.f32.mxu0 0.0
  %2054 = vmatmul.mubr.f32.gmra.mrb[0].mxu0 %v852
  %v2055 = vpop.f32.mrb[0].mxu0
  %v2056 = vadd.f32 %v272, %v2055
  %v2057 = vpop.f32.mrb[0].mxu0
  %2058 = vmatprep.mubr.f32.mxu0 0.0
  %2059 = vmatmul.mubr.f32.gmra.mrb[0].mxu0 %v855
  %v2060 = vpop.f32.mrb[0].mxu0
  %v2061 = vadd.f32 %v272, %v2060
  %v2062 = vpop.f32.mrb[0].mxu0
  %2063 = vmatprep.mubr.f32.mxu0 0.0
  %2064 = vmatmul.mubr.f32.gmra.mrb[0].mxu0 %v858
  %v2065 = vpop.f32.mrb[0].mxu0
  %v2066 = vadd.f32 %v272, %v2065
  %v2067 = vpop.f32.mrb[0].mxu0
  %2068 = vmatprep.mubr.f32.mxu0 0.0
  %2069 = vmatmul.mubr.f32.gmra.mrb[0].mxu0 %v861
  %v2070 = vpop.f32.mrb[0].mxu0
  %v2071 = vadd.f32 %v272, %v2070
  %v2072 = vpop.f32.mrb[0].mxu0
  %2073 = vmatprep.mubr.f32.mxu0 0.0
  %2074 = vmatmul.mubr.f32.gmra.mrb[0].mxu0 %v864
  %v2075 = vpop.f32.mrb[0].mxu0
  %v2076 = vadd.f32 %v272, %v2075
  %v2077 = vpop.f32.mrb[0].mxu0
  %2078 = vmatprep.mubr.f32.mxu0 0.0
  %2079 = vmatmul.mubr.f32.gmra.mrb[0].mxu0 %v867
  %v2080 = vpop.f32.mrb[0].mxu0
  %v2081 = vadd.f32 %v272, %v2080
  %v2082 = vpop.f32.mrb[0].mxu0
  %2083 = vmatprep.mubr.f32.mxu0 0.0
  %2084 = vmatmul.mubr.f32.gmra.mrb[0].mxu0 %v870
  %v2085 = vpop.f32.mrb[0].mxu0
  %v2086 = vadd.f32 %v272, %v2085
  %v2087 = vpop.f32.mrb[0].mxu0
  %2088 = vmatprep.mubr.f32.mxu0 0.0
  %2089 = vmatmul.mubr.f32.gmra.mrb[0].mxu0 %v873
  %v2090 = vpop.f32.mrb[0].mxu0
  %v2091 = vadd.f32 %v272, %v2090
  %v2092 = vpop.f32.mrb[0].mxu0
  %2093 = vmatprep.mubr.f32.mxu0 0.0
  %2094 = vmatmul.mubr.f32.gmra.mrb[0].mxu0 %v876
  %v2095 = vpop.f32.mrb[0].mxu0
  %v2096 = vadd.f32 %v272, %v2095
  %v2097 = vpop.f32.mrb[0].mxu0
  %2098 = vmatprep.mubr.f32.mxu0 0.0
  %2099 = vmatmul.mubr.f32.gmra.mrb[0].mxu0 %v879
  %v2100 = vpop.f32.mrb[0].mxu0
  %v2101 = vadd.f32 %v272, %v2100
  %v2102 = vpop.f32.mrb[0].mxu0
  %2103 = vmatprep.mubr.f32.mxu0 0.0
  %2104 = vmatmul.mubr.f32.gmra.mrb[0].mxu0 %v882
  %v2105 = vpop.f32.mrb[0].mxu0
  %v2106 = vadd.f32 %v272, %v2105
  %v2107 = vpop.f32.mrb[0].mxu0
  %2108 = vmatprep.mubr.f32.mxu0 0.0
  %2109 = vmatmul.mubr.f32.gmra.mrb[0].mxu0 %v885
  %v2110 = vpop.f32.mrb[0].mxu0
  %v2111 = vadd.f32 %v272, %v2110
  %v2112 = vpop.f32.mrb[0].mxu0
  %2113 = vmatprep.mubr.f32.mxu0 0.0
  %2114 = vmatmul.mubr.f32.gmra.mrb[0].mxu0 %v888
  %v2115 = vpop.f32.mrb[0].mxu0
  %v2116 = vadd.f32 %v272, %v2115
  %v2117 = vpop.f32.mrb[0].mxu0
  %2118 = vmatprep.mubr.f32.mxu0 0.0
  %2119 = vmatmul.mubr.f32.gmra.mrb[0].mxu0 %v891
  %v2120 = vpop.f32.mrb[0].mxu0
  %v2121 = vadd.f32 %v272, %v2120
  %v2122 = vpop.f32.mrb[0].mxu0
  %2123 = vmatprep.mubr.f32.mxu0 0.0
  %2124 = vmatmul.mubr.f32.gmra.mrb[0].mxu0 %v894
  %v2125 = vpop.f32.mrb[0].mxu0
  %v2126 = vadd.f32 %v272, %v2125
  %v2127 = vpop.f32.mrb[0].mxu0
  %2128 = vmatprep.mubr.f32.mxu0 0.0
  %2129 = vmatmul.mubr.f32.gmra.mrb[0].mxu0 %v897
  %v2130 = vpop.f32.mrb[0].mxu0
  %v2131 = vadd.f32 %v272, %v2130
  %v2132 = vpop.f32.mrb[0].mxu0
  %2133 = vmatprep.mubr.f32.mxu0 0.0
  %2134 = vmatmul.mubr.f32.gmra.mrb[0].mxu0 %v900
  %v2135 = vpop.f32.mrb[0].mxu0
  %v2136 = vadd.f32 %v272, %v2135
  %v2137 = vpop.f32.mrb[0].mxu0
  %2138 = vmatprep.mubr.f32.mxu0 0.0
  %2139 = vmatmul.mubr.f32.gmra.mrb[0].mxu0 %v903
  %v2140 = vpop.f32.mrb[0].mxu0
  %v2141 = vadd.f32 %v272, %v2140
  %v2142 = vpop.f32.mrb[0].mxu0
  %2143 = vmatprep.mubr.f32.mxu0 0.0
  %2144 = vmatmul.mubr.f32.gmra.mrb[0].mxu0 %v906
  %v2145 = vpop.f32.mrb[0].mxu0
  %v2146 = vadd.f32 %v272, %v2145
  %v2147 = vpop.f32.mrb[0].mxu0
  %2148 = vmatprep.mubr.f32.mxu0 0.0
  %2149 = vmatmul.mubr.f32.gmra.mrb[0].mxu0 %v909
  %v2150 = vpop.f32.mrb[0].mxu0
  %v2151 = vadd.f32 %v272, %v2150
  %v2152 = vpop.f32.mrb[0].mxu0
  %2153 = vmatprep.mubr.f32.mxu0 0.0
  %2154 = vmatmul.mubr.f32.gmra.mrb[0].mxu0 %v912
  %v2155 = vpop.f32.mrb[0].mxu0
  %v2156 = vadd.f32 %v272, %v2155
  %v2157 = vpop.f32.mrb[0].mxu0
  %2158 = vmatprep.mubr.f32.mxu0 0.0
  %2159 = vmatmul.mubr.f32.gmra.mrb[0].mxu0 %v915
  %v2160 = vpop.f32.mrb[0].mxu0
  %v2161 = vadd.f32 %v272, %v2160
  %v2162 = vpop.f32.mrb[0].mxu0
  %2163 = vmatprep.mubr.f32.mxu0 0.0
  %2164 = vmatmul.mubr.f32.gmra.mrb[0].mxu0 %v918
  %v2165 = vpop.f32.mrb[0].mxu0
  %v2166 = vadd.f32 %v272, %v2165
  %v2167 = vpop.f32.mrb[0].mxu0
  %2168 = vmatprep.mubr.f32.mxu0 0.0
  %2169 = vmatmul.mubr.f32.gmra.mrb[0].mxu0 %v921
  %v2170 = vpop.f32.mrb[0].mxu0
  %v2171 = vadd.f32 %v272, %v2170
  %v2172 = vpop.f32.mrb[0].mxu0
  %2173 = vmatprep.mubr.f32.mxu0 0.0
  %2174 = vmatmul.mubr.f32.gmra.mrb[0].mxu0 %v924
  %v2175 = vpop.f32.mrb[0].mxu0
  %v2176 = vadd.f32 %v272, %v2175
  %v2177 = vpop.f32.mrb[0].mxu0
  %2178 = vmatprep.mubr.f32.mxu0 0.0
  %2179 = vmatmul.mubr.f32.gmra.mrb[0].mxu0 %v927
  %v2180 = vpop.f32.mrb[0].mxu0
  %v2181 = vadd.f32 %v272, %v2180
  %v2182 = vpop.f32.mrb[0].mxu0
  %2183 = vmatprep.mubr.f32.mxu0 0.0
  %2184 = vmatmul.mubr.f32.gmra.mrb[0].mxu0 %v930
  %v2185 = vpop.f32.mrb[0].mxu0
  %v2186 = vadd.f32 %v272, %v2185
  %v2187 = vpop.f32.mrb[0].mxu0
  %2188 = vmatprep.mubr.f32.mxu0 0.0
  %2189 = vmatmul.mubr.f32.gmra.mrb[0].mxu0 %v933
  %v2190 = vpop.f32.mrb[0].mxu0
  %v2191 = vadd.f32 %v272, %v2190
  %v2192 = vpop.f32.mrb[0].mxu0
  %2193 = vmatprep.mubr.f32.mxu0 0.0
  %2194 = vmatmul.mubr.f32.gmra.mrb[0].mxu0 %v936
  %v2195 = vpop.f32.mrb[0].mxu0
  %v2196 = vadd.f32 %v272, %v2195
  %v2197 = vpop.f32.mrb[0].mxu0
  %2198 = vmatprep.mubr.f32.mxu0 0.0
  %2199 = vmatmul.mubr.f32.gmra.mrb[0].mxu0 %v939
  %v2200 = vpop.f32.mrb[0].mxu0
  %v2201 = vadd.f32 %v272, %v2200
  %v2202 = vpop.f32.mrb[0].mxu0
  %2203 = vmatprep.mubr.f32.mxu0 0.0
  %2204 = vmatmul.mubr.f32.gmra.mrb[0].mxu0 %v942
  %v2205 = vpop.f32.mrb[0].mxu0
  %v2206 = vadd.f32 %v272, %v2205
  %v2207 = vpop.f32.mrb[0].mxu0
  %2208 = vmatprep.mubr.f32.mxu0 0.0
  %2209 = vmatmul.mubr.f32.gmra.mrb[0].mxu0 %v945
  %v2210 = vpop.f32.mrb[0].mxu0
  %v2211 = vadd.f32 %v272, %v2210
  %v2212 = vpop.f32.mrb[0].mxu0
  %2213 = vmatprep.mubr.f32.mxu0 0.0
  %2214 = vmatmul.mubr.f32.gmra.mrb[0].mxu0 %v948
  %v2215 = vpop.f32.mrb[0].mxu0
  %v2216 = vadd.f32 %v272, %v2215
  %v2217 = vpop.f32.mrb[0].mxu0
  %2218 = vmatprep.mubr.f32.mxu0 0.0
  %2219 = vmatmul.mubr.f32.gmra.mrb[0].mxu0 %v951
  %v2220 = vpop.f32.mrb[0].mxu0
  %v2221 = vadd.f32 %v272, %v2220
  %v2222 = vpop.f32.mrb[0].mxu0
  %2223 = vmatprep.mubr.f32.mxu0 0.0
  %2224 = vmatmul.mubr.f32.gmra.mrb[0].mxu0 %v954
  %v2225 = vpop.f32.mrb[0].mxu0
  %v2226 = vadd.f32 %v272, %v2225
  %v2227 = vpop.f32.mrb[0].mxu0
  %2228 = vmatprep.mubr.f32.mxu0 0.0
  %2229 = vmatmul.mubr.f32.gmra.mrb[0].mxu0 %v957
  %v2230 = vpop.f32.mrb[0].mxu0
  %v2231 = vadd.f32 %v272, %v2230
  %v2232 = vpop.f32.mrb[0].mxu0
  %2233 = vmatprep.mubr.f32.mxu0 0.0
  %2234 = vmatmul.mubr.f32.gmra.mrb[0].mxu0 %v960
  %v2235 = vpop.f32.mrb[0].mxu0
  %v2236 = vadd.f32 %v272, %v2235
  %v2237 = vpop.f32.mrb[0].mxu0
  %2238 = vmatprep.mubr.f32.mxu0 0.0
  %2239 = vmatmul.mubr.f32.gmra.mrb[0].mxu0 %v963
  %v2240 = vpop.f32.mrb[0].mxu0
  %v2241 = vadd.f32 %v272, %v2240
  %v2242 = vpop.f32.mrb[0].mxu0
  %2243 = vmatprep.mubr.f32.mxu0 0.0
  %2244 = vmatmul.mubr.f32.gmra.mrb[0].mxu0 %v966
  %v2245 = vpop.f32.mrb[0].mxu0
  %v2246 = vadd.f32 %v272, %v2245
  %v2247 = vpop.f32.mrb[0].mxu0
  %2248 = vmatprep.mubr.f32.mxu0 0.0
  %2249 = vmatmul.mubr.f32.gmra.mrb[0].mxu0 %v969
  %v2250 = vpop.f32.mrb[0].mxu0
  %v2251 = vadd.f32 %v272, %v2250
  %v2252 = vpop.f32.mrb[0].mxu0
  %2253 = vmatprep.mubr.f32.mxu0 0.0
  %2254 = vmatmul.mubr.f32.gmra.mrb[0].mxu0 %v972
  %v2255 = vpop.f32.mrb[0].mxu0
  %v2256 = vadd.f32 %v272, %v2255
  %v2257 = vpop.f32.mrb[0].mxu0
  %2258 = vmatprep.mubr.f32.mxu0 0.0
  %2259 = vmatmul.mubr.f32.gmra.mrb[0].mxu0 %v975
  %v2260 = vpop.f32.mrb[0].mxu0
  %v2261 = vadd.f32 %v272, %v2260
  %v2262 = vpop.f32.mrb[0].mxu0
  %2263 = vmatprep.mubr.f32.mxu0 0.0
  %2264 = vmatmul.mubr.f32.gmra.mrb[0].mxu0 %v978
  %v2265 = vpop.f32.mrb[0].mxu0
  %v2266 = vadd.f32 %v272, %v2265
  %v2267 = vpop.f32.mrb[0].mxu0
  %2268 = vmatprep.mubr.f32.mxu0 0.0
  %2269 = vmatmul.mubr.f32.gmra.mrb[0].mxu0 %v981
  %v2270 = vpop.f32.mrb[0].mxu0
  %v2271 = vadd.f32 %v272, %v2270
  %v2272 = vpop.f32.mrb[0].mxu0
  %2273 = vmatprep.mubr.f32.mxu0 0.0
  %2274 = vmatmul.mubr.f32.gmra.mrb[0].mxu0 %v984
  %v2275 = vpop.f32.mrb[0].mxu0
  %v2276 = vadd.f32 %v272, %v2275
  %v2277 = vpop.f32.mrb[0].mxu0
  %2278 = vmatprep.mubr.f32.mxu0 0.0
  %2279 = vmatmul.mubr.f32.gmra.mrb[0].mxu0 %v987
  %v2280 = vpop.f32.mrb[0].mxu0
  %v2281 = vadd.f32 %v272, %v2280
  %v2282 = vpop.f32.mrb[0].mxu0
  %2283 = vmatprep.mubr.f32.mxu0 0.0
  %2284 = vmatmul.mubr.f32.gmra.mrb[0].mxu0 %v990
  %v2285 = vpop.f32.mrb[0].mxu0
  %v2286 = vadd.f32 %v272, %v2285
  %v2287 = vpop.f32.mrb[0].mxu0
  %2288 = vmatprep.mubr.f32.mxu0 0.0
  %2289 = vmatmul.mubr.f32.gmra.mrb[0].mxu0 %v993
  %v2290 = vpop.f32.mrb[0].mxu0
  %v2291 = vadd.f32 %v272, %v2290
  %v2292 = vpop.f32.mrb[0].mxu0
  %2293 = vmatprep.mubr.f32.mxu0 0.0
  %2294 = vmatmul.mubr.f32.gmra.mrb[0].mxu0 %v996
  %v2295 = vpop.f32.mrb[0].mxu0
  %v2296 = vadd.f32 %v272, %v2295
  %v2297 = vpop.f32.mrb[0].mxu0
  %2298 = vmatprep.mubr.f32.mxu0 0.0
  %2299 = vmatmul.mubr.f32.gmra.mrb[0].mxu0 %v999
  %v2300 = vpop.f32.mrb[0].mxu0
  %v2301 = vadd.f32 %v272, %v2300
  %v2302 = vpop.f32.mrb[0].mxu0
  %2303 = vmatprep.mubr.f32.mxu0 0.0
  %2304 = vmatmul.mubr.f32.gmra.mrb[0].mxu0 %v1002
  %v2305 = vpop.f32.mrb[0].mxu0
  %v2306 = vadd.f32 %v272, %v2305
  %v2307 = vpop.f32.mrb[0].mxu0
  %2308 = vmatprep.mubr.f32.mxu0 0.0
  %2309 = vmatmul.mubr.f32.gmra.mrb[0].mxu0 %v1005
  %v2310 = vpop.f32.mrb[0].mxu0
  %v2311 = vadd.f32 %v272, %v2310
  %v2312 = vpop.f32.mrb[0].mxu0
  %2313 = vmatprep.mubr.f32.mxu0 0.0
  %2314 = vmatmul.mubr.f32.gmra.mrb[0].mxu0 %v1008
  %v2315 = vpop.f32.mrb[0].mxu0
  %v2316 = vadd.f32 %v272, %v2315
  %v2317 = vpop.f32.mrb[0].mxu0
  %2318 = vmatprep.mubr.f32.mxu0 0.0
  %2319 = vmatmul.mubr.f32.gmra.mrb[0].mxu0 %v1011
  %v2320 = vpop.f32.mrb[0].mxu0
  %v2321 = vadd.f32 %v272, %v2320
  %v2322 = vpop.f32.mrb[0].mxu0
  %2323 = vmatprep.mubr.f32.mxu0 0.0
  %2324 = vmatmul.mubr.f32.gmra.mrb[0].mxu0 %v1014
  %v2325 = vpop.f32.mrb[0].mxu0
  %v2326 = vadd.f32 %v272, %v2325
  %v2327 = vpop.f32.mrb[0].mxu0
  %2328 = vmatprep.mubr.f32.mxu0 0.0
  %2329 = vmatmul.mubr.f32.gmra.mrb[0].mxu0 %v1017
  %v2330 = vpop.f32.mrb[0].mxu0
  %v2331 = vadd.f32 %v272, %v2330
  %v2332 = vpop.f32.mrb[0].mxu0
  %2333 = vmatprep.mubr.f32.mxu0 0.0
  %2334 = vmatmul.mubr.f32.gmra.mrb[0].mxu0 %v1020
  %v2335 = vpop.f32.mrb[0].mxu0
  %v2336 = vadd.f32 %v272, %v2335
  %v2337 = vpop.f32.mrb[0].mxu0
  %2338 = vmatprep.mubr.f32.mxu0 0.0
  %2339 = vmatmul.mubr.f32.gmra.mrb[0].mxu0 %v1023
  %v2340 = vpop.f32.mrb[0].mxu0
  %v2341 = vadd.f32 %v272, %v2340
  %v2342 = vpop.f32.mrb[0].mxu0
  %2343 = vdwg.mxu0
  %v2344 = vmax.f32 %v1096, 0.0
  %v2345 = vmax.f32 %v1101, 0.0
  %v2346 = vmax.f32 %v1106, 0.0
  %v2347 = vmax.f32 %v1111, 0.0
  %v2348 = vmax.f32 %v1116, 0.0
  %v2349 = vmax.f32 %v1121, 0.0
  %v2350 = vmax.f32 %v1126, 0.0
  %v2351 = vmax.f32 %v1131, 0.0
  %v2352 = vmax.f32 %v1136, 0.0
  %v2353 = vmax.f32 %v1141, 0.0
  %v2354 = vmax.f32 %v1146, 0.0
  %v2355 = vmax.f32 %v1151, 0.0
  %v2356 = vmax.f32 %v1156, 0.0
  %v2357 = vmax.f32 %v1161, 0.0
  %v2358 = vmax.f32 %v1166, 0.0
  %v2359 = vmax.f32 %v1171, 0.0
  %v2360 = vmax.f32 %v1176, 0.0
  %v2361 = vmax.f32 %v1181, 0.0
  %v2362 = vmax.f32 %v1186, 0.0
  %v2363 = vmax.f32 %v1191, 0.0
  %v2364 = vmax.f32 %v1196, 0.0
  %v2365 = vmax.f32 %v1201, 0.0
  %v2366 = vmax.f32 %v1206, 0.0
  %v2367 = vmax.f32 %v1211, 0.0
  %v2368 = vmax.f32 %v1216, 0.0
  %v2369 = vmax.f32 %v1221, 0.0
  %v2370 = vmax.f32 %v1226, 0.0
  %v2371 = vmax.f32 %v1231, 0.0
  %v2372 = vmax.f32 %v1236, 0.0
  %v2373 = vmax.f32 %v1241, 0.0
  %v2374 = vmax.f32 %v1246, 0.0
  %v2375 = vmax.f32 %v1251, 0.0
  %v2376 = vmax.f32 %v1256, 0.0
  %v2377 = vmax.f32 %v1261, 0.0
  %v2378 = vmax.f32 %v1266, 0.0
  %v2379 = vmax.f32 %v1271, 0.0
  %v2380 = vmax.f32 %v1276, 0.0
  %v2381 = vmax.f32 %v1281, 0.0
  %v2382 = vmax.f32 %v1286, 0.0
  %v2383 = vmax.f32 %v1291, 0.0
  %v2384 = vmax.f32 %v1296, 0.0
  %v2385 = vmax.f32 %v1301, 0.0
  %v2386 = vmax.f32 %v1306, 0.0
  %v2387 = vmax.f32 %v1311, 0.0
  %v2388 = vmax.f32 %v1316, 0.0
  %v2389 = vmax.f32 %v1321, 0.0
  %v2390 = vmax.f32 %v1326, 0.0
  %v2391 = vmax.f32 %v1331, 0.0
  %v2392 = vmax.f32 %v1336, 0.0
  %v2393 = vmax.f32 %v1341, 0.0
  %v2394 = vmax.f32 %v1346, 0.0
  %v2395 = vmax.f32 %v1351, 0.0
  %v2396 = vmax.f32 %v1356, 0.0
  %v2397 = vmax.f32 %v1361, 0.0
  %v2398 = vmax.f32 %v1366, 0.0
  %v2399 = vmax.f32 %v1371, 0.0
  %v2400 = vmax.f32 %v1376, 0.0
  %v2401 = vmax.f32 %v1381, 0.0
  %v2402 = vmax.f32 %v1386, 0.0
  %v2403 = vmax.f32 %v1391, 0.0
  %v2404 = vmax.f32 %v1396, 0.0
  %v2405 = vmax.f32 %v1401, 0.0
  %v2406 = vmax.f32 %v1406, 0.0
  %v2407 = vmax.f32 %v1411, 0.0
  %v2408 = vmax.f32 %v1416, 0.0
  %v2409 = vmax.f32 %v1421, 0.0
  %v2410 = vmax.f32 %v1426, 0.0
  %v2411 = vmax.f32 %v1431, 0.0
  %v2412 = vmax.f32 %v1436, 0.0
  %v2413 = vmax.f32 %v1441, 0.0
  %v2414 = vmax.f32 %v1446, 0.0
  %v2415 = vmax.f32 %v1451, 0.0
  %v2416 = vmax.f32 %v1456, 0.0
  %v2417 = vmax.f32 %v1461, 0.0
  %v2418 = vmax.f32 %v1466, 0.0
  %v2419 = vmax.f32 %v1471, 0.0
  %v2420 = vmax.f32 %v1476, 0.0
  %v2421 = vmax.f32 %v1481, 0.0
  %v2422 = vmax.f32 %v1486, 0.0
  %v2423 = vmax.f32 %v1491, 0.0
  %v2424 = vmax.f32 %v1496, 0.0
  %v2425 = vmax.f32 %v1501, 0.0
  %v2426 = vmax.f32 %v1506, 0.0
  %v2427 = vmax.f32 %v1511, 0.0
  %v2428 = vmax.f32 %v1516, 0.0
  %v2429 = vmax.f32 %v1521, 0.0
  %v2430 = vmax.f32 %v1526, 0.0
  %v2431 = vmax.f32 %v1531, 0.0
  %v2432 = vmax.f32 %v1536, 0.0
  %v2433 = vmax.f32 %v1541, 0.0
  %v2434 = vmax.f32 %v1546, 0.0
  %v2435 = vmax.f32 %v1551, 0.0
  %v2436 = vmax.f32 %v1556, 0.0
  %v2437 = vmax.f32 %v1561, 0.0
  %v2438 = vmax.f32 %v1566, 0.0
  %v2439 = vmax.f32 %v1571, 0.0
  %v2440 = vmax.f32 %v1576, 0.0
  %v2441 = vmax.f32 %v1581, 0.0
  %v2442 = vmax.f32 %v1586, 0.0
  %v2443 = vmax.f32 %v1591, 0.0
  %v2444 = vmax.f32 %v1596, 0.0
  %v2445 = vmax.f32 %v1601, 0.0
  %v2446 = vmax.f32 %v1606, 0.0
  %v2447 = vmax.f32 %v1611, 0.0
  %v2448 = vmax.f32 %v1616, 0.0
  %v2449 = vmax.f32 %v1621, 0.0
  %v2450 = vmax.f32 %v1626, 0.0
  %v2451 = vmax.f32 %v1631, 0.0
  %v2452 = vmax.f32 %v1636, 0.0
  %v2453 = vmax.f32 %v1641, 0.0
  %v2454 = vmax.f32 %v1646, 0.0
  %v2455 = vmax.f32 %v1651, 0.0
  %v2456 = vmax.f32 %v1656, 0.0
  %v2457 = vmax.f32 %v1661, 0.0
  %v2458 = vmax.f32 %v1666, 0.0
  %v2459 = vmax.f32 %v1671, 0.0
  %v2460 = vmax.f32 %v1676, 0.0
  %v2461 = vmax.f32 %v1681, 0.0
  %v2462 = vmax.f32 %v1686, 0.0
  %v2463 = vmax.f32 %v1691, 0.0
  %v2464 = vmax.f32 %v1696, 0.0
  %v2465 = vmax.f32 %v1701, 0.0
  %v2466 = vmax.f32 %v1706, 0.0
  %v2467 = vmax.f32 %v1711, 0.0
  %v2468 = vmax.f32 %v1716, 0.0
  %v2469 = vmax.f32 %v1721, 0.0
  %v2470 = vmax.f32 %v1726, 0.0
  %v2471 = vmax.f32 %v1731, 0.0
  %v2472 = vmax.f32 %v1736, 0.0
  %v2473 = vmax.f32 %v1741, 0.0
  %v2474 = vmax.f32 %v1746, 0.0
  %v2475 = vmax.f32 %v1751, 0.0
  %v2476 = vmax.f32 %v1756, 0.0
  %v2477 = vmax.f32 %v1761, 0.0
  %v2478 = vmax.f32 %v1766, 0.0
  %v2479 = vmax.f32 %v1771, 0.0
  %v2480 = vmax.f32 %v1776, 0.0
  %v2481 = vmax.f32 %v1781, 0.0
  %v2482 = vmax.f32 %v1786, 0.0
  %v2483 = vmax.f32 %v1791, 0.0
  %v2484 = vmax.f32 %v1796, 0.0
  %v2485 = vmax.f32 %v1801, 0.0
  %v2486 = vmax.f32 %v1806, 0.0
  %v2487 = vmax.f32 %v1811, 0.0
  %v2488 = vmax.f32 %v1816, 0.0
  %v2489 = vmax.f32 %v1821, 0.0
  %v2490 = vmax.f32 %v1826, 0.0
  %v2491 = vmax.f32 %v1831, 0.0
  %v2492 = vmax.f32 %v1836, 0.0
  %v2493 = vmax.f32 %v1841, 0.0
  %v2494 = vmax.f32 %v1846, 0.0
  %v2495 = vmax.f32 %v1851, 0.0
  %v2496 = vmax.f32 %v1856, 0.0
  %v2497 = vmax.f32 %v1861, 0.0
  %v2498 = vmax.f32 %v1866, 0.0
  %v2499 = vmax.f32 %v1871, 0.0
  %v2500 = vmax.f32 %v1876, 0.0
  %v2501 = vmax.f32 %v1881, 0.0
  %v2502 = vmax.f32 %v1886, 0.0
  %v2503 = vmax.f32 %v1891, 0.0
  %v2504 = vmax.f32 %v1896, 0.0
  %v2505 = vmax.f32 %v1901, 0.0
  %v2506 = vmax.f32 %v1906, 0.0
  %v2507 = vmax.f32 %v1911, 0.0
  %v2508 = vmax.f32 %v1916, 0.0
  %v2509 = vmax.f32 %v1921, 0.0
  %v2510 = vmax.f32 %v1926, 0.0
  %v2511 = vmax.f32 %v1931, 0.0
  %v2512 = vmax.f32 %v1936, 0.0
  %v2513 = vmax.f32 %v1941, 0.0
  %v2514 = vmax.f32 %v1946, 0.0
  %v2515 = vmax.f32 %v1951, 0.0
  %v2516 = vmax.f32 %v1956, 0.0
  %v2517 = vmax.f32 %v1961, 0.0
  %v2518 = vmax.f32 %v1966, 0.0
  %v2519 = vmax.f32 %v1971, 0.0
  %v2520 = vmax.f32 %v1976, 0.0
  %v2521 = vmax.f32 %v1981, 0.0
  %v2522 = vmax.f32 %v1986, 0.0
  %v2523 = vmax.f32 %v1991, 0.0
  %v2524 = vmax.f32 %v1996, 0.0
  %v2525 = vmax.f32 %v2001, 0.0
  %v2526 = vmax.f32 %v2006, 0.0
  %v2527 = vmax.f32 %v2011, 0.0
  %v2528 = vmax.f32 %v2016, 0.0
  %v2529 = vmax.f32 %v2021, 0.0
  %v2530 = vmax.f32 %v2026, 0.0
  %v2531 = vmax.f32 %v2031, 0.0
  %v2532 = vmax.f32 %v2036, 0.0
  %v2533 = vmax.f32 %v2041, 0.0
  %v2534 = vmax.f32 %v2046, 0.0
  %v2535 = vmax.f32 %v2051, 0.0
  %v2536 = vmax.f32 %v2056, 0.0
  %v2537 = vmax.f32 %v2061, 0.0
  %v2538 = vmax.f32 %v2066, 0.0
  %v2539 = vmax.f32 %v2071, 0.0
  %v2540 = vmax.f32 %v2076, 0.0
  %v2541 = vmax.f32 %v2081, 0.0
  %v2542 = vmax.f32 %v2086, 0.0
  %v2543 = vmax.f32 %v2091, 0.0
  %v2544 = vmax.f32 %v2096, 0.0
  %v2545 = vmax.f32 %v2101, 0.0
  %v2546 = vmax.f32 %v2106, 0.0
  %v2547 = vmax.f32 %v2111, 0.0
  %v2548 = vmax.f32 %v2116, 0.0
  %v2549 = vmax.f32 %v2121, 0.0
  %v2550 = vmax.f32 %v2126, 0.0
  %v2551 = vmax.f32 %v2131, 0.0
  %v2552 = vmax.f32 %v2136, 0.0
  %v2553 = vmax.f32 %v2141, 0.0
  %v2554 = vmax.f32 %v2146, 0.0
  %v2555 = vmax.f32 %v2151, 0.0
  %v2556 = vmax.f32 %v2156, 0.0
  %v2557 = vmax.f32 %v2161, 0.0
  %v2558 = vmax.f32 %v2166, 0.0
  %v2559 = vmax.f32 %v2171, 0.0
  %v2560 = vmax.f32 %v2176, 0.0
  %v2561 = vmax.f32 %v2181, 0.0
  %v2562 = vmax.f32 %v2186, 0.0
  %v2563 = vmax.f32 %v2191, 0.0
  %v2564 = vmax.f32 %v2196, 0.0
  %v2565 = vmax.f32 %v2201, 0.0
  %v2566 = vmax.f32 %v2206, 0.0
  %v2567 = vmax.f32 %v2211, 0.0
  %v2568 = vmax.f32 %v2216, 0.0
  %v2569 = vmax.f32 %v2221, 0.0
  %v2570 = vmax.f32 %v2226, 0.0
  %v2571 = vmax.f32 %v2231, 0.0
  %v2572 = vmax.f32 %v2236, 0.0
  %v2573 = vmax.f32 %v2241, 0.0
  %v2574 = vmax.f32 %v2246, 0.0
  %v2575 = vmax.f32 %v2251, 0.0
  %v2576 = vmax.f32 %v2256, 0.0
  %v2577 = vmax.f32 %v2261, 0.0
  %v2578 = vmax.f32 %v2266, 0.0
  %v2579 = vmax.f32 %v2271, 0.0
  %v2580 = vmax.f32 %v2276, 0.0
  %v2581 = vmax.f32 %v2281, 0.0
  %v2582 = vmax.f32 %v2286, 0.0
  %v2583 = vmax.f32 %v2291, 0.0
  %v2584 = vmax.f32 %v2296, 0.0
  %v2585 = vmax.f32 %v2301, 0.0
  %v2586 = vmax.f32 %v2306, 0.0
  %v2587 = vmax.f32 %v2311, 0.0
  %v2588 = vmax.f32 %v2316, 0.0
  %v2589 = vmax.f32 %v2321, 0.0
  %v2590 = vmax.f32 %v2326, 0.0
  %v2591 = vmax.f32 %v2331, 0.0
  %v2592 = vmax.f32 %v2336, 0.0
  %v2593 = vmax.f32 %v2341, 0.0
  %vm2594 = vcmask 130048
  %2595 = vst.msk [vmem:[%s3] sm:$0xff] %vm2594, %v2344
  %2596 = vst.msk [vmem:[%s3 + $0x8] sm:$0xff] %vm2594, %v2345
  %2597 = vst.msk [vmem:[%s3 + $0x10] sm:$0xff] %vm2594, %v2346
  %2598 = vst.msk [vmem:[%s3 + $0x18] sm:$0xff] %vm2594, %v2347
  %2599 = vst.msk [vmem:[%s3 + $0x20] sm:$0xff] %vm2594, %v2348
  %2600 = vst.msk [vmem:[%s3 + $0x28] sm:$0xff] %vm2594, %v2349
  %2601 = vst.msk [vmem:[%s3 + $0x30] sm:$0xff] %vm2594, %v2350
  %2602 = vst.msk [vmem:[%s3 + $0x38] sm:$0xff] %vm2594, %v2351
  %2603 = vst.msk [vmem:[%s3 + $0x40] sm:$0xff] %vm2594, %v2352
  %2604 = vst.msk [vmem:[%s3 + $0x48] sm:$0xff] %vm2594, %v2353
  %2605 = vst.msk [vmem:[%s3 + $0x50] sm:$0xff] %vm2594, %v2354
  %2606 = vst.msk [vmem:[%s3 + $0x58] sm:$0xff] %vm2594, %v2355
  %2607 = vst.msk [vmem:[%s3 + $0x60] sm:$0xff] %vm2594, %v2356
  %2608 = vst.msk [vmem:[%s3 + $0x68] sm:$0xff] %vm2594, %v2357
  %2609 = vst.msk [vmem:[%s3 + $0x70] sm:$0xff] %vm2594, %v2358
  %2610 = vst.msk [vmem:[%s3 + $0x78] sm:$0xff] %vm2594, %v2359
  %2611 = vst.msk [vmem:[%s3 + $0x80] sm:$0xff] %vm2594, %v2360
  %2612 = vst.msk [vmem:[%s3 + $0x88] sm:$0xff] %vm2594, %v2361
  %2613 = vst.msk [vmem:[%s3 + $0x90] sm:$0xff] %vm2594, %v2362
  %2614 = vst.msk [vmem:[%s3 + $0x98] sm:$0xff] %vm2594, %v2363
  %2615 = vst.msk [vmem:[%s3 + $0xa0] sm:$0xff] %vm2594, %v2364
  %2616 = vst.msk [vmem:[%s3 + $0xa8] sm:$0xff] %vm2594, %v2365
  %2617 = vst.msk [vmem:[%s3 + $0xb0] sm:$0xff] %vm2594, %v2366
  %2618 = vst.msk [vmem:[%s3 + $0xb8] sm:$0xff] %vm2594, %v2367
  %2619 = vst.msk [vmem:[%s3 + $0xc0] sm:$0xff] %vm2594, %v2368
  %2620 = vst.msk [vmem:[%s3 + $0xc8] sm:$0xff] %vm2594, %v2369
  %2621 = vst.msk [vmem:[%s3 + $0xd0] sm:$0xff] %vm2594, %v2370
  %2622 = vst.msk [vmem:[%s3 + $0xd8] sm:$0xff] %vm2594, %v2371
  %2623 = vst.msk [vmem:[%s3 + $0xe0] sm:$0xff] %vm2594, %v2372
  %2624 = vst.msk [vmem:[%s3 + $0xe8] sm:$0xff] %vm2594, %v2373
  %2625 = vst.msk [vmem:[%s3 + $0xf0] sm:$0xff] %vm2594, %v2374
  %2626 = vst.msk [vmem:[%s3 + $0xf8] sm:$0xff] %vm2594, %v2375
  %2627 = vst.msk [vmem:[%s3 + $0x100] sm:$0xff] %vm2594, %v2376
  %2628 = vst.msk [vmem:[%s3 + $0x108] sm:$0xff] %vm2594, %v2377
  %2629 = vst.msk [vmem:[%s3 + $0x110] sm:$0xff] %vm2594, %v2378
  %2630 = vst.msk [vmem:[%s3 + $0x118] sm:$0xff] %vm2594, %v2379
  %2631 = vst.msk [vmem:[%s3 + $0x120] sm:$0xff] %vm2594, %v2380
  %2632 = vst.msk [vmem:[%s3 + $0x128] sm:$0xff] %vm2594, %v2381
  %2633 = vst.msk [vmem:[%s3 + $0x130] sm:$0xff] %vm2594, %v2382
  %2634 = vst.msk [vmem:[%s3 + $0x138] sm:$0xff] %vm2594, %v2383
  %2635 = vst.msk [vmem:[%s3 + $0x140] sm:$0xff] %vm2594, %v2384
  %2636 = vst.msk [vmem:[%s3 + $0x148] sm:$0xff] %vm2594, %v2385
  %2637 = vst.msk [vmem:[%s3 + $0x150] sm:$0xff] %vm2594, %v2386
  %2638 = vst.msk [vmem:[%s3 + $0x158] sm:$0xff] %vm2594, %v2387
  %2639 = vst.msk [vmem:[%s3 + $0x160] sm:$0xff] %vm2594, %v2388
  %2640 = vst.msk [vmem:[%s3 + $0x168] sm:$0xff] %vm2594, %v2389
  %2641 = vst.msk [vmem:[%s3 + $0x170] sm:$0xff] %vm2594, %v2390
  %2642 = vst.msk [vmem:[%s3 + $0x178] sm:$0xff] %vm2594, %v2391
  %2643 = vst.msk [vmem:[%s3 + $0x180] sm:$0xff] %vm2594, %v2392
  %2644 = vst.msk [vmem:[%s3 + $0x188] sm:$0xff] %vm2594, %v2393
  %2645 = vst.msk [vmem:[%s3 + $0x190] sm:$0xff] %vm2594, %v2394
  %2646 = vst.msk [vmem:[%s3 + $0x198] sm:$0xff] %vm2594, %v2395
  %2647 = vst.msk [vmem:[%s3 + $0x1a0] sm:$0xff] %vm2594, %v2396
  %2648 = vst.msk [vmem:[%s3 + $0x1a8] sm:$0xff] %vm2594, %v2397
  %2649 = vst.msk [vmem:[%s3 + $0x1b0] sm:$0xff] %vm2594, %v2398
  %2650 = vst.msk [vmem:[%s3 + $0x1b8] sm:$0xff] %vm2594, %v2399
  %2651 = vst.msk [vmem:[%s3 + $0x1c0] sm:$0xff] %vm2594, %v2400
  %2652 = vst.msk [vmem:[%s3 + $0x1c8] sm:$0xff] %vm2594, %v2401
  %2653 = vst.msk [vmem:[%s3 + $0x1d0] sm:$0xff] %vm2594, %v2402
  %2654 = vst.msk [vmem:[%s3 + $0x1d8] sm:$0xff] %vm2594, %v2403
  %2655 = vst.msk [vmem:[%s3 + $0x1e0] sm:$0xff] %vm2594, %v2404
  %2656 = vst.msk [vmem:[%s3 + $0x1e8] sm:$0xff] %vm2594, %v2405
  %2657 = vst.msk [vmem:[%s3 + $0x1f0] sm:$0xff] %vm2594, %v2406
  %2658 = vst.msk [vmem:[%s3 + $0x1f8] sm:$0xff] %vm2594, %v2407
  %2659 = vst.msk [vmem:[%s3 + $0x200] sm:$0xff] %vm2594, %v2408
  %2660 = vst.msk [vmem:[%s3 + $0x208] sm:$0xff] %vm2594, %v2409
  %2661 = vst.msk [vmem:[%s3 + $0x210] sm:$0xff] %vm2594, %v2410
  %2662 = vst.msk [vmem:[%s3 + $0x218] sm:$0xff] %vm2594, %v2411
  %2663 = vst.msk [vmem:[%s3 + $0x220] sm:$0xff] %vm2594, %v2412
  %2664 = vst.msk [vmem:[%s3 + $0x228] sm:$0xff] %vm2594, %v2413
  %2665 = vst.msk [vmem:[%s3 + $0x230] sm:$0xff] %vm2594, %v2414
  %2666 = vst.msk [vmem:[%s3 + $0x238] sm:$0xff] %vm2594, %v2415
  %2667 = vst.msk [vmem:[%s3 + $0x240] sm:$0xff] %vm2594, %v2416
  %2668 = vst.msk [vmem:[%s3 + $0x248] sm:$0xff] %vm2594, %v2417
  %2669 = vst.msk [vmem:[%s3 + $0x250] sm:$0xff] %vm2594, %v2418
  %2670 = vst.msk [vmem:[%s3 + $0x258] sm:$0xff] %vm2594, %v2419
  %2671 = vst.msk [vmem:[%s3 + $0x260] sm:$0xff] %vm2594, %v2420
  %2672 = vst.msk [vmem:[%s3 + $0x268] sm:$0xff] %vm2594, %v2421
  %2673 = vst.msk [vmem:[%s3 + $0x270] sm:$0xff] %vm2594, %v2422
  %2674 = vst.msk [vmem:[%s3 + $0x278] sm:$0xff] %vm2594, %v2423
  %2675 = vst.msk [vmem:[%s3 + $0x280] sm:$0xff] %vm2594, %v2424
  %2676 = vst.msk [vmem:[%s3 + $0x288] sm:$0xff] %vm2594, %v2425
  %2677 = vst.msk [vmem:[%s3 + $0x290] sm:$0xff] %vm2594, %v2426
  %2678 = vst.msk [vmem:[%s3 + $0x298] sm:$0xff] %vm2594, %v2427
  %2679 = vst.msk [vmem:[%s3 + $0x2a0] sm:$0xff] %vm2594, %v2428
  %2680 = vst.msk [vmem:[%s3 + $0x2a8] sm:$0xff] %vm2594, %v2429
  %2681 = vst.msk [vmem:[%s3 + $0x2b0] sm:$0xff] %vm2594, %v2430
  %2682 = vst.msk [vmem:[%s3 + $0x2b8] sm:$0xff] %vm2594, %v2431
  %2683 = vst.msk [vmem:[%s3 + $0x2c0] sm:$0xff] %vm2594, %v2432
  %2684 = vst.msk [vmem:[%s3 + $0x2c8] sm:$0xff] %vm2594, %v2433
  %2685 = vst.msk [vmem:[%s3 + $0x2d0] sm:$0xff] %vm2594, %v2434
  %2686 = vst.msk [vmem:[%s3 + $0x2d8] sm:$0xff] %vm2594, %v2435
  %2687 = vst.msk [vmem:[%s3 + $0x2e0] sm:$0xff] %vm2594, %v2436
  %2688 = vst.msk [vmem:[%s3 + $0x2e8] sm:$0xff] %vm2594, %v2437
  %2689 = vst.msk [vmem:[%s3 + $0x2f0] sm:$0xff] %vm2594, %v2438
  %2690 = vst.msk [vmem:[%s3 + $0x2f8] sm:$0xff] %vm2594, %v2439
  %2691 = vst.msk [vmem:[%s3 + $0x300] sm:$0xff] %vm2594, %v2440
  %2692 = vst.msk [vmem:[%s3 + $0x308] sm:$0xff] %vm2594, %v2441
  %2693 = vst.msk [vmem:[%s3 + $0x310] sm:$0xff] %vm2594, %v2442
  %2694 = vst.msk [vmem:[%s3 + $0x318] sm:$0xff] %vm2594, %v2443
  %2695 = vst.msk [vmem:[%s3 + $0x320] sm:$0xff] %vm2594, %v2444
  %2696 = vst.msk [vmem:[%s3 + $0x328] sm:$0xff] %vm2594, %v2445
  %2697 = vst.msk [vmem:[%s3 + $0x330] sm:$0xff] %vm2594, %v2446
  %2698 = vst.msk [vmem:[%s3 + $0x338] sm:$0xff] %vm2594, %v2447
  %2699 = vst.msk [vmem:[%s3 + $0x340] sm:$0xff] %vm2594, %v2448
  %2700 = vst.msk [vmem:[%s3 + $0x348] sm:$0xff] %vm2594, %v2449
  %2701 = vst.msk [vmem:[%s3 + $0x350] sm:$0xff] %vm2594, %v2450
  %2702 = vst.msk [vmem:[%s3 + $0x358] sm:$0xff] %vm2594, %v2451
  %2703 = vst.msk [vmem:[%s3 + $0x360] sm:$0xff] %vm2594, %v2452
  %2704 = vst.msk [vmem:[%s3 + $0x368] sm:$0xff] %vm2594, %v2453
  %2705 = vst.msk [vmem:[%s3 + $0x370] sm:$0xff] %vm2594, %v2454
  %2706 = vst.msk [vmem:[%s3 + $0x378] sm:$0xff] %vm2594, %v2455
  %2707 = vst.msk [vmem:[%s3 + $0x380] sm:$0xff] %vm2594, %v2456
  %2708 = vst.msk [vmem:[%s3 + $0x388] sm:$0xff] %vm2594, %v2457
  %2709 = vst.msk [vmem:[%s3 + $0x390] sm:$0xff] %vm2594, %v2458
  %2710 = vst.msk [vmem:[%s3 + $0x398] sm:$0xff] %vm2594, %v2459
  %2711 = vst.msk [vmem:[%s3 + $0x3a0] sm:$0xff] %vm2594, %v2460
  %2712 = vst.msk [vmem:[%s3 + $0x3a8] sm:$0xff] %vm2594, %v2461
  %2713 = vst.msk [vmem:[%s3 + $0x3b0] sm:$0xff] %vm2594, %v2462
  %2714 = vst.msk [vmem:[%s3 + $0x3b8] sm:$0xff] %vm2594, %v2463
  %2715 = vst.msk [vmem:[%s3 + $0x3c0] sm:$0xff] %vm2594, %v2464
  %2716 = vst.msk [vmem:[%s3 + $0x3c8] sm:$0xff] %vm2594, %v2465
  %2717 = vst.msk [vmem:[%s3 + $0x3d0] sm:$0xff] %vm2594, %v2466
  %2718 = vst.msk [vmem:[%s3 + $0x3d8] sm:$0xff] %vm2594, %v2467
  %2719 = vst.msk [vmem:[%s3 + $0x3e0] sm:$0xff] %vm2594, %v2468
  %2720 = vst.msk [vmem:[%s3 + $0x3e8] sm:$0xff] %vm2594, %v2469
  %2721 = vst.msk [vmem:[%s3 + $0x3f0] sm:$0xff] %vm2594, %v2470
  %2722 = vst.msk [vmem:[%s3 + $0x3f8] sm:$0xff] %vm2594, %v2471
  %2723 = vst.msk [vmem:[%s3 + $0x400] sm:$0xff] %vm2594, %v2472
  %2724 = vst.msk [vmem:[%s3 + $0x408] sm:$0xff] %vm2594, %v2473
  %2725 = vst.msk [vmem:[%s3 + $0x410] sm:$0xff] %vm2594, %v2474
  %2726 = vst.msk [vmem:[%s3 + $0x418] sm:$0xff] %vm2594, %v2475
  %2727 = vst.msk [vmem:[%s3 + $0x420] sm:$0xff] %vm2594, %v2476
  %2728 = vst.msk [vmem:[%s3 + $0x428] sm:$0xff] %vm2594, %v2477
  %2729 = vst.msk [vmem:[%s3 + $0x430] sm:$0xff] %vm2594, %v2478
  %2730 = vst.msk [vmem:[%s3 + $0x438] sm:$0xff] %vm2594, %v2479
  %2731 = vst.msk [vmem:[%s3 + $0x440] sm:$0xff] %vm2594, %v2480
  %2732 = vst.msk [vmem:[%s3 + $0x448] sm:$0xff] %vm2594, %v2481
  %2733 = vst.msk [vmem:[%s3 + $0x450] sm:$0xff] %vm2594, %v2482
  %2734 = vst.msk [vmem:[%s3 + $0x458] sm:$0xff] %vm2594, %v2483
  %2735 = vst.msk [vmem:[%s3 + $0x460] sm:$0xff] %vm2594, %v2484
  %2736 = vst.msk [vmem:[%s3 + $0x468] sm:$0xff] %vm2594, %v2485
  %2737 = vst.msk [vmem:[%s3 + $0x470] sm:$0xff] %vm2594, %v2486
  %2738 = vst.msk [vmem:[%s3 + $0x478] sm:$0xff] %vm2594, %v2487
  %2739 = vst.msk [vmem:[%s3 + $0x480] sm:$0xff] %vm2594, %v2488
  %2740 = vst.msk [vmem:[%s3 + $0x488] sm:$0xff] %vm2594, %v2489
  %2741 = vst.msk [vmem:[%s3 + $0x490] sm:$0xff] %vm2594, %v2490
  %2742 = vst.msk [vmem:[%s3 + $0x498] sm:$0xff] %vm2594, %v2491
  %2743 = vst.msk [vmem:[%s3 + $0x4a0] sm:$0xff] %vm2594, %v2492
  %2744 = vst.msk [vmem:[%s3 + $0x4a8] sm:$0xff] %vm2594, %v2493
  %2745 = vst.msk [vmem:[%s3 + $0x4b0] sm:$0xff] %vm2594, %v2494
  %2746 = vst.msk [vmem:[%s3 + $0x4b8] sm:$0xff] %vm2594, %v2495
  %2747 = vst.msk [vmem:[%s3 + $0x4c0] sm:$0xff] %vm2594, %v2496
  %2748 = vst.msk [vmem:[%s3 + $0x4c8] sm:$0xff] %vm2594, %v2497
  %2749 = vst.msk [vmem:[%s3 + $0x4d0] sm:$0xff] %vm2594, %v2498
  %2750 = vst.msk [vmem:[%s3 + $0x4d8] sm:$0xff] %vm2594, %v2499
  %2751 = vst.msk [vmem:[%s3 + $0x4e0] sm:$0xff] %vm2594, %v2500
  %2752 = vst.msk [vmem:[%s3 + $0x4e8] sm:$0xff] %vm2594, %v2501
  %2753 = vst.msk [vmem:[%s3 + $0x4f0] sm:$0xff] %vm2594, %v2502
  %2754 = vst.msk [vmem:[%s3 + $0x4f8] sm:$0xff] %vm2594, %v2503
  %2755 = vst.msk [vmem:[%s3 + $0x500] sm:$0xff] %vm2594, %v2504
  %2756 = vst.msk [vmem:[%s3 + $0x508] sm:$0xff] %vm2594, %v2505
  %2757 = vst.msk [vmem:[%s3 + $0x510] sm:$0xff] %vm2594, %v2506
  %2758 = vst.msk [vmem:[%s3 + $0x518] sm:$0xff] %vm2594, %v2507
  %2759 = vst.msk [vmem:[%s3 + $0x520] sm:$0xff] %vm2594, %v2508
  %2760 = vst.msk [vmem:[%s3 + $0x528] sm:$0xff] %vm2594, %v2509
  %2761 = vst.msk [vmem:[%s3 + $0x530] sm:$0xff] %vm2594, %v2510
  %2762 = vst.msk [vmem:[%s3 + $0x538] sm:$0xff] %vm2594, %v2511
  %2763 = vst.msk [vmem:[%s3 + $0x540] sm:$0xff] %vm2594, %v2512
  %2764 = vst.msk [vmem:[%s3 + $0x548] sm:$0xff] %vm2594, %v2513
  %2765 = vst.msk [vmem:[%s3 + $0x550] sm:$0xff] %vm2594, %v2514
  %2766 = vst.msk [vmem:[%s3 + $0x558] sm:$0xff] %vm2594, %v2515
  %2767 = vst.msk [vmem:[%s3 + $0x560] sm:$0xff] %vm2594, %v2516
  %2768 = vst.msk [vmem:[%s3 + $0x568] sm:$0xff] %vm2594, %v2517
  %2769 = vst.msk [vmem:[%s3 + $0x570] sm:$0xff] %vm2594, %v2518
  %2770 = vst.msk [vmem:[%s3 + $0x578] sm:$0xff] %vm2594, %v2519
  %2771 = vst.msk [vmem:[%s3 + $0x580] sm:$0xff] %vm2594, %v2520
  %2772 = vst.msk [vmem:[%s3 + $0x588] sm:$0xff] %vm2594, %v2521
  %2773 = vst.msk [vmem:[%s3 + $0x590] sm:$0xff] %vm2594, %v2522
  %2774 = vst.msk [vmem:[%s3 + $0x598] sm:$0xff] %vm2594, %v2523
  %2775 = vst.msk [vmem:[%s3 + $0x5a0] sm:$0xff] %vm2594, %v2524
  %2776 = vst.msk [vmem:[%s3 + $0x5a8] sm:$0xff] %vm2594, %v2525
  %2777 = vst.msk [vmem:[%s3 + $0x5b0] sm:$0xff] %vm2594, %v2526
  %2778 = vst.msk [vmem:[%s3 + $0x5b8] sm:$0xff] %vm2594, %v2527
  %2779 = vst.msk [vmem:[%s3 + $0x5c0] sm:$0xff] %vm2594, %v2528
  %2780 = vst.msk [vmem:[%s3 + $0x5c8] sm:$0xff] %vm2594, %v2529
  %2781 = vst.msk [vmem:[%s3 + $0x5d0] sm:$0xff] %vm2594, %v2530
  %2782 = vst.msk [vmem:[%s3 + $0x5d8] sm:$0xff] %vm2594, %v2531
  %2783 = vst.msk [vmem:[%s3 + $0x5e0] sm:$0xff] %vm2594, %v2532
  %2784 = vst.msk [vmem:[%s3 + $0x5e8] sm:$0xff] %vm2594, %v2533
  %2785 = vst.msk [vmem:[%s3 + $0x5f0] sm:$0xff] %vm2594, %v2534
  %2786 = vst.msk [vmem:[%s3 + $0x5f8] sm:$0xff] %vm2594, %v2535
  %2787 = vst.msk [vmem:[%s3 + $0x600] sm:$0xff] %vm2594, %v2536
  %2788 = vst.msk [vmem:[%s3 + $0x608] sm:$0xff] %vm2594, %v2537
  %2789 = vst.msk [vmem:[%s3 + $0x610] sm:$0xff] %vm2594, %v2538
  %2790 = vst.msk [vmem:[%s3 + $0x618] sm:$0xff] %vm2594, %v2539
  %2791 = vst.msk [vmem:[%s3 + $0x620] sm:$0xff] %vm2594, %v2540
  %2792 = vst.msk [vmem:[%s3 + $0x628] sm:$0xff] %vm2594, %v2541
  %2793 = vst.msk [vmem:[%s3 + $0x630] sm:$0xff] %vm2594, %v2542
  %2794 = vst.msk [vmem:[%s3 + $0x638] sm:$0xff] %vm2594, %v2543
  %2795 = vst.msk [vmem:[%s3 + $0x640] sm:$0xff] %vm2594, %v2544
  %2796 = vst.msk [vmem:[%s3 + $0x648] sm:$0xff] %vm2594, %v2545
  %2797 = vst.msk [vmem:[%s3 + $0x650] sm:$0xff] %vm2594, %v2546
  %2798 = vst.msk [vmem:[%s3 + $0x658] sm:$0xff] %vm2594, %v2547
  %2799 = vst.msk [vmem:[%s3 + $0x660] sm:$0xff] %vm2594, %v2548
  %2800 = vst.msk [vmem:[%s3 + $0x668] sm:$0xff] %vm2594, %v2549
  %2801 = vst.msk [vmem:[%s3 + $0x670] sm:$0xff] %vm2594, %v2550
  %2802 = vst.msk [vmem:[%s3 + $0x678] sm:$0xff] %vm2594, %v2551
  %2803 = vst.msk [vmem:[%s3 + $0x680] sm:$0xff] %vm2594, %v2552
  %2804 = vst.msk [vmem:[%s3 + $0x688] sm:$0xff] %vm2594, %v2553
  %2805 = vst.msk [vmem:[%s3 + $0x690] sm:$0xff] %vm2594, %v2554
  %2806 = vst.msk [vmem:[%s3 + $0x698] sm:$0xff] %vm2594, %v2555
  %2807 = vst.msk [vmem:[%s3 + $0x6a0] sm:$0xff] %vm2594, %v2556
  %2808 = vst.msk [vmem:[%s3 + $0x6a8] sm:$0xff] %vm2594, %v2557
  %2809 = vst.msk [vmem:[%s3 + $0x6b0] sm:$0xff] %vm2594, %v2558
  %2810 = vst.msk [vmem:[%s3 + $0x6b8] sm:$0xff] %vm2594, %v2559
  %2811 = vst.msk [vmem:[%s3 + $0x6c0] sm:$0xff] %vm2594, %v2560
  %2812 = vst.msk [vmem:[%s3 + $0x6c8] sm:$0xff] %vm2594, %v2561
  %2813 = vst.msk [vmem:[%s3 + $0x6d0] sm:$0xff] %vm2594, %v2562
  %2814 = vst.msk [vmem:[%s3 + $0x6d8] sm:$0xff] %vm2594, %v2563
  %2815 = vst.msk [vmem:[%s3 + $0x6e0] sm:$0xff] %vm2594, %v2564
  %2816 = vst.msk [vmem:[%s3 + $0x6e8] sm:$0xff] %vm2594, %v2565
  %2817 = vst.msk [vmem:[%s3 + $0x6f0] sm:$0xff] %vm2594, %v2566
  %2818 = vst.msk [vmem:[%s3 + $0x6f8] sm:$0xff] %vm2594, %v2567
  %2819 = vst.msk [vmem:[%s3 + $0x700] sm:$0xff] %vm2594, %v2568
  %2820 = vst.msk [vmem:[%s3 + $0x708] sm:$0xff] %vm2594, %v2569
  %2821 = vst.msk [vmem:[%s3 + $0x710] sm:$0xff] %vm2594, %v2570
  %2822 = vst.msk [vmem:[%s3 + $0x718] sm:$0xff] %vm2594, %v2571
  %2823 = vst.msk [vmem:[%s3 + $0x720] sm:$0xff] %vm2594, %v2572
  %2824 = vst.msk [vmem:[%s3 + $0x728] sm:$0xff] %vm2594, %v2573
  %2825 = vst.msk [vmem:[%s3 + $0x730] sm:$0xff] %vm2594, %v2574
  %2826 = vst.msk [vmem:[%s3 + $0x738] sm:$0xff] %vm2594, %v2575
  %2827 = vst.msk [vmem:[%s3 + $0x740] sm:$0xff] %vm2594, %v2576
  %2828 = vst.msk [vmem:[%s3 + $0x748] sm:$0xff] %vm2594, %v2577
  %2829 = vst.msk [vmem:[%s3 + $0x750] sm:$0xff] %vm2594, %v2578
  %2830 = vst.msk [vmem:[%s3 + $0x758] sm:$0xff] %vm2594, %v2579
  %2831 = vst.msk [vmem:[%s3 + $0x760] sm:$0xff] %vm2594, %v2580
  %2832 = vst.msk [vmem:[%s3 + $0x768] sm:$0xff] %vm2594, %v2581
  %2833 = vst.msk [vmem:[%s3 + $0x770] sm:$0xff] %vm2594, %v2582
  %2834 = vst.msk [vmem:[%s3 + $0x778] sm:$0xff] %vm2594, %v2583
  %2835 = vst.msk [vmem:[%s3 + $0x780] sm:$0xff] %vm2594, %v2584
  %2836 = vst.msk [vmem:[%s3 + $0x788] sm:$0xff] %vm2594, %v2585
  %2837 = vst.msk [vmem:[%s3 + $0x790] sm:$0xff] %vm2594, %v2586
  %2838 = vst.msk [vmem:[%s3 + $0x798] sm:$0xff] %vm2594, %v2587
  %2839 = vst.msk [vmem:[%s3 + $0x7a0] sm:$0xff] %vm2594, %v2588
  %2840 = vst.msk [vmem:[%s3 + $0x7a8] sm:$0xff] %vm2594, %v2589
  %2841 = vst.msk [vmem:[%s3 + $0x7b0] sm:$0xff] %vm2594, %v2590
  %2842 = vst.msk [vmem:[%s3 + $0x7b8] sm:$0xff] %vm2594, %v2591
  %2843 = vst.msk [vmem:[%s3 + $0x7c0] sm:$0xff] %vm2594, %v2592
  %2844 = vst.msk [vmem:[%s3 + $0x7c8] sm:$0xff] %vm2594, %v2593
  // Predicated region
  $region14: #{simple_cnn_forward.3} parent=0 // pred_check
    _
  $region15: #{simple_cnn_forward.3} parent=0 // pred_check_branch
    %2846 = sbr.rel (0) target = $region17
  $region16: #{simple_cnn_forward.3} parent=0 // pred_region
    _
  $region17: #{simple_cnn_forward.3} parent=0 // pred_fallthru
    _
  // Predicated region
  $region18: #{simple_cnn_forward.3} parent=0 // pred_check
    _
  $region19: #{simple_cnn_forward.3} parent=0 // pred_check_branch
    %2848 = sbr.rel (0) target = $region21
  $region20: #{simple_cnn_forward.3} parent=0 // pred_region
    _
  $region21: #{simple_cnn_forward.3} parent=0 // pred_fallthru
    _

// kernel: simple_cnn_forward.4
$region0: #{simple_cnn_forward.4}
  #allocation0 [shape = 'u32[]', space=smem, size = 0x4, offset = 0x4, fixed_abs, tag = 'smem constant byte address 0x4 - core index']
  #allocation1 [shape = 'u32[144,128]{1,0:T(1,128)}', space=vmem, size = 0x12000, scoped, tag = 'internal scratch']
  %s0 = inlined_call_operand.vmem [shape: f32[500,144], index: 0, kind: input, shape index: {}]
  %s1 = inlined_call_operand.vmem [shape: f32[144,64], index: 1, kind: input, shape index: {}]
  %s2 = inlined_call_operand.vmem [shape: f32[1,64], index: 2, kind: input, shape index: {}]
  %s3 = inlined_call_operand.vmem [shape: bf16[500,64], index: 3, kind: output, shape index: {}]
  %s4 = sld [smem:[#allocation0]]
  $region22: #{simple_cnn_forward.4} parent=0
    _
  %s6 = ssub.s32 1, %s4
  %s7 = scalar_select 0, %s6, %s4
  // Predicated region
  $region2: #{simple_cnn_forward.4} parent=0 // pred_check
    _
  $region3: #{simple_cnn_forward.4} parent=0 // pred_check_branch
    %9 = sbr.rel (0) target = $region5
  $region4: #{simple_cnn_forward.4} parent=0 // pred_region
    _
  $region5: #{simple_cnn_forward.4} parent=0 // pred_fallthru
    _
  // Predicated region
  $region6: #{simple_cnn_forward.4} parent=0 // pred_check
    _
  $region7: #{simple_cnn_forward.4} parent=0 // pred_check_branch
    %11 = sbr.rel (0) target = $region9
  $region8: #{simple_cnn_forward.4} parent=0 // pred_region
    _
  $region9: #{simple_cnn_forward.4} parent=0 // pred_fallthru
    _
  // Predicated region
  $region10: #{simple_cnn_forward.4} parent=0 // pred_check
    _
  $region11: #{simple_cnn_forward.4} parent=0 // pred_check_branch
    %13 = sbr.rel (0) target = $region13
  $region12: #{simple_cnn_forward.4} parent=0 // pred_region
    _
  $region13: #{simple_cnn_forward.4} parent=0 // pred_fallthru
    _
  %v14 = vld [vmem:[%s0] sm:$0xff]
  %v15 = vld [vmem:[%s0 + $0x8] sm:$0xff]
  %v16 = vld [vmem:[%s0 + $0x10] sm:$0xff]
  %v17 = vld [vmem:[%s0 + $0x18] sm:$0xff]
  %v18 = vld [vmem:[%s0 + $0x20] sm:$0xff]
  %v19 = vld [vmem:[%s0 + $0x28] sm:$0xff]
  %v20 = vld [vmem:[%s0 + $0x30] sm:$0xff]
  %v21 = vld [vmem:[%s0 + $0x38] sm:$0xff]
  %v22 = vld [vmem:[%s0 + $0x40] sm:$0xff]
  %v23 = vld [vmem:[%s0 + $0x48] sm:$0xff]
  %v24 = vld [vmem:[%s0 + $0x50] sm:$0xff]
  %v25 = vld [vmem:[%s0 + $0x58] sm:$0xff]
  %v26 = vld [vmem:[%s0 + $0x60] sm:$0xff]
  %v27 = vld [vmem:[%s0 + $0x68] sm:$0xff]
  %v28 = vld [vmem:[%s0 + $0x70] sm:$0xff]
  %v29 = vld [vmem:[%s0 + $0x78] sm:$0xff]
  %v30 = vld [vmem:[%s0 + $0x80] sm:$0xff]
  %v31 = vld [vmem:[%s0 + $0x88] sm:$0xff]
  %v32 = vld [vmem:[%s0 + $0x90] sm:$0xff]
  %v33 = vld [vmem:[%s0 + $0x98] sm:$0xff]
  %v34 = vld [vmem:[%s0 + $0xa0] sm:$0xff]
  %v35 = vld [vmem:[%s0 + $0xa8] sm:$0xff]
  %v36 = vld [vmem:[%s0 + $0xb0] sm:$0xff]
  %v37 = vld [vmem:[%s0 + $0xb8] sm:$0xff]
  %v38 = vld [vmem:[%s0 + $0xc0] sm:$0xff]
  %v39 = vld [vmem:[%s0 + $0xc8] sm:$0xff]
  %v40 = vld [vmem:[%s0 + $0xd0] sm:$0xff]
  %v41 = vld [vmem:[%s0 + $0xd8] sm:$0xff]
  %v42 = vld [vmem:[%s0 + $0xe0] sm:$0xff]
  %v43 = vld [vmem:[%s0 + $0xe8] sm:$0xff]
  %v44 = vld [vmem:[%s0 + $0xf0] sm:$0xff]
  %v45 = vld [vmem:[%s0 + $0xf8] sm:$0xff]
  %v46 = vld [vmem:[%s0 + $0x100] sm:$0xff]
  %v47 = vld [vmem:[%s0 + $0x108] sm:$0xff]
  %v48 = vld [vmem:[%s0 + $0x110] sm:$0xff]
  %v49 = vld [vmem:[%s0 + $0x118] sm:$0xff]
  %v50 = vld [vmem:[%s0 + $0x120] sm:$0xff]
  %v51 = vld [vmem:[%s0 + $0x128] sm:$0xff]
  %v52 = vld [vmem:[%s0 + $0x130] sm:$0xff]
  %v53 = vld [vmem:[%s0 + $0x138] sm:$0xff]
  %v54 = vld [vmem:[%s0 + $0x140] sm:$0xff]
  %v55 = vld [vmem:[%s0 + $0x148] sm:$0xff]
  %v56 = vld [vmem:[%s0 + $0x150] sm:$0xff]
  %v57 = vld [vmem:[%s0 + $0x158] sm:$0xff]
  %v58 = vld [vmem:[%s0 + $0x160] sm:$0xff]
  %v59 = vld [vmem:[%s0 + $0x168] sm:$0xff]
  %v60 = vld [vmem:[%s0 + $0x170] sm:$0xff]
  %v61 = vld [vmem:[%s0 + $0x178] sm:$0xff]
  %v62 = vld [vmem:[%s0 + $0x180] sm:$0xff]
  %v63 = vld [vmem:[%s0 + $0x188] sm:$0xff]
  %v64 = vld [vmem:[%s0 + $0x190] sm:$0xff]
  %v65 = vld [vmem:[%s0 + $0x198] sm:$0xff]
  %v66 = vld [vmem:[%s0 + $0x1a0] sm:$0xff]
  %v67 = vld [vmem:[%s0 + $0x1a8] sm:$0xff]
  %v68 = vld [vmem:[%s0 + $0x1b0] sm:$0xff]
  %v69 = vld [vmem:[%s0 + $0x1b8] sm:$0xff]
  %v70 = vld [vmem:[%s0 + $0x1c0] sm:$0xff]
  %v71 = vld [vmem:[%s0 + $0x1c8] sm:$0xff]
  %v72 = vld [vmem:[%s0 + $0x1d0] sm:$0xff]
  %v73 = vld [vmem:[%s0 + $0x1d8] sm:$0xff]
  %v74 = vld [vmem:[%s0 + $0x1e0] sm:$0xff]
  %v75 = vld [vmem:[%s0 + $0x1e8] sm:$0xff]
  %v76 = vld [vmem:[%s0 + $0x1f0] sm:$0xff]
  %v77 = vld [vmem:[%s0 + $0x1f8] sm:$0xff]
  %v78 = vld [vmem:[%s0 + $0x200] sm:$0xff]
  %v79 = vld [vmem:[%s0 + $0x208] sm:$0xff]
  %v80 = vld [vmem:[%s0 + $0x210] sm:$0xff]
  %v81 = vld [vmem:[%s0 + $0x218] sm:$0xff]
  %v82 = vld [vmem:[%s0 + $0x220] sm:$0xff]
  %v83 = vld [vmem:[%s0 + $0x228] sm:$0xff]
  %v84 = vld [vmem:[%s0 + $0x230] sm:$0xff]
  %v85 = vld [vmem:[%s0 + $0x238] sm:$0xff]
  %v86 = vld [vmem:[%s0 + $0x240] sm:$0xff]
  %v87 = vld [vmem:[%s0 + $0x248] sm:$0xff]
  %v88 = vld [vmem:[%s0 + $0x250] sm:$0xff]
  %v89 = vld [vmem:[%s0 + $0x258] sm:$0xff]
  %v90 = vld [vmem:[%s0 + $0x260] sm:$0xff]
  %v91 = vld [vmem:[%s0 + $0x268] sm:$0xff]
  %v92 = vld [vmem:[%s0 + $0x270] sm:$0xff]
  %v93 = vld [vmem:[%s0 + $0x278] sm:$0xff]
  %v94 = vld [vmem:[%s0 + $0x280] sm:$0xff]
  %v95 = vld [vmem:[%s0 + $0x288] sm:$0xff]
  %v96 = vld [vmem:[%s0 + $0x290] sm:$0xff]
  %v97 = vld [vmem:[%s0 + $0x298] sm:$0xff]
  %v98 = vld [vmem:[%s0 + $0x2a0] sm:$0xff]
  %v99 = vld [vmem:[%s0 + $0x2a8] sm:$0xff]
  %v100 = vld [vmem:[%s0 + $0x2b0] sm:$0xff]
  %v101 = vld [vmem:[%s0 + $0x2b8] sm:$0xff]
  %v102 = vld [vmem:[%s0 + $0x2c0] sm:$0xff]
  %v103 = vld [vmem:[%s0 + $0x2c8] sm:$0xff]
  %v104 = vld [vmem:[%s0 + $0x2d0] sm:$0xff]
  %v105 = vld [vmem:[%s0 + $0x2d8] sm:$0xff]
  %v106 = vld [vmem:[%s0 + $0x2e0] sm:$0xff]
  %v107 = vld [vmem:[%s0 + $0x2e8] sm:$0xff]
  %v108 = vld [vmem:[%s0 + $0x2f0] sm:$0xff]
  %v109 = vld [vmem:[%s0 + $0x2f8] sm:$0xff]
  %v110 = vld [vmem:[%s0 + $0x300] sm:$0xff]
  %v111 = vld [vmem:[%s0 + $0x308] sm:$0xff]
  %v112 = vld [vmem:[%s0 + $0x310] sm:$0xff]
  %v113 = vld [vmem:[%s0 + $0x318] sm:$0xff]
  %v114 = vld [vmem:[%s0 + $0x320] sm:$0xff]
  %v115 = vld [vmem:[%s0 + $0x328] sm:$0xff]
  %v116 = vld [vmem:[%s0 + $0x330] sm:$0xff]
  %v117 = vld [vmem:[%s0 + $0x338] sm:$0xff]
  %v118 = vld [vmem:[%s0 + $0x340] sm:$0xff]
  %v119 = vld [vmem:[%s0 + $0x348] sm:$0xff]
  %v120 = vld [vmem:[%s0 + $0x350] sm:$0xff]
  %v121 = vld [vmem:[%s0 + $0x358] sm:$0xff]
  %v122 = vld [vmem:[%s0 + $0x360] sm:$0xff]
  %v123 = vld [vmem:[%s0 + $0x368] sm:$0xff]
  %v124 = vld [vmem:[%s0 + $0x370] sm:$0xff]
  %v125 = vld [vmem:[%s0 + $0x378] sm:$0xff]
  %v126 = vld [vmem:[%s0 + $0x380] sm:$0xff]
  %v127 = vld [vmem:[%s0 + $0x388] sm:$0xff]
  %v128 = vld [vmem:[%s0 + $0x390] sm:$0xff]
  %v129 = vld [vmem:[%s0 + $0x398] sm:$0xff]
  %v130 = vld [vmem:[%s0 + $0x3a0] sm:$0xff]
  %v131 = vld [vmem:[%s0 + $0x3a8] sm:$0xff]
  %v132 = vld [vmem:[%s0 + $0x3b0] sm:$0xff]
  %v133 = vld [vmem:[%s0 + $0x3b8] sm:$0xff]
  %v134 = vld [vmem:[%s0 + $0x3c0] sm:$0xff]
  %v135 = vld [vmem:[%s0 + $0x3c8] sm:$0xff]
  %v136 = vld [vmem:[%s0 + $0x3d0] sm:$0xff]
  %v137 = vld [vmem:[%s0 + $0x3d8] sm:$0xff]
  %v138 = vld [vmem:[%s0 + $0x3e0] sm:$0xf]
  %v139 = vld [vmem:[%s0 + $0x3e8] sm:$0xf]
  %v140 = vld [vmem:[%s1] sm:$0xff]
  %v141 = vld [vmem:[%s1 + $0x8] sm:$0xff]
  %v142 = vld [vmem:[%s1 + $0x10] sm:$0xff]
  %v143 = vld [vmem:[%s1 + $0x18] sm:$0xff]
  %v144 = vld [vmem:[%s1 + $0x20] sm:$0xff]
  %v145 = vld [vmem:[%s1 + $0x28] sm:$0xff]
  %v146 = vld [vmem:[%s1 + $0x30] sm:$0xff]
  %v147 = vld [vmem:[%s1 + $0x38] sm:$0xff]
  %v148 = vld [vmem:[%s1 + $0x40] sm:$0xff]
  %v149 = vld [vmem:[%s1 + $0x48] sm:$0xff]
  %v150 = vld [vmem:[%s1 + $0x50] sm:$0xff]
  %v151 = vld [vmem:[%s1 + $0x58] sm:$0xff]
  %v152 = vld [vmem:[%s1 + $0x60] sm:$0xff]
  %v153 = vld [vmem:[%s1 + $0x68] sm:$0xff]
  %v154 = vld [vmem:[%s1 + $0x70] sm:$0xff]
  %v155 = vld [vmem:[%s1 + $0x78] sm:$0xff]
  %v156 = vld [vmem:[%s1 + $0x80] sm:$0xff]
  %v157 = vld [vmem:[%s1 + $0x88] sm:$0xff]
  %v158 = vld [vmem:[%s2] sm:$0x1]
  %v160 = vlaneseq
  %v161 = vshrl.u32 %v160, 7
  %v162 = vsub.s32 0, %v161
  %v163 = vrot.slane %v158, %v162
  %vm165 = vcmask 130048
  %v167 = vsel %vm165, %v15, 0
  %v170 = vsel %vm165, %v17, 0
  %v173 = vsel %vm165, %v19, 0
  %v176 = vsel %vm165, %v21, 0
  %v179 = vsel %vm165, %v23, 0
  %v182 = vsel %vm165, %v25, 0
  %v185 = vsel %vm165, %v27, 0
  %v188 = vsel %vm165, %v29, 0
  %v191 = vsel %vm165, %v31, 0
  %v194 = vsel %vm165, %v33, 0
  %v197 = vsel %vm165, %v35, 0
  %v200 = vsel %vm165, %v37, 0
  %v203 = vsel %vm165, %v39, 0
  %v206 = vsel %vm165, %v41, 0
  %v209 = vsel %vm165, %v43, 0
  %v212 = vsel %vm165, %v45, 0
  %v215 = vsel %vm165, %v47, 0
  %v218 = vsel %vm165, %v49, 0
  %v221 = vsel %vm165, %v51, 0
  %v224 = vsel %vm165, %v53, 0
  %v227 = vsel %vm165, %v55, 0
  %v230 = vsel %vm165, %v57, 0
  %v233 = vsel %vm165, %v59, 0
  %v236 = vsel %vm165, %v61, 0
  %v239 = vsel %vm165, %v63, 0
  %v242 = vsel %vm165, %v65, 0
  %v245 = vsel %vm165, %v67, 0
  %v248 = vsel %vm165, %v69, 0
  %v251 = vsel %vm165, %v71, 0
  %v254 = vsel %vm165, %v73, 0
  %v257 = vsel %vm165, %v75, 0
  %v260 = vsel %vm165, %v77, 0
  %v263 = vsel %vm165, %v79, 0
  %v266 = vsel %vm165, %v81, 0
  %v269 = vsel %vm165, %v83, 0
  %v272 = vsel %vm165, %v85, 0
  %v275 = vsel %vm165, %v87, 0
  %v278 = vsel %vm165, %v89, 0
  %v281 = vsel %vm165, %v91, 0
  %v284 = vsel %vm165, %v93, 0
  %v287 = vsel %vm165, %v95, 0
  %v290 = vsel %vm165, %v97, 0
  %v293 = vsel %vm165, %v99, 0
  %v296 = vsel %vm165, %v101, 0
  %v299 = vsel %vm165, %v103, 0
  %v302 = vsel %vm165, %v105, 0
  %v305 = vsel %vm165, %v107, 0
  %v308 = vsel %vm165, %v109, 0
  %v311 = vsel %vm165, %v111, 0
  %v314 = vsel %vm165, %v113, 0
  %v317 = vsel %vm165, %v115, 0
  %v320 = vsel %vm165, %v117, 0
  %v323 = vsel %vm165, %v119, 0
  %v326 = vsel %vm165, %v121, 0
  %v329 = vsel %vm165, %v123, 0
  %v332 = vsel %vm165, %v125, 0
  %v335 = vsel %vm165, %v127, 0
  %v338 = vsel %vm165, %v129, 0
  %v341 = vsel %vm165, %v131, 0
  %v344 = vsel %vm165, %v133, 0
  %v347 = vsel %vm165, %v135, 0
  %v350 = vsel %vm165, %v137, 0
  %v353 = vsel %vm165, %v139, 0
  %355 = vmatprep.subr.mxu0 0.0
  %356 = vmatpush1.msra.mxu0 %v140
  %357 = vmatprep.subr.mxu0 0.0
  %358 = vmatpush1.msra.mxu0 %v141
  %359 = vmatprep.subr.mxu0 0.0
  %360 = vmatpush1.msra.mxu0 %v142
  %361 = vmatprep.subr.mxu0 0.0
  %362 = vmatpush1.msra.mxu0 %v143
  %363 = vmatprep.subr.mxu0 0.0
  %364 = vmatpush1.msra.mxu0 %v144
  %365 = vmatprep.subr.mxu0 0.0
  %366 = vmatpush1.msra.mxu0 %v145
  %367 = vmatprep.subr.mxu0 0.0
  %368 = vmatpush1.msra.mxu0 %v146
  %369 = vmatprep.subr.mxu0 0.0
  %370 = vmatpush1.msra.mxu0 %v147
  %371 = vmatprep.subr.mxu0 0.0
  %372 = vmatpush1.msra.mxu0 %v148
  %373 = vmatprep.subr.mxu0 0.0
  %374 = vmatpush1.msra.mxu0 %v149
  %375 = vmatprep.subr.mxu0 0.0
  %376 = vmatpush1.msra.mxu0 %v150
  %377 = vmatprep.subr.mxu0 0.0
  %378 = vmatpush1.msra.mxu0 %v151
  %379 = vmatprep.subr.mxu0 0.0
  %380 = vmatpush1.msra.mxu0 %v152
  %381 = vmatprep.subr.mxu0 0.0
  %382 = vmatpush1.msra.mxu0 %v153
  %383 = vmatprep.subr.mxu0 0.0
  %384 = vmatpush1.msra.mxu0 %v154
  %385 = vmatprep.subr.mxu0 0.0
  %386 = vmatpush1.msra.mxu0 %v155
  %387 = vmatprep.subr.mxu0 0.0
  %388 = vmatpush1.msra.mxu0 %v156
  %389 = vmatprep.subr.mxu0 0.0
  %390 = vmatpush1.msra.mxu0 %v157
  %391 = vmatprep.subr.mxu0 0.0
  %392 = vmatpush1.msra.mxu0 0.0
  %393 = vmatprep.subr.mxu0 0.0
  %394 = vmatpush1.msra.mxu0 0.0
  %395 = vmatprep.subr.mxu0 0.0
  %396 = vmatpush1.msra.mxu0 0.0
  %397 = vmatprep.subr.mxu0 0.0
  %398 = vmatpush1.msra.mxu0 0.0
  %399 = vmatprep.subr.mxu0 0.0
  %400 = vmatpush1.msra.mxu0 0.0
  %401 = vmatprep.subr.mxu0 0.0
  %402 = vmatpush1.msra.mxu0 0.0
  %403 = vmatprep.subr.mxu0 0.0
  %404 = vmatpush1.msra.mxu0 0.0
  %405 = vmatprep.subr.mxu0 0.0
  %406 = vmatpush1.msra.mxu0 0.0
  %407 = vmatprep.subr.mxu0 0.0
  %408 = vmatpush1.msra.mxu0 0.0
  %409 = vmatprep.subr.mxu0 0.0
  %410 = vmatpush1.msra.mxu0 0.0
  %411 = vmatprep.subr.mxu0 0.0
  %412 = vmatpush1.msra.mxu0 0.0
  %413 = vmatprep.subr.mxu0 0.0
  %414 = vmatpush1.msra.mxu0 0.0
  %415 = vmatprep.subr.mxu0 0.0
  %416 = vmatpush1.msra.mxu0 0.0
  %417 = vmatprep.subr.mxu0 0.0
  %418 = vmatpush1.msra.mxu0 0.0
  %419 = vmatprep.mubr.f32.mxu0 %v167
  %420 = vmatmul.mubr.f32.gmra.mrb[0].mxu0 %v14
  %v421 = vpop.f32.mrb[0].mxu0
  %v422 = vadd.f32 %v163, %v421
  %v423 = vpop.f32.mrb[0].mxu0
  %424 = vmatprep.mubr.f32.mxu0 %v170
  %425 = vmatmul.mubr.f32.gmra.mrb[0].mxu0 %v16
  %v426 = vpop.f32.mrb[0].mxu0
  %v427 = vadd.f32 %v163, %v426
  %v428 = vpop.f32.mrb[0].mxu0
  %429 = vmatprep.mubr.f32.mxu0 %v173
  %430 = vmatmul.mubr.f32.gmra.mrb[0].mxu0 %v18
  %v431 = vpop.f32.mrb[0].mxu0
  %v432 = vadd.f32 %v163, %v431
  %v433 = vpop.f32.mrb[0].mxu0
  %434 = vmatprep.mubr.f32.mxu0 %v176
  %435 = vmatmul.mubr.f32.gmra.mrb[0].mxu0 %v20
  %v436 = vpop.f32.mrb[0].mxu0
  %v437 = vadd.f32 %v163, %v436
  %v438 = vpop.f32.mrb[0].mxu0
  %439 = vmatprep.mubr.f32.mxu0 %v179
  %440 = vmatmul.mubr.f32.gmra.mrb[0].mxu0 %v22
  %v441 = vpop.f32.mrb[0].mxu0
  %v442 = vadd.f32 %v163, %v441
  %v443 = vpop.f32.mrb[0].mxu0
  %444 = vmatprep.mubr.f32.mxu0 %v182
  %445 = vmatmul.mubr.f32.gmra.mrb[0].mxu0 %v24
  %v446 = vpop.f32.mrb[0].mxu0
  %v447 = vadd.f32 %v163, %v446
  %v448 = vpop.f32.mrb[0].mxu0
  %449 = vmatprep.mubr.f32.mxu0 %v185
  %450 = vmatmul.mubr.f32.gmra.mrb[0].mxu0 %v26
  %v451 = vpop.f32.mrb[0].mxu0
  %v452 = vadd.f32 %v163, %v451
  %v453 = vpop.f32.mrb[0].mxu0
  %454 = vmatprep.mubr.f32.mxu0 %v188
  %455 = vmatmul.mubr.f32.gmra.mrb[0].mxu0 %v28
  %v456 = vpop.f32.mrb[0].mxu0
  %v457 = vadd.f32 %v163, %v456
  %v458 = vpop.f32.mrb[0].mxu0
  %459 = vmatprep.mubr.f32.mxu0 %v191
  %460 = vmatmul.mubr.f32.gmra.mrb[0].mxu0 %v30
  %v461 = vpop.f32.mrb[0].mxu0
  %v462 = vadd.f32 %v163, %v461
  %v463 = vpop.f32.mrb[0].mxu0
  %464 = vmatprep.mubr.f32.mxu0 %v194
  %465 = vmatmul.mubr.f32.gmra.mrb[0].mxu0 %v32
  %v466 = vpop.f32.mrb[0].mxu0
  %v467 = vadd.f32 %v163, %v466
  %v468 = vpop.f32.mrb[0].mxu0
  %469 = vmatprep.mubr.f32.mxu0 %v197
  %470 = vmatmul.mubr.f32.gmra.mrb[0].mxu0 %v34
  %v471 = vpop.f32.mrb[0].mxu0
  %v472 = vadd.f32 %v163, %v471
  %v473 = vpop.f32.mrb[0].mxu0
  %474 = vmatprep.mubr.f32.mxu0 %v200
  %475 = vmatmul.mubr.f32.gmra.mrb[0].mxu0 %v36
  %v476 = vpop.f32.mrb[0].mxu0
  %v477 = vadd.f32 %v163, %v476
  %v478 = vpop.f32.mrb[0].mxu0
  %479 = vmatprep.mubr.f32.mxu0 %v203
  %480 = vmatmul.mubr.f32.gmra.mrb[0].mxu0 %v38
  %v481 = vpop.f32.mrb[0].mxu0
  %v482 = vadd.f32 %v163, %v481
  %v483 = vpop.f32.mrb[0].mxu0
  %484 = vmatprep.mubr.f32.mxu0 %v206
  %485 = vmatmul.mubr.f32.gmra.mrb[0].mxu0 %v40
  %v486 = vpop.f32.mrb[0].mxu0
  %v487 = vadd.f32 %v163, %v486
  %v488 = vpop.f32.mrb[0].mxu0
  %489 = vmatprep.mubr.f32.mxu0 %v209
  %490 = vmatmul.mubr.f32.gmra.mrb[0].mxu0 %v42
  %v491 = vpop.f32.mrb[0].mxu0
  %v492 = vadd.f32 %v163, %v491
  %v493 = vpop.f32.mrb[0].mxu0
  %494 = vmatprep.mubr.f32.mxu0 %v212
  %495 = vmatmul.mubr.f32.gmra.mrb[0].mxu0 %v44
  %v496 = vpop.f32.mrb[0].mxu0
  %v497 = vadd.f32 %v163, %v496
  %v498 = vpop.f32.mrb[0].mxu0
  %499 = vmatprep.mubr.f32.mxu0 %v215
  %500 = vmatmul.mubr.f32.gmra.mrb[0].mxu0 %v46
  %v501 = vpop.f32.mrb[0].mxu0
  %v502 = vadd.f32 %v163, %v501
  %v503 = vpop.f32.mrb[0].mxu0
  %504 = vmatprep.mubr.f32.mxu0 %v218
  %505 = vmatmul.mubr.f32.gmra.mrb[0].mxu0 %v48
  %v506 = vpop.f32.mrb[0].mxu0
  %v507 = vadd.f32 %v163, %v506
  %v508 = vpop.f32.mrb[0].mxu0
  %509 = vmatprep.mubr.f32.mxu0 %v221
  %510 = vmatmul.mubr.f32.gmra.mrb[0].mxu0 %v50
  %v511 = vpop.f32.mrb[0].mxu0
  %v512 = vadd.f32 %v163, %v511
  %v513 = vpop.f32.mrb[0].mxu0
  %514 = vmatprep.mubr.f32.mxu0 %v224
  %515 = vmatmul.mubr.f32.gmra.mrb[0].mxu0 %v52
  %v516 = vpop.f32.mrb[0].mxu0
  %v517 = vadd.f32 %v163, %v516
  %v518 = vpop.f32.mrb[0].mxu0
  %519 = vmatprep.mubr.f32.mxu0 %v227
  %520 = vmatmul.mubr.f32.gmra.mrb[0].mxu0 %v54
  %v521 = vpop.f32.mrb[0].mxu0
  %v522 = vadd.f32 %v163, %v521
  %v523 = vpop.f32.mrb[0].mxu0
  %524 = vmatprep.mubr.f32.mxu0 %v230
  %525 = vmatmul.mubr.f32.gmra.mrb[0].mxu0 %v56
  %v526 = vpop.f32.mrb[0].mxu0
  %v527 = vadd.f32 %v163, %v526
  %v528 = vpop.f32.mrb[0].mxu0
  %529 = vmatprep.mubr.f32.mxu0 %v233
  %530 = vmatmul.mubr.f32.gmra.mrb[0].mxu0 %v58
  %v531 = vpop.f32.mrb[0].mxu0
  %v532 = vadd.f32 %v163, %v531
  %v533 = vpop.f32.mrb[0].mxu0
  %534 = vmatprep.mubr.f32.mxu0 %v236
  %535 = vmatmul.mubr.f32.gmra.mrb[0].mxu0 %v60
  %v536 = vpop.f32.mrb[0].mxu0
  %v537 = vadd.f32 %v163, %v536
  %v538 = vpop.f32.mrb[0].mxu0
  %539 = vmatprep.mubr.f32.mxu0 %v239
  %540 = vmatmul.mubr.f32.gmra.mrb[0].mxu0 %v62
  %v541 = vpop.f32.mrb[0].mxu0
  %v542 = vadd.f32 %v163, %v541
  %v543 = vpop.f32.mrb[0].mxu0
  %544 = vmatprep.mubr.f32.mxu0 %v242
  %545 = vmatmul.mubr.f32.gmra.mrb[0].mxu0 %v64
  %v546 = vpop.f32.mrb[0].mxu0
  %v547 = vadd.f32 %v163, %v546
  %v548 = vpop.f32.mrb[0].mxu0
  %549 = vmatprep.mubr.f32.mxu0 %v245
  %550 = vmatmul.mubr.f32.gmra.mrb[0].mxu0 %v66
  %v551 = vpop.f32.mrb[0].mxu0
  %v552 = vadd.f32 %v163, %v551
  %v553 = vpop.f32.mrb[0].mxu0
  %554 = vmatprep.mubr.f32.mxu0 %v248
  %555 = vmatmul.mubr.f32.gmra.mrb[0].mxu0 %v68
  %v556 = vpop.f32.mrb[0].mxu0
  %v557 = vadd.f32 %v163, %v556
  %v558 = vpop.f32.mrb[0].mxu0
  %559 = vmatprep.mubr.f32.mxu0 %v251
  %560 = vmatmul.mubr.f32.gmra.mrb[0].mxu0 %v70
  %v561 = vpop.f32.mrb[0].mxu0
  %v562 = vadd.f32 %v163, %v561
  %v563 = vpop.f32.mrb[0].mxu0
  %564 = vmatprep.mubr.f32.mxu0 %v254
  %565 = vmatmul.mubr.f32.gmra.mrb[0].mxu0 %v72
  %v566 = vpop.f32.mrb[0].mxu0
  %v567 = vadd.f32 %v163, %v566
  %v568 = vpop.f32.mrb[0].mxu0
  %569 = vmatprep.mubr.f32.mxu0 %v257
  %570 = vmatmul.mubr.f32.gmra.mrb[0].mxu0 %v74
  %v571 = vpop.f32.mrb[0].mxu0
  %v572 = vadd.f32 %v163, %v571
  %v573 = vpop.f32.mrb[0].mxu0
  %574 = vmatprep.mubr.f32.mxu0 %v260
  %575 = vmatmul.mubr.f32.gmra.mrb[0].mxu0 %v76
  %v576 = vpop.f32.mrb[0].mxu0
  %v577 = vadd.f32 %v163, %v576
  %v578 = vpop.f32.mrb[0].mxu0
  %579 = vmatprep.mubr.f32.mxu0 %v263
  %580 = vmatmul.mubr.f32.gmra.mrb[0].mxu0 %v78
  %v581 = vpop.f32.mrb[0].mxu0
  %v582 = vadd.f32 %v163, %v581
  %v583 = vpop.f32.mrb[0].mxu0
  %584 = vmatprep.mubr.f32.mxu0 %v266
  %585 = vmatmul.mubr.f32.gmra.mrb[0].mxu0 %v80
  %v586 = vpop.f32.mrb[0].mxu0
  %v587 = vadd.f32 %v163, %v586
  %v588 = vpop.f32.mrb[0].mxu0
  %589 = vmatprep.mubr.f32.mxu0 %v269
  %590 = vmatmul.mubr.f32.gmra.mrb[0].mxu0 %v82
  %v591 = vpop.f32.mrb[0].mxu0
  %v592 = vadd.f32 %v163, %v591
  %v593 = vpop.f32.mrb[0].mxu0
  %594 = vmatprep.mubr.f32.mxu0 %v272
  %595 = vmatmul.mubr.f32.gmra.mrb[0].mxu0 %v84
  %v596 = vpop.f32.mrb[0].mxu0
  %v597 = vadd.f32 %v163, %v596
  %v598 = vpop.f32.mrb[0].mxu0
  %599 = vmatprep.mubr.f32.mxu0 %v275
  %600 = vmatmul.mubr.f32.gmra.mrb[0].mxu0 %v86
  %v601 = vpop.f32.mrb[0].mxu0
  %v602 = vadd.f32 %v163, %v601
  %v603 = vpop.f32.mrb[0].mxu0
  %604 = vmatprep.mubr.f32.mxu0 %v278
  %605 = vmatmul.mubr.f32.gmra.mrb[0].mxu0 %v88
  %v606 = vpop.f32.mrb[0].mxu0
  %v607 = vadd.f32 %v163, %v606
  %v608 = vpop.f32.mrb[0].mxu0
  %609 = vmatprep.mubr.f32.mxu0 %v281
  %610 = vmatmul.mubr.f32.gmra.mrb[0].mxu0 %v90
  %v611 = vpop.f32.mrb[0].mxu0
  %v612 = vadd.f32 %v163, %v611
  %v613 = vpop.f32.mrb[0].mxu0
  %614 = vmatprep.mubr.f32.mxu0 %v284
  %615 = vmatmul.mubr.f32.gmra.mrb[0].mxu0 %v92
  %v616 = vpop.f32.mrb[0].mxu0
  %v617 = vadd.f32 %v163, %v616
  %v618 = vpop.f32.mrb[0].mxu0
  %619 = vmatprep.mubr.f32.mxu0 %v287
  %620 = vmatmul.mubr.f32.gmra.mrb[0].mxu0 %v94
  %v621 = vpop.f32.mrb[0].mxu0
  %v622 = vadd.f32 %v163, %v621
  %v623 = vpop.f32.mrb[0].mxu0
  %624 = vmatprep.mubr.f32.mxu0 %v290
  %625 = vmatmul.mubr.f32.gmra.mrb[0].mxu0 %v96
  %v626 = vpop.f32.mrb[0].mxu0
  %v627 = vadd.f32 %v163, %v626
  %v628 = vpop.f32.mrb[0].mxu0
  %629 = vmatprep.mubr.f32.mxu0 %v293
  %630 = vmatmul.mubr.f32.gmra.mrb[0].mxu0 %v98
  %v631 = vpop.f32.mrb[0].mxu0
  %v632 = vadd.f32 %v163, %v631
  %v633 = vpop.f32.mrb[0].mxu0
  %634 = vmatprep.mubr.f32.mxu0 %v296
  %635 = vmatmul.mubr.f32.gmra.mrb[0].mxu0 %v100
  %v636 = vpop.f32.mrb[0].mxu0
  %v637 = vadd.f32 %v163, %v636
  %v638 = vpop.f32.mrb[0].mxu0
  %639 = vmatprep.mubr.f32.mxu0 %v299
  %640 = vmatmul.mubr.f32.gmra.mrb[0].mxu0 %v102
  %v641 = vpop.f32.mrb[0].mxu0
  %v642 = vadd.f32 %v163, %v641
  %v643 = vpop.f32.mrb[0].mxu0
  %644 = vmatprep.mubr.f32.mxu0 %v302
  %645 = vmatmul.mubr.f32.gmra.mrb[0].mxu0 %v104
  %v646 = vpop.f32.mrb[0].mxu0
  %v647 = vadd.f32 %v163, %v646
  %v648 = vpop.f32.mrb[0].mxu0
  %649 = vmatprep.mubr.f32.mxu0 %v305
  %650 = vmatmul.mubr.f32.gmra.mrb[0].mxu0 %v106
  %v651 = vpop.f32.mrb[0].mxu0
  %v652 = vadd.f32 %v163, %v651
  %v653 = vpop.f32.mrb[0].mxu0
  %654 = vmatprep.mubr.f32.mxu0 %v308
  %655 = vmatmul.mubr.f32.gmra.mrb[0].mxu0 %v108
  %v656 = vpop.f32.mrb[0].mxu0
  %v657 = vadd.f32 %v163, %v656
  %v658 = vpop.f32.mrb[0].mxu0
  %659 = vmatprep.mubr.f32.mxu0 %v311
  %660 = vmatmul.mubr.f32.gmra.mrb[0].mxu0 %v110
  %v661 = vpop.f32.mrb[0].mxu0
  %v662 = vadd.f32 %v163, %v661
  %v663 = vpop.f32.mrb[0].mxu0
  %664 = vmatprep.mubr.f32.mxu0 %v314
  %665 = vmatmul.mubr.f32.gmra.mrb[0].mxu0 %v112
  %v666 = vpop.f32.mrb[0].mxu0
  %v667 = vadd.f32 %v163, %v666
  %v668 = vpop.f32.mrb[0].mxu0
  %669 = vmatprep.mubr.f32.mxu0 %v317
  %670 = vmatmul.mubr.f32.gmra.mrb[0].mxu0 %v114
  %v671 = vpop.f32.mrb[0].mxu0
  %v672 = vadd.f32 %v163, %v671
  %v673 = vpop.f32.mrb[0].mxu0
  %674 = vmatprep.mubr.f32.mxu0 %v320
  %675 = vmatmul.mubr.f32.gmra.mrb[0].mxu0 %v116
  %v676 = vpop.f32.mrb[0].mxu0
  %v677 = vadd.f32 %v163, %v676
  %v678 = vpop.f32.mrb[0].mxu0
  %679 = vmatprep.mubr.f32.mxu0 %v323
  %680 = vmatmul.mubr.f32.gmra.mrb[0].mxu0 %v118
  %v681 = vpop.f32.mrb[0].mxu0
  %v682 = vadd.f32 %v163, %v681
  %v683 = vpop.f32.mrb[0].mxu0
  %684 = vmatprep.mubr.f32.mxu0 %v326
  %685 = vmatmul.mubr.f32.gmra.mrb[0].mxu0 %v120
  %v686 = vpop.f32.mrb[0].mxu0
  %v687 = vadd.f32 %v163, %v686
  %v688 = vpop.f32.mrb[0].mxu0
  %689 = vmatprep.mubr.f32.mxu0 %v329
  %690 = vmatmul.mubr.f32.gmra.mrb[0].mxu0 %v122
  %v691 = vpop.f32.mrb[0].mxu0
  %v692 = vadd.f32 %v163, %v691
  %v693 = vpop.f32.mrb[0].mxu0
  %694 = vmatprep.mubr.f32.mxu0 %v332
  %695 = vmatmul.mubr.f32.gmra.mrb[0].mxu0 %v124
  %v696 = vpop.f32.mrb[0].mxu0
  %v697 = vadd.f32 %v163, %v696
  %v698 = vpop.f32.mrb[0].mxu0
  %699 = vmatprep.mubr.f32.mxu0 %v335
  %700 = vmatmul.mubr.f32.gmra.mrb[0].mxu0 %v126
  %v701 = vpop.f32.mrb[0].mxu0
  %v702 = vadd.f32 %v163, %v701
  %v703 = vpop.f32.mrb[0].mxu0
  %704 = vmatprep.mubr.f32.mxu0 %v338
  %705 = vmatmul.mubr.f32.gmra.mrb[0].mxu0 %v128
  %v706 = vpop.f32.mrb[0].mxu0
  %v707 = vadd.f32 %v163, %v706
  %v708 = vpop.f32.mrb[0].mxu0
  %709 = vmatprep.mubr.f32.mxu0 %v341
  %710 = vmatmul.mubr.f32.gmra.mrb[0].mxu0 %v130
  %v711 = vpop.f32.mrb[0].mxu0
  %v712 = vadd.f32 %v163, %v711
  %v713 = vpop.f32.mrb[0].mxu0
  %714 = vmatprep.mubr.f32.mxu0 %v344
  %715 = vmatmul.mubr.f32.gmra.mrb[0].mxu0 %v132
  %v716 = vpop.f32.mrb[0].mxu0
  %v717 = vadd.f32 %v163, %v716
  %v718 = vpop.f32.mrb[0].mxu0
  %719 = vmatprep.mubr.f32.mxu0 %v347
  %720 = vmatmul.mubr.f32.gmra.mrb[0].mxu0 %v134
  %v721 = vpop.f32.mrb[0].mxu0
  %v722 = vadd.f32 %v163, %v721
  %v723 = vpop.f32.mrb[0].mxu0
  %724 = vmatprep.mubr.f32.mxu0 %v350
  %725 = vmatmul.mubr.f32.gmra.mrb[0].mxu0 %v136
  %v726 = vpop.f32.mrb[0].mxu0
  %v727 = vadd.f32 %v163, %v726
  %v728 = vpop.f32.mrb[0].mxu0
  %729 = vmatprep.mubr.f32.mxu0 %v353
  %730 = vmatmul.mubr.f32.gmra.mrb[0].mxu0 %v138
  %v731 = vpop.f32.mrb[0].mxu0
  %v732 = vadd.f32 %v163, %v731
  %v733 = vpop.f32.mrb[0].mxu0
  %734 = vdwg.mxu0
  %v735 = vmax.f32 %v422, 0.0
  %v736 = vmax.f32 %v427, 0.0
  %v737 = vmax.f32 %v432, 0.0
  %v738 = vmax.f32 %v437, 0.0
  %v739 = vmax.f32 %v442, 0.0
  %v740 = vmax.f32 %v447, 0.0
  %v741 = vmax.f32 %v452, 0.0
  %v742 = vmax.f32 %v457, 0.0
  %v743 = vmax.f32 %v462, 0.0
  %v744 = vmax.f32 %v467, 0.0
  %v745 = vmax.f32 %v472, 0.0
  %v746 = vmax.f32 %v477, 0.0
  %v747 = vmax.f32 %v482, 0.0
  %v748 = vmax.f32 %v487, 0.0
  %v749 = vmax.f32 %v492, 0.0
  %v750 = vmax.f32 %v497, 0.0
  %v751 = vmax.f32 %v502, 0.0
  %v752 = vmax.f32 %v507, 0.0
  %v753 = vmax.f32 %v512, 0.0
  %v754 = vmax.f32 %v517, 0.0
  %v755 = vmax.f32 %v522, 0.0
  %v756 = vmax.f32 %v527, 0.0
  %v757 = vmax.f32 %v532, 0.0
  %v758 = vmax.f32 %v537, 0.0
  %v759 = vmax.f32 %v542, 0.0
  %v760 = vmax.f32 %v547, 0.0
  %v761 = vmax.f32 %v552, 0.0
  %v762 = vmax.f32 %v557, 0.0
  %v763 = vmax.f32 %v562, 0.0
  %v764 = vmax.f32 %v567, 0.0
  %v765 = vmax.f32 %v572, 0.0
  %v766 = vmax.f32 %v577, 0.0
  %v767 = vmax.f32 %v582, 0.0
  %v768 = vmax.f32 %v587, 0.0
  %v769 = vmax.f32 %v592, 0.0
  %v770 = vmax.f32 %v597, 0.0
  %v771 = vmax.f32 %v602, 0.0
  %v772 = vmax.f32 %v607, 0.0
  %v773 = vmax.f32 %v612, 0.0
  %v774 = vmax.f32 %v617, 0.0
  %v775 = vmax.f32 %v622, 0.0
  %v776 = vmax.f32 %v627, 0.0
  %v777 = vmax.f32 %v632, 0.0
  %v778 = vmax.f32 %v637, 0.0
  %v779 = vmax.f32 %v642, 0.0
  %v780 = vmax.f32 %v647, 0.0
  %v781 = vmax.f32 %v652, 0.0
  %v782 = vmax.f32 %v657, 0.0
  %v783 = vmax.f32 %v662, 0.0
  %v784 = vmax.f32 %v667, 0.0
  %v785 = vmax.f32 %v672, 0.0
  %v786 = vmax.f32 %v677, 0.0
  %v787 = vmax.f32 %v682, 0.0
  %v788 = vmax.f32 %v687, 0.0
  %v789 = vmax.f32 %v692, 0.0
  %v790 = vmax.f32 %v697, 0.0
  %v791 = vmax.f32 %v702, 0.0
  %v792 = vmax.f32 %v707, 0.0
  %v793 = vmax.f32 %v712, 0.0
  %v794 = vmax.f32 %v717, 0.0
  %v795 = vmax.f32 %v722, 0.0
  %v796 = vmax.f32 %v727, 0.0
  %v797 = vmax.f32 %v732, 0.0
  %v798 = vpack.c.bf16 %v736, %v735
  %v799 = vpack.c.bf16 %v738, %v737
  %v800 = vpack.c.bf16 %v740, %v739
  %v801 = vpack.c.bf16 %v742, %v741
  %v802 = vpack.c.bf16 %v744, %v743
  %v803 = vpack.c.bf16 %v746, %v745
  %v804 = vpack.c.bf16 %v748, %v747
  %v805 = vpack.c.bf16 %v750, %v749
  %v806 = vpack.c.bf16 %v752, %v751
  %v807 = vpack.c.bf16 %v754, %v753
  %v808 = vpack.c.bf16 %v756, %v755
  %v809 = vpack.c.bf16 %v758, %v757
  %v810 = vpack.c.bf16 %v760, %v759
  %v811 = vpack.c.bf16 %v762, %v761
  %v812 = vpack.c.bf16 %v764, %v763
  %v813 = vpack.c.bf16 %v766, %v765
  %v814 = vpack.c.bf16 %v768, %v767
  %v815 = vpack.c.bf16 %v770, %v769
  %v816 = vpack.c.bf16 %v772, %v771
  %v817 = vpack.c.bf16 %v774, %v773
  %v818 = vpack.c.bf16 %v776, %v775
  %v819 = vpack.c.bf16 %v778, %v777
  %v820 = vpack.c.bf16 %v780, %v779
  %v821 = vpack.c.bf16 %v782, %v781
  %v822 = vpack.c.bf16 %v784, %v783
  %v823 = vpack.c.bf16 %v786, %v785
  %v824 = vpack.c.bf16 %v788, %v787
  %v825 = vpack.c.bf16 %v790, %v789
  %v826 = vpack.c.bf16 %v792, %v791
  %v827 = vpack.c.bf16 %v794, %v793
  %v828 = vpack.c.bf16 %v796, %v795
  %v829 = vpack.c.bf16 %v797, %v797
  %v862 = vunpack.c.l.b16 %v798
  %v863 = vunpack.c.h.b16 %v798
  %v864 = vunpack.c.l.b16 %v799
  %v865 = vunpack.c.h.b16 %v799
  %v866 = vunpack.c.l.b16 %v800
  %v867 = vunpack.c.h.b16 %v800
  %v868 = vunpack.c.l.b16 %v801
  %v869 = vunpack.c.h.b16 %v801
  %v870 = vunpack.c.l.b16 %v802
  %v871 = vunpack.c.h.b16 %v802
  %v872 = vunpack.c.l.b16 %v803
  %v873 = vunpack.c.h.b16 %v803
  %v874 = vunpack.c.l.b16 %v804
  %v875 = vunpack.c.h.b16 %v804
  %v876 = vunpack.c.l.b16 %v805
  %v877 = vunpack.c.h.b16 %v805
  %v878 = vunpack.c.l.b16 %v806
  %v879 = vunpack.c.h.b16 %v806
  %v880 = vunpack.c.l.b16 %v807
  %v881 = vunpack.c.h.b16 %v807
  %v882 = vunpack.c.l.b16 %v808
  %v883 = vunpack.c.h.b16 %v808
  %v884 = vunpack.c.l.b16 %v809
  %v885 = vunpack.c.h.b16 %v809
  %v886 = vunpack.c.l.b16 %v810
  %v887 = vunpack.c.h.b16 %v810
  %v888 = vunpack.c.l.b16 %v811
  %v889 = vunpack.c.h.b16 %v811
  %v890 = vunpack.c.l.b16 %v812
  %v891 = vunpack.c.h.b16 %v812
  %v892 = vunpack.c.l.b16 %v813
  %v893 = vunpack.c.h.b16 %v813
  %v894 = vunpack.c.l.b16 %v814
  %v895 = vunpack.c.h.b16 %v814
  %v896 = vunpack.c.l.b16 %v815
  %v897 = vunpack.c.h.b16 %v815
  %v898 = vunpack.c.l.b16 %v816
  %v899 = vunpack.c.h.b16 %v816
  %v900 = vunpack.c.l.b16 %v817
  %v901 = vunpack.c.h.b16 %v817
  %v902 = vunpack.c.l.b16 %v818
  %v903 = vunpack.c.h.b16 %v818
  %v904 = vunpack.c.l.b16 %v819
  %v905 = vunpack.c.h.b16 %v819
  %v906 = vunpack.c.l.b16 %v820
  %v907 = vunpack.c.h.b16 %v820
  %v908 = vunpack.c.l.b16 %v821
  %v909 = vunpack.c.h.b16 %v821
  %v910 = vunpack.c.l.b16 %v822
  %v911 = vunpack.c.h.b16 %v822
  %v912 = vunpack.c.l.b16 %v823
  %v913 = vunpack.c.h.b16 %v823
  %v914 = vunpack.c.l.b16 %v824
  %v915 = vunpack.c.h.b16 %v824
  %v916 = vunpack.c.l.b16 %v825
  %v917 = vunpack.c.h.b16 %v825
  %v918 = vunpack.c.l.b16 %v826
  %v919 = vunpack.c.h.b16 %v826
  %v920 = vunpack.c.l.b16 %v827
  %v921 = vunpack.c.h.b16 %v827
  %v922 = vunpack.c.l.b16 %v828
  %v923 = vunpack.c.h.b16 %v828
  %v924 = vunpack.c.l.b16 %v829
  %v925 = vpack.c.b16 %v862, %v862
  %v926 = vpack.c.b16 %v863, %v863
  %v927 = vpack.c.b16 %v864, %v864
  %v928 = vpack.c.b16 %v865, %v865
  %v929 = vpack.c.b16 %v866, %v866
  %v930 = vpack.c.b16 %v867, %v867
  %v931 = vpack.c.b16 %v868, %v868
  %v932 = vpack.c.b16 %v869, %v869
  %v933 = vpack.c.b16 %v870, %v870
  %v934 = vpack.c.b16 %v871, %v871
  %v935 = vpack.c.b16 %v872, %v872
  %v936 = vpack.c.b16 %v873, %v873
  %v937 = vpack.c.b16 %v874, %v874
  %v938 = vpack.c.b16 %v875, %v875
  %v939 = vpack.c.b16 %v876, %v876
  %v940 = vpack.c.b16 %v877, %v877
  %v941 = vpack.c.b16 %v878, %v878
  %v942 = vpack.c.b16 %v879, %v879
  %v943 = vpack.c.b16 %v880, %v880
  %v944 = vpack.c.b16 %v881, %v881
  %v945 = vpack.c.b16 %v882, %v882
  %v946 = vpack.c.b16 %v883, %v883
  %v947 = vpack.c.b16 %v884, %v884
  %v948 = vpack.c.b16 %v885, %v885
  %v949 = vpack.c.b16 %v886, %v886
  %v950 = vpack.c.b16 %v887, %v887
  %v951 = vpack.c.b16 %v888, %v888
  %v952 = vpack.c.b16 %v889, %v889
  %v953 = vpack.c.b16 %v890, %v890
  %v954 = vpack.c.b16 %v891, %v891
  %v955 = vpack.c.b16 %v892, %v892
  %v956 = vpack.c.b16 %v893, %v893
  %v957 = vpack.c.b16 %v894, %v894
  %v958 = vpack.c.b16 %v895, %v895
  %v959 = vpack.c.b16 %v896, %v896
  %v960 = vpack.c.b16 %v897, %v897
  %v961 = vpack.c.b16 %v898, %v898
  %v962 = vpack.c.b16 %v899, %v899
  %v963 = vpack.c.b16 %v900, %v900
  %v964 = vpack.c.b16 %v901, %v901
  %v965 = vpack.c.b16 %v902, %v902
  %v966 = vpack.c.b16 %v903, %v903
  %v967 = vpack.c.b16 %v904, %v904
  %v968 = vpack.c.b16 %v905, %v905
  %v969 = vpack.c.b16 %v906, %v906
  %v970 = vpack.c.b16 %v907, %v907
  %v971 = vpack.c.b16 %v908, %v908
  %v972 = vpack.c.b16 %v909, %v909
  %v973 = vpack.c.b16 %v910, %v910
  %v974 = vpack.c.b16 %v911, %v911
  %v975 = vpack.c.b16 %v912, %v912
  %v976 = vpack.c.b16 %v913, %v913
  %v977 = vpack.c.b16 %v914, %v914
  %v978 = vpack.c.b16 %v915, %v915
  %v979 = vpack.c.b16 %v916, %v916
  %v980 = vpack.c.b16 %v917, %v917
  %v981 = vpack.c.b16 %v918, %v918
  %v982 = vpack.c.b16 %v919, %v919
  %v983 = vpack.c.b16 %v920, %v920
  %v984 = vpack.c.b16 %v921, %v921
  %v985 = vpack.c.b16 %v922, %v922
  %v986 = vpack.c.b16 %v923, %v923
  %v987 = vpack.c.b16 %v924, %v924
  %vm1051 = vcmask 519168
  %1052 = vst.msk [vmem:[%s3] sm:$0xf] %vm1051, %v925
  %1053 = vst.msk [vmem:[%s3 + $0x4] sm:$0xf] %vm1051, %v926
  %1054 = vst.msk [vmem:[%s3 + $0x8] sm:$0xf] %vm1051, %v927
  %1055 = vst.msk [vmem:[%s3 + $0xc] sm:$0xf] %vm1051, %v928
  %1056 = vst.msk [vmem:[%s3 + $0x10] sm:$0xf] %vm1051, %v929
  %1057 = vst.msk [vmem:[%s3 + $0x14] sm:$0xf] %vm1051, %v930
  %1058 = vst.msk [vmem:[%s3 + $0x18] sm:$0xf] %vm1051, %v931
  %1059 = vst.msk [vmem:[%s3 + $0x1c] sm:$0xf] %vm1051, %v932
  %1060 = vst.msk [vmem:[%s3 + $0x20] sm:$0xf] %vm1051, %v933
  %1061 = vst.msk [vmem:[%s3 + $0x24] sm:$0xf] %vm1051, %v934
  %1062 = vst.msk [vmem:[%s3 + $0x28] sm:$0xf] %vm1051, %v935
  %1063 = vst.msk [vmem:[%s3 + $0x2c] sm:$0xf] %vm1051, %v936
  %1064 = vst.msk [vmem:[%s3 + $0x30] sm:$0xf] %vm1051, %v937
  %1065 = vst.msk [vmem:[%s3 + $0x34] sm:$0xf] %vm1051, %v938
  %1066 = vst.msk [vmem:[%s3 + $0x38] sm:$0xf] %vm1051, %v939
  %1067 = vst.msk [vmem:[%s3 + $0x3c] sm:$0xf] %vm1051, %v940
  %1068 = vst.msk [vmem:[%s3 + $0x40] sm:$0xf] %vm1051, %v941
  %1069 = vst.msk [vmem:[%s3 + $0x44] sm:$0xf] %vm1051, %v942
  %1070 = vst.msk [vmem:[%s3 + $0x48] sm:$0xf] %vm1051, %v943
  %1071 = vst.msk [vmem:[%s3 + $0x4c] sm:$0xf] %vm1051, %v944
  %1072 = vst.msk [vmem:[%s3 + $0x50] sm:$0xf] %vm1051, %v945
  %1073 = vst.msk [vmem:[%s3 + $0x54] sm:$0xf] %vm1051, %v946
  %1074 = vst.msk [vmem:[%s3 + $0x58] sm:$0xf] %vm1051, %v947
  %1075 = vst.msk [vmem:[%s3 + $0x5c] sm:$0xf] %vm1051, %v948
  %1076 = vst.msk [vmem:[%s3 + $0x60] sm:$0xf] %vm1051, %v949
  %1077 = vst.msk [vmem:[%s3 + $0x64] sm:$0xf] %vm1051, %v950
  %1078 = vst.msk [vmem:[%s3 + $0x68] sm:$0xf] %vm1051, %v951
  %1079 = vst.msk [vmem:[%s3 + $0x6c] sm:$0xf] %vm1051, %v952
  %1080 = vst.msk [vmem:[%s3 + $0x70] sm:$0xf] %vm1051, %v953
  %1081 = vst.msk [vmem:[%s3 + $0x74] sm:$0xf] %vm1051, %v954
  %1082 = vst.msk [vmem:[%s3 + $0x78] sm:$0xf] %vm1051, %v955
  %1083 = vst.msk [vmem:[%s3 + $0x7c] sm:$0xf] %vm1051, %v956
  %1084 = vst.msk [vmem:[%s3 + $0x80] sm:$0xf] %vm1051, %v957
  %1085 = vst.msk [vmem:[%s3 + $0x84] sm:$0xf] %vm1051, %v958
  %1086 = vst.msk [vmem:[%s3 + $0x88] sm:$0xf] %vm1051, %v959
  %1087 = vst.msk [vmem:[%s3 + $0x8c] sm:$0xf] %vm1051, %v960
  %1088 = vst.msk [vmem:[%s3 + $0x90] sm:$0xf] %vm1051, %v961
  %1089 = vst.msk [vmem:[%s3 + $0x94] sm:$0xf] %vm1051, %v962
  %1090 = vst.msk [vmem:[%s3 + $0x98] sm:$0xf] %vm1051, %v963
  %1091 = vst.msk [vmem:[%s3 + $0x9c] sm:$0xf] %vm1051, %v964
  %1092 = vst.msk [vmem:[%s3 + $0xa0] sm:$0xf] %vm1051, %v965
  %1093 = vst.msk [vmem:[%s3 + $0xa4] sm:$0xf] %vm1051, %v966
  %1094 = vst.msk [vmem:[%s3 + $0xa8] sm:$0xf] %vm1051, %v967
  %1095 = vst.msk [vmem:[%s3 + $0xac] sm:$0xf] %vm1051, %v968
  %1096 = vst.msk [vmem:[%s3 + $0xb0] sm:$0xf] %vm1051, %v969
  %1097 = vst.msk [vmem:[%s3 + $0xb4] sm:$0xf] %vm1051, %v970
  %1098 = vst.msk [vmem:[%s3 + $0xb8] sm:$0xf] %vm1051, %v971
  %1099 = vst.msk [vmem:[%s3 + $0xbc] sm:$0xf] %vm1051, %v972
  %1100 = vst.msk [vmem:[%s3 + $0xc0] sm:$0xf] %vm1051, %v973
  %1101 = vst.msk [vmem:[%s3 + $0xc4] sm:$0xf] %vm1051, %v974
  %1102 = vst.msk [vmem:[%s3 + $0xc8] sm:$0xf] %vm1051, %v975
  %1103 = vst.msk [vmem:[%s3 + $0xcc] sm:$0xf] %vm1051, %v976
  %1104 = vst.msk [vmem:[%s3 + $0xd0] sm:$0xf] %vm1051, %v977
  %1105 = vst.msk [vmem:[%s3 + $0xd4] sm:$0xf] %vm1051, %v978
  %1106 = vst.msk [vmem:[%s3 + $0xd8] sm:$0xf] %vm1051, %v979
  %1107 = vst.msk [vmem:[%s3 + $0xdc] sm:$0xf] %vm1051, %v980
  %1108 = vst.msk [vmem:[%s3 + $0xe0] sm:$0xf] %vm1051, %v981
  %1109 = vst.msk [vmem:[%s3 + $0xe4] sm:$0xf] %vm1051, %v982
  %1110 = vst.msk [vmem:[%s3 + $0xe8] sm:$0xf] %vm1051, %v983
  %1111 = vst.msk [vmem:[%s3 + $0xec] sm:$0xf] %vm1051, %v984
  %1112 = vst.msk [vmem:[%s3 + $0xf0] sm:$0xf] %vm1051, %v985
  %1113 = vst.msk [vmem:[%s3 + $0xf4] sm:$0xf] %vm1051, %v986
  %vm1114 = vcmask 517120
  %1115 = vst.msk [vmem:[%s3 + $0xf8] sm:$0x3] %vm1114, %v987
  // Predicated region
  $region14: #{simple_cnn_forward.4} parent=0 // pred_check
    _
  $region15: #{simple_cnn_forward.4} parent=0 // pred_check_branch
    %1117 = sbr.rel (0) target = $region17
  $region16: #{simple_cnn_forward.4} parent=0 // pred_region
    _
  $region17: #{simple_cnn_forward.4} parent=0 // pred_fallthru
    _
  // Predicated region
  $region18: #{simple_cnn_forward.4} parent=0 // pred_check
    _
  $region19: #{simple_cnn_forward.4} parent=0 // pred_check_branch
    %1119 = sbr.rel (0) target = $region21
  $region20: #{simple_cnn_forward.4} parent=0 // pred_region
    _
  $region21: #{simple_cnn_forward.4} parent=0 // pred_fallthru
    _

// kernel: simple_cnn_forward.5
$region0: #{simple_cnn_forward.5}
  #allocation0 [shape = 'u32[]', space=smem, size = 0x4, offset = 0x4, fixed_abs, tag = 'smem constant byte address 0x4 - core index']
  #allocation1 [shape = 'u32[144,128]{1,0:T(1,128)}', space=vmem, size = 0x12000, scoped, tag = 'internal scratch']
  #allocation2 [shape = 'f32[2,512]{1,0:T(2,128)}', space=vmem, size = 0x1000, scoped, tag = 'scratch operand']
  %s0 = inlined_call_operand.vmem [shape: bf16[5,2,3200], index: 0, kind: input, shape index: {}]
  %s1 = inlined_call_operand.hbm [shape: bf16[2,16000,512], index: 1, kind: input, shape index: {}]
  %s2 = inlined_call_operand.vmem [shape: f32[1,1024], index: 2, kind: input, shape index: {}]
  %s3 = inlined_call_operand.vmem [shape: f32[1024,3], index: 3, kind: input, shape index: {}]
  %s4 = inlined_call_operand.vmem [shape: f32[2,2,3], index: 4, kind: output, shape index: {}]
  %s5 = sld [smem:[#allocation0]]
  $region61: #{simple_cnn_forward.5} parent=0
    _
  %s7 = ssub.s32 1, %s5
  %s8 = scalar_select 0, %s7, %s5
  $region1: #{simple_cnn_forward.5} parent=0
    #allocation3 [shape = 'u8[6553600]{0}', space=vmem, size = 0x640000, scoped, tag = 'input window, operand 1']
    #allocation4 [shape = 's32[2]{0}', space=sflag, size = 0x8, scoped, tag = 'scoped memory for simple_cnn_forward.5']
    %9 = vsyncpa [#allocation4], 0
    %s10 = scalar_lea.sflag [#allocation4], 1
    %11 = vsyncpa %s10, 0
    loop: start=0, step=1, limit=12
    $region2: #{simple_cnn_forward.5} parent=1 // loop_pre_header
      _
    $region3: #{simple_cnn_forward.5} parent=1 // loop_header
      %s13 = sphi 0, %s17
      %p14 = scmp.ge.s32.totalorder %s13, 12
      %s20 = sphi 0, %s32
      %s21 = sphi 0, %s28
      %s22 = sphi 0, %s20
      %s23 = sphi 0, %s21
      %s24 = sphi 0, %s22
      %s25 = sphi 0, %s23
      %s33 = sphi 0, %s33
      %s35 = sphi 0, %s33
      %s36 = sphi 0, %s35
      %s50 = sphi 0, %s36
      %s58 = sphi 0, %s60
      %s61 = sphi 0, %s58
      %s62 = sphi 0, %s61
      %s78 = sphi 0, %s62
      %s84 = sphi 0, %s86
      %s87 = sphi 0, %s84
      %s88 = sphi 0, %s87
      %s104 = sphi 0, %s88
      %s110 = sphi 0, %s112
      %s113 = sphi 0, %s110
      %s114 = sphi 0, %s113
      %s130 = sphi 0, %s114
      %s136 = sphi 0, %s138
      %s139 = sphi 0, %s136
      %s140 = sphi 0, %s139
      %s156 = sphi 0, %s140
    $region4: #{simple_cnn_forward.5} parent=1 // loop_header_branch
      %16 = sbr.rel (%p14) target = $region8
    $region5: #{simple_cnn_forward.5} parent=1 // loop_body
      %s18 = ssub.s32 %s13, 1
      %s19 = ssub.s32 %s13, 2
      %s26 = sadd.s32 1, %s21
      %p27 = scmp.ge.s32.totalorder %s26, 5
      %s28 = scalar_select %p27, 0, %s26
      %s29 = sadd.s32 1, %s20
      %s30 = scalar_select %p27, %s29, %s20
      %p31 = scmp.ge.s32.totalorder %s30, 2
      %s32 = scalar_select %p31, 0, %s30
      %s34 = sadd.s32 %s33, 1
      %p37 = scmp.eq.s32.totalorder %s13, 9
      %p38 = scmp.ne.s32.totalorder %s33, %s35
      %p39 = scmp.eq.s32.totalorder %s13, 0
      %p40 = por %p38, %p39
      %p41 = scmp.ne.s32.totalorder %s33, %s35
      %p42 = scmp.eq.s32.totalorder %s18, 9
      %p43 = por %p41, %p42
      %p44 = scmp.ne.s32.totalorder %s35, %s36
      %p45 = scmp.eq.s32.totalorder %s18, 0
      %p46 = por %p44, %p45
      %p47 = scmp.ne.s32.totalorder %s35, %s36
      %p48 = scmp.eq.s32.totalorder %s19, 9
      %p49 = por %p47, %p48
      %p51 = scmp.ne.s32.totalorder %s36, %s50
      %p52 = scmp.eq.s32.totalorder %s19, 0
      %p53 = por %p51, %p52
      %s54 = ssub.s32 %s20, %s32
      %s55 = ssub.s32 %s21, %s28
      %s56 = sor.u32 %s54, %s55
      %p57 = scmp.eq.s32.totalorder %s56, 0
      %s59 = sadd.s32 %s58, 1
      %s60 = scalar_select %p57, %s58, %s59
      %p63 = pneg %p57
      %p64 = scmp.eq.s32.totalorder %s13, 9
      %p65 = por %p63, %p64
      %p66 = scmp.ne.s32.totalorder %s58, %s61
      %p67 = scmp.eq.s32.totalorder %s13, 0
      %p68 = por %p66, %p67
      %p69 = scmp.ne.s32.totalorder %s58, %s61
      %p70 = scmp.eq.s32.totalorder %s18, 9
      %p71 = por %p69, %p70
      %p72 = scmp.ne.s32.totalorder %s61, %s62
      %p73 = scmp.eq.s32.totalorder %s18, 0
      %p74 = por %p72, %p73
      %p75 = scmp.ne.s32.totalorder %s61, %s62
      %p76 = scmp.eq.s32.totalorder %s19, 9
      %p77 = por %p75, %p76
      %p79 = scmp.ne.s32.totalorder %s62, %s78
      %p80 = scmp.eq.s32.totalorder %s19, 0
      %p81 = por %p79, %p80
      %s82 = ssub.s32 %s20, %s32
      %p83 = scmp.eq.s32.totalorder %s82, 0
      %s85 = sadd.s32 %s84, 1
      %s86 = scalar_select %p83, %s84, %s85
      %p89 = pneg %p83
      %p90 = scmp.eq.s32.totalorder %s13, 9
      %p91 = por %p89, %p90
      %p92 = scmp.ne.s32.totalorder %s84, %s87
      %p93 = scmp.eq.s32.totalorder %s13, 0
      %p94 = por %p92, %p93
      %p95 = scmp.ne.s32.totalorder %s84, %s87
      %p96 = scmp.eq.s32.totalorder %s18, 9
      %p97 = por %p95, %p96
      %p98 = scmp.ne.s32.totalorder %s87, %s88
      %p99 = scmp.eq.s32.totalorder %s18, 0
      %p100 = por %p98, %p99
      %p101 = scmp.ne.s32.totalorder %s87, %s88
      %p102 = scmp.eq.s32.totalorder %s19, 9
      %p103 = por %p101, %p102
      %p105 = scmp.ne.s32.totalorder %s88, %s104
      %p106 = scmp.eq.s32.totalorder %s19, 0
      %p107 = por %p105, %p106
      %s108 = ssub.s32 %s20, %s32
      %p109 = scmp.eq.s32.totalorder %s108, 0
      %s111 = sadd.s32 %s110, 1
      %s112 = scalar_select %p109, %s110, %s111
      %p115 = pneg %p109
      %p116 = scmp.eq.s32.totalorder %s13, 9
      %p117 = por %p115, %p116
      %p118 = scmp.ne.s32.totalorder %s110, %s113
      %p119 = scmp.eq.s32.totalorder %s13, 0
      %p120 = por %p118, %p119
      %p121 = scmp.ne.s32.totalorder %s110, %s113
      %p122 = scmp.eq.s32.totalorder %s18, 9
      %p123 = por %p121, %p122
      %p124 = scmp.ne.s32.totalorder %s113, %s114
      %p125 = scmp.eq.s32.totalorder %s18, 0
      %p126 = por %p124, %p125
      %p127 = scmp.ne.s32.totalorder %s113, %s114
      %p128 = scmp.eq.s32.totalorder %s19, 9
      %p129 = por %p127, %p128
      %p131 = scmp.ne.s32.totalorder %s114, %s130
      %p132 = scmp.eq.s32.totalorder %s19, 0
      %p133 = por %p131, %p132
      %s134 = ssub.s32 %s20, %s32
      %p135 = scmp.eq.s32.totalorder %s134, 0
      %s137 = sadd.s32 %s136, 1
      %s138 = scalar_select %p135, %s136, %s137
      %p141 = pneg %p135
      %p142 = scmp.eq.s32.totalorder %s13, 9
      %p143 = por %p141, %p142
      %p144 = scmp.ne.s32.totalorder %s136, %s139
      %p145 = scmp.eq.s32.totalorder %s13, 0
      %p146 = por %p144, %p145
      %p147 = scmp.ne.s32.totalorder %s136, %s139
      %p148 = scmp.eq.s32.totalorder %s18, 9
      %p149 = por %p147, %p148
      %p150 = scmp.ne.s32.totalorder %s139, %s140
      %p151 = scmp.eq.s32.totalorder %s18, 0
      %p152 = por %p150, %p151
      %p153 = scmp.ne.s32.totalorder %s139, %s140
      %p154 = scmp.eq.s32.totalorder %s19, 9
      %p155 = por %p153, %p154
      %p157 = scmp.ne.s32.totalorder %s140, %s156
      %p158 = scmp.eq.s32.totalorder %s19, 0
      %p159 = por %p157, %p158
      %p160 = scmp.le.s32.totalorder 1, %s13
      %p161 = scmp.lt.s32.totalorder %s13, 11
      %p162 = pnand %p160, %p161
      %p163 = pneg %p162
      // Predicated region
      $region9: #{simple_cnn_forward.5} parent=5 // pred_check
        _
      $region10: #{simple_cnn_forward.5} parent=5 // pred_check_branch
        %165 = sbr.rel (%p162) target = $region12
      $region11: #{simple_cnn_forward.5} parent=5 // pred_region
        %s166 = ssub.s32 %s13, 1
        // Predicated region
        $region13: #{simple_cnn_forward.5} parent=11 // pred_check
          %p167 = pneg %p46
        $region14: #{simple_cnn_forward.5} parent=11 // pred_check_branch
          %169 = sbr.rel (%p167) target = $region16
        $region15: #{simple_cnn_forward.5} parent=11 // pred_region
          _
        $region16: #{simple_cnn_forward.5} parent=11 // pred_fallthru
          _
      $region12: #{simple_cnn_forward.5} parent=5 // pred_fallthru
        _
      %p170 = scmp.lt.s32.totalorder %s13, 10
      // Predicated region
      $region17: #{simple_cnn_forward.5} parent=5 // pred_check
        %p171 = pneg %p170
      $region18: #{simple_cnn_forward.5} parent=5 // pred_check_branch
        %173 = sbr.rel (%p171) target = $region20
      $region19: #{simple_cnn_forward.5} parent=5 // pred_region
        // Predicated region
        $region21: #{simple_cnn_forward.5} parent=19 // pred_check
          %p174 = pneg %p68
        $region22: #{simple_cnn_forward.5} parent=19 // pred_check_branch
          %176 = sbr.rel (%p174) target = $region24
        $region23: #{simple_cnn_forward.5} parent=19 // pred_region
          %s177 = sand.u32 %s58, 1
          %s178 = scalar_lea.sflag [#allocation4], %s177
          %s179 = sand.u32 %s58, 1
          %s180 = smul.addr %s179, 6400
          %s181 = scalar_lea.vmem [#allocation3], %s180
          %s182 = smul.u32 400, %s21
          %s184 = ssub.s32 102400, 102400
          %185 = vsyncadd %s178, %s184
          %s186 = smul.addr %s182, 4
          %s187 = smul.addr %s20, 8000
          %s188 = sadd.s32 %s186, %s187
          %s189 = smul.addr %s188, 64
          %s190 = scalar_lea.hbm %s1, %s189
          %s191 = sshll.u32 %s181, 4
          %s192 = int_to_ptr.vmem [resolvable:$true] %s191
          %197 = dma.hbm_to_vmem [thread:$0]  %s190, 102400, %s192, %s178, 256, 256, 16
        $region24: #{simple_cnn_forward.5} parent=19 // pred_fallthru
          _
        // Predicated region
        $region25: #{simple_cnn_forward.5} parent=19 // pred_check
          %p198 = pneg %p94
        $region26: #{simple_cnn_forward.5} parent=19 // pred_check_branch
          %200 = sbr.rel (%p198) target = $region28
        $region27: #{simple_cnn_forward.5} parent=19 // pred_region
          %s201 = smul.u32 4, %s20
          %p202 = scmp.lt.s32.totalorder %s201, 7
          %s203 = scalar_select %p202, %s201, 7
          %s204 = scalar_lea.vmem %s2, %s203
          %s205 = smul.u32 4, %s20
        $region28: #{simple_cnn_forward.5} parent=19 // pred_fallthru
          _
        // Predicated region
        $region29: #{simple_cnn_forward.5} parent=19 // pred_check
          %p206 = pneg %p120
        $region30: #{simple_cnn_forward.5} parent=19 // pred_check_branch
          %208 = sbr.rel (%p206) target = $region32
        $region31: #{simple_cnn_forward.5} parent=19 // pred_region
          %s209 = smul.u32 64, %s20
          %p210 = scmp.lt.s32.totalorder %s209, 127
          %s211 = scalar_select %p210, %s209, 127
          %s212 = smul.addr %s211, 8
          %s213 = scalar_lea.vmem %s3, %s212
          %s214 = smul.u32 64, %s20
        $region32: #{simple_cnn_forward.5} parent=19 // pred_fallthru
          _
      $region20: #{simple_cnn_forward.5} parent=5 // pred_fallthru
        _
      %p215 = scmp.le.s32.totalorder 1, %s13
      %p216 = scmp.lt.s32.totalorder %s13, 11
      %p217 = pnand %p215, %p216
      %p218 = pneg %p217
      // Predicated region
      $region33: #{simple_cnn_forward.5} parent=5 // pred_check
        _
      $region34: #{simple_cnn_forward.5} parent=5 // pred_check_branch
        %220 = sbr.rel (%p217) target = $region36
      $region35: #{simple_cnn_forward.5} parent=5 // pred_region
        %s221 = ssub.s32 %s13, 1
        %s222 = sand.u32 %s61, 1
        %s223 = scalar_lea.sflag [#allocation4], %s222
        %s224 = sand.u32 %s61, 1
        %s225 = smul.addr %s224, 6400
        %s226 = scalar_lea.vmem [#allocation3], %s225
        // Predicated region
        $region37: #{simple_cnn_forward.5} parent=35 // pred_check
          %p227 = pneg %p74
        $region38: #{simple_cnn_forward.5} parent=35 // pred_check_branch
          %229 = sbr.rel (%p227) target = $region40
        $region39: #{simple_cnn_forward.5} parent=35 // pred_region
          %230 = dma.done %s223, 102400
        $region40: #{simple_cnn_forward.5} parent=35 // pred_fallthru
          _
        %p231 = pneg %p46
        %p232 = pneg %p43
        %s233 = sand.u32 %s61, 1
        %s234 = scalar_lea.sflag [#allocation4], %s233
        %s235 = sand.u32 %s61, 1
        %s236 = smul.addr %s235, 6400
        %s237 = scalar_lea.vmem [#allocation3], %s236
        %p238 = pneg %p74
        %p239 = pneg %p71
        %s240 = smul.u32 4, %s22
        %p241 = scmp.lt.s32.totalorder %s240, 7
        %s242 = scalar_select %p241, %s240, 7
        %s243 = scalar_lea.vmem %s2, %s242
        %p244 = pneg %p100
        %p245 = pneg %p97
        %s246 = smul.u32 64, %s22
        %p247 = scmp.lt.s32.totalorder %s246, 127
        %s248 = scalar_select %p247, %s246, 127
        %s249 = smul.addr %s248, 8
        %s250 = scalar_lea.vmem %s3, %s249
        %p251 = pneg %p126
        %p252 = pneg %p123
        %p253 = pneg %p152
        %p254 = pneg %p149
        %p255 = scmp.lt.s32.totalorder %s22, 1
        %s256 = scalar_select %p255, %s22, 1
        %s257 = smul.addr %s256, 2
        %s258 = scalar_lea.vmem %s4, %s257
        %s259 = smul.u32 400, %s23
        %s260 = smul.u32 4, %s22
        %p261 = scmp.lt.s32.totalorder %s260, 7
        %s262 = scalar_select %p261, %s260, 7
        %s263 = scalar_lea.vmem %s2, %s262
        %s264 = smul.u32 4, %s22
        %s265 = smul.u32 64, %s22
        %p266 = scmp.lt.s32.totalorder %s265, 127
        %s267 = scalar_select %p266, %s265, 127
        %s268 = smul.addr %s267, 8
        %s269 = scalar_lea.vmem %s3, %s268
        %s270 = smul.u32 64, %s22
        %p271 = scmp.lt.s32.totalorder %s22, 1
        %s272 = scalar_select %p271, %s22, 1
        %s273 = smul.addr %s272, 2
        %s274 = scalar_lea.vmem %s4, %s273
        %p276 = scmp.eq.s32.totalorder %s23, 0
        // Predicated region
        $region41: #{simple_cnn_forward.5} parent=35 // pred_check
          %p277 = pneg %p276
        $region42: #{simple_cnn_forward.5} parent=35 // pred_check_branch
          %279 = sbr.rel (%p277) target = $region44
        $region43: #{simple_cnn_forward.5} parent=35 // pred_region
          %280 = vst [vmem:[#allocation2] sm:$0xff] 0.0
        $region44: #{simple_cnn_forward.5} parent=35 // pred_fallthru
          _
        %v281 = vld [vmem:[#allocation2] sm:$0xff]
        %s282 = smul.u32 %s23, 25
        %s283 = scalar_lea.vmem %s0, %s282
        %v284 = vld [vmem:[%s283] sm:$0xff]
        %v285 = vld [vmem:[%s283 + $0x8] sm:$0xff]
        %v286 = vld [vmem:[%s283 + $0x10] sm:$0xff]
        %v287 = vld [vmem:[%s283 + $0x18] sm:$0x1]
        %v288 = vld [vmem:[%s226] sm:$0xff]
        %v289 = vld [vmem:[%s226 + $0x8] sm:$0xff]
        %v290 = vld [vmem:[%s226 + $0x10] sm:$0xff]
        %v291 = vld [vmem:[%s226 + $0x18] sm:$0xff]
        %v292 = vld [vmem:[%s226 + $0x20] sm:$0xff]
        %v293 = vld [vmem:[%s226 + $0x28] sm:$0xff]
        %v294 = vld [vmem:[%s226 + $0x30] sm:$0xff]
        %v295 = vld [vmem:[%s226 + $0x38] sm:$0xff]
        %v296 = vld [vmem:[%s226 + $0x40] sm:$0xff]
        %v297 = vld [vmem:[%s226 + $0x48] sm:$0xff]
        %v298 = vld [vmem:[%s226 + $0x50] sm:$0xff]
        %v299 = vld [vmem:[%s226 + $0x58] sm:$0xff]
        %v300 = vld [vmem:[%s226 + $0x60] sm:$0xff]
        %v301 = vld [vmem:[%s226 + $0x68] sm:$0xff]
        %v302 = vld [vmem:[%s226 + $0x70] sm:$0xff]
        %v303 = vld [vmem:[%s226 + $0x78] sm:$0xff]
        %v304 = vld [vmem:[%s226 + $0x80] sm:$0xff]
        %v305 = vld [vmem:[%s226 + $0x88] sm:$0xff]
        %v306 = vld [vmem:[%s226 + $0x90] sm:$0xff]
        %v307 = vld [vmem:[%s226 + $0x98] sm:$0xff]
        %v308 = vld [vmem:[%s226 + $0xa0] sm:$0xff]
        %v309 = vld [vmem:[%s226 + $0xa8] sm:$0xff]
        %v310 = vld [vmem:[%s226 + $0xb0] sm:$0xff]
        %v311 = vld [vmem:[%s226 + $0xb8] sm:$0xff]
        %v312 = vld [vmem:[%s226 + $0xc0] sm:$0xff]
        %v313 = vld [vmem:[%s226 + $0xc8] sm:$0xff]
        %v314 = vld [vmem:[%s226 + $0xd0] sm:$0xff]
        %v315 = vld [vmem:[%s226 + $0xd8] sm:$0xff]
        %v316 = vld [vmem:[%s226 + $0xe0] sm:$0xff]
        %v317 = vld [vmem:[%s226 + $0xe8] sm:$0xff]
        %v318 = vld [vmem:[%s226 + $0xf0] sm:$0xff]
        %v319 = vld [vmem:[%s226 + $0xf8] sm:$0xff]
        %v320 = vld [vmem:[%s226 + $0x100] sm:$0xff]
        %v321 = vld [vmem:[%s226 + $0x108] sm:$0xff]
        %v322 = vld [vmem:[%s226 + $0x110] sm:$0xff]
        %v323 = vld [vmem:[%s226 + $0x118] sm:$0xff]
        %v324 = vld [vmem:[%s226 + $0x120] sm:$0xff]
        %v325 = vld [vmem:[%s226 + $0x128] sm:$0xff]
        %v326 = vld [vmem:[%s226 + $0x130] sm:$0xff]
        %v327 = vld [vmem:[%s226 + $0x138] sm:$0xff]
        %v328 = vld [vmem:[%s226 + $0x140] sm:$0xff]
        %v329 = vld [vmem:[%s226 + $0x148] sm:$0xff]
        %v330 = vld [vmem:[%s226 + $0x150] sm:$0xff]
        %v331 = vld [vmem:[%s226 + $0x158] sm:$0xff]
        %v332 = vld [vmem:[%s226 + $0x160] sm:$0xff]
        %v333 = vld [vmem:[%s226 + $0x168] sm:$0xff]
        %v334 = vld [vmem:[%s226 + $0x170] sm:$0xff]
        %v335 = vld [vmem:[%s226 + $0x178] sm:$0xff]
        %v336 = vld [vmem:[%s226 + $0x180] sm:$0xff]
        %v337 = vld [vmem:[%s226 + $0x188] sm:$0xff]
        %v338 = vld [vmem:[%s226 + $0x190] sm:$0xff]
        %v339 = vld [vmem:[%s226 + $0x198] sm:$0xff]
        %v340 = vld [vmem:[%s226 + $0x1a0] sm:$0xff]
        %v341 = vld [vmem:[%s226 + $0x1a8] sm:$0xff]
        %v342 = vld [vmem:[%s226 + $0x1b0] sm:$0xff]
        %v343 = vld [vmem:[%s226 + $0x1b8] sm:$0xff]
        %v344 = vld [vmem:[%s226 + $0x1c0] sm:$0xff]
        %v345 = vld [vmem:[%s226 + $0x1c8] sm:$0xff]
        %v346 = vld [vmem:[%s226 + $0x1d0] sm:$0xff]
        %v347 = vld [vmem:[%s226 + $0x1d8] sm:$0xff]
        %v348 = vld [vmem:[%s226 + $0x1e0] sm:$0xff]
        %v349 = vld [vmem:[%s226 + $0x1e8] sm:$0xff]
        %v350 = vld [vmem:[%s226 + $0x1f0] sm:$0xff]
        %v351 = vld [vmem:[%s226 + $0x1f8] sm:$0xff]
        %v352 = vld [vmem:[%s226 + $0x200] sm:$0xff]
        %v353 = vld [vmem:[%s226 + $0x208] sm:$0xff]
        %v354 = vld [vmem:[%s226 + $0x210] sm:$0xff]
        %v355 = vld [vmem:[%s226 + $0x218] sm:$0xff]
        %v356 = vld [vmem:[%s226 + $0x220] sm:$0xff]
        %v357 = vld [vmem:[%s226 + $0x228] sm:$0xff]
        %v358 = vld [vmem:[%s226 + $0x230] sm:$0xff]
        %v359 = vld [vmem:[%s226 + $0x238] sm:$0xff]
        %v360 = vld [vmem:[%s226 + $0x240] sm:$0xff]
        %v361 = vld [vmem:[%s226 + $0x248] sm:$0xff]
        %v362 = vld [vmem:[%s226 + $0x250] sm:$0xff]
        %v363 = vld [vmem:[%s226 + $0x258] sm:$0xff]
        %v364 = vld [vmem:[%s226 + $0x260] sm:$0xff]
        %v365 = vld [vmem:[%s226 + $0x268] sm:$0xff]
        %v366 = vld [vmem:[%s226 + $0x270] sm:$0xff]
        %v367 = vld [vmem:[%s226 + $0x278] sm:$0xff]
        %v368 = vld [vmem:[%s226 + $0x280] sm:$0xff]
        %v369 = vld [vmem:[%s226 + $0x288] sm:$0xff]
        %v370 = vld [vmem:[%s226 + $0x290] sm:$0xff]
        %v371 = vld [vmem:[%s226 + $0x298] sm:$0xff]
        %v372 = vld [vmem:[%s226 + $0x2a0] sm:$0xff]
        %v373 = vld [vmem:[%s226 + $0x2a8] sm:$0xff]
        %v374 = vld [vmem:[%s226 + $0x2b0] sm:$0xff]
        %v375 = vld [vmem:[%s226 + $0x2b8] sm:$0xff]
        %v376 = vld [vmem:[%s226 + $0x2c0] sm:$0xff]
        %v377 = vld [vmem:[%s226 + $0x2c8] sm:$0xff]
        %v378 = vld [vmem:[%s226 + $0x2d0] sm:$0xff]
        %v379 = vld [vmem:[%s226 + $0x2d8] sm:$0xff]
        %v380 = vld [vmem:[%s226 + $0x2e0] sm:$0xff]
        %v381 = vld [vmem:[%s226 + $0x2e8] sm:$0xff]
        %v382 = vld [vmem:[%s226 + $0x2f0] sm:$0xff]
        %v383 = vld [vmem:[%s226 + $0x2f8] sm:$0xff]
        %v384 = vld [vmem:[%s226 + $0x300] sm:$0xff]
        %v385 = vld [vmem:[%s226 + $0x308] sm:$0xff]
        %v386 = vld [vmem:[%s226 + $0x310] sm:$0xff]
        %v387 = vld [vmem:[%s226 + $0x318] sm:$0xff]
        %v388 = vld [vmem:[%s226 + $0x320] sm:$0xff]
        %v389 = vld [vmem:[%s226 + $0x328] sm:$0xff]
        %v390 = vld [vmem:[%s226 + $0x330] sm:$0xff]
        %v391 = vld [vmem:[%s226 + $0x338] sm:$0xff]
        %v392 = vld [vmem:[%s226 + $0x340] sm:$0xff]
        %v393 = vld [vmem:[%s226 + $0x348] sm:$0xff]
        %v394 = vld [vmem:[%s226 + $0x350] sm:$0xff]
        %v395 = vld [vmem:[%s226 + $0x358] sm:$0xff]
        %v396 = vld [vmem:[%s226 + $0x360] sm:$0xff]
        %v397 = vld [vmem:[%s226 + $0x368] sm:$0xff]
        %v398 = vld [vmem:[%s226 + $0x370] sm:$0xff]
        %v399 = vld [vmem:[%s226 + $0x378] sm:$0xff]
        %v400 = vld [vmem:[%s226 + $0x380] sm:$0xff]
        %v401 = vld [vmem:[%s226 + $0x388] sm:$0xff]
        %v402 = vld [vmem:[%s226 + $0x390] sm:$0xff]
        %v403 = vld [vmem:[%s226 + $0x398] sm:$0xff]
        %v404 = vld [vmem:[%s226 + $0x3a0] sm:$0xff]
        %v405 = vld [vmem:[%s226 + $0x3a8] sm:$0xff]
        %v406 = vld [vmem:[%s226 + $0x3b0] sm:$0xff]
        %v407 = vld [vmem:[%s226 + $0x3b8] sm:$0xff]
        %v408 = vld [vmem:[%s226 + $0x3c0] sm:$0xff]
        %v409 = vld [vmem:[%s226 + $0x3c8] sm:$0xff]
        %v410 = vld [vmem:[%s226 + $0x3d0] sm:$0xff]
        %v411 = vld [vmem:[%s226 + $0x3d8] sm:$0xff]
        %v412 = vld [vmem:[%s226 + $0x3e0] sm:$0xff]
        %v413 = vld [vmem:[%s226 + $0x3e8] sm:$0xff]
        %v414 = vld [vmem:[%s226 + $0x3f0] sm:$0xff]
        %v415 = vld [vmem:[%s226 + $0x3f8] sm:$0xff]
        %v416 = vld [vmem:[%s226 + $0x400] sm:$0xff]
        %v417 = vld [vmem:[%s226 + $0x408] sm:$0xff]
        %v418 = vld [vmem:[%s226 + $0x410] sm:$0xff]
        %v419 = vld [vmem:[%s226 + $0x418] sm:$0xff]
        %v420 = vld [vmem:[%s226 + $0x420] sm:$0xff]
        %v421 = vld [vmem:[%s226 + $0x428] sm:$0xff]
        %v422 = vld [vmem:[%s226 + $0x430] sm:$0xff]
        %v423 = vld [vmem:[%s226 + $0x438] sm:$0xff]
        %v424 = vld [vmem:[%s226 + $0x440] sm:$0xff]
        %v425 = vld [vmem:[%s226 + $0x448] sm:$0xff]
        %v426 = vld [vmem:[%s226 + $0x450] sm:$0xff]
        %v427 = vld [vmem:[%s226 + $0x458] sm:$0xff]
        %v428 = vld [vmem:[%s226 + $0x460] sm:$0xff]
        %v429 = vld [vmem:[%s226 + $0x468] sm:$0xff]
        %v430 = vld [vmem:[%s226 + $0x470] sm:$0xff]
        %v431 = vld [vmem:[%s226 + $0x478] sm:$0xff]
        %v432 = vld [vmem:[%s226 + $0x480] sm:$0xff]
        %v433 = vld [vmem:[%s226 + $0x488] sm:$0xff]
        %v434 = vld [vmem:[%s226 + $0x490] sm:$0xff]
        %v435 = vld [vmem:[%s226 + $0x498] sm:$0xff]
        %v436 = vld [vmem:[%s226 + $0x4a0] sm:$0xff]
        %v437 = vld [vmem:[%s226 + $0x4a8] sm:$0xff]
        %v438 = vld [vmem:[%s226 + $0x4b0] sm:$0xff]
        %v439 = vld [vmem:[%s226 + $0x4b8] sm:$0xff]
        %v440 = vld [vmem:[%s226 + $0x4c0] sm:$0xff]
        %v441 = vld [vmem:[%s226 + $0x4c8] sm:$0xff]
        %v442 = vld [vmem:[%s226 + $0x4d0] sm:$0xff]
        %v443 = vld [vmem:[%s226 + $0x4d8] sm:$0xff]
        %v444 = vld [vmem:[%s226 + $0x4e0] sm:$0xff]
        %v445 = vld [vmem:[%s226 + $0x4e8] sm:$0xff]
        %v446 = vld [vmem:[%s226 + $0x4f0] sm:$0xff]
        %v447 = vld [vmem:[%s226 + $0x4f8] sm:$0xff]
        %v448 = vld [vmem:[%s226 + $0x500] sm:$0xff]
        %v449 = vld [vmem:[%s226 + $0x508] sm:$0xff]
        %v450 = vld [vmem:[%s226 + $0x510] sm:$0xff]
        %v451 = vld [vmem:[%s226 + $0x518] sm:$0xff]
        %v452 = vld [vmem:[%s226 + $0x520] sm:$0xff]
        %v453 = vld [vmem:[%s226 + $0x528] sm:$0xff]
        %v454 = vld [vmem:[%s226 + $0x530] sm:$0xff]
        %v455 = vld [vmem:[%s226 + $0x538] sm:$0xff]
        %v456 = vld [vmem:[%s226 + $0x540] sm:$0xff]
        %v457 = vld [vmem:[%s226 + $0x548] sm:$0xff]
        %v458 = vld [vmem:[%s226 + $0x550] sm:$0xff]
        %v459 = vld [vmem:[%s226 + $0x558] sm:$0xff]
        %v460 = vld [vmem:[%s226 + $0x560] sm:$0xff]
        %v461 = vld [vmem:[%s226 + $0x568] sm:$0xff]
        %v462 = vld [vmem:[%s226 + $0x570] sm:$0xff]
        %v463 = vld [vmem:[%s226 + $0x578] sm:$0xff]
        %v464 = vld [vmem:[%s226 + $0x580] sm:$0xff]
        %v465 = vld [vmem:[%s226 + $0x588] sm:$0xff]
        %v466 = vld [vmem:[%s226 + $0x590] sm:$0xff]
        %v467 = vld [vmem:[%s226 + $0x598] sm:$0xff]
        %v468 = vld [vmem:[%s226 + $0x5a0] sm:$0xff]
        %v469 = vld [vmem:[%s226 + $0x5a8] sm:$0xff]
        %v470 = vld [vmem:[%s226 + $0x5b0] sm:$0xff]
        %v471 = vld [vmem:[%s226 + $0x5b8] sm:$0xff]
        %v472 = vld [vmem:[%s226 + $0x5c0] sm:$0xff]
        %v473 = vld [vmem:[%s226 + $0x5c8] sm:$0xff]
        %v474 = vld [vmem:[%s226 + $0x5d0] sm:$0xff]
        %v475 = vld [vmem:[%s226 + $0x5d8] sm:$0xff]
        %v476 = vld [vmem:[%s226 + $0x5e0] sm:$0xff]
        %v477 = vld [vmem:[%s226 + $0x5e8] sm:$0xff]
        %v478 = vld [vmem:[%s226 + $0x5f0] sm:$0xff]
        %v479 = vld [vmem:[%s226 + $0x5f8] sm:$0xff]
        %v480 = vld [vmem:[%s226 + $0x600] sm:$0xff]
        %v481 = vld [vmem:[%s226 + $0x608] sm:$0xff]
        %v482 = vld [vmem:[%s226 + $0x610] sm:$0xff]
        %v483 = vld [vmem:[%s226 + $0x618] sm:$0xff]
        %v484 = vld [vmem:[%s226 + $0x620] sm:$0xff]
        %v485 = vld [vmem:[%s226 + $0x628] sm:$0xff]
        %v486 = vld [vmem:[%s226 + $0x630] sm:$0xff]
        %v487 = vld [vmem:[%s226 + $0x638] sm:$0xff]
        %v488 = vld [vmem:[%s226 + $0x640] sm:$0xff]
        %v489 = vld [vmem:[%s226 + $0x648] sm:$0xff]
        %v490 = vld [vmem:[%s226 + $0x650] sm:$0xff]
        %v491 = vld [vmem:[%s226 + $0x658] sm:$0xff]
        %v492 = vld [vmem:[%s226 + $0x660] sm:$0xff]
        %v493 = vld [vmem:[%s226 + $0x668] sm:$0xff]
        %v494 = vld [vmem:[%s226 + $0x670] sm:$0xff]
        %v495 = vld [vmem:[%s226 + $0x678] sm:$0xff]
        %v496 = vld [vmem:[%s226 + $0x680] sm:$0xff]
        %v497 = vld [vmem:[%s226 + $0x688] sm:$0xff]
        %v498 = vld [vmem:[%s226 + $0x690] sm:$0xff]
        %v499 = vld [vmem:[%s226 + $0x698] sm:$0xff]
        %v500 = vld [vmem:[%s226 + $0x6a0] sm:$0xff]
        %v501 = vld [vmem:[%s226 + $0x6a8] sm:$0xff]
        %v502 = vld [vmem:[%s226 + $0x6b0] sm:$0xff]
        %v503 = vld [vmem:[%s226 + $0x6b8] sm:$0xff]
        %v504 = vld [vmem:[%s226 + $0x6c0] sm:$0xff]
        %v505 = vld [vmem:[%s226 + $0x6c8] sm:$0xff]
        %v506 = vld [vmem:[%s226 + $0x6d0] sm:$0xff]
        %v507 = vld [vmem:[%s226 + $0x6d8] sm:$0xff]
        %v508 = vld [vmem:[%s226 + $0x6e0] sm:$0xff]
        %v509 = vld [vmem:[%s226 + $0x6e8] sm:$0xff]
        %v510 = vld [vmem:[%s226 + $0x6f0] sm:$0xff]
        %v511 = vld [vmem:[%s226 + $0x6f8] sm:$0xff]
        %v512 = vld [vmem:[%s226 + $0x700] sm:$0xff]
        %v513 = vld [vmem:[%s226 + $0x708] sm:$0xff]
        %v514 = vld [vmem:[%s226 + $0x710] sm:$0xff]
        %v515 = vld [vmem:[%s226 + $0x718] sm:$0xff]
        %v516 = vld [vmem:[%s226 + $0x720] sm:$0xff]
        %v517 = vld [vmem:[%s226 + $0x728] sm:$0xff]
        %v518 = vld [vmem:[%s226 + $0x730] sm:$0xff]
        %v519 = vld [vmem:[%s226 + $0x738] sm:$0xff]
        %v520 = vld [vmem:[%s226 + $0x740] sm:$0xff]
        %v521 = vld [vmem:[%s226 + $0x748] sm:$0xff]
        %v522 = vld [vmem:[%s226 + $0x750] sm:$0xff]
        %v523 = vld [vmem:[%s226 + $0x758] sm:$0xff]
        %v524 = vld [vmem:[%s226 + $0x760] sm:$0xff]
        %v525 = vld [vmem:[%s226 + $0x768] sm:$0xff]
        %v526 = vld [vmem:[%s226 + $0x770] sm:$0xff]
        %v527 = vld [vmem:[%s226 + $0x778] sm:$0xff]
        %v528 = vld [vmem:[%s226 + $0x780] sm:$0xff]
        %v529 = vld [vmem:[%s226 + $0x788] sm:$0xff]
        %v530 = vld [vmem:[%s226 + $0x790] sm:$0xff]
        %v531 = vld [vmem:[%s226 + $0x798] sm:$0xff]
        %v532 = vld [vmem:[%s226 + $0x7a0] sm:$0xff]
        %v533 = vld [vmem:[%s226 + $0x7a8] sm:$0xff]
        %v534 = vld [vmem:[%s226 + $0x7b0] sm:$0xff]
        %v535 = vld [vmem:[%s226 + $0x7b8] sm:$0xff]
        %v536 = vld [vmem:[%s226 + $0x7c0] sm:$0xff]
        %v537 = vld [vmem:[%s226 + $0x7c8] sm:$0xff]
        %v538 = vld [vmem:[%s226 + $0x7d0] sm:$0xff]
        %v539 = vld [vmem:[%s226 + $0x7d8] sm:$0xff]
        %v540 = vld [vmem:[%s226 + $0x7e0] sm:$0xff]
        %v541 = vld [vmem:[%s226 + $0x7e8] sm:$0xff]
        %v542 = vld [vmem:[%s226 + $0x7f0] sm:$0xff]
        %v543 = vld [vmem:[%s226 + $0x7f8] sm:$0xff]
        %v544 = vld [vmem:[%s226 + $0x800] sm:$0xff]
        %v545 = vld [vmem:[%s226 + $0x808] sm:$0xff]
        %v546 = vld [vmem:[%s226 + $0x810] sm:$0xff]
        %v547 = vld [vmem:[%s226 + $0x818] sm:$0xff]
        %v548 = vld [vmem:[%s226 + $0x820] sm:$0xff]
        %v549 = vld [vmem:[%s226 + $0x828] sm:$0xff]
        %v550 = vld [vmem:[%s226 + $0x830] sm:$0xff]
        %v551 = vld [vmem:[%s226 + $0x838] sm:$0xff]
        %v552 = vld [vmem:[%s226 + $0x840] sm:$0xff]
        %v553 = vld [vmem:[%s226 + $0x848] sm:$0xff]
        %v554 = vld [vmem:[%s226 + $0x850] sm:$0xff]
        %v555 = vld [vmem:[%s226 + $0x858] sm:$0xff]
        %v556 = vld [vmem:[%s226 + $0x860] sm:$0xff]
        %v557 = vld [vmem:[%s226 + $0x868] sm:$0xff]
        %v558 = vld [vmem:[%s226 + $0x870] sm:$0xff]
        %v559 = vld [vmem:[%s226 + $0x878] sm:$0xff]
        %v560 = vld [vmem:[%s226 + $0x880] sm:$0xff]
        %v561 = vld [vmem:[%s226 + $0x888] sm:$0xff]
        %v562 = vld [vmem:[%s226 + $0x890] sm:$0xff]
        %v563 = vld [vmem:[%s226 + $0x898] sm:$0xff]
        %v564 = vld [vmem:[%s226 + $0x8a0] sm:$0xff]
        %v565 = vld [vmem:[%s226 + $0x8a8] sm:$0xff]
        %v566 = vld [vmem:[%s226 + $0x8b0] sm:$0xff]
        %v567 = vld [vmem:[%s226 + $0x8b8] sm:$0xff]
        %v568 = vld [vmem:[%s226 + $0x8c0] sm:$0xff]
        %v569 = vld [vmem:[%s226 + $0x8c8] sm:$0xff]
        %v570 = vld [vmem:[%s226 + $0x8d0] sm:$0xff]
        %v571 = vld [vmem:[%s226 + $0x8d8] sm:$0xff]
        %v572 = vld [vmem:[%s226 + $0x8e0] sm:$0xff]
        %v573 = vld [vmem:[%s226 + $0x8e8] sm:$0xff]
        %v574 = vld [vmem:[%s226 + $0x8f0] sm:$0xff]
        %v575 = vld [vmem:[%s226 + $0x8f8] sm:$0xff]
        %v576 = vld [vmem:[%s226 + $0x900] sm:$0xff]
        %v577 = vld [vmem:[%s226 + $0x908] sm:$0xff]
        %v578 = vld [vmem:[%s226 + $0x910] sm:$0xff]
        %v579 = vld [vmem:[%s226 + $0x918] sm:$0xff]
        %v580 = vld [vmem:[%s226 + $0x920] sm:$0xff]
        %v581 = vld [vmem:[%s226 + $0x928] sm:$0xff]
        %v582 = vld [vmem:[%s226 + $0x930] sm:$0xff]
        %v583 = vld [vmem:[%s226 + $0x938] sm:$0xff]
        %v584 = vld [vmem:[%s226 + $0x940] sm:$0xff]
        %v585 = vld [vmem:[%s226 + $0x948] sm:$0xff]
        %v586 = vld [vmem:[%s226 + $0x950] sm:$0xff]
        %v587 = vld [vmem:[%s226 + $0x958] sm:$0xff]
        %v588 = vld [vmem:[%s226 + $0x960] sm:$0xff]
        %v589 = vld [vmem:[%s226 + $0x968] sm:$0xff]
        %v590 = vld [vmem:[%s226 + $0x970] sm:$0xff]
        %v591 = vld [vmem:[%s226 + $0x978] sm:$0xff]
        %v592 = vld [vmem:[%s226 + $0x980] sm:$0xff]
        %v593 = vld [vmem:[%s226 + $0x988] sm:$0xff]
        %v594 = vld [vmem:[%s226 + $0x990] sm:$0xff]
        %v595 = vld [vmem:[%s226 + $0x998] sm:$0xff]
        %v596 = vld [vmem:[%s226 + $0x9a0] sm:$0xff]
        %v597 = vld [vmem:[%s226 + $0x9a8] sm:$0xff]
        %v598 = vld [vmem:[%s226 + $0x9b0] sm:$0xff]
        %v599 = vld [vmem:[%s226 + $0x9b8] sm:$0xff]
        %v600 = vld [vmem:[%s226 + $0x9c0] sm:$0xff]
        %v601 = vld [vmem:[%s226 + $0x9c8] sm:$0xff]
        %v602 = vld [vmem:[%s226 + $0x9d0] sm:$0xff]
        %v603 = vld [vmem:[%s226 + $0x9d8] sm:$0xff]
        %v604 = vld [vmem:[%s226 + $0x9e0] sm:$0xff]
        %v605 = vld [vmem:[%s226 + $0x9e8] sm:$0xff]
        %v606 = vld [vmem:[%s226 + $0x9f0] sm:$0xff]
        %v607 = vld [vmem:[%s226 + $0x9f8] sm:$0xff]
        %v608 = vld [vmem:[%s226 + $0xa00] sm:$0xff]
        %v609 = vld [vmem:[%s226 + $0xa08] sm:$0xff]
        %v610 = vld [vmem:[%s226 + $0xa10] sm:$0xff]
        %v611 = vld [vmem:[%s226 + $0xa18] sm:$0xff]
        %v612 = vld [vmem:[%s226 + $0xa20] sm:$0xff]
        %v613 = vld [vmem:[%s226 + $0xa28] sm:$0xff]
        %v614 = vld [vmem:[%s226 + $0xa30] sm:$0xff]
        %v615 = vld [vmem:[%s226 + $0xa38] sm:$0xff]
        %v616 = vld [vmem:[%s226 + $0xa40] sm:$0xff]
        %v617 = vld [vmem:[%s226 + $0xa48] sm:$0xff]
        %v618 = vld [vmem:[%s226 + $0xa50] sm:$0xff]
        %v619 = vld [vmem:[%s226 + $0xa58] sm:$0xff]
        %v620 = vld [vmem:[%s226 + $0xa60] sm:$0xff]
        %v621 = vld [vmem:[%s226 + $0xa68] sm:$0xff]
        %v622 = vld [vmem:[%s226 + $0xa70] sm:$0xff]
        %v623 = vld [vmem:[%s226 + $0xa78] sm:$0xff]
        %v624 = vld [vmem:[%s226 + $0xa80] sm:$0xff]
        %v625 = vld [vmem:[%s226 + $0xa88] sm:$0xff]
        %v626 = vld [vmem:[%s226 + $0xa90] sm:$0xff]
        %v627 = vld [vmem:[%s226 + $0xa98] sm:$0xff]
        %v628 = vld [vmem:[%s226 + $0xaa0] sm:$0xff]
        %v629 = vld [vmem:[%s226 + $0xaa8] sm:$0xff]
        %v630 = vld [vmem:[%s226 + $0xab0] sm:$0xff]
        %v631 = vld [vmem:[%s226 + $0xab8] sm:$0xff]
        %v632 = vld [vmem:[%s226 + $0xac0] sm:$0xff]
        %v633 = vld [vmem:[%s226 + $0xac8] sm:$0xff]
        %v634 = vld [vmem:[%s226 + $0xad0] sm:$0xff]
        %v635 = vld [vmem:[%s226 + $0xad8] sm:$0xff]
        %v636 = vld [vmem:[%s226 + $0xae0] sm:$0xff]
        %v637 = vld [vmem:[%s226 + $0xae8] sm:$0xff]
        %v638 = vld [vmem:[%s226 + $0xaf0] sm:$0xff]
        %v639 = vld [vmem:[%s226 + $0xaf8] sm:$0xff]
        %v640 = vld [vmem:[%s226 + $0xb00] sm:$0xff]
        %v641 = vld [vmem:[%s226 + $0xb08] sm:$0xff]
        %v642 = vld [vmem:[%s226 + $0xb10] sm:$0xff]
        %v643 = vld [vmem:[%s226 + $0xb18] sm:$0xff]
        %v644 = vld [vmem:[%s226 + $0xb20] sm:$0xff]
        %v645 = vld [vmem:[%s226 + $0xb28] sm:$0xff]
        %v646 = vld [vmem:[%s226 + $0xb30] sm:$0xff]
        %v647 = vld [vmem:[%s226 + $0xb38] sm:$0xff]
        %v648 = vld [vmem:[%s226 + $0xb40] sm:$0xff]
        %v649 = vld [vmem:[%s226 + $0xb48] sm:$0xff]
        %v650 = vld [vmem:[%s226 + $0xb50] sm:$0xff]
        %v651 = vld [vmem:[%s226 + $0xb58] sm:$0xff]
        %v652 = vld [vmem:[%s226 + $0xb60] sm:$0xff]
        %v653 = vld [vmem:[%s226 + $0xb68] sm:$0xff]
        %v654 = vld [vmem:[%s226 + $0xb70] sm:$0xff]
        %v655 = vld [vmem:[%s226 + $0xb78] sm:$0xff]
        %v656 = vld [vmem:[%s226 + $0xb80] sm:$0xff]
        %v657 = vld [vmem:[%s226 + $0xb88] sm:$0xff]
        %v658 = vld [vmem:[%s226 + $0xb90] sm:$0xff]
        %v659 = vld [vmem:[%s226 + $0xb98] sm:$0xff]
        %v660 = vld [vmem:[%s226 + $0xba0] sm:$0xff]
        %v661 = vld [vmem:[%s226 + $0xba8] sm:$0xff]
        %v662 = vld [vmem:[%s226 + $0xbb0] sm:$0xff]
        %v663 = vld [vmem:[%s226 + $0xbb8] sm:$0xff]
        %v664 = vld [vmem:[%s226 + $0xbc0] sm:$0xff]
        %v665 = vld [vmem:[%s226 + $0xbc8] sm:$0xff]
        %v666 = vld [vmem:[%s226 + $0xbd0] sm:$0xff]
        %v667 = vld [vmem:[%s226 + $0xbd8] sm:$0xff]
        %v668 = vld [vmem:[%s226 + $0xbe0] sm:$0xff]
        %v669 = vld [vmem:[%s226 + $0xbe8] sm:$0xff]
        %v670 = vld [vmem:[%s226 + $0xbf0] sm:$0xff]
        %v671 = vld [vmem:[%s226 + $0xbf8] sm:$0xff]
        %v672 = vld [vmem:[%s226 + $0xc00] sm:$0xff]
        %v673 = vld [vmem:[%s226 + $0xc08] sm:$0xff]
        %v674 = vld [vmem:[%s226 + $0xc10] sm:$0xff]
        %v675 = vld [vmem:[%s226 + $0xc18] sm:$0xff]
        %v676 = vld [vmem:[%s226 + $0xc20] sm:$0xff]
        %v677 = vld [vmem:[%s226 + $0xc28] sm:$0xff]
        %v678 = vld [vmem:[%s226 + $0xc30] sm:$0xff]
        %v679 = vld [vmem:[%s226 + $0xc38] sm:$0xff]
        %v680 = vld [vmem:[%s226 + $0xc40] sm:$0xff]
        %v681 = vld [vmem:[%s226 + $0xc48] sm:$0xff]
        %v682 = vld [vmem:[%s226 + $0xc50] sm:$0xff]
        %v683 = vld [vmem:[%s226 + $0xc58] sm:$0xff]
        %v684 = vld [vmem:[%s226 + $0xc60] sm:$0xff]
        %v685 = vld [vmem:[%s226 + $0xc68] sm:$0xff]
        %v686 = vld [vmem:[%s226 + $0xc70] sm:$0xff]
        %v687 = vld [vmem:[%s226 + $0xc78] sm:$0xff]
        %v688 = vld [vmem:[%s226 + $0xc80] sm:$0xff]
        %v689 = vld [vmem:[%s226 + $0xc88] sm:$0xff]
        %v690 = vld [vmem:[%s226 + $0xc90] sm:$0xff]
        %v691 = vld [vmem:[%s226 + $0xc98] sm:$0xff]
        %v692 = vld [vmem:[%s226 + $0xca0] sm:$0xff]
        %v693 = vld [vmem:[%s226 + $0xca8] sm:$0xff]
        %v694 = vld [vmem:[%s226 + $0xcb0] sm:$0xff]
        %v695 = vld [vmem:[%s226 + $0xcb8] sm:$0xff]
        %v696 = vld [vmem:[%s226 + $0xcc0] sm:$0xff]
        %v697 = vld [vmem:[%s226 + $0xcc8] sm:$0xff]
        %v698 = vld [vmem:[%s226 + $0xcd0] sm:$0xff]
        %v699 = vld [vmem:[%s226 + $0xcd8] sm:$0xff]
        %v700 = vld [vmem:[%s226 + $0xce0] sm:$0xff]
        %v701 = vld [vmem:[%s226 + $0xce8] sm:$0xff]
        %v702 = vld [vmem:[%s226 + $0xcf0] sm:$0xff]
        %v703 = vld [vmem:[%s226 + $0xcf8] sm:$0xff]
        %v704 = vld [vmem:[%s226 + $0xd00] sm:$0xff]
        %v705 = vld [vmem:[%s226 + $0xd08] sm:$0xff]
        %v706 = vld [vmem:[%s226 + $0xd10] sm:$0xff]
        %v707 = vld [vmem:[%s226 + $0xd18] sm:$0xff]
        %v708 = vld [vmem:[%s226 + $0xd20] sm:$0xff]
        %v709 = vld [vmem:[%s226 + $0xd28] sm:$0xff]
        %v710 = vld [vmem:[%s226 + $0xd30] sm:$0xff]
        %v711 = vld [vmem:[%s226 + $0xd38] sm:$0xff]
        %v712 = vld [vmem:[%s226 + $0xd40] sm:$0xff]
        %v713 = vld [vmem:[%s226 + $0xd48] sm:$0xff]
        %v714 = vld [vmem:[%s226 + $0xd50] sm:$0xff]
        %v715 = vld [vmem:[%s226 + $0xd58] sm:$0xff]
        %v716 = vld [vmem:[%s226 + $0xd60] sm:$0xff]
        %v717 = vld [vmem:[%s226 + $0xd68] sm:$0xff]
        %v718 = vld [vmem:[%s226 + $0xd70] sm:$0xff]
        %v719 = vld [vmem:[%s226 + $0xd78] sm:$0xff]
        %v720 = vld [vmem:[%s226 + $0xd80] sm:$0xff]
        %v721 = vld [vmem:[%s226 + $0xd88] sm:$0xff]
        %v722 = vld [vmem:[%s226 + $0xd90] sm:$0xff]
        %v723 = vld [vmem:[%s226 + $0xd98] sm:$0xff]
        %v724 = vld [vmem:[%s226 + $0xda0] sm:$0xff]
        %v725 = vld [vmem:[%s226 + $0xda8] sm:$0xff]
        %v726 = vld [vmem:[%s226 + $0xdb0] sm:$0xff]
        %v727 = vld [vmem:[%s226 + $0xdb8] sm:$0xff]
        %v728 = vld [vmem:[%s226 + $0xdc0] sm:$0xff]
        %v729 = vld [vmem:[%s226 + $0xdc8] sm:$0xff]
        %v730 = vld [vmem:[%s226 + $0xdd0] sm:$0xff]
        %v731 = vld [vmem:[%s226 + $0xdd8] sm:$0xff]
        %v732 = vld [vmem:[%s226 + $0xde0] sm:$0xff]
        %v733 = vld [vmem:[%s226 + $0xde8] sm:$0xff]
        %v734 = vld [vmem:[%s226 + $0xdf0] sm:$0xff]
        %v735 = vld [vmem:[%s226 + $0xdf8] sm:$0xff]
        %v736 = vld [vmem:[%s226 + $0xe00] sm:$0xff]
        %v737 = vld [vmem:[%s226 + $0xe08] sm:$0xff]
        %v738 = vld [vmem:[%s226 + $0xe10] sm:$0xff]
        %v739 = vld [vmem:[%s226 + $0xe18] sm:$0xff]
        %v740 = vld [vmem:[%s226 + $0xe20] sm:$0xff]
        %v741 = vld [vmem:[%s226 + $0xe28] sm:$0xff]
        %v742 = vld [vmem:[%s226 + $0xe30] sm:$0xff]
        %v743 = vld [vmem:[%s226 + $0xe38] sm:$0xff]
        %v744 = vld [vmem:[%s226 + $0xe40] sm:$0xff]
        %v745 = vld [vmem:[%s226 + $0xe48] sm:$0xff]
        %v746 = vld [vmem:[%s226 + $0xe50] sm:$0xff]
        %v747 = vld [vmem:[%s226 + $0xe58] sm:$0xff]
        %v748 = vld [vmem:[%s226 + $0xe60] sm:$0xff]
        %v749 = vld [vmem:[%s226 + $0xe68] sm:$0xff]
        %v750 = vld [vmem:[%s226 + $0xe70] sm:$0xff]
        %v751 = vld [vmem:[%s226 + $0xe78] sm:$0xff]
        %v752 = vld [vmem:[%s226 + $0xe80] sm:$0xff]
        %v753 = vld [vmem:[%s226 + $0xe88] sm:$0xff]
        %v754 = vld [vmem:[%s226 + $0xe90] sm:$0xff]
        %v755 = vld [vmem:[%s226 + $0xe98] sm:$0xff]
        %v756 = vld [vmem:[%s226 + $0xea0] sm:$0xff]
        %v757 = vld [vmem:[%s226 + $0xea8] sm:$0xff]
        %v758 = vld [vmem:[%s226 + $0xeb0] sm:$0xff]
        %v759 = vld [vmem:[%s226 + $0xeb8] sm:$0xff]
        %v760 = vld [vmem:[%s226 + $0xec0] sm:$0xff]
        %v761 = vld [vmem:[%s226 + $0xec8] sm:$0xff]
        %v762 = vld [vmem:[%s226 + $0xed0] sm:$0xff]
        %v763 = vld [vmem:[%s226 + $0xed8] sm:$0xff]
        %v764 = vld [vmem:[%s226 + $0xee0] sm:$0xff]
        %v765 = vld [vmem:[%s226 + $0xee8] sm:$0xff]
        %v766 = vld [vmem:[%s226 + $0xef0] sm:$0xff]
        %v767 = vld [vmem:[%s226 + $0xef8] sm:$0xff]
        %v768 = vld [vmem:[%s226 + $0xf00] sm:$0xff]
        %v769 = vld [vmem:[%s226 + $0xf08] sm:$0xff]
        %v770 = vld [vmem:[%s226 + $0xf10] sm:$0xff]
        %v771 = vld [vmem:[%s226 + $0xf18] sm:$0xff]
        %v772 = vld [vmem:[%s226 + $0xf20] sm:$0xff]
        %v773 = vld [vmem:[%s226 + $0xf28] sm:$0xff]
        %v774 = vld [vmem:[%s226 + $0xf30] sm:$0xff]
        %v775 = vld [vmem:[%s226 + $0xf38] sm:$0xff]
        %v776 = vld [vmem:[%s226 + $0xf40] sm:$0xff]
        %v777 = vld [vmem:[%s226 + $0xf48] sm:$0xff]
        %v778 = vld [vmem:[%s226 + $0xf50] sm:$0xff]
        %v779 = vld [vmem:[%s226 + $0xf58] sm:$0xff]
        %v780 = vld [vmem:[%s226 + $0xf60] sm:$0xff]
        %v781 = vld [vmem:[%s226 + $0xf68] sm:$0xff]
        %v782 = vld [vmem:[%s226 + $0xf70] sm:$0xff]
        %v783 = vld [vmem:[%s226 + $0xf78] sm:$0xff]
        %v784 = vld [vmem:[%s226 + $0xf80] sm:$0xff]
        %v785 = vld [vmem:[%s226 + $0xf88] sm:$0xff]
        %v786 = vld [vmem:[%s226 + $0xf90] sm:$0xff]
        %v787 = vld [vmem:[%s226 + $0xf98] sm:$0xff]
        %v788 = vld [vmem:[%s226 + $0xfa0] sm:$0xff]
        %v789 = vld [vmem:[%s226 + $0xfa8] sm:$0xff]
        %v790 = vld [vmem:[%s226 + $0xfb0] sm:$0xff]
        %v791 = vld [vmem:[%s226 + $0xfb8] sm:$0xff]
        %v792 = vld [vmem:[%s226 + $0xfc0] sm:$0xff]
        %v793 = vld [vmem:[%s226 + $0xfc8] sm:$0xff]
        %v794 = vld [vmem:[%s226 + $0xfd0] sm:$0xff]
        %v795 = vld [vmem:[%s226 + $0xfd8] sm:$0xff]
        %v796 = vld [vmem:[%s226 + $0xfe0] sm:$0xff]
        %v797 = vld [vmem:[%s226 + $0xfe8] sm:$0xff]
        %v798 = vld [vmem:[%s226 + $0xff0] sm:$0xff]
        %v799 = vld [vmem:[%s226 + $0xff8] sm:$0xff]
        %v800 = vld [vmem:[%s226 + $0x1000] sm:$0xff]
        %v801 = vld [vmem:[%s226 + $0x1008] sm:$0xff]
        %v802 = vld [vmem:[%s226 + $0x1010] sm:$0xff]
        %v803 = vld [vmem:[%s226 + $0x1018] sm:$0xff]
        %v804 = vld [vmem:[%s226 + $0x1020] sm:$0xff]
        %v805 = vld [vmem:[%s226 + $0x1028] sm:$0xff]
        %v806 = vld [vmem:[%s226 + $0x1030] sm:$0xff]
        %v807 = vld [vmem:[%s226 + $0x1038] sm:$0xff]
        %v808 = vld [vmem:[%s226 + $0x1040] sm:$0xff]
        %v809 = vld [vmem:[%s226 + $0x1048] sm:$0xff]
        %v810 = vld [vmem:[%s226 + $0x1050] sm:$0xff]
        %v811 = vld [vmem:[%s226 + $0x1058] sm:$0xff]
        %v812 = vld [vmem:[%s226 + $0x1060] sm:$0xff]
        %v813 = vld [vmem:[%s226 + $0x1068] sm:$0xff]
        %v814 = vld [vmem:[%s226 + $0x1070] sm:$0xff]
        %v815 = vld [vmem:[%s226 + $0x1078] sm:$0xff]
        %v816 = vld [vmem:[%s226 + $0x1080] sm:$0xff]
        %v817 = vld [vmem:[%s226 + $0x1088] sm:$0xff]
        %v818 = vld [vmem:[%s226 + $0x1090] sm:$0xff]
        %v819 = vld [vmem:[%s226 + $0x1098] sm:$0xff]
        %v820 = vld [vmem:[%s226 + $0x10a0] sm:$0xff]
        %v821 = vld [vmem:[%s226 + $0x10a8] sm:$0xff]
        %v822 = vld [vmem:[%s226 + $0x10b0] sm:$0xff]
        %v823 = vld [vmem:[%s226 + $0x10b8] sm:$0xff]
        %v824 = vld [vmem:[%s226 + $0x10c0] sm:$0xff]
        %v825 = vld [vmem:[%s226 + $0x10c8] sm:$0xff]
        %v826 = vld [vmem:[%s226 + $0x10d0] sm:$0xff]
        %v827 = vld [vmem:[%s226 + $0x10d8] sm:$0xff]
        %v828 = vld [vmem:[%s226 + $0x10e0] sm:$0xff]
        %v829 = vld [vmem:[%s226 + $0x10e8] sm:$0xff]
        %v830 = vld [vmem:[%s226 + $0x10f0] sm:$0xff]
        %v831 = vld [vmem:[%s226 + $0x10f8] sm:$0xff]
        %v832 = vld [vmem:[%s226 + $0x1100] sm:$0xff]
        %v833 = vld [vmem:[%s226 + $0x1108] sm:$0xff]
        %v834 = vld [vmem:[%s226 + $0x1110] sm:$0xff]
        %v835 = vld [vmem:[%s226 + $0x1118] sm:$0xff]
        %v836 = vld [vmem:[%s226 + $0x1120] sm:$0xff]
        %v837 = vld [vmem:[%s226 + $0x1128] sm:$0xff]
        %v838 = vld [vmem:[%s226 + $0x1130] sm:$0xff]
        %v839 = vld [vmem:[%s226 + $0x1138] sm:$0xff]
        %v840 = vld [vmem:[%s226 + $0x1140] sm:$0xff]
        %v841 = vld [vmem:[%s226 + $0x1148] sm:$0xff]
        %v842 = vld [vmem:[%s226 + $0x1150] sm:$0xff]
        %v843 = vld [vmem:[%s226 + $0x1158] sm:$0xff]
        %v844 = vld [vmem:[%s226 + $0x1160] sm:$0xff]
        %v845 = vld [vmem:[%s226 + $0x1168] sm:$0xff]
        %v846 = vld [vmem:[%s226 + $0x1170] sm:$0xff]
        %v847 = vld [vmem:[%s226 + $0x1178] sm:$0xff]
        %v848 = vld [vmem:[%s226 + $0x1180] sm:$0xff]
        %v849 = vld [vmem:[%s226 + $0x1188] sm:$0xff]
        %v850 = vld [vmem:[%s226 + $0x1190] sm:$0xff]
        %v851 = vld [vmem:[%s226 + $0x1198] sm:$0xff]
        %v852 = vld [vmem:[%s226 + $0x11a0] sm:$0xff]
        %v853 = vld [vmem:[%s226 + $0x11a8] sm:$0xff]
        %v854 = vld [vmem:[%s226 + $0x11b0] sm:$0xff]
        %v855 = vld [vmem:[%s226 + $0x11b8] sm:$0xff]
        %v856 = vld [vmem:[%s226 + $0x11c0] sm:$0xff]
        %v857 = vld [vmem:[%s226 + $0x11c8] sm:$0xff]
        %v858 = vld [vmem:[%s226 + $0x11d0] sm:$0xff]
        %v859 = vld [vmem:[%s226 + $0x11d8] sm:$0xff]
        %v860 = vld [vmem:[%s226 + $0x11e0] sm:$0xff]
        %v861 = vld [vmem:[%s226 + $0x11e8] sm:$0xff]
        %v862 = vld [vmem:[%s226 + $0x11f0] sm:$0xff]
        %v863 = vld [vmem:[%s226 + $0x11f8] sm:$0xff]
        %v864 = vld [vmem:[%s226 + $0x1200] sm:$0xff]
        %v865 = vld [vmem:[%s226 + $0x1208] sm:$0xff]
        %v866 = vld [vmem:[%s226 + $0x1210] sm:$0xff]
        %v867 = vld [vmem:[%s226 + $0x1218] sm:$0xff]
        %v868 = vld [vmem:[%s226 + $0x1220] sm:$0xff]
        %v869 = vld [vmem:[%s226 + $0x1228] sm:$0xff]
        %v870 = vld [vmem:[%s226 + $0x1230] sm:$0xff]
        %v871 = vld [vmem:[%s226 + $0x1238] sm:$0xff]
        %v872 = vld [vmem:[%s226 + $0x1240] sm:$0xff]
        %v873 = vld [vmem:[%s226 + $0x1248] sm:$0xff]
        %v874 = vld [vmem:[%s226 + $0x1250] sm:$0xff]
        %v875 = vld [vmem:[%s226 + $0x1258] sm:$0xff]
        %v876 = vld [vmem:[%s226 + $0x1260] sm:$0xff]
        %v877 = vld [vmem:[%s226 + $0x1268] sm:$0xff]
        %v878 = vld [vmem:[%s226 + $0x1270] sm:$0xff]
        %v879 = vld [vmem:[%s226 + $0x1278] sm:$0xff]
        %v880 = vld [vmem:[%s226 + $0x1280] sm:$0xff]
        %v881 = vld [vmem:[%s226 + $0x1288] sm:$0xff]
        %v882 = vld [vmem:[%s226 + $0x1290] sm:$0xff]
        %v883 = vld [vmem:[%s226 + $0x1298] sm:$0xff]
        %v884 = vld [vmem:[%s226 + $0x12a0] sm:$0xff]
        %v885 = vld [vmem:[%s226 + $0x12a8] sm:$0xff]
        %v886 = vld [vmem:[%s226 + $0x12b0] sm:$0xff]
        %v887 = vld [vmem:[%s226 + $0x12b8] sm:$0xff]
        %v888 = vld [vmem:[%s226 + $0x12c0] sm:$0xff]
        %v889 = vld [vmem:[%s226 + $0x12c8] sm:$0xff]
        %v890 = vld [vmem:[%s226 + $0x12d0] sm:$0xff]
        %v891 = vld [vmem:[%s226 + $0x12d8] sm:$0xff]
        %v892 = vld [vmem:[%s226 + $0x12e0] sm:$0xff]
        %v893 = vld [vmem:[%s226 + $0x12e8] sm:$0xff]
        %v894 = vld [vmem:[%s226 + $0x12f0] sm:$0xff]
        %v895 = vld [vmem:[%s226 + $0x12f8] sm:$0xff]
        %v896 = vld [vmem:[%s226 + $0x1300] sm:$0xff]
        %v897 = vld [vmem:[%s226 + $0x1308] sm:$0xff]
        %v898 = vld [vmem:[%s226 + $0x1310] sm:$0xff]
        %v899 = vld [vmem:[%s226 + $0x1318] sm:$0xff]
        %v900 = vld [vmem:[%s226 + $0x1320] sm:$0xff]
        %v901 = vld [vmem:[%s226 + $0x1328] sm:$0xff]
        %v902 = vld [vmem:[%s226 + $0x1330] sm:$0xff]
        %v903 = vld [vmem:[%s226 + $0x1338] sm:$0xff]
        %v904 = vld [vmem:[%s226 + $0x1340] sm:$0xff]
        %v905 = vld [vmem:[%s226 + $0x1348] sm:$0xff]
        %v906 = vld [vmem:[%s226 + $0x1350] sm:$0xff]
        %v907 = vld [vmem:[%s226 + $0x1358] sm:$0xff]
        %v908 = vld [vmem:[%s226 + $0x1360] sm:$0xff]
        %v909 = vld [vmem:[%s226 + $0x1368] sm:$0xff]
        %v910 = vld [vmem:[%s226 + $0x1370] sm:$0xff]
        %v911 = vld [vmem:[%s226 + $0x1378] sm:$0xff]
        %v912 = vld [vmem:[%s226 + $0x1380] sm:$0xff]
        %v913 = vld [vmem:[%s226 + $0x1388] sm:$0xff]
        %v914 = vld [vmem:[%s226 + $0x1390] sm:$0xff]
        %v915 = vld [vmem:[%s226 + $0x1398] sm:$0xff]
        %v916 = vld [vmem:[%s226 + $0x13a0] sm:$0xff]
        %v917 = vld [vmem:[%s226 + $0x13a8] sm:$0xff]
        %v918 = vld [vmem:[%s226 + $0x13b0] sm:$0xff]
        %v919 = vld [vmem:[%s226 + $0x13b8] sm:$0xff]
        %v920 = vld [vmem:[%s226 + $0x13c0] sm:$0xff]
        %v921 = vld [vmem:[%s226 + $0x13c8] sm:$0xff]
        %v922 = vld [vmem:[%s226 + $0x13d0] sm:$0xff]
        %v923 = vld [vmem:[%s226 + $0x13d8] sm:$0xff]
        %v924 = vld [vmem:[%s226 + $0x13e0] sm:$0xff]
        %v925 = vld [vmem:[%s226 + $0x13e8] sm:$0xff]
        %v926 = vld [vmem:[%s226 + $0x13f0] sm:$0xff]
        %v927 = vld [vmem:[%s226 + $0x13f8] sm:$0xff]
        %v928 = vld [vmem:[%s226 + $0x1400] sm:$0xff]
        %v929 = vld [vmem:[%s226 + $0x1408] sm:$0xff]
        %v930 = vld [vmem:[%s226 + $0x1410] sm:$0xff]
        %v931 = vld [vmem:[%s226 + $0x1418] sm:$0xff]
        %v932 = vld [vmem:[%s226 + $0x1420] sm:$0xff]
        %v933 = vld [vmem:[%s226 + $0x1428] sm:$0xff]
        %v934 = vld [vmem:[%s226 + $0x1430] sm:$0xff]
        %v935 = vld [vmem:[%s226 + $0x1438] sm:$0xff]
        %v936 = vld [vmem:[%s226 + $0x1440] sm:$0xff]
        %v937 = vld [vmem:[%s226 + $0x1448] sm:$0xff]
        %v938 = vld [vmem:[%s226 + $0x1450] sm:$0xff]
        %v939 = vld [vmem:[%s226 + $0x1458] sm:$0xff]
        %v940 = vld [vmem:[%s226 + $0x1460] sm:$0xff]
        %v941 = vld [vmem:[%s226 + $0x1468] sm:$0xff]
        %v942 = vld [vmem:[%s226 + $0x1470] sm:$0xff]
        %v943 = vld [vmem:[%s226 + $0x1478] sm:$0xff]
        %v944 = vld [vmem:[%s226 + $0x1480] sm:$0xff]
        %v945 = vld [vmem:[%s226 + $0x1488] sm:$0xff]
        %v946 = vld [vmem:[%s226 + $0x1490] sm:$0xff]
        %v947 = vld [vmem:[%s226 + $0x1498] sm:$0xff]
        %v948 = vld [vmem:[%s226 + $0x14a0] sm:$0xff]
        %v949 = vld [vmem:[%s226 + $0x14a8] sm:$0xff]
        %v950 = vld [vmem:[%s226 + $0x14b0] sm:$0xff]
        %v951 = vld [vmem:[%s226 + $0x14b8] sm:$0xff]
        %v952 = vld [vmem:[%s226 + $0x14c0] sm:$0xff]
        %v953 = vld [vmem:[%s226 + $0x14c8] sm:$0xff]
        %v954 = vld [vmem:[%s226 + $0x14d0] sm:$0xff]
        %v955 = vld [vmem:[%s226 + $0x14d8] sm:$0xff]
        %v956 = vld [vmem:[%s226 + $0x14e0] sm:$0xff]
        %v957 = vld [vmem:[%s226 + $0x14e8] sm:$0xff]
        %v958 = vld [vmem:[%s226 + $0x14f0] sm:$0xff]
        %v959 = vld [vmem:[%s226 + $0x14f8] sm:$0xff]
        %v960 = vld [vmem:[%s226 + $0x1500] sm:$0xff]
        %v961 = vld [vmem:[%s226 + $0x1508] sm:$0xff]
        %v962 = vld [vmem:[%s226 + $0x1510] sm:$0xff]
        %v963 = vld [vmem:[%s226 + $0x1518] sm:$0xff]
        %v964 = vld [vmem:[%s226 + $0x1520] sm:$0xff]
        %v965 = vld [vmem:[%s226 + $0x1528] sm:$0xff]
        %v966 = vld [vmem:[%s226 + $0x1530] sm:$0xff]
        %v967 = vld [vmem:[%s226 + $0x1538] sm:$0xff]
        %v968 = vld [vmem:[%s226 + $0x1540] sm:$0xff]
        %v969 = vld [vmem:[%s226 + $0x1548] sm:$0xff]
        %v970 = vld [vmem:[%s226 + $0x1550] sm:$0xff]
        %v971 = vld [vmem:[%s226 + $0x1558] sm:$0xff]
        %v972 = vld [vmem:[%s226 + $0x1560] sm:$0xff]
        %v973 = vld [vmem:[%s226 + $0x1568] sm:$0xff]
        %v974 = vld [vmem:[%s226 + $0x1570] sm:$0xff]
        %v975 = vld [vmem:[%s226 + $0x1578] sm:$0xff]
        %v976 = vld [vmem:[%s226 + $0x1580] sm:$0xff]
        %v977 = vld [vmem:[%s226 + $0x1588] sm:$0xff]
        %v978 = vld [vmem:[%s226 + $0x1590] sm:$0xff]
        %v979 = vld [vmem:[%s226 + $0x1598] sm:$0xff]
        %v980 = vld [vmem:[%s226 + $0x15a0] sm:$0xff]
        %v981 = vld [vmem:[%s226 + $0x15a8] sm:$0xff]
        %v982 = vld [vmem:[%s226 + $0x15b0] sm:$0xff]
        %v983 = vld [vmem:[%s226 + $0x15b8] sm:$0xff]
        %v984 = vld [vmem:[%s226 + $0x15c0] sm:$0xff]
        %v985 = vld [vmem:[%s226 + $0x15c8] sm:$0xff]
        %v986 = vld [vmem:[%s226 + $0x15d0] sm:$0xff]
        %v987 = vld [vmem:[%s226 + $0x15d8] sm:$0xff]
        %v988 = vld [vmem:[%s226 + $0x15e0] sm:$0xff]
        %v989 = vld [vmem:[%s226 + $0x15e8] sm:$0xff]
        %v990 = vld [vmem:[%s226 + $0x15f0] sm:$0xff]
        %v991 = vld [vmem:[%s226 + $0x15f8] sm:$0xff]
        %v992 = vld [vmem:[%s226 + $0x1600] sm:$0xff]
        %v993 = vld [vmem:[%s226 + $0x1608] sm:$0xff]
        %v994 = vld [vmem:[%s226 + $0x1610] sm:$0xff]
        %v995 = vld [vmem:[%s226 + $0x1618] sm:$0xff]
        %v996 = vld [vmem:[%s226 + $0x1620] sm:$0xff]
        %v997 = vld [vmem:[%s226 + $0x1628] sm:$0xff]
        %v998 = vld [vmem:[%s226 + $0x1630] sm:$0xff]
        %v999 = vld [vmem:[%s226 + $0x1638] sm:$0xff]
        %v1000 = vld [vmem:[%s226 + $0x1640] sm:$0xff]
        %v1001 = vld [vmem:[%s226 + $0x1648] sm:$0xff]
        %v1002 = vld [vmem:[%s226 + $0x1650] sm:$0xff]
        %v1003 = vld [vmem:[%s226 + $0x1658] sm:$0xff]
        %v1004 = vld [vmem:[%s226 + $0x1660] sm:$0xff]
        %v1005 = vld [vmem:[%s226 + $0x1668] sm:$0xff]
        %v1006 = vld [vmem:[%s226 + $0x1670] sm:$0xff]
        %v1007 = vld [vmem:[%s226 + $0x1678] sm:$0xff]
        %v1008 = vld [vmem:[%s226 + $0x1680] sm:$0xff]
        %v1009 = vld [vmem:[%s226 + $0x1688] sm:$0xff]
        %v1010 = vld [vmem:[%s226 + $0x1690] sm:$0xff]
        %v1011 = vld [vmem:[%s226 + $0x1698] sm:$0xff]
        %v1012 = vld [vmem:[%s226 + $0x16a0] sm:$0xff]
        %v1013 = vld [vmem:[%s226 + $0x16a8] sm:$0xff]
        %v1014 = vld [vmem:[%s226 + $0x16b0] sm:$0xff]
        %v1015 = vld [vmem:[%s226 + $0x16b8] sm:$0xff]
        %v1016 = vld [vmem:[%s226 + $0x16c0] sm:$0xff]
        %v1017 = vld [vmem:[%s226 + $0x16c8] sm:$0xff]
        %v1018 = vld [vmem:[%s226 + $0x16d0] sm:$0xff]
        %v1019 = vld [vmem:[%s226 + $0x16d8] sm:$0xff]
        %v1020 = vld [vmem:[%s226 + $0x16e0] sm:$0xff]
        %v1021 = vld [vmem:[%s226 + $0x16e8] sm:$0xff]
        %v1022 = vld [vmem:[%s226 + $0x16f0] sm:$0xff]
        %v1023 = vld [vmem:[%s226 + $0x16f8] sm:$0xff]
        %v1024 = vld [vmem:[%s226 + $0x1700] sm:$0xff]
        %v1025 = vld [vmem:[%s226 + $0x1708] sm:$0xff]
        %v1026 = vld [vmem:[%s226 + $0x1710] sm:$0xff]
        %v1027 = vld [vmem:[%s226 + $0x1718] sm:$0xff]
        %v1028 = vld [vmem:[%s226 + $0x1720] sm:$0xff]
        %v1029 = vld [vmem:[%s226 + $0x1728] sm:$0xff]
        %v1030 = vld [vmem:[%s226 + $0x1730] sm:$0xff]
        %v1031 = vld [vmem:[%s226 + $0x1738] sm:$0xff]
        %v1032 = vld [vmem:[%s226 + $0x1740] sm:$0xff]
        %v1033 = vld [vmem:[%s226 + $0x1748] sm:$0xff]
        %v1034 = vld [vmem:[%s226 + $0x1750] sm:$0xff]
        %v1035 = vld [vmem:[%s226 + $0x1758] sm:$0xff]
        %v1036 = vld [vmem:[%s226 + $0x1760] sm:$0xff]
        %v1037 = vld [vmem:[%s226 + $0x1768] sm:$0xff]
        %v1038 = vld [vmem:[%s226 + $0x1770] sm:$0xff]
        %v1039 = vld [vmem:[%s226 + $0x1778] sm:$0xff]
        %v1040 = vld [vmem:[%s226 + $0x1780] sm:$0xff]
        %v1041 = vld [vmem:[%s226 + $0x1788] sm:$0xff]
        %v1042 = vld [vmem:[%s226 + $0x1790] sm:$0xff]
        %v1043 = vld [vmem:[%s226 + $0x1798] sm:$0xff]
        %v1044 = vld [vmem:[%s226 + $0x17a0] sm:$0xff]
        %v1045 = vld [vmem:[%s226 + $0x17a8] sm:$0xff]
        %v1046 = vld [vmem:[%s226 + $0x17b0] sm:$0xff]
        %v1047 = vld [vmem:[%s226 + $0x17b8] sm:$0xff]
        %v1048 = vld [vmem:[%s226 + $0x17c0] sm:$0xff]
        %v1049 = vld [vmem:[%s226 + $0x17c8] sm:$0xff]
        %v1050 = vld [vmem:[%s226 + $0x17d0] sm:$0xff]
        %v1051 = vld [vmem:[%s226 + $0x17d8] sm:$0xff]
        %v1052 = vld [vmem:[%s226 + $0x17e0] sm:$0xff]
        %v1053 = vld [vmem:[%s226 + $0x17e8] sm:$0xff]
        %v1054 = vld [vmem:[%s226 + $0x17f0] sm:$0xff]
        %v1055 = vld [vmem:[%s226 + $0x17f8] sm:$0xff]
        %v1056 = vld [vmem:[%s226 + $0x1800] sm:$0xff]
        %v1057 = vld [vmem:[%s226 + $0x1808] sm:$0xff]
        %v1058 = vld [vmem:[%s226 + $0x1810] sm:$0xff]
        %v1059 = vld [vmem:[%s226 + $0x1818] sm:$0xff]
        %v1060 = vld [vmem:[%s226 + $0x1820] sm:$0xff]
        %v1061 = vld [vmem:[%s226 + $0x1828] sm:$0xff]
        %v1062 = vld [vmem:[%s226 + $0x1830] sm:$0xff]
        %v1063 = vld [vmem:[%s226 + $0x1838] sm:$0xff]
        %v1064 = vld [vmem:[%s226 + $0x1840] sm:$0xff]
        %v1065 = vld [vmem:[%s226 + $0x1848] sm:$0xff]
        %v1066 = vld [vmem:[%s226 + $0x1850] sm:$0xff]
        %v1067 = vld [vmem:[%s226 + $0x1858] sm:$0xff]
        %v1068 = vld [vmem:[%s226 + $0x1860] sm:$0xff]
        %v1069 = vld [vmem:[%s226 + $0x1868] sm:$0xff]
        %v1070 = vld [vmem:[%s226 + $0x1870] sm:$0xff]
        %v1071 = vld [vmem:[%s226 + $0x1878] sm:$0xff]
        %v1072 = vld [vmem:[%s226 + $0x1880] sm:$0xff]
        %v1073 = vld [vmem:[%s226 + $0x1888] sm:$0xff]
        %v1074 = vld [vmem:[%s226 + $0x1890] sm:$0xff]
        %v1075 = vld [vmem:[%s226 + $0x1898] sm:$0xff]
        %v1076 = vld [vmem:[%s226 + $0x18a0] sm:$0xff]
        %v1077 = vld [vmem:[%s226 + $0x18a8] sm:$0xff]
        %v1078 = vld [vmem:[%s226 + $0x18b0] sm:$0xff]
        %v1079 = vld [vmem:[%s226 + $0x18b8] sm:$0xff]
        %v1080 = vld [vmem:[%s226 + $0x18c0] sm:$0xff]
        %v1081 = vld [vmem:[%s226 + $0x18c8] sm:$0xff]
        %v1082 = vld [vmem:[%s226 + $0x18d0] sm:$0xff]
        %v1083 = vld [vmem:[%s226 + $0x18d8] sm:$0xff]
        %v1084 = vld [vmem:[%s226 + $0x18e0] sm:$0xff]
        %v1085 = vld [vmem:[%s226 + $0x18e8] sm:$0xff]
        %v1086 = vld [vmem:[%s226 + $0x18f0] sm:$0xff]
        %v1087 = vld [vmem:[%s226 + $0x18f8] sm:$0xff]
        %v1092 = vcombine.high %v284, %v284
        %v1094 = vunpack.c.l.s4 1966171168
        %v1095 = vunpack.c.0.s8 %v1094
        %v1096 = vlaneseq
        %v1097 = vshrl.u32 %v1096, 7
        %v1098 = vsub.s32 %v1095, %v1097
        %v1099 = vrot.slane %v284, %v1098
        %v1101 = vunpack.c.l.s4 1966171168
        %v1102 = vunpack.c.0.s8 %v1101
        %v1103 = vlaneseq
        %v1104 = vshrl.u32 %v1103, 7
        %v1105 = vsub.s32 %v1102, %v1104
        %v1106 = vrot.slane %v1092, %v1105
        %v1107 = vcombine.high %v1099, %v1099
        %v1108 = vcombine.high %v1106, %v1106
        %v1110 = vunpack.c.l.s4 1966171168
        %v1111 = vunpack.c.0.s8 %v1110
        %v1112 = vlaneseq
        %v1113 = vshrl.u32 %v1112, 7
        %v1114 = vsub.s32 %v1111, %v1113
        %v1115 = vrot.slane %v1099, %v1114
        %v1117 = vunpack.c.l.s4 1966171168
        %v1118 = vunpack.c.0.s8 %v1117
        %v1119 = vlaneseq
        %v1120 = vshrl.u32 %v1119, 7
        %v1121 = vsub.s32 %v1118, %v1120
        %v1122 = vrot.slane %v1106, %v1121
        %v1124 = vunpack.c.l.s4 1966171168
        %v1125 = vunpack.c.0.s8 %v1124
        %v1126 = vlaneseq
        %v1127 = vshrl.u32 %v1126, 7
        %v1128 = vsub.s32 %v1125, %v1127
        %v1129 = vrot.slane %v1107, %v1128
        %v1131 = vunpack.c.l.s4 1966171168
        %v1132 = vunpack.c.0.s8 %v1131
        %v1133 = vlaneseq
        %v1134 = vshrl.u32 %v1133, 7
        %v1135 = vsub.s32 %v1132, %v1134
        %v1136 = vrot.slane %v1108, %v1135
        %v1137 = vcombine.high %v1115, %v1115
        %v1138 = vcombine.high %v1122, %v1122
        %v1139 = vcombine.high %v1129, %v1129
        %v1140 = vcombine.high %v1136, %v1136
        %v1141 = vcombine.high %v285, %v285
        %v1143 = vunpack.c.l.s4 1966171168
        %v1144 = vunpack.c.0.s8 %v1143
        %v1145 = vlaneseq
        %v1146 = vshrl.u32 %v1145, 7
        %v1147 = vsub.s32 %v1144, %v1146
        %v1148 = vrot.slane %v285, %v1147
        %v1150 = vunpack.c.l.s4 1966171168
        %v1151 = vunpack.c.0.s8 %v1150
        %v1152 = vlaneseq
        %v1153 = vshrl.u32 %v1152, 7
        %v1154 = vsub.s32 %v1151, %v1153
        %v1155 = vrot.slane %v1141, %v1154
        %v1156 = vcombine.high %v1148, %v1148
        %v1157 = vcombine.high %v1155, %v1155
        %v1159 = vunpack.c.l.s4 1966171168
        %v1160 = vunpack.c.0.s8 %v1159
        %v1161 = vlaneseq
        %v1162 = vshrl.u32 %v1161, 7
        %v1163 = vsub.s32 %v1160, %v1162
        %v1164 = vrot.slane %v1148, %v1163
        %v1166 = vunpack.c.l.s4 1966171168
        %v1167 = vunpack.c.0.s8 %v1166
        %v1168 = vlaneseq
        %v1169 = vshrl.u32 %v1168, 7
        %v1170 = vsub.s32 %v1167, %v1169
        %v1171 = vrot.slane %v1155, %v1170
        %v1173 = vunpack.c.l.s4 1966171168
        %v1174 = vunpack.c.0.s8 %v1173
        %v1175 = vlaneseq
        %v1176 = vshrl.u32 %v1175, 7
        %v1177 = vsub.s32 %v1174, %v1176
        %v1178 = vrot.slane %v1156, %v1177
        %v1180 = vunpack.c.l.s4 1966171168
        %v1181 = vunpack.c.0.s8 %v1180
        %v1182 = vlaneseq
        %v1183 = vshrl.u32 %v1182, 7
        %v1184 = vsub.s32 %v1181, %v1183
        %v1185 = vrot.slane %v1157, %v1184
        %v1186 = vcombine.high %v1164, %v1164
        %v1187 = vcombine.high %v1171, %v1171
        %v1188 = vcombine.high %v1178, %v1178
        %v1189 = vcombine.high %v1185, %v1185
        %v1190 = vcombine.high %v286, %v286
        %v1192 = vunpack.c.l.s4 1966171168
        %v1193 = vunpack.c.0.s8 %v1192
        %v1194 = vlaneseq
        %v1195 = vshrl.u32 %v1194, 7
        %v1196 = vsub.s32 %v1193, %v1195
        %v1197 = vrot.slane %v286, %v1196
        %v1199 = vunpack.c.l.s4 1966171168
        %v1200 = vunpack.c.0.s8 %v1199
        %v1201 = vlaneseq
        %v1202 = vshrl.u32 %v1201, 7
        %v1203 = vsub.s32 %v1200, %v1202
        %v1204 = vrot.slane %v1190, %v1203
        %v1205 = vcombine.high %v1197, %v1197
        %v1206 = vcombine.high %v1204, %v1204
        %v1208 = vunpack.c.l.s4 1966171168
        %v1209 = vunpack.c.0.s8 %v1208
        %v1210 = vlaneseq
        %v1211 = vshrl.u32 %v1210, 7
        %v1212 = vsub.s32 %v1209, %v1211
        %v1213 = vrot.slane %v1197, %v1212
        %v1215 = vunpack.c.l.s4 1966171168
        %v1216 = vunpack.c.0.s8 %v1215
        %v1217 = vlaneseq
        %v1218 = vshrl.u32 %v1217, 7
        %v1219 = vsub.s32 %v1216, %v1218
        %v1220 = vrot.slane %v1204, %v1219
        %v1222 = vunpack.c.l.s4 1966171168
        %v1223 = vunpack.c.0.s8 %v1222
        %v1224 = vlaneseq
        %v1225 = vshrl.u32 %v1224, 7
        %v1226 = vsub.s32 %v1223, %v1225
        %v1227 = vrot.slane %v1205, %v1226
        %v1229 = vunpack.c.l.s4 1966171168
        %v1230 = vunpack.c.0.s8 %v1229
        %v1231 = vlaneseq
        %v1232 = vshrl.u32 %v1231, 7
        %v1233 = vsub.s32 %v1230, %v1232
        %v1234 = vrot.slane %v1206, %v1233
        %v1235 = vcombine.high %v1213, %v1213
        %v1236 = vcombine.high %v1220, %v1220
        %v1237 = vcombine.high %v1227, %v1227
        %v1238 = vcombine.high %v1234, %v1234
        %v1240 = vunpack.c.l.s4 1966171168
        %v1241 = vunpack.c.0.s8 %v1240
        %v1242 = vlaneseq
        %v1243 = vshrl.u32 %v1242, 7
        %v1244 = vsub.s32 %v1241, %v1243
        %v1245 = vrot.slane %v287, %v1244
        %v1247 = vunpack.c.l.s4 1966171168
        %v1248 = vunpack.c.0.s8 %v1247
        %v1249 = vlaneseq
        %v1250 = vshrl.u32 %v1249, 7
        %v1251 = vsub.s32 %v1248, %v1250
        %v1252 = vrot.slane %v1245, %v1251
        %v2078 = vunpack.c.l.b16 %v288
        %v2079 = vunpack.c.h.b16 %v288
        %v2080 = vunpack.c.l.b16 %v289
        %v2081 = vunpack.c.h.b16 %v289
        %v2082 = vunpack.c.l.b16 %v290
        %v2083 = vunpack.c.h.b16 %v290
        %v2084 = vunpack.c.l.b16 %v291
        %v2085 = vunpack.c.h.b16 %v291
        %v2086 = vunpack.c.l.b16 %v292
        %v2087 = vunpack.c.h.b16 %v292
        %v2088 = vunpack.c.l.b16 %v293
        %v2089 = vunpack.c.h.b16 %v293
        %v2090 = vunpack.c.l.b16 %v294
        %v2091 = vunpack.c.h.b16 %v294
        %v2092 = vunpack.c.l.b16 %v295
        %v2093 = vunpack.c.h.b16 %v295
        %v2094 = vunpack.c.l.b16 %v296
        %v2095 = vunpack.c.h.b16 %v296
        %v2096 = vunpack.c.l.b16 %v297
        %v2097 = vunpack.c.h.b16 %v297
        %v2098 = vunpack.c.l.b16 %v298
        %v2099 = vunpack.c.h.b16 %v298
        %v2100 = vunpack.c.l.b16 %v299
        %v2101 = vunpack.c.h.b16 %v299
        %v2102 = vunpack.c.l.b16 %v300
        %v2103 = vunpack.c.h.b16 %v300
        %v2104 = vunpack.c.l.b16 %v301
        %v2105 = vunpack.c.h.b16 %v301
        %v2106 = vunpack.c.l.b16 %v302
        %v2107 = vunpack.c.h.b16 %v302
        %v2108 = vunpack.c.l.b16 %v303
        %v2109 = vunpack.c.h.b16 %v303
        %v2110 = vunpack.c.l.b16 %v304
        %v2111 = vunpack.c.h.b16 %v304
        %v2112 = vunpack.c.l.b16 %v305
        %v2113 = vunpack.c.h.b16 %v305
        %v2114 = vunpack.c.l.b16 %v306
        %v2115 = vunpack.c.h.b16 %v306
        %v2116 = vunpack.c.l.b16 %v307
        %v2117 = vunpack.c.h.b16 %v307
        %v2118 = vunpack.c.l.b16 %v308
        %v2119 = vunpack.c.h.b16 %v308
        %v2120 = vunpack.c.l.b16 %v309
        %v2121 = vunpack.c.h.b16 %v309
        %v2122 = vunpack.c.l.b16 %v310
        %v2123 = vunpack.c.h.b16 %v310
        %v2124 = vunpack.c.l.b16 %v311
        %v2125 = vunpack.c.h.b16 %v311
        %v2126 = vunpack.c.l.b16 %v312
        %v2127 = vunpack.c.h.b16 %v312
        %v2128 = vunpack.c.l.b16 %v313
        %v2129 = vunpack.c.h.b16 %v313
        %v2130 = vunpack.c.l.b16 %v314
        %v2131 = vunpack.c.h.b16 %v314
        %v2132 = vunpack.c.l.b16 %v315
        %v2133 = vunpack.c.h.b16 %v315
        %v2134 = vunpack.c.l.b16 %v316
        %v2135 = vunpack.c.h.b16 %v316
        %v2136 = vunpack.c.l.b16 %v317
        %v2137 = vunpack.c.h.b16 %v317
        %v2138 = vunpack.c.l.b16 %v318
        %v2139 = vunpack.c.h.b16 %v318
        %v2140 = vunpack.c.l.b16 %v319
        %v2141 = vunpack.c.h.b16 %v319
        %v2142 = vunpack.c.l.b16 %v320
        %v2143 = vunpack.c.h.b16 %v320
        %v2144 = vunpack.c.l.b16 %v321
        %v2145 = vunpack.c.h.b16 %v321
        %v2146 = vunpack.c.l.b16 %v322
        %v2147 = vunpack.c.h.b16 %v322
        %v2148 = vunpack.c.l.b16 %v323
        %v2149 = vunpack.c.h.b16 %v323
        %v2150 = vunpack.c.l.b16 %v324
        %v2151 = vunpack.c.h.b16 %v324
        %v2152 = vunpack.c.l.b16 %v325
        %v2153 = vunpack.c.h.b16 %v325
        %v2154 = vunpack.c.l.b16 %v326
        %v2155 = vunpack.c.h.b16 %v326
        %v2156 = vunpack.c.l.b16 %v327
        %v2157 = vunpack.c.h.b16 %v327
        %v2158 = vunpack.c.l.b16 %v328
        %v2159 = vunpack.c.h.b16 %v328
        %v2160 = vunpack.c.l.b16 %v329
        %v2161 = vunpack.c.h.b16 %v329
        %v2162 = vunpack.c.l.b16 %v330
        %v2163 = vunpack.c.h.b16 %v330
        %v2164 = vunpack.c.l.b16 %v331
        %v2165 = vunpack.c.h.b16 %v331
        %v2166 = vunpack.c.l.b16 %v332
        %v2167 = vunpack.c.h.b16 %v332
        %v2168 = vunpack.c.l.b16 %v333
        %v2169 = vunpack.c.h.b16 %v333
        %v2170 = vunpack.c.l.b16 %v334
        %v2171 = vunpack.c.h.b16 %v334
        %v2172 = vunpack.c.l.b16 %v335
        %v2173 = vunpack.c.h.b16 %v335
        %v2174 = vunpack.c.l.b16 %v336
        %v2175 = vunpack.c.h.b16 %v336
        %v2176 = vunpack.c.l.b16 %v337
        %v2177 = vunpack.c.h.b16 %v337
        %v2178 = vunpack.c.l.b16 %v338
        %v2179 = vunpack.c.h.b16 %v338
        %v2180 = vunpack.c.l.b16 %v339
        %v2181 = vunpack.c.h.b16 %v339
        %v2182 = vunpack.c.l.b16 %v340
        %v2183 = vunpack.c.h.b16 %v340
        %v2184 = vunpack.c.l.b16 %v341
        %v2185 = vunpack.c.h.b16 %v341
        %v2186 = vunpack.c.l.b16 %v342
        %v2187 = vunpack.c.h.b16 %v342
        %v2188 = vunpack.c.l.b16 %v343
        %v2189 = vunpack.c.h.b16 %v343
        %v2190 = vunpack.c.l.b16 %v344
        %v2191 = vunpack.c.h.b16 %v344
        %v2192 = vunpack.c.l.b16 %v345
        %v2193 = vunpack.c.h.b16 %v345
        %v2194 = vunpack.c.l.b16 %v346
        %v2195 = vunpack.c.h.b16 %v346
        %v2196 = vunpack.c.l.b16 %v347
        %v2197 = vunpack.c.h.b16 %v347
        %v2198 = vunpack.c.l.b16 %v348
        %v2199 = vunpack.c.h.b16 %v348
        %v2200 = vunpack.c.l.b16 %v349
        %v2201 = vunpack.c.h.b16 %v349
        %v2202 = vunpack.c.l.b16 %v350
        %v2203 = vunpack.c.h.b16 %v350
        %v2204 = vunpack.c.l.b16 %v351
        %v2205 = vunpack.c.h.b16 %v351
        %v2206 = vunpack.c.l.b16 %v352
        %v2207 = vunpack.c.h.b16 %v352
        %v2208 = vunpack.c.l.b16 %v353
        %v2209 = vunpack.c.h.b16 %v353
        %v2210 = vunpack.c.l.b16 %v354
        %v2211 = vunpack.c.h.b16 %v354
        %v2212 = vunpack.c.l.b16 %v355
        %v2213 = vunpack.c.h.b16 %v355
        %v2214 = vunpack.c.l.b16 %v356
        %v2215 = vunpack.c.h.b16 %v356
        %v2216 = vunpack.c.l.b16 %v357
        %v2217 = vunpack.c.h.b16 %v357
        %v2218 = vunpack.c.l.b16 %v358
        %v2219 = vunpack.c.h.b16 %v358
        %v2220 = vunpack.c.l.b16 %v359
        %v2221 = vunpack.c.h.b16 %v359
        %v2222 = vunpack.c.l.b16 %v360
        %v2223 = vunpack.c.h.b16 %v360
        %v2224 = vunpack.c.l.b16 %v361
        %v2225 = vunpack.c.h.b16 %v361
        %v2226 = vunpack.c.l.b16 %v362
        %v2227 = vunpack.c.h.b16 %v362
        %v2228 = vunpack.c.l.b16 %v363
        %v2229 = vunpack.c.h.b16 %v363
        %v2230 = vunpack.c.l.b16 %v364
        %v2231 = vunpack.c.h.b16 %v364
        %v2232 = vunpack.c.l.b16 %v365
        %v2233 = vunpack.c.h.b16 %v365
        %v2234 = vunpack.c.l.b16 %v366
        %v2235 = vunpack.c.h.b16 %v366
        %v2236 = vunpack.c.l.b16 %v367
        %v2237 = vunpack.c.h.b16 %v367
        %v2238 = vunpack.c.l.b16 %v368
        %v2239 = vunpack.c.h.b16 %v368
        %v2240 = vunpack.c.l.b16 %v369
        %v2241 = vunpack.c.h.b16 %v369
        %v2242 = vunpack.c.l.b16 %v370
        %v2243 = vunpack.c.h.b16 %v370
        %v2244 = vunpack.c.l.b16 %v371
        %v2245 = vunpack.c.h.b16 %v371
        %v2246 = vunpack.c.l.b16 %v372
        %v2247 = vunpack.c.h.b16 %v372
        %v2248 = vunpack.c.l.b16 %v373
        %v2249 = vunpack.c.h.b16 %v373
        %v2250 = vunpack.c.l.b16 %v374
        %v2251 = vunpack.c.h.b16 %v374
        %v2252 = vunpack.c.l.b16 %v375
        %v2253 = vunpack.c.h.b16 %v375
        %v2254 = vunpack.c.l.b16 %v376
        %v2255 = vunpack.c.h.b16 %v376
        %v2256 = vunpack.c.l.b16 %v377
        %v2257 = vunpack.c.h.b16 %v377
        %v2258 = vunpack.c.l.b16 %v378
        %v2259 = vunpack.c.h.b16 %v378
        %v2260 = vunpack.c.l.b16 %v379
        %v2261 = vunpack.c.h.b16 %v379
        %v2262 = vunpack.c.l.b16 %v380
        %v2263 = vunpack.c.h.b16 %v380
        %v2264 = vunpack.c.l.b16 %v381
        %v2265 = vunpack.c.h.b16 %v381
        %v2266 = vunpack.c.l.b16 %v382
        %v2267 = vunpack.c.h.b16 %v382
        %v2268 = vunpack.c.l.b16 %v383
        %v2269 = vunpack.c.h.b16 %v383
        %v2270 = vunpack.c.l.b16 %v384
        %v2271 = vunpack.c.h.b16 %v384
        %v2272 = vunpack.c.l.b16 %v385
        %v2273 = vunpack.c.h.b16 %v385
        %v2274 = vunpack.c.l.b16 %v386
        %v2275 = vunpack.c.h.b16 %v386
        %v2276 = vunpack.c.l.b16 %v387
        %v2277 = vunpack.c.h.b16 %v387
        %v2278 = vunpack.c.l.b16 %v388
        %v2279 = vunpack.c.h.b16 %v388
        %v2280 = vunpack.c.l.b16 %v389
        %v2281 = vunpack.c.h.b16 %v389
        %v2282 = vunpack.c.l.b16 %v390
        %v2283 = vunpack.c.h.b16 %v390
        %v2284 = vunpack.c.l.b16 %v391
        %v2285 = vunpack.c.h.b16 %v391
        %v2286 = vunpack.c.l.b16 %v392
        %v2287 = vunpack.c.h.b16 %v392
        %v2288 = vunpack.c.l.b16 %v393
        %v2289 = vunpack.c.h.b16 %v393
        %v2290 = vunpack.c.l.b16 %v394
        %v2291 = vunpack.c.h.b16 %v394
        %v2292 = vunpack.c.l.b16 %v395
        %v2293 = vunpack.c.h.b16 %v395
        %v2294 = vunpack.c.l.b16 %v396
        %v2295 = vunpack.c.h.b16 %v396
        %v2296 = vunpack.c.l.b16 %v397
        %v2297 = vunpack.c.h.b16 %v397
        %v2298 = vunpack.c.l.b16 %v398
        %v2299 = vunpack.c.h.b16 %v398
        %v2300 = vunpack.c.l.b16 %v399
        %v2301 = vunpack.c.h.b16 %v399
        %v2302 = vunpack.c.l.b16 %v400
        %v2303 = vunpack.c.h.b16 %v400
        %v2304 = vunpack.c.l.b16 %v401
        %v2305 = vunpack.c.h.b16 %v401
        %v2306 = vunpack.c.l.b16 %v402
        %v2307 = vunpack.c.h.b16 %v402
        %v2308 = vunpack.c.l.b16 %v403
        %v2309 = vunpack.c.h.b16 %v403
        %v2310 = vunpack.c.l.b16 %v404
        %v2311 = vunpack.c.h.b16 %v404
        %v2312 = vunpack.c.l.b16 %v405
        %v2313 = vunpack.c.h.b16 %v405
        %v2314 = vunpack.c.l.b16 %v406
        %v2315 = vunpack.c.h.b16 %v406
        %v2316 = vunpack.c.l.b16 %v407
        %v2317 = vunpack.c.h.b16 %v407
        %v2318 = vunpack.c.l.b16 %v408
        %v2319 = vunpack.c.h.b16 %v408
        %v2320 = vunpack.c.l.b16 %v409
        %v2321 = vunpack.c.h.b16 %v409
        %v2322 = vunpack.c.l.b16 %v410
        %v2323 = vunpack.c.h.b16 %v410
        %v2324 = vunpack.c.l.b16 %v411
        %v2325 = vunpack.c.h.b16 %v411
        %v2326 = vunpack.c.l.b16 %v412
        %v2327 = vunpack.c.h.b16 %v412
        %v2328 = vunpack.c.l.b16 %v413
        %v2329 = vunpack.c.h.b16 %v413
        %v2330 = vunpack.c.l.b16 %v414
        %v2331 = vunpack.c.h.b16 %v414
        %v2332 = vunpack.c.l.b16 %v415
        %v2333 = vunpack.c.h.b16 %v415
        %v2334 = vunpack.c.l.b16 %v416
        %v2335 = vunpack.c.h.b16 %v416
        %v2336 = vunpack.c.l.b16 %v417
        %v2337 = vunpack.c.h.b16 %v417
        %v2338 = vunpack.c.l.b16 %v418
        %v2339 = vunpack.c.h.b16 %v418
        %v2340 = vunpack.c.l.b16 %v419
        %v2341 = vunpack.c.h.b16 %v419
        %v2342 = vunpack.c.l.b16 %v420
        %v2343 = vunpack.c.h.b16 %v420
        %v2344 = vunpack.c.l.b16 %v421
        %v2345 = vunpack.c.h.b16 %v421
        %v2346 = vunpack.c.l.b16 %v422
        %v2347 = vunpack.c.h.b16 %v422
        %v2348 = vunpack.c.l.b16 %v423
        %v2349 = vunpack.c.h.b16 %v423
        %v2350 = vunpack.c.l.b16 %v424
        %v2351 = vunpack.c.h.b16 %v424
        %v2352 = vunpack.c.l.b16 %v425
        %v2353 = vunpack.c.h.b16 %v425
        %v2354 = vunpack.c.l.b16 %v426
        %v2355 = vunpack.c.h.b16 %v426
        %v2356 = vunpack.c.l.b16 %v427
        %v2357 = vunpack.c.h.b16 %v427
        %v2358 = vunpack.c.l.b16 %v428
        %v2359 = vunpack.c.h.b16 %v428
        %v2360 = vunpack.c.l.b16 %v429
        %v2361 = vunpack.c.h.b16 %v429
        %v2362 = vunpack.c.l.b16 %v430
        %v2363 = vunpack.c.h.b16 %v430
        %v2364 = vunpack.c.l.b16 %v431
        %v2365 = vunpack.c.h.b16 %v431
        %v2366 = vunpack.c.l.b16 %v432
        %v2367 = vunpack.c.h.b16 %v432
        %v2368 = vunpack.c.l.b16 %v433
        %v2369 = vunpack.c.h.b16 %v433
        %v2370 = vunpack.c.l.b16 %v434
        %v2371 = vunpack.c.h.b16 %v434
        %v2372 = vunpack.c.l.b16 %v435
        %v2373 = vunpack.c.h.b16 %v435
        %v2374 = vunpack.c.l.b16 %v436
        %v2375 = vunpack.c.h.b16 %v436
        %v2376 = vunpack.c.l.b16 %v437
        %v2377 = vunpack.c.h.b16 %v437
        %v2378 = vunpack.c.l.b16 %v438
        %v2379 = vunpack.c.h.b16 %v438
        %v2380 = vunpack.c.l.b16 %v439
        %v2381 = vunpack.c.h.b16 %v439
        %v2382 = vunpack.c.l.b16 %v440
        %v2383 = vunpack.c.h.b16 %v440
        %v2384 = vunpack.c.l.b16 %v441
        %v2385 = vunpack.c.h.b16 %v441
        %v2386 = vunpack.c.l.b16 %v442
        %v2387 = vunpack.c.h.b16 %v442
        %v2388 = vunpack.c.l.b16 %v443
        %v2389 = vunpack.c.h.b16 %v443
        %v2390 = vunpack.c.l.b16 %v444
        %v2391 = vunpack.c.h.b16 %v444
        %v2392 = vunpack.c.l.b16 %v445
        %v2393 = vunpack.c.h.b16 %v445
        %v2394 = vunpack.c.l.b16 %v446
        %v2395 = vunpack.c.h.b16 %v446
        %v2396 = vunpack.c.l.b16 %v447
        %v2397 = vunpack.c.h.b16 %v447
        %v2398 = vunpack.c.l.b16 %v448
        %v2399 = vunpack.c.h.b16 %v448
        %v2400 = vunpack.c.l.b16 %v449
        %v2401 = vunpack.c.h.b16 %v449
        %v2402 = vunpack.c.l.b16 %v450
        %v2403 = vunpack.c.h.b16 %v450
        %v2404 = vunpack.c.l.b16 %v451
        %v2405 = vunpack.c.h.b16 %v451
        %v2406 = vunpack.c.l.b16 %v452
        %v2407 = vunpack.c.h.b16 %v452
        %v2408 = vunpack.c.l.b16 %v453
        %v2409 = vunpack.c.h.b16 %v453
        %v2410 = vunpack.c.l.b16 %v454
        %v2411 = vunpack.c.h.b16 %v454
        %v2412 = vunpack.c.l.b16 %v455
        %v2413 = vunpack.c.h.b16 %v455
        %v2414 = vunpack.c.l.b16 %v456
        %v2415 = vunpack.c.h.b16 %v456
        %v2416 = vunpack.c.l.b16 %v457
        %v2417 = vunpack.c.h.b16 %v457
        %v2418 = vunpack.c.l.b16 %v458
        %v2419 = vunpack.c.h.b16 %v458
        %v2420 = vunpack.c.l.b16 %v459
        %v2421 = vunpack.c.h.b16 %v459
        %v2422 = vunpack.c.l.b16 %v460
        %v2423 = vunpack.c.h.b16 %v460
        %v2424 = vunpack.c.l.b16 %v461
        %v2425 = vunpack.c.h.b16 %v461
        %v2426 = vunpack.c.l.b16 %v462
        %v2427 = vunpack.c.h.b16 %v462
        %v2428 = vunpack.c.l.b16 %v463
        %v2429 = vunpack.c.h.b16 %v463
        %v2430 = vunpack.c.l.b16 %v464
        %v2431 = vunpack.c.h.b16 %v464
        %v2432 = vunpack.c.l.b16 %v465
        %v2433 = vunpack.c.h.b16 %v465
        %v2434 = vunpack.c.l.b16 %v466
        %v2435 = vunpack.c.h.b16 %v466
        %v2436 = vunpack.c.l.b16 %v467
        %v2437 = vunpack.c.h.b16 %v467
        %v2438 = vunpack.c.l.b16 %v468
        %v2439 = vunpack.c.h.b16 %v468
        %v2440 = vunpack.c.l.b16 %v469
        %v2441 = vunpack.c.h.b16 %v469
        %v2442 = vunpack.c.l.b16 %v470
        %v2443 = vunpack.c.h.b16 %v470
        %v2444 = vunpack.c.l.b16 %v471
        %v2445 = vunpack.c.h.b16 %v471
        %v2446 = vunpack.c.l.b16 %v472
        %v2447 = vunpack.c.h.b16 %v472
        %v2448 = vunpack.c.l.b16 %v473
        %v2449 = vunpack.c.h.b16 %v473
        %v2450 = vunpack.c.l.b16 %v474
        %v2451 = vunpack.c.h.b16 %v474
        %v2452 = vunpack.c.l.b16 %v475
        %v2453 = vunpack.c.h.b16 %v475
        %v2454 = vunpack.c.l.b16 %v476
        %v2455 = vunpack.c.h.b16 %v476
        %v2456 = vunpack.c.l.b16 %v477
        %v2457 = vunpack.c.h.b16 %v477
        %v2458 = vunpack.c.l.b16 %v478
        %v2459 = vunpack.c.h.b16 %v478
        %v2460 = vunpack.c.l.b16 %v479
        %v2461 = vunpack.c.h.b16 %v479
        %v2462 = vunpack.c.l.b16 %v480
        %v2463 = vunpack.c.h.b16 %v480
        %v2464 = vunpack.c.l.b16 %v481
        %v2465 = vunpack.c.h.b16 %v481
        %v2466 = vunpack.c.l.b16 %v482
        %v2467 = vunpack.c.h.b16 %v482
        %v2468 = vunpack.c.l.b16 %v483
        %v2469 = vunpack.c.h.b16 %v483
        %v2470 = vunpack.c.l.b16 %v484
        %v2471 = vunpack.c.h.b16 %v484
        %v2472 = vunpack.c.l.b16 %v485
        %v2473 = vunpack.c.h.b16 %v485
        %v2474 = vunpack.c.l.b16 %v486
        %v2475 = vunpack.c.h.b16 %v486
        %v2476 = vunpack.c.l.b16 %v487
        %v2477 = vunpack.c.h.b16 %v487
        %v2478 = vunpack.c.l.b16 %v488
        %v2479 = vunpack.c.h.b16 %v488
        %v2480 = vunpack.c.l.b16 %v489
        %v2481 = vunpack.c.h.b16 %v489
        %v2482 = vunpack.c.l.b16 %v490
        %v2483 = vunpack.c.h.b16 %v490
        %v2484 = vunpack.c.l.b16 %v491
        %v2485 = vunpack.c.h.b16 %v491
        %v2486 = vunpack.c.l.b16 %v492
        %v2487 = vunpack.c.h.b16 %v492
        %v2488 = vunpack.c.l.b16 %v493
        %v2489 = vunpack.c.h.b16 %v493
        %v2490 = vunpack.c.l.b16 %v494
        %v2491 = vunpack.c.h.b16 %v494
        %v2492 = vunpack.c.l.b16 %v495
        %v2493 = vunpack.c.h.b16 %v495
        %v2494 = vunpack.c.l.b16 %v496
        %v2495 = vunpack.c.h.b16 %v496
        %v2496 = vunpack.c.l.b16 %v497
        %v2497 = vunpack.c.h.b16 %v497
        %v2498 = vunpack.c.l.b16 %v498
        %v2499 = vunpack.c.h.b16 %v498
        %v2500 = vunpack.c.l.b16 %v499
        %v2501 = vunpack.c.h.b16 %v499
        %v2502 = vunpack.c.l.b16 %v500
        %v2503 = vunpack.c.h.b16 %v500
        %v2504 = vunpack.c.l.b16 %v501
        %v2505 = vunpack.c.h.b16 %v501
        %v2506 = vunpack.c.l.b16 %v502
        %v2507 = vunpack.c.h.b16 %v502
        %v2508 = vunpack.c.l.b16 %v503
        %v2509 = vunpack.c.h.b16 %v503
        %v2510 = vunpack.c.l.b16 %v504
        %v2511 = vunpack.c.h.b16 %v504
        %v2512 = vunpack.c.l.b16 %v505
        %v2513 = vunpack.c.h.b16 %v505
        %v2514 = vunpack.c.l.b16 %v506
        %v2515 = vunpack.c.h.b16 %v506
        %v2516 = vunpack.c.l.b16 %v507
        %v2517 = vunpack.c.h.b16 %v507
        %v2518 = vunpack.c.l.b16 %v508
        %v2519 = vunpack.c.h.b16 %v508
        %v2520 = vunpack.c.l.b16 %v509
        %v2521 = vunpack.c.h.b16 %v509
        %v2522 = vunpack.c.l.b16 %v510
        %v2523 = vunpack.c.h.b16 %v510
        %v2524 = vunpack.c.l.b16 %v511
        %v2525 = vunpack.c.h.b16 %v511
        %v2526 = vunpack.c.l.b16 %v512
        %v2527 = vunpack.c.h.b16 %v512
        %v2528 = vunpack.c.l.b16 %v513
        %v2529 = vunpack.c.h.b16 %v513
        %v2530 = vunpack.c.l.b16 %v514
        %v2531 = vunpack.c.h.b16 %v514
        %v2532 = vunpack.c.l.b16 %v515
        %v2533 = vunpack.c.h.b16 %v515
        %v2534 = vunpack.c.l.b16 %v516
        %v2535 = vunpack.c.h.b16 %v516
        %v2536 = vunpack.c.l.b16 %v517
        %v2537 = vunpack.c.h.b16 %v517
        %v2538 = vunpack.c.l.b16 %v518
        %v2539 = vunpack.c.h.b16 %v518
        %v2540 = vunpack.c.l.b16 %v519
        %v2541 = vunpack.c.h.b16 %v519
        %v2542 = vunpack.c.l.b16 %v520
        %v2543 = vunpack.c.h.b16 %v520
        %v2544 = vunpack.c.l.b16 %v521
        %v2545 = vunpack.c.h.b16 %v521
        %v2546 = vunpack.c.l.b16 %v522
        %v2547 = vunpack.c.h.b16 %v522
        %v2548 = vunpack.c.l.b16 %v523
        %v2549 = vunpack.c.h.b16 %v523
        %v2550 = vunpack.c.l.b16 %v524
        %v2551 = vunpack.c.h.b16 %v524
        %v2552 = vunpack.c.l.b16 %v525
        %v2553 = vunpack.c.h.b16 %v525
        %v2554 = vunpack.c.l.b16 %v526
        %v2555 = vunpack.c.h.b16 %v526
        %v2556 = vunpack.c.l.b16 %v527
        %v2557 = vunpack.c.h.b16 %v527
        %v2558 = vunpack.c.l.b16 %v528
        %v2559 = vunpack.c.h.b16 %v528
        %v2560 = vunpack.c.l.b16 %v529
        %v2561 = vunpack.c.h.b16 %v529
        %v2562 = vunpack.c.l.b16 %v530
        %v2563 = vunpack.c.h.b16 %v530
        %v2564 = vunpack.c.l.b16 %v531
        %v2565 = vunpack.c.h.b16 %v531
        %v2566 = vunpack.c.l.b16 %v532
        %v2567 = vunpack.c.h.b16 %v532
        %v2568 = vunpack.c.l.b16 %v533
        %v2569 = vunpack.c.h.b16 %v533
        %v2570 = vunpack.c.l.b16 %v534
        %v2571 = vunpack.c.h.b16 %v534
        %v2572 = vunpack.c.l.b16 %v535
        %v2573 = vunpack.c.h.b16 %v535
        %v2574 = vunpack.c.l.b16 %v536
        %v2575 = vunpack.c.h.b16 %v536
        %v2576 = vunpack.c.l.b16 %v537
        %v2577 = vunpack.c.h.b16 %v537
        %v2578 = vunpack.c.l.b16 %v538
        %v2579 = vunpack.c.h.b16 %v538
        %v2580 = vunpack.c.l.b16 %v539
        %v2581 = vunpack.c.h.b16 %v539
        %v2582 = vunpack.c.l.b16 %v540
        %v2583 = vunpack.c.h.b16 %v540
        %v2584 = vunpack.c.l.b16 %v541
        %v2585 = vunpack.c.h.b16 %v541
        %v2586 = vunpack.c.l.b16 %v542
        %v2587 = vunpack.c.h.b16 %v542
        %v2588 = vunpack.c.l.b16 %v543
        %v2589 = vunpack.c.h.b16 %v543
        %v2590 = vunpack.c.l.b16 %v544
        %v2591 = vunpack.c.h.b16 %v544
        %v2592 = vunpack.c.l.b16 %v545
        %v2593 = vunpack.c.h.b16 %v545
        %v2594 = vunpack.c.l.b16 %v546
        %v2595 = vunpack.c.h.b16 %v546
        %v2596 = vunpack.c.l.b16 %v547
        %v2597 = vunpack.c.h.b16 %v547
        %v2598 = vunpack.c.l.b16 %v548
        %v2599 = vunpack.c.h.b16 %v548
        %v2600 = vunpack.c.l.b16 %v549
        %v2601 = vunpack.c.h.b16 %v549
        %v2602 = vunpack.c.l.b16 %v550
        %v2603 = vunpack.c.h.b16 %v550
        %v2604 = vunpack.c.l.b16 %v551
        %v2605 = vunpack.c.h.b16 %v551
        %v2606 = vunpack.c.l.b16 %v552
        %v2607 = vunpack.c.h.b16 %v552
        %v2608 = vunpack.c.l.b16 %v553
        %v2609 = vunpack.c.h.b16 %v553
        %v2610 = vunpack.c.l.b16 %v554
        %v2611 = vunpack.c.h.b16 %v554
        %v2612 = vunpack.c.l.b16 %v555
        %v2613 = vunpack.c.h.b16 %v555
        %v2614 = vunpack.c.l.b16 %v556
        %v2615 = vunpack.c.h.b16 %v556
        %v2616 = vunpack.c.l.b16 %v557
        %v2617 = vunpack.c.h.b16 %v557
        %v2618 = vunpack.c.l.b16 %v558
        %v2619 = vunpack.c.h.b16 %v558
        %v2620 = vunpack.c.l.b16 %v559
        %v2621 = vunpack.c.h.b16 %v559
        %v2622 = vunpack.c.l.b16 %v560
        %v2623 = vunpack.c.h.b16 %v560
        %v2624 = vunpack.c.l.b16 %v561
        %v2625 = vunpack.c.h.b16 %v561
        %v2626 = vunpack.c.l.b16 %v562
        %v2627 = vunpack.c.h.b16 %v562
        %v2628 = vunpack.c.l.b16 %v563
        %v2629 = vunpack.c.h.b16 %v563
        %v2630 = vunpack.c.l.b16 %v564
        %v2631 = vunpack.c.h.b16 %v564
        %v2632 = vunpack.c.l.b16 %v565
        %v2633 = vunpack.c.h.b16 %v565
        %v2634 = vunpack.c.l.b16 %v566
        %v2635 = vunpack.c.h.b16 %v566
        %v2636 = vunpack.c.l.b16 %v567
        %v2637 = vunpack.c.h.b16 %v567
        %v2638 = vunpack.c.l.b16 %v568
        %v2639 = vunpack.c.h.b16 %v568
        %v2640 = vunpack.c.l.b16 %v569
        %v2641 = vunpack.c.h.b16 %v569
        %v2642 = vunpack.c.l.b16 %v570
        %v2643 = vunpack.c.h.b16 %v570
        %v2644 = vunpack.c.l.b16 %v571
        %v2645 = vunpack.c.h.b16 %v571
        %v2646 = vunpack.c.l.b16 %v572
        %v2647 = vunpack.c.h.b16 %v572
        %v2648 = vunpack.c.l.b16 %v573
        %v2649 = vunpack.c.h.b16 %v573
        %v2650 = vunpack.c.l.b16 %v574
        %v2651 = vunpack.c.h.b16 %v574
        %v2652 = vunpack.c.l.b16 %v575
        %v2653 = vunpack.c.h.b16 %v575
        %v2654 = vunpack.c.l.b16 %v576
        %v2655 = vunpack.c.h.b16 %v576
        %v2656 = vunpack.c.l.b16 %v577
        %v2657 = vunpack.c.h.b16 %v577
        %v2658 = vunpack.c.l.b16 %v578
        %v2659 = vunpack.c.h.b16 %v578
        %v2660 = vunpack.c.l.b16 %v579
        %v2661 = vunpack.c.h.b16 %v579
        %v2662 = vunpack.c.l.b16 %v580
        %v2663 = vunpack.c.h.b16 %v580
        %v2664 = vunpack.c.l.b16 %v581
        %v2665 = vunpack.c.h.b16 %v581
        %v2666 = vunpack.c.l.b16 %v582
        %v2667 = vunpack.c.h.b16 %v582
        %v2668 = vunpack.c.l.b16 %v583
        %v2669 = vunpack.c.h.b16 %v583
        %v2670 = vunpack.c.l.b16 %v584
        %v2671 = vunpack.c.h.b16 %v584
        %v2672 = vunpack.c.l.b16 %v585
        %v2673 = vunpack.c.h.b16 %v585
        %v2674 = vunpack.c.l.b16 %v586
        %v2675 = vunpack.c.h.b16 %v586
        %v2676 = vunpack.c.l.b16 %v587
        %v2677 = vunpack.c.h.b16 %v587
        %v2678 = vunpack.c.l.b16 %v588
        %v2679 = vunpack.c.h.b16 %v588
        %v2680 = vunpack.c.l.b16 %v589
        %v2681 = vunpack.c.h.b16 %v589
        %v2682 = vunpack.c.l.b16 %v590
        %v2683 = vunpack.c.h.b16 %v590
        %v2684 = vunpack.c.l.b16 %v591
        %v2685 = vunpack.c.h.b16 %v591
        %v2686 = vunpack.c.l.b16 %v592
        %v2687 = vunpack.c.h.b16 %v592
        %v2688 = vunpack.c.l.b16 %v593
        %v2689 = vunpack.c.h.b16 %v593
        %v2690 = vunpack.c.l.b16 %v594
        %v2691 = vunpack.c.h.b16 %v594
        %v2692 = vunpack.c.l.b16 %v595
        %v2693 = vunpack.c.h.b16 %v595
        %v2694 = vunpack.c.l.b16 %v596
        %v2695 = vunpack.c.h.b16 %v596
        %v2696 = vunpack.c.l.b16 %v597
        %v2697 = vunpack.c.h.b16 %v597
        %v2698 = vunpack.c.l.b16 %v598
        %v2699 = vunpack.c.h.b16 %v598
        %v2700 = vunpack.c.l.b16 %v599
        %v2701 = vunpack.c.h.b16 %v599
        %v2702 = vunpack.c.l.b16 %v600
        %v2703 = vunpack.c.h.b16 %v600
        %v2704 = vunpack.c.l.b16 %v601
        %v2705 = vunpack.c.h.b16 %v601
        %v2706 = vunpack.c.l.b16 %v602
        %v2707 = vunpack.c.h.b16 %v602
        %v2708 = vunpack.c.l.b16 %v603
        %v2709 = vunpack.c.h.b16 %v603
        %v2710 = vunpack.c.l.b16 %v604
        %v2711 = vunpack.c.h.b16 %v604
        %v2712 = vunpack.c.l.b16 %v605
        %v2713 = vunpack.c.h.b16 %v605
        %v2714 = vunpack.c.l.b16 %v606
        %v2715 = vunpack.c.h.b16 %v606
        %v2716 = vunpack.c.l.b16 %v607
        %v2717 = vunpack.c.h.b16 %v607
        %v2718 = vunpack.c.l.b16 %v608
        %v2719 = vunpack.c.h.b16 %v608
        %v2720 = vunpack.c.l.b16 %v609
        %v2721 = vunpack.c.h.b16 %v609
        %v2722 = vunpack.c.l.b16 %v610
        %v2723 = vunpack.c.h.b16 %v610
        %v2724 = vunpack.c.l.b16 %v611
        %v2725 = vunpack.c.h.b16 %v611
        %v2726 = vunpack.c.l.b16 %v612
        %v2727 = vunpack.c.h.b16 %v612
        %v2728 = vunpack.c.l.b16 %v613
        %v2729 = vunpack.c.h.b16 %v613
        %v2730 = vunpack.c.l.b16 %v614
        %v2731 = vunpack.c.h.b16 %v614
        %v2732 = vunpack.c.l.b16 %v615
        %v2733 = vunpack.c.h.b16 %v615
        %v2734 = vunpack.c.l.b16 %v616
        %v2735 = vunpack.c.h.b16 %v616
        %v2736 = vunpack.c.l.b16 %v617
        %v2737 = vunpack.c.h.b16 %v617
        %v2738 = vunpack.c.l.b16 %v618
        %v2739 = vunpack.c.h.b16 %v618
        %v2740 = vunpack.c.l.b16 %v619
        %v2741 = vunpack.c.h.b16 %v619
        %v2742 = vunpack.c.l.b16 %v620
        %v2743 = vunpack.c.h.b16 %v620
        %v2744 = vunpack.c.l.b16 %v621
        %v2745 = vunpack.c.h.b16 %v621
        %v2746 = vunpack.c.l.b16 %v622
        %v2747 = vunpack.c.h.b16 %v622
        %v2748 = vunpack.c.l.b16 %v623
        %v2749 = vunpack.c.h.b16 %v623
        %v2750 = vunpack.c.l.b16 %v624
        %v2751 = vunpack.c.h.b16 %v624
        %v2752 = vunpack.c.l.b16 %v625
        %v2753 = vunpack.c.h.b16 %v625
        %v2754 = vunpack.c.l.b16 %v626
        %v2755 = vunpack.c.h.b16 %v626
        %v2756 = vunpack.c.l.b16 %v627
        %v2757 = vunpack.c.h.b16 %v627
        %v2758 = vunpack.c.l.b16 %v628
        %v2759 = vunpack.c.h.b16 %v628
        %v2760 = vunpack.c.l.b16 %v629
        %v2761 = vunpack.c.h.b16 %v629
        %v2762 = vunpack.c.l.b16 %v630
        %v2763 = vunpack.c.h.b16 %v630
        %v2764 = vunpack.c.l.b16 %v631
        %v2765 = vunpack.c.h.b16 %v631
        %v2766 = vunpack.c.l.b16 %v632
        %v2767 = vunpack.c.h.b16 %v632
        %v2768 = vunpack.c.l.b16 %v633
        %v2769 = vunpack.c.h.b16 %v633
        %v2770 = vunpack.c.l.b16 %v634
        %v2771 = vunpack.c.h.b16 %v634
        %v2772 = vunpack.c.l.b16 %v635
        %v2773 = vunpack.c.h.b16 %v635
        %v2774 = vunpack.c.l.b16 %v636
        %v2775 = vunpack.c.h.b16 %v636
        %v2776 = vunpack.c.l.b16 %v637
        %v2777 = vunpack.c.h.b16 %v637
        %v2778 = vunpack.c.l.b16 %v638
        %v2779 = vunpack.c.h.b16 %v638
        %v2780 = vunpack.c.l.b16 %v639
        %v2781 = vunpack.c.h.b16 %v639
        %v2782 = vunpack.c.l.b16 %v640
        %v2783 = vunpack.c.h.b16 %v640
        %v2784 = vunpack.c.l.b16 %v641
        %v2785 = vunpack.c.h.b16 %v641
        %v2786 = vunpack.c.l.b16 %v642
        %v2787 = vunpack.c.h.b16 %v642
        %v2788 = vunpack.c.l.b16 %v643
        %v2789 = vunpack.c.h.b16 %v643
        %v2790 = vunpack.c.l.b16 %v644
        %v2791 = vunpack.c.h.b16 %v644
        %v2792 = vunpack.c.l.b16 %v645
        %v2793 = vunpack.c.h.b16 %v645
        %v2794 = vunpack.c.l.b16 %v646
        %v2795 = vunpack.c.h.b16 %v646
        %v2796 = vunpack.c.l.b16 %v647
        %v2797 = vunpack.c.h.b16 %v647
        %v2798 = vunpack.c.l.b16 %v648
        %v2799 = vunpack.c.h.b16 %v648
        %v2800 = vunpack.c.l.b16 %v649
        %v2801 = vunpack.c.h.b16 %v649
        %v2802 = vunpack.c.l.b16 %v650
        %v2803 = vunpack.c.h.b16 %v650
        %v2804 = vunpack.c.l.b16 %v651
        %v2805 = vunpack.c.h.b16 %v651
        %v2806 = vunpack.c.l.b16 %v652
        %v2807 = vunpack.c.h.b16 %v652
        %v2808 = vunpack.c.l.b16 %v653
        %v2809 = vunpack.c.h.b16 %v653
        %v2810 = vunpack.c.l.b16 %v654
        %v2811 = vunpack.c.h.b16 %v654
        %v2812 = vunpack.c.l.b16 %v655
        %v2813 = vunpack.c.h.b16 %v655
        %v2814 = vunpack.c.l.b16 %v656
        %v2815 = vunpack.c.h.b16 %v656
        %v2816 = vunpack.c.l.b16 %v657
        %v2817 = vunpack.c.h.b16 %v657
        %v2818 = vunpack.c.l.b16 %v658
        %v2819 = vunpack.c.h.b16 %v658
        %v2820 = vunpack.c.l.b16 %v659
        %v2821 = vunpack.c.h.b16 %v659
        %v2822 = vunpack.c.l.b16 %v660
        %v2823 = vunpack.c.h.b16 %v660
        %v2824 = vunpack.c.l.b16 %v661
        %v2825 = vunpack.c.h.b16 %v661
        %v2826 = vunpack.c.l.b16 %v662
        %v2827 = vunpack.c.h.b16 %v662
        %v2828 = vunpack.c.l.b16 %v663
        %v2829 = vunpack.c.h.b16 %v663
        %v2830 = vunpack.c.l.b16 %v664
        %v2831 = vunpack.c.h.b16 %v664
        %v2832 = vunpack.c.l.b16 %v665
        %v2833 = vunpack.c.h.b16 %v665
        %v2834 = vunpack.c.l.b16 %v666
        %v2835 = vunpack.c.h.b16 %v666
        %v2836 = vunpack.c.l.b16 %v667
        %v2837 = vunpack.c.h.b16 %v667
        %v2838 = vunpack.c.l.b16 %v668
        %v2839 = vunpack.c.h.b16 %v668
        %v2840 = vunpack.c.l.b16 %v669
        %v2841 = vunpack.c.h.b16 %v669
        %v2842 = vunpack.c.l.b16 %v670
        %v2843 = vunpack.c.h.b16 %v670
        %v2844 = vunpack.c.l.b16 %v671
        %v2845 = vunpack.c.h.b16 %v671
        %v2846 = vunpack.c.l.b16 %v672
        %v2847 = vunpack.c.h.b16 %v672
        %v2848 = vunpack.c.l.b16 %v673
        %v2849 = vunpack.c.h.b16 %v673
        %v2850 = vunpack.c.l.b16 %v674
        %v2851 = vunpack.c.h.b16 %v674
        %v2852 = vunpack.c.l.b16 %v675
        %v2853 = vunpack.c.h.b16 %v675
        %v2854 = vunpack.c.l.b16 %v676
        %v2855 = vunpack.c.h.b16 %v676
        %v2856 = vunpack.c.l.b16 %v677
        %v2857 = vunpack.c.h.b16 %v677
        %v2858 = vunpack.c.l.b16 %v678
        %v2859 = vunpack.c.h.b16 %v678
        %v2860 = vunpack.c.l.b16 %v679
        %v2861 = vunpack.c.h.b16 %v679
        %v2862 = vunpack.c.l.b16 %v680
        %v2863 = vunpack.c.h.b16 %v680
        %v2864 = vunpack.c.l.b16 %v681
        %v2865 = vunpack.c.h.b16 %v681
        %v2866 = vunpack.c.l.b16 %v682
        %v2867 = vunpack.c.h.b16 %v682
        %v2868 = vunpack.c.l.b16 %v683
        %v2869 = vunpack.c.h.b16 %v683
        %v2870 = vunpack.c.l.b16 %v684
        %v2871 = vunpack.c.h.b16 %v684
        %v2872 = vunpack.c.l.b16 %v685
        %v2873 = vunpack.c.h.b16 %v685
        %v2874 = vunpack.c.l.b16 %v686
        %v2875 = vunpack.c.h.b16 %v686
        %v2876 = vunpack.c.l.b16 %v687
        %v2877 = vunpack.c.h.b16 %v687
        %v2878 = vunpack.c.l.b16 %v688
        %v2879 = vunpack.c.h.b16 %v688
        %v2880 = vunpack.c.l.b16 %v689
        %v2881 = vunpack.c.h.b16 %v689
        %v2882 = vunpack.c.l.b16 %v690
        %v2883 = vunpack.c.h.b16 %v690
        %v2884 = vunpack.c.l.b16 %v691
        %v2885 = vunpack.c.h.b16 %v691
        %v2886 = vunpack.c.l.b16 %v692
        %v2887 = vunpack.c.h.b16 %v692
        %v2888 = vunpack.c.l.b16 %v693
        %v2889 = vunpack.c.h.b16 %v693
        %v2890 = vunpack.c.l.b16 %v694
        %v2891 = vunpack.c.h.b16 %v694
        %v2892 = vunpack.c.l.b16 %v695
        %v2893 = vunpack.c.h.b16 %v695
        %v2894 = vunpack.c.l.b16 %v696
        %v2895 = vunpack.c.h.b16 %v696
        %v2896 = vunpack.c.l.b16 %v697
        %v2897 = vunpack.c.h.b16 %v697
        %v2898 = vunpack.c.l.b16 %v698
        %v2899 = vunpack.c.h.b16 %v698
        %v2900 = vunpack.c.l.b16 %v699
        %v2901 = vunpack.c.h.b16 %v699
        %v2902 = vunpack.c.l.b16 %v700
        %v2903 = vunpack.c.h.b16 %v700
        %v2904 = vunpack.c.l.b16 %v701
        %v2905 = vunpack.c.h.b16 %v701
        %v2906 = vunpack.c.l.b16 %v702
        %v2907 = vunpack.c.h.b16 %v702
        %v2908 = vunpack.c.l.b16 %v703
        %v2909 = vunpack.c.h.b16 %v703
        %v2910 = vunpack.c.l.b16 %v704
        %v2911 = vunpack.c.h.b16 %v704
        %v2912 = vunpack.c.l.b16 %v705
        %v2913 = vunpack.c.h.b16 %v705
        %v2914 = vunpack.c.l.b16 %v706
        %v2915 = vunpack.c.h.b16 %v706
        %v2916 = vunpack.c.l.b16 %v707
        %v2917 = vunpack.c.h.b16 %v707
        %v2918 = vunpack.c.l.b16 %v708
        %v2919 = vunpack.c.h.b16 %v708
        %v2920 = vunpack.c.l.b16 %v709
        %v2921 = vunpack.c.h.b16 %v709
        %v2922 = vunpack.c.l.b16 %v710
        %v2923 = vunpack.c.h.b16 %v710
        %v2924 = vunpack.c.l.b16 %v711
        %v2925 = vunpack.c.h.b16 %v711
        %v2926 = vunpack.c.l.b16 %v712
        %v2927 = vunpack.c.h.b16 %v712
        %v2928 = vunpack.c.l.b16 %v713
        %v2929 = vunpack.c.h.b16 %v713
        %v2930 = vunpack.c.l.b16 %v714
        %v2931 = vunpack.c.h.b16 %v714
        %v2932 = vunpack.c.l.b16 %v715
        %v2933 = vunpack.c.h.b16 %v715
        %v2934 = vunpack.c.l.b16 %v716
        %v2935 = vunpack.c.h.b16 %v716
        %v2936 = vunpack.c.l.b16 %v717
        %v2937 = vunpack.c.h.b16 %v717
        %v2938 = vunpack.c.l.b16 %v718
        %v2939 = vunpack.c.h.b16 %v718
        %v2940 = vunpack.c.l.b16 %v719
        %v2941 = vunpack.c.h.b16 %v719
        %v2942 = vunpack.c.l.b16 %v720
        %v2943 = vunpack.c.h.b16 %v720
        %v2944 = vunpack.c.l.b16 %v721
        %v2945 = vunpack.c.h.b16 %v721
        %v2946 = vunpack.c.l.b16 %v722
        %v2947 = vunpack.c.h.b16 %v722
        %v2948 = vunpack.c.l.b16 %v723
        %v2949 = vunpack.c.h.b16 %v723
        %v2950 = vunpack.c.l.b16 %v724
        %v2951 = vunpack.c.h.b16 %v724
        %v2952 = vunpack.c.l.b16 %v725
        %v2953 = vunpack.c.h.b16 %v725
        %v2954 = vunpack.c.l.b16 %v726
        %v2955 = vunpack.c.h.b16 %v726
        %v2956 = vunpack.c.l.b16 %v727
        %v2957 = vunpack.c.h.b16 %v727
        %v2958 = vunpack.c.l.b16 %v728
        %v2959 = vunpack.c.h.b16 %v728
        %v2960 = vunpack.c.l.b16 %v729
        %v2961 = vunpack.c.h.b16 %v729
        %v2962 = vunpack.c.l.b16 %v730
        %v2963 = vunpack.c.h.b16 %v730
        %v2964 = vunpack.c.l.b16 %v731
        %v2965 = vunpack.c.h.b16 %v731
        %v2966 = vunpack.c.l.b16 %v732
        %v2967 = vunpack.c.h.b16 %v732
        %v2968 = vunpack.c.l.b16 %v733
        %v2969 = vunpack.c.h.b16 %v733
        %v2970 = vunpack.c.l.b16 %v734
        %v2971 = vunpack.c.h.b16 %v734
        %v2972 = vunpack.c.l.b16 %v735
        %v2973 = vunpack.c.h.b16 %v735
        %v2974 = vunpack.c.l.b16 %v736
        %v2975 = vunpack.c.h.b16 %v736
        %v2976 = vunpack.c.l.b16 %v737
        %v2977 = vunpack.c.h.b16 %v737
        %v2978 = vunpack.c.l.b16 %v738
        %v2979 = vunpack.c.h.b16 %v738
        %v2980 = vunpack.c.l.b16 %v739
        %v2981 = vunpack.c.h.b16 %v739
        %v2982 = vunpack.c.l.b16 %v740
        %v2983 = vunpack.c.h.b16 %v740
        %v2984 = vunpack.c.l.b16 %v741
        %v2985 = vunpack.c.h.b16 %v741
        %v2986 = vunpack.c.l.b16 %v742
        %v2987 = vunpack.c.h.b16 %v742
        %v2988 = vunpack.c.l.b16 %v743
        %v2989 = vunpack.c.h.b16 %v743
        %v2990 = vunpack.c.l.b16 %v744
        %v2991 = vunpack.c.h.b16 %v744
        %v2992 = vunpack.c.l.b16 %v745
        %v2993 = vunpack.c.h.b16 %v745
        %v2994 = vunpack.c.l.b16 %v746
        %v2995 = vunpack.c.h.b16 %v746
        %v2996 = vunpack.c.l.b16 %v747
        %v2997 = vunpack.c.h.b16 %v747
        %v2998 = vunpack.c.l.b16 %v748
        %v2999 = vunpack.c.h.b16 %v748
        %v3000 = vunpack.c.l.b16 %v749
        %v3001 = vunpack.c.h.b16 %v749
        %v3002 = vunpack.c.l.b16 %v750
        %v3003 = vunpack.c.h.b16 %v750
        %v3004 = vunpack.c.l.b16 %v751
        %v3005 = vunpack.c.h.b16 %v751
        %v3006 = vunpack.c.l.b16 %v752
        %v3007 = vunpack.c.h.b16 %v752
        %v3008 = vunpack.c.l.b16 %v753
        %v3009 = vunpack.c.h.b16 %v753
        %v3010 = vunpack.c.l.b16 %v754
        %v3011 = vunpack.c.h.b16 %v754
        %v3012 = vunpack.c.l.b16 %v755
        %v3013 = vunpack.c.h.b16 %v755
        %v3014 = vunpack.c.l.b16 %v756
        %v3015 = vunpack.c.h.b16 %v756
        %v3016 = vunpack.c.l.b16 %v757
        %v3017 = vunpack.c.h.b16 %v757
        %v3018 = vunpack.c.l.b16 %v758
        %v3019 = vunpack.c.h.b16 %v758
        %v3020 = vunpack.c.l.b16 %v759
        %v3021 = vunpack.c.h.b16 %v759
        %v3022 = vunpack.c.l.b16 %v760
        %v3023 = vunpack.c.h.b16 %v760
        %v3024 = vunpack.c.l.b16 %v761
        %v3025 = vunpack.c.h.b16 %v761
        %v3026 = vunpack.c.l.b16 %v762
        %v3027 = vunpack.c.h.b16 %v762
        %v3028 = vunpack.c.l.b16 %v763
        %v3029 = vunpack.c.h.b16 %v763
        %v3030 = vunpack.c.l.b16 %v764
        %v3031 = vunpack.c.h.b16 %v764
        %v3032 = vunpack.c.l.b16 %v765
        %v3033 = vunpack.c.h.b16 %v765
        %v3034 = vunpack.c.l.b16 %v766
        %v3035 = vunpack.c.h.b16 %v766
        %v3036 = vunpack.c.l.b16 %v767
        %v3037 = vunpack.c.h.b16 %v767
        %v3038 = vunpack.c.l.b16 %v768
        %v3039 = vunpack.c.h.b16 %v768
        %v3040 = vunpack.c.l.b16 %v769
        %v3041 = vunpack.c.h.b16 %v769
        %v3042 = vunpack.c.l.b16 %v770
        %v3043 = vunpack.c.h.b16 %v770
        %v3044 = vunpack.c.l.b16 %v771
        %v3045 = vunpack.c.h.b16 %v771
        %v3046 = vunpack.c.l.b16 %v772
        %v3047 = vunpack.c.h.b16 %v772
        %v3048 = vunpack.c.l.b16 %v773
        %v3049 = vunpack.c.h.b16 %v773
        %v3050 = vunpack.c.l.b16 %v774
        %v3051 = vunpack.c.h.b16 %v774
        %v3052 = vunpack.c.l.b16 %v775
        %v3053 = vunpack.c.h.b16 %v775
        %v3054 = vunpack.c.l.b16 %v776
        %v3055 = vunpack.c.h.b16 %v776
        %v3056 = vunpack.c.l.b16 %v777
        %v3057 = vunpack.c.h.b16 %v777
        %v3058 = vunpack.c.l.b16 %v778
        %v3059 = vunpack.c.h.b16 %v778
        %v3060 = vunpack.c.l.b16 %v779
        %v3061 = vunpack.c.h.b16 %v779
        %v3062 = vunpack.c.l.b16 %v780
        %v3063 = vunpack.c.h.b16 %v780
        %v3064 = vunpack.c.l.b16 %v781
        %v3065 = vunpack.c.h.b16 %v781
        %v3066 = vunpack.c.l.b16 %v782
        %v3067 = vunpack.c.h.b16 %v782
        %v3068 = vunpack.c.l.b16 %v783
        %v3069 = vunpack.c.h.b16 %v783
        %v3070 = vunpack.c.l.b16 %v784
        %v3071 = vunpack.c.h.b16 %v784
        %v3072 = vunpack.c.l.b16 %v785
        %v3073 = vunpack.c.h.b16 %v785
        %v3074 = vunpack.c.l.b16 %v786
        %v3075 = vunpack.c.h.b16 %v786
        %v3076 = vunpack.c.l.b16 %v787
        %v3077 = vunpack.c.h.b16 %v787
        %v3078 = vunpack.c.l.b16 %v788
        %v3079 = vunpack.c.h.b16 %v788
        %v3080 = vunpack.c.l.b16 %v789
        %v3081 = vunpack.c.h.b16 %v789
        %v3082 = vunpack.c.l.b16 %v790
        %v3083 = vunpack.c.h.b16 %v790
        %v3084 = vunpack.c.l.b16 %v791
        %v3085 = vunpack.c.h.b16 %v791
        %v3086 = vunpack.c.l.b16 %v792
        %v3087 = vunpack.c.h.b16 %v792
        %v3088 = vunpack.c.l.b16 %v793
        %v3089 = vunpack.c.h.b16 %v793
        %v3090 = vunpack.c.l.b16 %v794
        %v3091 = vunpack.c.h.b16 %v794
        %v3092 = vunpack.c.l.b16 %v795
        %v3093 = vunpack.c.h.b16 %v795
        %v3094 = vunpack.c.l.b16 %v796
        %v3095 = vunpack.c.h.b16 %v796
        %v3096 = vunpack.c.l.b16 %v797
        %v3097 = vunpack.c.h.b16 %v797
        %v3098 = vunpack.c.l.b16 %v798
        %v3099 = vunpack.c.h.b16 %v798
        %v3100 = vunpack.c.l.b16 %v799
        %v3101 = vunpack.c.h.b16 %v799
        %v3102 = vunpack.c.l.b16 %v800
        %v3103 = vunpack.c.h.b16 %v800
        %v3104 = vunpack.c.l.b16 %v801
        %v3105 = vunpack.c.h.b16 %v801
        %v3106 = vunpack.c.l.b16 %v802
        %v3107 = vunpack.c.h.b16 %v802
        %v3108 = vunpack.c.l.b16 %v803
        %v3109 = vunpack.c.h.b16 %v803
        %v3110 = vunpack.c.l.b16 %v804
        %v3111 = vunpack.c.h.b16 %v804
        %v3112 = vunpack.c.l.b16 %v805
        %v3113 = vunpack.c.h.b16 %v805
        %v3114 = vunpack.c.l.b16 %v806
        %v3115 = vunpack.c.h.b16 %v806
        %v3116 = vunpack.c.l.b16 %v807
        %v3117 = vunpack.c.h.b16 %v807
        %v3118 = vunpack.c.l.b16 %v808
        %v3119 = vunpack.c.h.b16 %v808
        %v3120 = vunpack.c.l.b16 %v809
        %v3121 = vunpack.c.h.b16 %v809
        %v3122 = vunpack.c.l.b16 %v810
        %v3123 = vunpack.c.h.b16 %v810
        %v3124 = vunpack.c.l.b16 %v811
        %v3125 = vunpack.c.h.b16 %v811
        %v3126 = vunpack.c.l.b16 %v812
        %v3127 = vunpack.c.h.b16 %v812
        %v3128 = vunpack.c.l.b16 %v813
        %v3129 = vunpack.c.h.b16 %v813
        %v3130 = vunpack.c.l.b16 %v814
        %v3131 = vunpack.c.h.b16 %v814
        %v3132 = vunpack.c.l.b16 %v815
        %v3133 = vunpack.c.h.b16 %v815
        %v3134 = vunpack.c.l.b16 %v816
        %v3135 = vunpack.c.h.b16 %v816
        %v3136 = vunpack.c.l.b16 %v817
        %v3137 = vunpack.c.h.b16 %v817
        %v3138 = vunpack.c.l.b16 %v818
        %v3139 = vunpack.c.h.b16 %v818
        %v3140 = vunpack.c.l.b16 %v819
        %v3141 = vunpack.c.h.b16 %v819
        %v3142 = vunpack.c.l.b16 %v820
        %v3143 = vunpack.c.h.b16 %v820
        %v3144 = vunpack.c.l.b16 %v821
        %v3145 = vunpack.c.h.b16 %v821
        %v3146 = vunpack.c.l.b16 %v822
        %v3147 = vunpack.c.h.b16 %v822
        %v3148 = vunpack.c.l.b16 %v823
        %v3149 = vunpack.c.h.b16 %v823
        %v3150 = vunpack.c.l.b16 %v824
        %v3151 = vunpack.c.h.b16 %v824
        %v3152 = vunpack.c.l.b16 %v825
        %v3153 = vunpack.c.h.b16 %v825
        %v3154 = vunpack.c.l.b16 %v826
        %v3155 = vunpack.c.h.b16 %v826
        %v3156 = vunpack.c.l.b16 %v827
        %v3157 = vunpack.c.h.b16 %v827
        %v3158 = vunpack.c.l.b16 %v828
        %v3159 = vunpack.c.h.b16 %v828
        %v3160 = vunpack.c.l.b16 %v829
        %v3161 = vunpack.c.h.b16 %v829
        %v3162 = vunpack.c.l.b16 %v830
        %v3163 = vunpack.c.h.b16 %v830
        %v3164 = vunpack.c.l.b16 %v831
        %v3165 = vunpack.c.h.b16 %v831
        %v3166 = vunpack.c.l.b16 %v832
        %v3167 = vunpack.c.h.b16 %v832
        %v3168 = vunpack.c.l.b16 %v833
        %v3169 = vunpack.c.h.b16 %v833
        %v3170 = vunpack.c.l.b16 %v834
        %v3171 = vunpack.c.h.b16 %v834
        %v3172 = vunpack.c.l.b16 %v835
        %v3173 = vunpack.c.h.b16 %v835
        %v3174 = vunpack.c.l.b16 %v836
        %v3175 = vunpack.c.h.b16 %v836
        %v3176 = vunpack.c.l.b16 %v837
        %v3177 = vunpack.c.h.b16 %v837
        %v3178 = vunpack.c.l.b16 %v838
        %v3179 = vunpack.c.h.b16 %v838
        %v3180 = vunpack.c.l.b16 %v839
        %v3181 = vunpack.c.h.b16 %v839
        %v3182 = vunpack.c.l.b16 %v840
        %v3183 = vunpack.c.h.b16 %v840
        %v3184 = vunpack.c.l.b16 %v841
        %v3185 = vunpack.c.h.b16 %v841
        %v3186 = vunpack.c.l.b16 %v842
        %v3187 = vunpack.c.h.b16 %v842
        %v3188 = vunpack.c.l.b16 %v843
        %v3189 = vunpack.c.h.b16 %v843
        %v3190 = vunpack.c.l.b16 %v844
        %v3191 = vunpack.c.h.b16 %v844
        %v3192 = vunpack.c.l.b16 %v845
        %v3193 = vunpack.c.h.b16 %v845
        %v3194 = vunpack.c.l.b16 %v846
        %v3195 = vunpack.c.h.b16 %v846
        %v3196 = vunpack.c.l.b16 %v847
        %v3197 = vunpack.c.h.b16 %v847
        %v3198 = vunpack.c.l.b16 %v848
        %v3199 = vunpack.c.h.b16 %v848
        %v3200 = vunpack.c.l.b16 %v849
        %v3201 = vunpack.c.h.b16 %v849
        %v3202 = vunpack.c.l.b16 %v850
        %v3203 = vunpack.c.h.b16 %v850
        %v3204 = vunpack.c.l.b16 %v851
        %v3205 = vunpack.c.h.b16 %v851
        %v3206 = vunpack.c.l.b16 %v852
        %v3207 = vunpack.c.h.b16 %v852
        %v3208 = vunpack.c.l.b16 %v853
        %v3209 = vunpack.c.h.b16 %v853
        %v3210 = vunpack.c.l.b16 %v854
        %v3211 = vunpack.c.h.b16 %v854
        %v3212 = vunpack.c.l.b16 %v855
        %v3213 = vunpack.c.h.b16 %v855
        %v3214 = vunpack.c.l.b16 %v856
        %v3215 = vunpack.c.h.b16 %v856
        %v3216 = vunpack.c.l.b16 %v857
        %v3217 = vunpack.c.h.b16 %v857
        %v3218 = vunpack.c.l.b16 %v858
        %v3219 = vunpack.c.h.b16 %v858
        %v3220 = vunpack.c.l.b16 %v859
        %v3221 = vunpack.c.h.b16 %v859
        %v3222 = vunpack.c.l.b16 %v860
        %v3223 = vunpack.c.h.b16 %v860
        %v3224 = vunpack.c.l.b16 %v861
        %v3225 = vunpack.c.h.b16 %v861
        %v3226 = vunpack.c.l.b16 %v862
        %v3227 = vunpack.c.h.b16 %v862
        %v3228 = vunpack.c.l.b16 %v863
        %v3229 = vunpack.c.h.b16 %v863
        %v3230 = vunpack.c.l.b16 %v864
        %v3231 = vunpack.c.h.b16 %v864
        %v3232 = vunpack.c.l.b16 %v865
        %v3233 = vunpack.c.h.b16 %v865
        %v3234 = vunpack.c.l.b16 %v866
        %v3235 = vunpack.c.h.b16 %v866
        %v3236 = vunpack.c.l.b16 %v867
        %v3237 = vunpack.c.h.b16 %v867
        %v3238 = vunpack.c.l.b16 %v868
        %v3239 = vunpack.c.h.b16 %v868
        %v3240 = vunpack.c.l.b16 %v869
        %v3241 = vunpack.c.h.b16 %v869
        %v3242 = vunpack.c.l.b16 %v870
        %v3243 = vunpack.c.h.b16 %v870
        %v3244 = vunpack.c.l.b16 %v871
        %v3245 = vunpack.c.h.b16 %v871
        %v3246 = vunpack.c.l.b16 %v872
        %v3247 = vunpack.c.h.b16 %v872
        %v3248 = vunpack.c.l.b16 %v873
        %v3249 = vunpack.c.h.b16 %v873
        %v3250 = vunpack.c.l.b16 %v874
        %v3251 = vunpack.c.h.b16 %v874
        %v3252 = vunpack.c.l.b16 %v875
        %v3253 = vunpack.c.h.b16 %v875
        %v3254 = vunpack.c.l.b16 %v876
        %v3255 = vunpack.c.h.b16 %v876
        %v3256 = vunpack.c.l.b16 %v877
        %v3257 = vunpack.c.h.b16 %v877
        %v3258 = vunpack.c.l.b16 %v878
        %v3259 = vunpack.c.h.b16 %v878
        %v3260 = vunpack.c.l.b16 %v879
        %v3261 = vunpack.c.h.b16 %v879
        %v3262 = vunpack.c.l.b16 %v880
        %v3263 = vunpack.c.h.b16 %v880
        %v3264 = vunpack.c.l.b16 %v881
        %v3265 = vunpack.c.h.b16 %v881
        %v3266 = vunpack.c.l.b16 %v882
        %v3267 = vunpack.c.h.b16 %v882
        %v3268 = vunpack.c.l.b16 %v883
        %v3269 = vunpack.c.h.b16 %v883
        %v3270 = vunpack.c.l.b16 %v884
        %v3271 = vunpack.c.h.b16 %v884
        %v3272 = vunpack.c.l.b16 %v885
        %v3273 = vunpack.c.h.b16 %v885
        %v3274 = vunpack.c.l.b16 %v886
        %v3275 = vunpack.c.h.b16 %v886
        %v3276 = vunpack.c.l.b16 %v887
        %v3277 = vunpack.c.h.b16 %v887
        %v3278 = vunpack.c.l.b16 %v888
        %v3279 = vunpack.c.h.b16 %v888
        %v3280 = vunpack.c.l.b16 %v889
        %v3281 = vunpack.c.h.b16 %v889
        %v3282 = vunpack.c.l.b16 %v890
        %v3283 = vunpack.c.h.b16 %v890
        %v3284 = vunpack.c.l.b16 %v891
        %v3285 = vunpack.c.h.b16 %v891
        %v3286 = vunpack.c.l.b16 %v892
        %v3287 = vunpack.c.h.b16 %v892
        %v3288 = vunpack.c.l.b16 %v893
        %v3289 = vunpack.c.h.b16 %v893
        %v3290 = vunpack.c.l.b16 %v894
        %v3291 = vunpack.c.h.b16 %v894
        %v3292 = vunpack.c.l.b16 %v895
        %v3293 = vunpack.c.h.b16 %v895
        %v3294 = vunpack.c.l.b16 %v896
        %v3295 = vunpack.c.h.b16 %v896
        %v3296 = vunpack.c.l.b16 %v897
        %v3297 = vunpack.c.h.b16 %v897
        %v3298 = vunpack.c.l.b16 %v898
        %v3299 = vunpack.c.h.b16 %v898
        %v3300 = vunpack.c.l.b16 %v899
        %v3301 = vunpack.c.h.b16 %v899
        %v3302 = vunpack.c.l.b16 %v900
        %v3303 = vunpack.c.h.b16 %v900
        %v3304 = vunpack.c.l.b16 %v901
        %v3305 = vunpack.c.h.b16 %v901
        %v3306 = vunpack.c.l.b16 %v902
        %v3307 = vunpack.c.h.b16 %v902
        %v3308 = vunpack.c.l.b16 %v903
        %v3309 = vunpack.c.h.b16 %v903
        %v3310 = vunpack.c.l.b16 %v904
        %v3311 = vunpack.c.h.b16 %v904
        %v3312 = vunpack.c.l.b16 %v905
        %v3313 = vunpack.c.h.b16 %v905
        %v3314 = vunpack.c.l.b16 %v906
        %v3315 = vunpack.c.h.b16 %v906
        %v3316 = vunpack.c.l.b16 %v907
        %v3317 = vunpack.c.h.b16 %v907
        %v3318 = vunpack.c.l.b16 %v908
        %v3319 = vunpack.c.h.b16 %v908
        %v3320 = vunpack.c.l.b16 %v909
        %v3321 = vunpack.c.h.b16 %v909
        %v3322 = vunpack.c.l.b16 %v910
        %v3323 = vunpack.c.h.b16 %v910
        %v3324 = vunpack.c.l.b16 %v911
        %v3325 = vunpack.c.h.b16 %v911
        %v3326 = vunpack.c.l.b16 %v912
        %v3327 = vunpack.c.h.b16 %v912
        %v3328 = vunpack.c.l.b16 %v913
        %v3329 = vunpack.c.h.b16 %v913
        %v3330 = vunpack.c.l.b16 %v914
        %v3331 = vunpack.c.h.b16 %v914
        %v3332 = vunpack.c.l.b16 %v915
        %v3333 = vunpack.c.h.b16 %v915
        %v3334 = vunpack.c.l.b16 %v916
        %v3335 = vunpack.c.h.b16 %v916
        %v3336 = vunpack.c.l.b16 %v917
        %v3337 = vunpack.c.h.b16 %v917
        %v3338 = vunpack.c.l.b16 %v918
        %v3339 = vunpack.c.h.b16 %v918
        %v3340 = vunpack.c.l.b16 %v919
        %v3341 = vunpack.c.h.b16 %v919
        %v3342 = vunpack.c.l.b16 %v920
        %v3343 = vunpack.c.h.b16 %v920
        %v3344 = vunpack.c.l.b16 %v921
        %v3345 = vunpack.c.h.b16 %v921
        %v3346 = vunpack.c.l.b16 %v922
        %v3347 = vunpack.c.h.b16 %v922
        %v3348 = vunpack.c.l.b16 %v923
        %v3349 = vunpack.c.h.b16 %v923
        %v3350 = vunpack.c.l.b16 %v924
        %v3351 = vunpack.c.h.b16 %v924
        %v3352 = vunpack.c.l.b16 %v925
        %v3353 = vunpack.c.h.b16 %v925
        %v3354 = vunpack.c.l.b16 %v926
        %v3355 = vunpack.c.h.b16 %v926
        %v3356 = vunpack.c.l.b16 %v927
        %v3357 = vunpack.c.h.b16 %v927
        %v3358 = vunpack.c.l.b16 %v928
        %v3359 = vunpack.c.h.b16 %v928
        %v3360 = vunpack.c.l.b16 %v929
        %v3361 = vunpack.c.h.b16 %v929
        %v3362 = vunpack.c.l.b16 %v930
        %v3363 = vunpack.c.h.b16 %v930
        %v3364 = vunpack.c.l.b16 %v931
        %v3365 = vunpack.c.h.b16 %v931
        %v3366 = vunpack.c.l.b16 %v932
        %v3367 = vunpack.c.h.b16 %v932
        %v3368 = vunpack.c.l.b16 %v933
        %v3369 = vunpack.c.h.b16 %v933
        %v3370 = vunpack.c.l.b16 %v934
        %v3371 = vunpack.c.h.b16 %v934
        %v3372 = vunpack.c.l.b16 %v935
        %v3373 = vunpack.c.h.b16 %v935
        %v3374 = vunpack.c.l.b16 %v936
        %v3375 = vunpack.c.h.b16 %v936
        %v3376 = vunpack.c.l.b16 %v937
        %v3377 = vunpack.c.h.b16 %v937
        %v3378 = vunpack.c.l.b16 %v938
        %v3379 = vunpack.c.h.b16 %v938
        %v3380 = vunpack.c.l.b16 %v939
        %v3381 = vunpack.c.h.b16 %v939
        %v3382 = vunpack.c.l.b16 %v940
        %v3383 = vunpack.c.h.b16 %v940
        %v3384 = vunpack.c.l.b16 %v941
        %v3385 = vunpack.c.h.b16 %v941
        %v3386 = vunpack.c.l.b16 %v942
        %v3387 = vunpack.c.h.b16 %v942
        %v3388 = vunpack.c.l.b16 %v943
        %v3389 = vunpack.c.h.b16 %v943
        %v3390 = vunpack.c.l.b16 %v944
        %v3391 = vunpack.c.h.b16 %v944
        %v3392 = vunpack.c.l.b16 %v945
        %v3393 = vunpack.c.h.b16 %v945
        %v3394 = vunpack.c.l.b16 %v946
        %v3395 = vunpack.c.h.b16 %v946
        %v3396 = vunpack.c.l.b16 %v947
        %v3397 = vunpack.c.h.b16 %v947
        %v3398 = vunpack.c.l.b16 %v948
        %v3399 = vunpack.c.h.b16 %v948
        %v3400 = vunpack.c.l.b16 %v949
        %v3401 = vunpack.c.h.b16 %v949
        %v3402 = vunpack.c.l.b16 %v950
        %v3403 = vunpack.c.h.b16 %v950
        %v3404 = vunpack.c.l.b16 %v951
        %v3405 = vunpack.c.h.b16 %v951
        %v3406 = vunpack.c.l.b16 %v952
        %v3407 = vunpack.c.h.b16 %v952
        %v3408 = vunpack.c.l.b16 %v953
        %v3409 = vunpack.c.h.b16 %v953
        %v3410 = vunpack.c.l.b16 %v954
        %v3411 = vunpack.c.h.b16 %v954
        %v3412 = vunpack.c.l.b16 %v955
        %v3413 = vunpack.c.h.b16 %v955
        %v3414 = vunpack.c.l.b16 %v956
        %v3415 = vunpack.c.h.b16 %v956
        %v3416 = vunpack.c.l.b16 %v957
        %v3417 = vunpack.c.h.b16 %v957
        %v3418 = vunpack.c.l.b16 %v958
        %v3419 = vunpack.c.h.b16 %v958
        %v3420 = vunpack.c.l.b16 %v959
        %v3421 = vunpack.c.h.b16 %v959
        %v3422 = vunpack.c.l.b16 %v960
        %v3423 = vunpack.c.h.b16 %v960
        %v3424 = vunpack.c.l.b16 %v961
        %v3425 = vunpack.c.h.b16 %v961
        %v3426 = vunpack.c.l.b16 %v962
        %v3427 = vunpack.c.h.b16 %v962
        %v3428 = vunpack.c.l.b16 %v963
        %v3429 = vunpack.c.h.b16 %v963
        %v3430 = vunpack.c.l.b16 %v964
        %v3431 = vunpack.c.h.b16 %v964
        %v3432 = vunpack.c.l.b16 %v965
        %v3433 = vunpack.c.h.b16 %v965
        %v3434 = vunpack.c.l.b16 %v966
        %v3435 = vunpack.c.h.b16 %v966
        %v3436 = vunpack.c.l.b16 %v967
        %v3437 = vunpack.c.h.b16 %v967
        %v3438 = vunpack.c.l.b16 %v968
        %v3439 = vunpack.c.h.b16 %v968
        %v3440 = vunpack.c.l.b16 %v969
        %v3441 = vunpack.c.h.b16 %v969
        %v3442 = vunpack.c.l.b16 %v970
        %v3443 = vunpack.c.h.b16 %v970
        %v3444 = vunpack.c.l.b16 %v971
        %v3445 = vunpack.c.h.b16 %v971
        %v3446 = vunpack.c.l.b16 %v972
        %v3447 = vunpack.c.h.b16 %v972
        %v3448 = vunpack.c.l.b16 %v973
        %v3449 = vunpack.c.h.b16 %v973
        %v3450 = vunpack.c.l.b16 %v974
        %v3451 = vunpack.c.h.b16 %v974
        %v3452 = vunpack.c.l.b16 %v975
        %v3453 = vunpack.c.h.b16 %v975
        %v3454 = vunpack.c.l.b16 %v976
        %v3455 = vunpack.c.h.b16 %v976
        %v3456 = vunpack.c.l.b16 %v977
        %v3457 = vunpack.c.h.b16 %v977
        %v3458 = vunpack.c.l.b16 %v978
        %v3459 = vunpack.c.h.b16 %v978
        %v3460 = vunpack.c.l.b16 %v979
        %v3461 = vunpack.c.h.b16 %v979
        %v3462 = vunpack.c.l.b16 %v980
        %v3463 = vunpack.c.h.b16 %v980
        %v3464 = vunpack.c.l.b16 %v981
        %v3465 = vunpack.c.h.b16 %v981
        %v3466 = vunpack.c.l.b16 %v982
        %v3467 = vunpack.c.h.b16 %v982
        %v3468 = vunpack.c.l.b16 %v983
        %v3469 = vunpack.c.h.b16 %v983
        %v3470 = vunpack.c.l.b16 %v984
        %v3471 = vunpack.c.h.b16 %v984
        %v3472 = vunpack.c.l.b16 %v985
        %v3473 = vunpack.c.h.b16 %v985
        %v3474 = vunpack.c.l.b16 %v986
        %v3475 = vunpack.c.h.b16 %v986
        %v3476 = vunpack.c.l.b16 %v987
        %v3477 = vunpack.c.h.b16 %v987
        %v3478 = vunpack.c.l.b16 %v988
        %v3479 = vunpack.c.h.b16 %v988
        %v3480 = vunpack.c.l.b16 %v989
        %v3481 = vunpack.c.h.b16 %v989
        %v3482 = vunpack.c.l.b16 %v990
        %v3483 = vunpack.c.h.b16 %v990
        %v3484 = vunpack.c.l.b16 %v991
        %v3485 = vunpack.c.h.b16 %v991
        %v3486 = vunpack.c.l.b16 %v992
        %v3487 = vunpack.c.h.b16 %v992
        %v3488 = vunpack.c.l.b16 %v993
        %v3489 = vunpack.c.h.b16 %v993
        %v3490 = vunpack.c.l.b16 %v994
        %v3491 = vunpack.c.h.b16 %v994
        %v3492 = vunpack.c.l.b16 %v995
        %v3493 = vunpack.c.h.b16 %v995
        %v3494 = vunpack.c.l.b16 %v996
        %v3495 = vunpack.c.h.b16 %v996
        %v3496 = vunpack.c.l.b16 %v997
        %v3497 = vunpack.c.h.b16 %v997
        %v3498 = vunpack.c.l.b16 %v998
        %v3499 = vunpack.c.h.b16 %v998
        %v3500 = vunpack.c.l.b16 %v999
        %v3501 = vunpack.c.h.b16 %v999
        %v3502 = vunpack.c.l.b16 %v1000
        %v3503 = vunpack.c.h.b16 %v1000
        %v3504 = vunpack.c.l.b16 %v1001
        %v3505 = vunpack.c.h.b16 %v1001
        %v3506 = vunpack.c.l.b16 %v1002
        %v3507 = vunpack.c.h.b16 %v1002
        %v3508 = vunpack.c.l.b16 %v1003
        %v3509 = vunpack.c.h.b16 %v1003
        %v3510 = vunpack.c.l.b16 %v1004
        %v3511 = vunpack.c.h.b16 %v1004
        %v3512 = vunpack.c.l.b16 %v1005
        %v3513 = vunpack.c.h.b16 %v1005
        %v3514 = vunpack.c.l.b16 %v1006
        %v3515 = vunpack.c.h.b16 %v1006
        %v3516 = vunpack.c.l.b16 %v1007
        %v3517 = vunpack.c.h.b16 %v1007
        %v3518 = vunpack.c.l.b16 %v1008
        %v3519 = vunpack.c.h.b16 %v1008
        %v3520 = vunpack.c.l.b16 %v1009
        %v3521 = vunpack.c.h.b16 %v1009
        %v3522 = vunpack.c.l.b16 %v1010
        %v3523 = vunpack.c.h.b16 %v1010
        %v3524 = vunpack.c.l.b16 %v1011
        %v3525 = vunpack.c.h.b16 %v1011
        %v3526 = vunpack.c.l.b16 %v1012
        %v3527 = vunpack.c.h.b16 %v1012
        %v3528 = vunpack.c.l.b16 %v1013
        %v3529 = vunpack.c.h.b16 %v1013
        %v3530 = vunpack.c.l.b16 %v1014
        %v3531 = vunpack.c.h.b16 %v1014
        %v3532 = vunpack.c.l.b16 %v1015
        %v3533 = vunpack.c.h.b16 %v1015
        %v3534 = vunpack.c.l.b16 %v1016
        %v3535 = vunpack.c.h.b16 %v1016
        %v3536 = vunpack.c.l.b16 %v1017
        %v3537 = vunpack.c.h.b16 %v1017
        %v3538 = vunpack.c.l.b16 %v1018
        %v3539 = vunpack.c.h.b16 %v1018
        %v3540 = vunpack.c.l.b16 %v1019
        %v3541 = vunpack.c.h.b16 %v1019
        %v3542 = vunpack.c.l.b16 %v1020
        %v3543 = vunpack.c.h.b16 %v1020
        %v3544 = vunpack.c.l.b16 %v1021
        %v3545 = vunpack.c.h.b16 %v1021
        %v3546 = vunpack.c.l.b16 %v1022
        %v3547 = vunpack.c.h.b16 %v1022
        %v3548 = vunpack.c.l.b16 %v1023
        %v3549 = vunpack.c.h.b16 %v1023
        %v3550 = vunpack.c.l.b16 %v1024
        %v3551 = vunpack.c.h.b16 %v1024
        %v3552 = vunpack.c.l.b16 %v1025
        %v3553 = vunpack.c.h.b16 %v1025
        %v3554 = vunpack.c.l.b16 %v1026
        %v3555 = vunpack.c.h.b16 %v1026
        %v3556 = vunpack.c.l.b16 %v1027
        %v3557 = vunpack.c.h.b16 %v1027
        %v3558 = vunpack.c.l.b16 %v1028
        %v3559 = vunpack.c.h.b16 %v1028
        %v3560 = vunpack.c.l.b16 %v1029
        %v3561 = vunpack.c.h.b16 %v1029
        %v3562 = vunpack.c.l.b16 %v1030
        %v3563 = vunpack.c.h.b16 %v1030
        %v3564 = vunpack.c.l.b16 %v1031
        %v3565 = vunpack.c.h.b16 %v1031
        %v3566 = vunpack.c.l.b16 %v1032
        %v3567 = vunpack.c.h.b16 %v1032
        %v3568 = vunpack.c.l.b16 %v1033
        %v3569 = vunpack.c.h.b16 %v1033
        %v3570 = vunpack.c.l.b16 %v1034
        %v3571 = vunpack.c.h.b16 %v1034
        %v3572 = vunpack.c.l.b16 %v1035
        %v3573 = vunpack.c.h.b16 %v1035
        %v3574 = vunpack.c.l.b16 %v1036
        %v3575 = vunpack.c.h.b16 %v1036
        %v3576 = vunpack.c.l.b16 %v1037
        %v3577 = vunpack.c.h.b16 %v1037
        %v3578 = vunpack.c.l.b16 %v1038
        %v3579 = vunpack.c.h.b16 %v1038
        %v3580 = vunpack.c.l.b16 %v1039
        %v3581 = vunpack.c.h.b16 %v1039
        %v3582 = vunpack.c.l.b16 %v1040
        %v3583 = vunpack.c.h.b16 %v1040
        %v3584 = vunpack.c.l.b16 %v1041
        %v3585 = vunpack.c.h.b16 %v1041
        %v3586 = vunpack.c.l.b16 %v1042
        %v3587 = vunpack.c.h.b16 %v1042
        %v3588 = vunpack.c.l.b16 %v1043
        %v3589 = vunpack.c.h.b16 %v1043
        %v3590 = vunpack.c.l.b16 %v1044
        %v3591 = vunpack.c.h.b16 %v1044
        %v3592 = vunpack.c.l.b16 %v1045
        %v3593 = vunpack.c.h.b16 %v1045
        %v3594 = vunpack.c.l.b16 %v1046
        %v3595 = vunpack.c.h.b16 %v1046
        %v3596 = vunpack.c.l.b16 %v1047
        %v3597 = vunpack.c.h.b16 %v1047
        %v3598 = vunpack.c.l.b16 %v1048
        %v3599 = vunpack.c.h.b16 %v1048
        %v3600 = vunpack.c.l.b16 %v1049
        %v3601 = vunpack.c.h.b16 %v1049
        %v3602 = vunpack.c.l.b16 %v1050
        %v3603 = vunpack.c.h.b16 %v1050
        %v3604 = vunpack.c.l.b16 %v1051
        %v3605 = vunpack.c.h.b16 %v1051
        %v3606 = vunpack.c.l.b16 %v1052
        %v3607 = vunpack.c.h.b16 %v1052
        %v3608 = vunpack.c.l.b16 %v1053
        %v3609 = vunpack.c.h.b16 %v1053
        %v3610 = vunpack.c.l.b16 %v1054
        %v3611 = vunpack.c.h.b16 %v1054
        %v3612 = vunpack.c.l.b16 %v1055
        %v3613 = vunpack.c.h.b16 %v1055
        %v3614 = vunpack.c.l.b16 %v1056
        %v3615 = vunpack.c.h.b16 %v1056
        %v3616 = vunpack.c.l.b16 %v1057
        %v3617 = vunpack.c.h.b16 %v1057
        %v3618 = vunpack.c.l.b16 %v1058
        %v3619 = vunpack.c.h.b16 %v1058
        %v3620 = vunpack.c.l.b16 %v1059
        %v3621 = vunpack.c.h.b16 %v1059
        %v3622 = vunpack.c.l.b16 %v1060
        %v3623 = vunpack.c.h.b16 %v1060
        %v3624 = vunpack.c.l.b16 %v1061
        %v3625 = vunpack.c.h.b16 %v1061
        %v3626 = vunpack.c.l.b16 %v1062
        %v3627 = vunpack.c.h.b16 %v1062
        %v3628 = vunpack.c.l.b16 %v1063
        %v3629 = vunpack.c.h.b16 %v1063
        %v3630 = vunpack.c.l.b16 %v1064
        %v3631 = vunpack.c.h.b16 %v1064
        %v3632 = vunpack.c.l.b16 %v1065
        %v3633 = vunpack.c.h.b16 %v1065
        %v3634 = vunpack.c.l.b16 %v1066
        %v3635 = vunpack.c.h.b16 %v1066
        %v3636 = vunpack.c.l.b16 %v1067
        %v3637 = vunpack.c.h.b16 %v1067
        %v3638 = vunpack.c.l.b16 %v1068
        %v3639 = vunpack.c.h.b16 %v1068
        %v3640 = vunpack.c.l.b16 %v1069
        %v3641 = vunpack.c.h.b16 %v1069
        %v3642 = vunpack.c.l.b16 %v1070
        %v3643 = vunpack.c.h.b16 %v1070
        %v3644 = vunpack.c.l.b16 %v1071
        %v3645 = vunpack.c.h.b16 %v1071
        %v3646 = vunpack.c.l.b16 %v1072
        %v3647 = vunpack.c.h.b16 %v1072
        %v3648 = vunpack.c.l.b16 %v1073
        %v3649 = vunpack.c.h.b16 %v1073
        %v3650 = vunpack.c.l.b16 %v1074
        %v3651 = vunpack.c.h.b16 %v1074
        %v3652 = vunpack.c.l.b16 %v1075
        %v3653 = vunpack.c.h.b16 %v1075
        %v3654 = vunpack.c.l.b16 %v1076
        %v3655 = vunpack.c.h.b16 %v1076
        %v3656 = vunpack.c.l.b16 %v1077
        %v3657 = vunpack.c.h.b16 %v1077
        %v3658 = vunpack.c.l.b16 %v1078
        %v3659 = vunpack.c.h.b16 %v1078
        %v3660 = vunpack.c.l.b16 %v1079
        %v3661 = vunpack.c.h.b16 %v1079
        %v3662 = vunpack.c.l.b16 %v1080
        %v3663 = vunpack.c.h.b16 %v1080
        %v3664 = vunpack.c.l.b16 %v1081
        %v3665 = vunpack.c.h.b16 %v1081
        %v3666 = vunpack.c.l.b16 %v1082
        %v3667 = vunpack.c.h.b16 %v1082
        %v3668 = vunpack.c.l.b16 %v1083
        %v3669 = vunpack.c.h.b16 %v1083
        %v3670 = vunpack.c.l.b16 %v1084
        %v3671 = vunpack.c.h.b16 %v1084
        %v3672 = vunpack.c.l.b16 %v1085
        %v3673 = vunpack.c.h.b16 %v1085
        %v3674 = vunpack.c.l.b16 %v1086
        %v3675 = vunpack.c.h.b16 %v1086
        %v3676 = vunpack.c.l.b16 %v1087
        %v3677 = vunpack.c.h.b16 %v1087
        %v3678 = vpack.c.b16 %v2082, %v2078
        %v3679 = vpack.c.b16 %v2083, %v2079
        %v3680 = vpack.c.b16 %v2084, %v2080
        %v3681 = vpack.c.b16 %v2085, %v2081
        %v3682 = vpack.c.b16 %v2090, %v2086
        %v3683 = vpack.c.b16 %v2091, %v2087
        %v3684 = vpack.c.b16 %v2092, %v2088
        %v3685 = vpack.c.b16 %v2093, %v2089
        %v3686 = vpack.c.b16 %v2098, %v2094
        %v3687 = vpack.c.b16 %v2099, %v2095
        %v3688 = vpack.c.b16 %v2100, %v2096
        %v3689 = vpack.c.b16 %v2101, %v2097
        %v3690 = vpack.c.b16 %v2106, %v2102
        %v3691 = vpack.c.b16 %v2107, %v2103
        %v3692 = vpack.c.b16 %v2108, %v2104
        %v3693 = vpack.c.b16 %v2109, %v2105
        %v3694 = vpack.c.b16 %v2114, %v2110
        %v3695 = vpack.c.b16 %v2115, %v2111
        %v3696 = vpack.c.b16 %v2116, %v2112
        %v3697 = vpack.c.b16 %v2117, %v2113
        %v3698 = vpack.c.b16 %v2122, %v2118
        %v3699 = vpack.c.b16 %v2123, %v2119
        %v3700 = vpack.c.b16 %v2124, %v2120
        %v3701 = vpack.c.b16 %v2125, %v2121
        %v3702 = vpack.c.b16 %v2130, %v2126
        %v3703 = vpack.c.b16 %v2131, %v2127
        %v3704 = vpack.c.b16 %v2132, %v2128
        %v3705 = vpack.c.b16 %v2133, %v2129
        %v3706 = vpack.c.b16 %v2138, %v2134
        %v3707 = vpack.c.b16 %v2139, %v2135
        %v3708 = vpack.c.b16 %v2140, %v2136
        %v3709 = vpack.c.b16 %v2141, %v2137
        %v3710 = vpack.c.b16 %v2146, %v2142
        %v3711 = vpack.c.b16 %v2147, %v2143
        %v3712 = vpack.c.b16 %v2148, %v2144
        %v3713 = vpack.c.b16 %v2149, %v2145
        %v3714 = vpack.c.b16 %v2154, %v2150
        %v3715 = vpack.c.b16 %v2155, %v2151
        %v3716 = vpack.c.b16 %v2156, %v2152
        %v3717 = vpack.c.b16 %v2157, %v2153
        %v3718 = vpack.c.b16 %v2162, %v2158
        %v3719 = vpack.c.b16 %v2163, %v2159
        %v3720 = vpack.c.b16 %v2164, %v2160
        %v3721 = vpack.c.b16 %v2165, %v2161
        %v3722 = vpack.c.b16 %v2170, %v2166
        %v3723 = vpack.c.b16 %v2171, %v2167
        %v3724 = vpack.c.b16 %v2172, %v2168
        %v3725 = vpack.c.b16 %v2173, %v2169
        %v3726 = vpack.c.b16 %v2178, %v2174
        %v3727 = vpack.c.b16 %v2179, %v2175
        %v3728 = vpack.c.b16 %v2180, %v2176
        %v3729 = vpack.c.b16 %v2181, %v2177
        %v3730 = vpack.c.b16 %v2186, %v2182
        %v3731 = vpack.c.b16 %v2187, %v2183
        %v3732 = vpack.c.b16 %v2188, %v2184
        %v3733 = vpack.c.b16 %v2189, %v2185
        %v3734 = vpack.c.b16 %v2194, %v2190
        %v3735 = vpack.c.b16 %v2195, %v2191
        %v3736 = vpack.c.b16 %v2196, %v2192
        %v3737 = vpack.c.b16 %v2197, %v2193
        %v3738 = vpack.c.b16 %v2202, %v2198
        %v3739 = vpack.c.b16 %v2203, %v2199
        %v3740 = vpack.c.b16 %v2204, %v2200
        %v3741 = vpack.c.b16 %v2205, %v2201
        %v3742 = vpack.c.b16 %v2210, %v2206
        %v3743 = vpack.c.b16 %v2211, %v2207
        %v3744 = vpack.c.b16 %v2212, %v2208
        %v3745 = vpack.c.b16 %v2213, %v2209
        %v3746 = vpack.c.b16 %v2218, %v2214
        %v3747 = vpack.c.b16 %v2219, %v2215
        %v3748 = vpack.c.b16 %v2220, %v2216
        %v3749 = vpack.c.b16 %v2221, %v2217
        %v3750 = vpack.c.b16 %v2226, %v2222
        %v3751 = vpack.c.b16 %v2227, %v2223
        %v3752 = vpack.c.b16 %v2228, %v2224
        %v3753 = vpack.c.b16 %v2229, %v2225
        %v3754 = vpack.c.b16 %v2234, %v2230
        %v3755 = vpack.c.b16 %v2235, %v2231
        %v3756 = vpack.c.b16 %v2236, %v2232
        %v3757 = vpack.c.b16 %v2237, %v2233
        %v3758 = vpack.c.b16 %v2242, %v2238
        %v3759 = vpack.c.b16 %v2243, %v2239
        %v3760 = vpack.c.b16 %v2244, %v2240
        %v3761 = vpack.c.b16 %v2245, %v2241
        %v3762 = vpack.c.b16 %v2250, %v2246
        %v3763 = vpack.c.b16 %v2251, %v2247
        %v3764 = vpack.c.b16 %v2252, %v2248
        %v3765 = vpack.c.b16 %v2253, %v2249
        %v3766 = vpack.c.b16 %v2258, %v2254
        %v3767 = vpack.c.b16 %v2259, %v2255
        %v3768 = vpack.c.b16 %v2260, %v2256
        %v3769 = vpack.c.b16 %v2261, %v2257
        %v3770 = vpack.c.b16 %v2266, %v2262
        %v3771 = vpack.c.b16 %v2267, %v2263
        %v3772 = vpack.c.b16 %v2268, %v2264
        %v3773 = vpack.c.b16 %v2269, %v2265
        %v3774 = vpack.c.b16 %v2274, %v2270
        %v3775 = vpack.c.b16 %v2275, %v2271
        %v3776 = vpack.c.b16 %v2276, %v2272
        %v3777 = vpack.c.b16 %v2277, %v2273
        %v3778 = vpack.c.b16 %v2282, %v2278
        %v3779 = vpack.c.b16 %v2283, %v2279
        %v3780 = vpack.c.b16 %v2284, %v2280
        %v3781 = vpack.c.b16 %v2285, %v2281
        %v3782 = vpack.c.b16 %v2290, %v2286
        %v3783 = vpack.c.b16 %v2291, %v2287
        %v3784 = vpack.c.b16 %v2292, %v2288
        %v3785 = vpack.c.b16 %v2293, %v2289
        %v3786 = vpack.c.b16 %v2298, %v2294
        %v3787 = vpack.c.b16 %v2299, %v2295
        %v3788 = vpack.c.b16 %v2300, %v2296
        %v3789 = vpack.c.b16 %v2301, %v2297
        %v3790 = vpack.c.b16 %v2306, %v2302
        %v3791 = vpack.c.b16 %v2307, %v2303
        %v3792 = vpack.c.b16 %v2308, %v2304
        %v3793 = vpack.c.b16 %v2309, %v2305
        %v3794 = vpack.c.b16 %v2314, %v2310
        %v3795 = vpack.c.b16 %v2315, %v2311
        %v3796 = vpack.c.b16 %v2316, %v2312
        %v3797 = vpack.c.b16 %v2317, %v2313
        %v3798 = vpack.c.b16 %v2322, %v2318
        %v3799 = vpack.c.b16 %v2323, %v2319
        %v3800 = vpack.c.b16 %v2324, %v2320
        %v3801 = vpack.c.b16 %v2325, %v2321
        %v3802 = vpack.c.b16 %v2330, %v2326
        %v3803 = vpack.c.b16 %v2331, %v2327
        %v3804 = vpack.c.b16 %v2332, %v2328
        %v3805 = vpack.c.b16 %v2333, %v2329
        %v3806 = vpack.c.b16 %v2338, %v2334
        %v3807 = vpack.c.b16 %v2339, %v2335
        %v3808 = vpack.c.b16 %v2340, %v2336
        %v3809 = vpack.c.b16 %v2341, %v2337
        %v3810 = vpack.c.b16 %v2346, %v2342
        %v3811 = vpack.c.b16 %v2347, %v2343
        %v3812 = vpack.c.b16 %v2348, %v2344
        %v3813 = vpack.c.b16 %v2349, %v2345
        %v3814 = vpack.c.b16 %v2354, %v2350
        %v3815 = vpack.c.b16 %v2355, %v2351
        %v3816 = vpack.c.b16 %v2356, %v2352
        %v3817 = vpack.c.b16 %v2357, %v2353
        %v3818 = vpack.c.b16 %v2362, %v2358
        %v3819 = vpack.c.b16 %v2363, %v2359
        %v3820 = vpack.c.b16 %v2364, %v2360
        %v3821 = vpack.c.b16 %v2365, %v2361
        %v3822 = vpack.c.b16 %v2370, %v2366
        %v3823 = vpack.c.b16 %v2371, %v2367
        %v3824 = vpack.c.b16 %v2372, %v2368
        %v3825 = vpack.c.b16 %v2373, %v2369
        %v3826 = vpack.c.b16 %v2378, %v2374
        %v3827 = vpack.c.b16 %v2379, %v2375
        %v3828 = vpack.c.b16 %v2380, %v2376
        %v3829 = vpack.c.b16 %v2381, %v2377
        %v3830 = vpack.c.b16 %v2386, %v2382
        %v3831 = vpack.c.b16 %v2387, %v2383
        %v3832 = vpack.c.b16 %v2388, %v2384
        %v3833 = vpack.c.b16 %v2389, %v2385
        %v3834 = vpack.c.b16 %v2394, %v2390
        %v3835 = vpack.c.b16 %v2395, %v2391
        %v3836 = vpack.c.b16 %v2396, %v2392
        %v3837 = vpack.c.b16 %v2397, %v2393
        %v3838 = vpack.c.b16 %v2402, %v2398
        %v3839 = vpack.c.b16 %v2403, %v2399
        %v3840 = vpack.c.b16 %v2404, %v2400
        %v3841 = vpack.c.b16 %v2405, %v2401
        %v3842 = vpack.c.b16 %v2410, %v2406
        %v3843 = vpack.c.b16 %v2411, %v2407
        %v3844 = vpack.c.b16 %v2412, %v2408
        %v3845 = vpack.c.b16 %v2413, %v2409
        %v3846 = vpack.c.b16 %v2418, %v2414
        %v3847 = vpack.c.b16 %v2419, %v2415
        %v3848 = vpack.c.b16 %v2420, %v2416
        %v3849 = vpack.c.b16 %v2421, %v2417
        %v3850 = vpack.c.b16 %v2426, %v2422
        %v3851 = vpack.c.b16 %v2427, %v2423
        %v3852 = vpack.c.b16 %v2428, %v2424
        %v3853 = vpack.c.b16 %v2429, %v2425
        %v3854 = vpack.c.b16 %v2434, %v2430
        %v3855 = vpack.c.b16 %v2435, %v2431
        %v3856 = vpack.c.b16 %v2436, %v2432
        %v3857 = vpack.c.b16 %v2437, %v2433
        %v3858 = vpack.c.b16 %v2442, %v2438
        %v3859 = vpack.c.b16 %v2443, %v2439
        %v3860 = vpack.c.b16 %v2444, %v2440
        %v3861 = vpack.c.b16 %v2445, %v2441
        %v3862 = vpack.c.b16 %v2450, %v2446
        %v3863 = vpack.c.b16 %v2451, %v2447
        %v3864 = vpack.c.b16 %v2452, %v2448
        %v3865 = vpack.c.b16 %v2453, %v2449
        %v3866 = vpack.c.b16 %v2458, %v2454
        %v3867 = vpack.c.b16 %v2459, %v2455
        %v3868 = vpack.c.b16 %v2460, %v2456
        %v3869 = vpack.c.b16 %v2461, %v2457
        %v3870 = vpack.c.b16 %v2466, %v2462
        %v3871 = vpack.c.b16 %v2467, %v2463
        %v3872 = vpack.c.b16 %v2468, %v2464
        %v3873 = vpack.c.b16 %v2469, %v2465
        %v3874 = vpack.c.b16 %v2474, %v2470
        %v3875 = vpack.c.b16 %v2475, %v2471
        %v3876 = vpack.c.b16 %v2476, %v2472
        %v3877 = vpack.c.b16 %v2477, %v2473
        %v3878 = vpack.c.b16 %v2482, %v2478
        %v3879 = vpack.c.b16 %v2483, %v2479
        %v3880 = vpack.c.b16 %v2484, %v2480
        %v3881 = vpack.c.b16 %v2485, %v2481
        %v3882 = vpack.c.b16 %v2490, %v2486
        %v3883 = vpack.c.b16 %v2491, %v2487
        %v3884 = vpack.c.b16 %v2492, %v2488
        %v3885 = vpack.c.b16 %v2493, %v2489
        %v3886 = vpack.c.b16 %v2498, %v2494
        %v3887 = vpack.c.b16 %v2499, %v2495
        %v3888 = vpack.c.b16 %v2500, %v2496
        %v3889 = vpack.c.b16 %v2501, %v2497
        %v3890 = vpack.c.b16 %v2506, %v2502
        %v3891 = vpack.c.b16 %v2507, %v2503
        %v3892 = vpack.c.b16 %v2508, %v2504
        %v3893 = vpack.c.b16 %v2509, %v2505
        %v3894 = vpack.c.b16 %v2514, %v2510
        %v3895 = vpack.c.b16 %v2515, %v2511
        %v3896 = vpack.c.b16 %v2516, %v2512
        %v3897 = vpack.c.b16 %v2517, %v2513
        %v3898 = vpack.c.b16 %v2522, %v2518
        %v3899 = vpack.c.b16 %v2523, %v2519
        %v3900 = vpack.c.b16 %v2524, %v2520
        %v3901 = vpack.c.b16 %v2525, %v2521
        %v3902 = vpack.c.b16 %v2530, %v2526
        %v3903 = vpack.c.b16 %v2531, %v2527
        %v3904 = vpack.c.b16 %v2532, %v2528
        %v3905 = vpack.c.b16 %v2533, %v2529
        %v3906 = vpack.c.b16 %v2538, %v2534
        %v3907 = vpack.c.b16 %v2539, %v2535
        %v3908 = vpack.c.b16 %v2540, %v2536
        %v3909 = vpack.c.b16 %v2541, %v2537
        %v3910 = vpack.c.b16 %v2546, %v2542
        %v3911 = vpack.c.b16 %v2547, %v2543
        %v3912 = vpack.c.b16 %v2548, %v2544
        %v3913 = vpack.c.b16 %v2549, %v2545
        %v3914 = vpack.c.b16 %v2554, %v2550
        %v3915 = vpack.c.b16 %v2555, %v2551
        %v3916 = vpack.c.b16 %v2556, %v2552
        %v3917 = vpack.c.b16 %v2557, %v2553
        %v3918 = vpack.c.b16 %v2562, %v2558
        %v3919 = vpack.c.b16 %v2563, %v2559
        %v3920 = vpack.c.b16 %v2564, %v2560
        %v3921 = vpack.c.b16 %v2565, %v2561
        %v3922 = vpack.c.b16 %v2570, %v2566
        %v3923 = vpack.c.b16 %v2571, %v2567
        %v3924 = vpack.c.b16 %v2572, %v2568
        %v3925 = vpack.c.b16 %v2573, %v2569
        %v3926 = vpack.c.b16 %v2578, %v2574
        %v3927 = vpack.c.b16 %v2579, %v2575
        %v3928 = vpack.c.b16 %v2580, %v2576
        %v3929 = vpack.c.b16 %v2581, %v2577
        %v3930 = vpack.c.b16 %v2586, %v2582
        %v3931 = vpack.c.b16 %v2587, %v2583
        %v3932 = vpack.c.b16 %v2588, %v2584
        %v3933 = vpack.c.b16 %v2589, %v2585
        %v3934 = vpack.c.b16 %v2594, %v2590
        %v3935 = vpack.c.b16 %v2595, %v2591
        %v3936 = vpack.c.b16 %v2596, %v2592
        %v3937 = vpack.c.b16 %v2597, %v2593
        %v3938 = vpack.c.b16 %v2602, %v2598
        %v3939 = vpack.c.b16 %v2603, %v2599
        %v3940 = vpack.c.b16 %v2604, %v2600
        %v3941 = vpack.c.b16 %v2605, %v2601
        %v3942 = vpack.c.b16 %v2610, %v2606
        %v3943 = vpack.c.b16 %v2611, %v2607
        %v3944 = vpack.c.b16 %v2612, %v2608
        %v3945 = vpack.c.b16 %v2613, %v2609
        %v3946 = vpack.c.b16 %v2618, %v2614
        %v3947 = vpack.c.b16 %v2619, %v2615
        %v3948 = vpack.c.b16 %v2620, %v2616
        %v3949 = vpack.c.b16 %v2621, %v2617
        %v3950 = vpack.c.b16 %v2626, %v2622
        %v3951 = vpack.c.b16 %v2627, %v2623
        %v3952 = vpack.c.b16 %v2628, %v2624
        %v3953 = vpack.c.b16 %v2629, %v2625
        %v3954 = vpack.c.b16 %v2634, %v2630
        %v3955 = vpack.c.b16 %v2635, %v2631
        %v3956 = vpack.c.b16 %v2636, %v2632
        %v3957 = vpack.c.b16 %v2637, %v2633
        %v3958 = vpack.c.b16 %v2642, %v2638
        %v3959 = vpack.c.b16 %v2643, %v2639
        %v3960 = vpack.c.b16 %v2644, %v2640
        %v3961 = vpack.c.b16 %v2645, %v2641
        %v3962 = vpack.c.b16 %v2650, %v2646
        %v3963 = vpack.c.b16 %v2651, %v2647
        %v3964 = vpack.c.b16 %v2652, %v2648
        %v3965 = vpack.c.b16 %v2653, %v2649
        %v3966 = vpack.c.b16 %v2658, %v2654
        %v3967 = vpack.c.b16 %v2659, %v2655
        %v3968 = vpack.c.b16 %v2660, %v2656
        %v3969 = vpack.c.b16 %v2661, %v2657
        %v3970 = vpack.c.b16 %v2666, %v2662
        %v3971 = vpack.c.b16 %v2667, %v2663
        %v3972 = vpack.c.b16 %v2668, %v2664
        %v3973 = vpack.c.b16 %v2669, %v2665
        %v3974 = vpack.c.b16 %v2674, %v2670
        %v3975 = vpack.c.b16 %v2675, %v2671
        %v3976 = vpack.c.b16 %v2676, %v2672
        %v3977 = vpack.c.b16 %v2677, %v2673
        %v3978 = vpack.c.b16 %v2682, %v2678
        %v3979 = vpack.c.b16 %v2683, %v2679
        %v3980 = vpack.c.b16 %v2684, %v2680
        %v3981 = vpack.c.b16 %v2685, %v2681
        %v3982 = vpack.c.b16 %v2690, %v2686
        %v3983 = vpack.c.b16 %v2691, %v2687
        %v3984 = vpack.c.b16 %v2692, %v2688
        %v3985 = vpack.c.b16 %v2693, %v2689
        %v3986 = vpack.c.b16 %v2698, %v2694
        %v3987 = vpack.c.b16 %v2699, %v2695
        %v3988 = vpack.c.b16 %v2700, %v2696
        %v3989 = vpack.c.b16 %v2701, %v2697
        %v3990 = vpack.c.b16 %v2706, %v2702
        %v3991 = vpack.c.b16 %v2707, %v2703
        %v3992 = vpack.c.b16 %v2708, %v2704
        %v3993 = vpack.c.b16 %v2709, %v2705
        %v3994 = vpack.c.b16 %v2714, %v2710
        %v3995 = vpack.c.b16 %v2715, %v2711
        %v3996 = vpack.c.b16 %v2716, %v2712
        %v3997 = vpack.c.b16 %v2717, %v2713
        %v3998 = vpack.c.b16 %v2722, %v2718
        %v3999 = vpack.c.b16 %v2723, %v2719
        %v4000 = vpack.c.b16 %v2724, %v2720
        %v4001 = vpack.c.b16 %v2725, %v2721
        %v4002 = vpack.c.b16 %v2730, %v2726
        %v4003 = vpack.c.b16 %v2731, %v2727
        %v4004 = vpack.c.b16 %v2732, %v2728
        %v4005 = vpack.c.b16 %v2733, %v2729
        %v4006 = vpack.c.b16 %v2738, %v2734
        %v4007 = vpack.c.b16 %v2739, %v2735
        %v4008 = vpack.c.b16 %v2740, %v2736
        %v4009 = vpack.c.b16 %v2741, %v2737
        %v4010 = vpack.c.b16 %v2746, %v2742
        %v4011 = vpack.c.b16 %v2747, %v2743
        %v4012 = vpack.c.b16 %v2748, %v2744
        %v4013 = vpack.c.b16 %v2749, %v2745
        %v4014 = vpack.c.b16 %v2754, %v2750
        %v4015 = vpack.c.b16 %v2755, %v2751
        %v4016 = vpack.c.b16 %v2756, %v2752
        %v4017 = vpack.c.b16 %v2757, %v2753
        %v4018 = vpack.c.b16 %v2762, %v2758
        %v4019 = vpack.c.b16 %v2763, %v2759
        %v4020 = vpack.c.b16 %v2764, %v2760
        %v4021 = vpack.c.b16 %v2765, %v2761
        %v4022 = vpack.c.b16 %v2770, %v2766
        %v4023 = vpack.c.b16 %v2771, %v2767
        %v4024 = vpack.c.b16 %v2772, %v2768
        %v4025 = vpack.c.b16 %v2773, %v2769
        %v4026 = vpack.c.b16 %v2778, %v2774
        %v4027 = vpack.c.b16 %v2779, %v2775
        %v4028 = vpack.c.b16 %v2780, %v2776
        %v4029 = vpack.c.b16 %v2781, %v2777
        %v4030 = vpack.c.b16 %v2786, %v2782
        %v4031 = vpack.c.b16 %v2787, %v2783
        %v4032 = vpack.c.b16 %v2788, %v2784
        %v4033 = vpack.c.b16 %v2789, %v2785
        %v4034 = vpack.c.b16 %v2794, %v2790
        %v4035 = vpack.c.b16 %v2795, %v2791
        %v4036 = vpack.c.b16 %v2796, %v2792
        %v4037 = vpack.c.b16 %v2797, %v2793
        %v4038 = vpack.c.b16 %v2802, %v2798
        %v4039 = vpack.c.b16 %v2803, %v2799
        %v4040 = vpack.c.b16 %v2804, %v2800
        %v4041 = vpack.c.b16 %v2805, %v2801
        %v4042 = vpack.c.b16 %v2810, %v2806
        %v4043 = vpack.c.b16 %v2811, %v2807
        %v4044 = vpack.c.b16 %v2812, %v2808
        %v4045 = vpack.c.b16 %v2813, %v2809
        %v4046 = vpack.c.b16 %v2818, %v2814
        %v4047 = vpack.c.b16 %v2819, %v2815
        %v4048 = vpack.c.b16 %v2820, %v2816
        %v4049 = vpack.c.b16 %v2821, %v2817
        %v4050 = vpack.c.b16 %v2826, %v2822
        %v4051 = vpack.c.b16 %v2827, %v2823
        %v4052 = vpack.c.b16 %v2828, %v2824
        %v4053 = vpack.c.b16 %v2829, %v2825
        %v4054 = vpack.c.b16 %v2834, %v2830
        %v4055 = vpack.c.b16 %v2835, %v2831
        %v4056 = vpack.c.b16 %v2836, %v2832
        %v4057 = vpack.c.b16 %v2837, %v2833
        %v4058 = vpack.c.b16 %v2842, %v2838
        %v4059 = vpack.c.b16 %v2843, %v2839
        %v4060 = vpack.c.b16 %v2844, %v2840
        %v4061 = vpack.c.b16 %v2845, %v2841
        %v4062 = vpack.c.b16 %v2850, %v2846
        %v4063 = vpack.c.b16 %v2851, %v2847
        %v4064 = vpack.c.b16 %v2852, %v2848
        %v4065 = vpack.c.b16 %v2853, %v2849
        %v4066 = vpack.c.b16 %v2858, %v2854
        %v4067 = vpack.c.b16 %v2859, %v2855
        %v4068 = vpack.c.b16 %v2860, %v2856
        %v4069 = vpack.c.b16 %v2861, %v2857
        %v4070 = vpack.c.b16 %v2866, %v2862
        %v4071 = vpack.c.b16 %v2867, %v2863
        %v4072 = vpack.c.b16 %v2868, %v2864
        %v4073 = vpack.c.b16 %v2869, %v2865
        %v4074 = vpack.c.b16 %v2874, %v2870
        %v4075 = vpack.c.b16 %v2875, %v2871
        %v4076 = vpack.c.b16 %v2876, %v2872
        %v4077 = vpack.c.b16 %v2877, %v2873
        %v4078 = vpack.c.b16 %v2882, %v2878
        %v4079 = vpack.c.b16 %v2883, %v2879
        %v4080 = vpack.c.b16 %v2884, %v2880
        %v4081 = vpack.c.b16 %v2885, %v2881
        %v4082 = vpack.c.b16 %v2890, %v2886
        %v4083 = vpack.c.b16 %v2891, %v2887
        %v4084 = vpack.c.b16 %v2892, %v2888
        %v4085 = vpack.c.b16 %v2893, %v2889
        %v4086 = vpack.c.b16 %v2898, %v2894
        %v4087 = vpack.c.b16 %v2899, %v2895
        %v4088 = vpack.c.b16 %v2900, %v2896
        %v4089 = vpack.c.b16 %v2901, %v2897
        %v4090 = vpack.c.b16 %v2906, %v2902
        %v4091 = vpack.c.b16 %v2907, %v2903
        %v4092 = vpack.c.b16 %v2908, %v2904
        %v4093 = vpack.c.b16 %v2909, %v2905
        %v4094 = vpack.c.b16 %v2914, %v2910
        %v4095 = vpack.c.b16 %v2915, %v2911
        %v4096 = vpack.c.b16 %v2916, %v2912
        %v4097 = vpack.c.b16 %v2917, %v2913
        %v4098 = vpack.c.b16 %v2922, %v2918
        %v4099 = vpack.c.b16 %v2923, %v2919
        %v4100 = vpack.c.b16 %v2924, %v2920
        %v4101 = vpack.c.b16 %v2925, %v2921
        %v4102 = vpack.c.b16 %v2930, %v2926
        %v4103 = vpack.c.b16 %v2931, %v2927
        %v4104 = vpack.c.b16 %v2932, %v2928
        %v4105 = vpack.c.b16 %v2933, %v2929
        %v4106 = vpack.c.b16 %v2938, %v2934
        %v4107 = vpack.c.b16 %v2939, %v2935
        %v4108 = vpack.c.b16 %v2940, %v2936
        %v4109 = vpack.c.b16 %v2941, %v2937
        %v4110 = vpack.c.b16 %v2946, %v2942
        %v4111 = vpack.c.b16 %v2947, %v2943
        %v4112 = vpack.c.b16 %v2948, %v2944
        %v4113 = vpack.c.b16 %v2949, %v2945
        %v4114 = vpack.c.b16 %v2954, %v2950
        %v4115 = vpack.c.b16 %v2955, %v2951
        %v4116 = vpack.c.b16 %v2956, %v2952
        %v4117 = vpack.c.b16 %v2957, %v2953
        %v4118 = vpack.c.b16 %v2962, %v2958
        %v4119 = vpack.c.b16 %v2963, %v2959
        %v4120 = vpack.c.b16 %v2964, %v2960
        %v4121 = vpack.c.b16 %v2965, %v2961
        %v4122 = vpack.c.b16 %v2970, %v2966
        %v4123 = vpack.c.b16 %v2971, %v2967
        %v4124 = vpack.c.b16 %v2972, %v2968
        %v4125 = vpack.c.b16 %v2973, %v2969
        %v4126 = vpack.c.b16 %v2978, %v2974
        %v4127 = vpack.c.b16 %v2979, %v2975
        %v4128 = vpack.c.b16 %v2980, %v2976
        %v4129 = vpack.c.b16 %v2981, %v2977
        %v4130 = vpack.c.b16 %v2986, %v2982
        %v4131 = vpack.c.b16 %v2987, %v2983
        %v4132 = vpack.c.b16 %v2988, %v2984
        %v4133 = vpack.c.b16 %v2989, %v2985
        %v4134 = vpack.c.b16 %v2994, %v2990
        %v4135 = vpack.c.b16 %v2995, %v2991
        %v4136 = vpack.c.b16 %v2996, %v2992
        %v4137 = vpack.c.b16 %v2997, %v2993
        %v4138 = vpack.c.b16 %v3002, %v2998
        %v4139 = vpack.c.b16 %v3003, %v2999
        %v4140 = vpack.c.b16 %v3004, %v3000
        %v4141 = vpack.c.b16 %v3005, %v3001
        %v4142 = vpack.c.b16 %v3010, %v3006
        %v4143 = vpack.c.b16 %v3011, %v3007
        %v4144 = vpack.c.b16 %v3012, %v3008
        %v4145 = vpack.c.b16 %v3013, %v3009
        %v4146 = vpack.c.b16 %v3018, %v3014
        %v4147 = vpack.c.b16 %v3019, %v3015
        %v4148 = vpack.c.b16 %v3020, %v3016
        %v4149 = vpack.c.b16 %v3021, %v3017
        %v4150 = vpack.c.b16 %v3026, %v3022
        %v4151 = vpack.c.b16 %v3027, %v3023
        %v4152 = vpack.c.b16 %v3028, %v3024
        %v4153 = vpack.c.b16 %v3029, %v3025
        %v4154 = vpack.c.b16 %v3034, %v3030
        %v4155 = vpack.c.b16 %v3035, %v3031
        %v4156 = vpack.c.b16 %v3036, %v3032
        %v4157 = vpack.c.b16 %v3037, %v3033
        %v4158 = vpack.c.b16 %v3042, %v3038
        %v4159 = vpack.c.b16 %v3043, %v3039
        %v4160 = vpack.c.b16 %v3044, %v3040
        %v4161 = vpack.c.b16 %v3045, %v3041
        %v4162 = vpack.c.b16 %v3050, %v3046
        %v4163 = vpack.c.b16 %v3051, %v3047
        %v4164 = vpack.c.b16 %v3052, %v3048
        %v4165 = vpack.c.b16 %v3053, %v3049
        %v4166 = vpack.c.b16 %v3058, %v3054
        %v4167 = vpack.c.b16 %v3059, %v3055
        %v4168 = vpack.c.b16 %v3060, %v3056
        %v4169 = vpack.c.b16 %v3061, %v3057
        %v4170 = vpack.c.b16 %v3066, %v3062
        %v4171 = vpack.c.b16 %v3067, %v3063
        %v4172 = vpack.c.b16 %v3068, %v3064
        %v4173 = vpack.c.b16 %v3069, %v3065
        %v4174 = vpack.c.b16 %v3074, %v3070
        %v4175 = vpack.c.b16 %v3075, %v3071
        %v4176 = vpack.c.b16 %v3076, %v3072
        %v4177 = vpack.c.b16 %v3077, %v3073
        %v4178 = vpack.c.b16 %v3082, %v3078
        %v4179 = vpack.c.b16 %v3083, %v3079
        %v4180 = vpack.c.b16 %v3084, %v3080
        %v4181 = vpack.c.b16 %v3085, %v3081
        %v4182 = vpack.c.b16 %v3090, %v3086
        %v4183 = vpack.c.b16 %v3091, %v3087
        %v4184 = vpack.c.b16 %v3092, %v3088
        %v4185 = vpack.c.b16 %v3093, %v3089
        %v4186 = vpack.c.b16 %v3098, %v3094
        %v4187 = vpack.c.b16 %v3099, %v3095
        %v4188 = vpack.c.b16 %v3100, %v3096
        %v4189 = vpack.c.b16 %v3101, %v3097
        %v4190 = vpack.c.b16 %v3106, %v3102
        %v4191 = vpack.c.b16 %v3107, %v3103
        %v4192 = vpack.c.b16 %v3108, %v3104
        %v4193 = vpack.c.b16 %v3109, %v3105
        %v4194 = vpack.c.b16 %v3114, %v3110
        %v4195 = vpack.c.b16 %v3115, %v3111
        %v4196 = vpack.c.b16 %v3116, %v3112
        %v4197 = vpack.c.b16 %v3117, %v3113
        %v4198 = vpack.c.b16 %v3122, %v3118
        %v4199 = vpack.c.b16 %v3123, %v3119
        %v4200 = vpack.c.b16 %v3124, %v3120
        %v4201 = vpack.c.b16 %v3125, %v3121
        %v4202 = vpack.c.b16 %v3130, %v3126
        %v4203 = vpack.c.b16 %v3131, %v3127
        %v4204 = vpack.c.b16 %v3132, %v3128
        %v4205 = vpack.c.b16 %v3133, %v3129
        %v4206 = vpack.c.b16 %v3138, %v3134
        %v4207 = vpack.c.b16 %v3139, %v3135
        %v4208 = vpack.c.b16 %v3140, %v3136
        %v4209 = vpack.c.b16 %v3141, %v3137
        %v4210 = vpack.c.b16 %v3146, %v3142
        %v4211 = vpack.c.b16 %v3147, %v3143
        %v4212 = vpack.c.b16 %v3148, %v3144
        %v4213 = vpack.c.b16 %v3149, %v3145
        %v4214 = vpack.c.b16 %v3154, %v3150
        %v4215 = vpack.c.b16 %v3155, %v3151
        %v4216 = vpack.c.b16 %v3156, %v3152
        %v4217 = vpack.c.b16 %v3157, %v3153
        %v4218 = vpack.c.b16 %v3162, %v3158
        %v4219 = vpack.c.b16 %v3163, %v3159
        %v4220 = vpack.c.b16 %v3164, %v3160
        %v4221 = vpack.c.b16 %v3165, %v3161
        %v4222 = vpack.c.b16 %v3170, %v3166
        %v4223 = vpack.c.b16 %v3171, %v3167
        %v4224 = vpack.c.b16 %v3172, %v3168
        %v4225 = vpack.c.b16 %v3173, %v3169
        %v4226 = vpack.c.b16 %v3178, %v3174
        %v4227 = vpack.c.b16 %v3179, %v3175
        %v4228 = vpack.c.b16 %v3180, %v3176
        %v4229 = vpack.c.b16 %v3181, %v3177
        %v4230 = vpack.c.b16 %v3186, %v3182
        %v4231 = vpack.c.b16 %v3187, %v3183
        %v4232 = vpack.c.b16 %v3188, %v3184
        %v4233 = vpack.c.b16 %v3189, %v3185
        %v4234 = vpack.c.b16 %v3194, %v3190
        %v4235 = vpack.c.b16 %v3195, %v3191
        %v4236 = vpack.c.b16 %v3196, %v3192
        %v4237 = vpack.c.b16 %v3197, %v3193
        %v4238 = vpack.c.b16 %v3202, %v3198
        %v4239 = vpack.c.b16 %v3203, %v3199
        %v4240 = vpack.c.b16 %v3204, %v3200
        %v4241 = vpack.c.b16 %v3205, %v3201
        %v4242 = vpack.c.b16 %v3210, %v3206
        %v4243 = vpack.c.b16 %v3211, %v3207
        %v4244 = vpack.c.b16 %v3212, %v3208
        %v4245 = vpack.c.b16 %v3213, %v3209
        %v4246 = vpack.c.b16 %v3218, %v3214
        %v4247 = vpack.c.b16 %v3219, %v3215
        %v4248 = vpack.c.b16 %v3220, %v3216
        %v4249 = vpack.c.b16 %v3221, %v3217
        %v4250 = vpack.c.b16 %v3226, %v3222
        %v4251 = vpack.c.b16 %v3227, %v3223
        %v4252 = vpack.c.b16 %v3228, %v3224
        %v4253 = vpack.c.b16 %v3229, %v3225
        %v4254 = vpack.c.b16 %v3234, %v3230
        %v4255 = vpack.c.b16 %v3235, %v3231
        %v4256 = vpack.c.b16 %v3236, %v3232
        %v4257 = vpack.c.b16 %v3237, %v3233
        %v4258 = vpack.c.b16 %v3242, %v3238
        %v4259 = vpack.c.b16 %v3243, %v3239
        %v4260 = vpack.c.b16 %v3244, %v3240
        %v4261 = vpack.c.b16 %v3245, %v3241
        %v4262 = vpack.c.b16 %v3250, %v3246
        %v4263 = vpack.c.b16 %v3251, %v3247
        %v4264 = vpack.c.b16 %v3252, %v3248
        %v4265 = vpack.c.b16 %v3253, %v3249
        %v4266 = vpack.c.b16 %v3258, %v3254
        %v4267 = vpack.c.b16 %v3259, %v3255
        %v4268 = vpack.c.b16 %v3260, %v3256
        %v4269 = vpack.c.b16 %v3261, %v3257
        %v4270 = vpack.c.b16 %v3266, %v3262
        %v4271 = vpack.c.b16 %v3267, %v3263
        %v4272 = vpack.c.b16 %v3268, %v3264
        %v4273 = vpack.c.b16 %v3269, %v3265
        %v4274 = vpack.c.b16 %v3274, %v3270
        %v4275 = vpack.c.b16 %v3275, %v3271
        %v4276 = vpack.c.b16 %v3276, %v3272
        %v4277 = vpack.c.b16 %v3277, %v3273
        %v4278 = vpack.c.b16 %v3282, %v3278
        %v4279 = vpack.c.b16 %v3283, %v3279
        %v4280 = vpack.c.b16 %v3284, %v3280
        %v4281 = vpack.c.b16 %v3285, %v3281
        %v4282 = vpack.c.b16 %v3290, %v3286
        %v4283 = vpack.c.b16 %v3291, %v3287
        %v4284 = vpack.c.b16 %v3292, %v3288
        %v4285 = vpack.c.b16 %v3293, %v3289
        %v4286 = vpack.c.b16 %v3298, %v3294
        %v4287 = vpack.c.b16 %v3299, %v3295
        %v4288 = vpack.c.b16 %v3300, %v3296
        %v4289 = vpack.c.b16 %v3301, %v3297
        %v4290 = vpack.c.b16 %v3306, %v3302
        %v4291 = vpack.c.b16 %v3307, %v3303
        %v4292 = vpack.c.b16 %v3308, %v3304
        %v4293 = vpack.c.b16 %v3309, %v3305
        %v4294 = vpack.c.b16 %v3314, %v3310
        %v4295 = vpack.c.b16 %v3315, %v3311
        %v4296 = vpack.c.b16 %v3316, %v3312
        %v4297 = vpack.c.b16 %v3317, %v3313
        %v4298 = vpack.c.b16 %v3322, %v3318
        %v4299 = vpack.c.b16 %v3323, %v3319
        %v4300 = vpack.c.b16 %v3324, %v3320
        %v4301 = vpack.c.b16 %v3325, %v3321
        %v4302 = vpack.c.b16 %v3330, %v3326
        %v4303 = vpack.c.b16 %v3331, %v3327
        %v4304 = vpack.c.b16 %v3332, %v3328
        %v4305 = vpack.c.b16 %v3333, %v3329
        %v4306 = vpack.c.b16 %v3338, %v3334
        %v4307 = vpack.c.b16 %v3339, %v3335
        %v4308 = vpack.c.b16 %v3340, %v3336
        %v4309 = vpack.c.b16 %v3341, %v3337
        %v4310 = vpack.c.b16 %v3346, %v3342
        %v4311 = vpack.c.b16 %v3347, %v3343
        %v4312 = vpack.c.b16 %v3348, %v3344
        %v4313 = vpack.c.b16 %v3349, %v3345
        %v4314 = vpack.c.b16 %v3354, %v3350
        %v4315 = vpack.c.b16 %v3355, %v3351
        %v4316 = vpack.c.b16 %v3356, %v3352
        %v4317 = vpack.c.b16 %v3357, %v3353
        %v4318 = vpack.c.b16 %v3362, %v3358
        %v4319 = vpack.c.b16 %v3363, %v3359
        %v4320 = vpack.c.b16 %v3364, %v3360
        %v4321 = vpack.c.b16 %v3365, %v3361
        %v4322 = vpack.c.b16 %v3370, %v3366
        %v4323 = vpack.c.b16 %v3371, %v3367
        %v4324 = vpack.c.b16 %v3372, %v3368
        %v4325 = vpack.c.b16 %v3373, %v3369
        %v4326 = vpack.c.b16 %v3378, %v3374
        %v4327 = vpack.c.b16 %v3379, %v3375
        %v4328 = vpack.c.b16 %v3380, %v3376
        %v4329 = vpack.c.b16 %v3381, %v3377
        %v4330 = vpack.c.b16 %v3386, %v3382
        %v4331 = vpack.c.b16 %v3387, %v3383
        %v4332 = vpack.c.b16 %v3388, %v3384
        %v4333 = vpack.c.b16 %v3389, %v3385
        %v4334 = vpack.c.b16 %v3394, %v3390
        %v4335 = vpack.c.b16 %v3395, %v3391
        %v4336 = vpack.c.b16 %v3396, %v3392
        %v4337 = vpack.c.b16 %v3397, %v3393
        %v4338 = vpack.c.b16 %v3402, %v3398
        %v4339 = vpack.c.b16 %v3403, %v3399
        %v4340 = vpack.c.b16 %v3404, %v3400
        %v4341 = vpack.c.b16 %v3405, %v3401
        %v4342 = vpack.c.b16 %v3410, %v3406
        %v4343 = vpack.c.b16 %v3411, %v3407
        %v4344 = vpack.c.b16 %v3412, %v3408
        %v4345 = vpack.c.b16 %v3413, %v3409
        %v4346 = vpack.c.b16 %v3418, %v3414
        %v4347 = vpack.c.b16 %v3419, %v3415
        %v4348 = vpack.c.b16 %v3420, %v3416
        %v4349 = vpack.c.b16 %v3421, %v3417
        %v4350 = vpack.c.b16 %v3426, %v3422
        %v4351 = vpack.c.b16 %v3427, %v3423
        %v4352 = vpack.c.b16 %v3428, %v3424
        %v4353 = vpack.c.b16 %v3429, %v3425
        %v4354 = vpack.c.b16 %v3434, %v3430
        %v4355 = vpack.c.b16 %v3435, %v3431
        %v4356 = vpack.c.b16 %v3436, %v3432
        %v4357 = vpack.c.b16 %v3437, %v3433
        %v4358 = vpack.c.b16 %v3442, %v3438
        %v4359 = vpack.c.b16 %v3443, %v3439
        %v4360 = vpack.c.b16 %v3444, %v3440
        %v4361 = vpack.c.b16 %v3445, %v3441
        %v4362 = vpack.c.b16 %v3450, %v3446
        %v4363 = vpack.c.b16 %v3451, %v3447
        %v4364 = vpack.c.b16 %v3452, %v3448
        %v4365 = vpack.c.b16 %v3453, %v3449
        %v4366 = vpack.c.b16 %v3458, %v3454
        %v4367 = vpack.c.b16 %v3459, %v3455
        %v4368 = vpack.c.b16 %v3460, %v3456
        %v4369 = vpack.c.b16 %v3461, %v3457
        %v4370 = vpack.c.b16 %v3466, %v3462
        %v4371 = vpack.c.b16 %v3467, %v3463
        %v4372 = vpack.c.b16 %v3468, %v3464
        %v4373 = vpack.c.b16 %v3469, %v3465
        %v4374 = vpack.c.b16 %v3474, %v3470
        %v4375 = vpack.c.b16 %v3475, %v3471
        %v4376 = vpack.c.b16 %v3476, %v3472
        %v4377 = vpack.c.b16 %v3477, %v3473
        %v4378 = vpack.c.b16 %v3482, %v3478
        %v4379 = vpack.c.b16 %v3483, %v3479
        %v4380 = vpack.c.b16 %v3484, %v3480
        %v4381 = vpack.c.b16 %v3485, %v3481
        %v4382 = vpack.c.b16 %v3490, %v3486
        %v4383 = vpack.c.b16 %v3491, %v3487
        %v4384 = vpack.c.b16 %v3492, %v3488
        %v4385 = vpack.c.b16 %v3493, %v3489
        %v4386 = vpack.c.b16 %v3498, %v3494
        %v4387 = vpack.c.b16 %v3499, %v3495
        %v4388 = vpack.c.b16 %v3500, %v3496
        %v4389 = vpack.c.b16 %v3501, %v3497
        %v4390 = vpack.c.b16 %v3506, %v3502
        %v4391 = vpack.c.b16 %v3507, %v3503
        %v4392 = vpack.c.b16 %v3508, %v3504
        %v4393 = vpack.c.b16 %v3509, %v3505
        %v4394 = vpack.c.b16 %v3514, %v3510
        %v4395 = vpack.c.b16 %v3515, %v3511
        %v4396 = vpack.c.b16 %v3516, %v3512
        %v4397 = vpack.c.b16 %v3517, %v3513
        %v4398 = vpack.c.b16 %v3522, %v3518
        %v4399 = vpack.c.b16 %v3523, %v3519
        %v4400 = vpack.c.b16 %v3524, %v3520
        %v4401 = vpack.c.b16 %v3525, %v3521
        %v4402 = vpack.c.b16 %v3530, %v3526
        %v4403 = vpack.c.b16 %v3531, %v3527
        %v4404 = vpack.c.b16 %v3532, %v3528
        %v4405 = vpack.c.b16 %v3533, %v3529
        %v4406 = vpack.c.b16 %v3538, %v3534
        %v4407 = vpack.c.b16 %v3539, %v3535
        %v4408 = vpack.c.b16 %v3540, %v3536
        %v4409 = vpack.c.b16 %v3541, %v3537
        %v4410 = vpack.c.b16 %v3546, %v3542
        %v4411 = vpack.c.b16 %v3547, %v3543
        %v4412 = vpack.c.b16 %v3548, %v3544
        %v4413 = vpack.c.b16 %v3549, %v3545
        %v4414 = vpack.c.b16 %v3554, %v3550
        %v4415 = vpack.c.b16 %v3555, %v3551
        %v4416 = vpack.c.b16 %v3556, %v3552
        %v4417 = vpack.c.b16 %v3557, %v3553
        %v4418 = vpack.c.b16 %v3562, %v3558
        %v4419 = vpack.c.b16 %v3563, %v3559
        %v4420 = vpack.c.b16 %v3564, %v3560
        %v4421 = vpack.c.b16 %v3565, %v3561
        %v4422 = vpack.c.b16 %v3570, %v3566
        %v4423 = vpack.c.b16 %v3571, %v3567
        %v4424 = vpack.c.b16 %v3572, %v3568
        %v4425 = vpack.c.b16 %v3573, %v3569
        %v4426 = vpack.c.b16 %v3578, %v3574
        %v4427 = vpack.c.b16 %v3579, %v3575
        %v4428 = vpack.c.b16 %v3580, %v3576
        %v4429 = vpack.c.b16 %v3581, %v3577
        %v4430 = vpack.c.b16 %v3586, %v3582
        %v4431 = vpack.c.b16 %v3587, %v3583
        %v4432 = vpack.c.b16 %v3588, %v3584
        %v4433 = vpack.c.b16 %v3589, %v3585
        %v4434 = vpack.c.b16 %v3594, %v3590
        %v4435 = vpack.c.b16 %v3595, %v3591
        %v4436 = vpack.c.b16 %v3596, %v3592
        %v4437 = vpack.c.b16 %v3597, %v3593
        %v4438 = vpack.c.b16 %v3602, %v3598
        %v4439 = vpack.c.b16 %v3603, %v3599
        %v4440 = vpack.c.b16 %v3604, %v3600
        %v4441 = vpack.c.b16 %v3605, %v3601
        %v4442 = vpack.c.b16 %v3610, %v3606
        %v4443 = vpack.c.b16 %v3611, %v3607
        %v4444 = vpack.c.b16 %v3612, %v3608
        %v4445 = vpack.c.b16 %v3613, %v3609
        %v4446 = vpack.c.b16 %v3618, %v3614
        %v4447 = vpack.c.b16 %v3619, %v3615
        %v4448 = vpack.c.b16 %v3620, %v3616
        %v4449 = vpack.c.b16 %v3621, %v3617
        %v4450 = vpack.c.b16 %v3626, %v3622
        %v4451 = vpack.c.b16 %v3627, %v3623
        %v4452 = vpack.c.b16 %v3628, %v3624
        %v4453 = vpack.c.b16 %v3629, %v3625
        %v4454 = vpack.c.b16 %v3634, %v3630
        %v4455 = vpack.c.b16 %v3635, %v3631
        %v4456 = vpack.c.b16 %v3636, %v3632
        %v4457 = vpack.c.b16 %v3637, %v3633
        %v4458 = vpack.c.b16 %v3642, %v3638
        %v4459 = vpack.c.b16 %v3643, %v3639
        %v4460 = vpack.c.b16 %v3644, %v3640
        %v4461 = vpack.c.b16 %v3645, %v3641
        %v4462 = vpack.c.b16 %v3650, %v3646
        %v4463 = vpack.c.b16 %v3651, %v3647
        %v4464 = vpack.c.b16 %v3652, %v3648
        %v4465 = vpack.c.b16 %v3653, %v3649
        %v4466 = vpack.c.b16 %v3658, %v3654
        %v4467 = vpack.c.b16 %v3659, %v3655
        %v4468 = vpack.c.b16 %v3660, %v3656
        %v4469 = vpack.c.b16 %v3661, %v3657
        %v4470 = vpack.c.b16 %v3666, %v3662
        %v4471 = vpack.c.b16 %v3667, %v3663
        %v4472 = vpack.c.b16 %v3668, %v3664
        %v4473 = vpack.c.b16 %v3669, %v3665
        %v4474 = vpack.c.b16 %v3674, %v3670
        %v4475 = vpack.c.b16 %v3675, %v3671
        %v4476 = vpack.c.b16 %v3676, %v3672
        %v4477 = vpack.c.b16 %v3677, %v3673
        %5278 = vmatprep.subr.bf16.mxu0 %v3679
        %5279 = vmatpush1.bf16.msra.mxu0 %v3678
        %5280 = vmatprep.subr.bf16.mxu0 %v3683
        %5281 = vmatpush1.bf16.msra.mxu0 %v3682
        %5282 = vmatprep.subr.bf16.mxu0 %v3687
        %5283 = vmatpush1.bf16.msra.mxu0 %v3686
        %5284 = vmatprep.subr.bf16.mxu0 %v3691
        %5285 = vmatpush1.bf16.msra.mxu0 %v3690
        %5286 = vmatprep.subr.bf16.mxu0 %v3695
        %5287 = vmatpush1.bf16.msra.mxu0 %v3694
        %5288 = vmatprep.subr.bf16.mxu0 %v3699
        %5289 = vmatpush1.bf16.msra.mxu0 %v3698
        %5290 = vmatprep.subr.bf16.mxu0 %v3703
        %5291 = vmatpush1.bf16.msra.mxu0 %v3702
        %5292 = vmatprep.subr.bf16.mxu0 %v3707
        %5293 = vmatpush1.bf16.msra.mxu0 %v3706
        %5294 = vmatprep.subr.bf16.mxu0 %v3711
        %5295 = vmatpush1.bf16.msra.mxu0 %v3710
        %5296 = vmatprep.subr.bf16.mxu0 %v3715
        %5297 = vmatpush1.bf16.msra.mxu0 %v3714
        %5298 = vmatprep.subr.bf16.mxu0 %v3719
        %5299 = vmatpush1.bf16.msra.mxu0 %v3718
        %5300 = vmatprep.subr.bf16.mxu0 %v3723
        %5301 = vmatpush1.bf16.msra.mxu0 %v3722
        %5302 = vmatprep.subr.bf16.mxu0 %v3727
        %5303 = vmatpush1.bf16.msra.mxu0 %v3726
        %5304 = vmatprep.subr.bf16.mxu0 %v3731
        %5305 = vmatpush1.bf16.msra.mxu0 %v3730
        %5306 = vmatprep.subr.bf16.mxu0 %v3735
        %5307 = vmatpush1.bf16.msra.mxu0 %v3734
        %5308 = vmatprep.subr.bf16.mxu0 %v3739
        %5309 = vmatpush1.bf16.msra.mxu0 %v3738
        %5310 = vmatprep.mubr.bf16.mxu0 %v1129
        %5311 = vmatmul.mubr.bf16.gmra.mrb[0].mxu0 %v1115
        %v5312 = vpop.f32.mrb[0].mxu0
        %v5313 = vadd.f32 0.0, %v5312
        %v5314 = vpop.f32.mrb[0].mxu0
        %v5315 = vadd.f32 0.0, %v5314
        %v5316 = vpop.f32.mrb[0].mxu0
        %v5317 = vpop.f32.mrb[0].mxu0
        %5318 = vdwg.mxu0
        %5319 = vmatprep.subr.bf16.mxu0 %v3743
        %5320 = vmatpush1.bf16.msra.mxu0 %v3742
        %5321 = vmatprep.subr.bf16.mxu0 %v3747
        %5322 = vmatpush1.bf16.msra.mxu0 %v3746
        %5323 = vmatprep.subr.bf16.mxu0 %v3751
        %5324 = vmatpush1.bf16.msra.mxu0 %v3750
        %5325 = vmatprep.subr.bf16.mxu0 %v3755
        %5326 = vmatpush1.bf16.msra.mxu0 %v3754
        %5327 = vmatprep.subr.bf16.mxu0 %v3759
        %5328 = vmatpush1.bf16.msra.mxu0 %v3758
        %5329 = vmatprep.subr.bf16.mxu0 %v3763
        %5330 = vmatpush1.bf16.msra.mxu0 %v3762
        %5331 = vmatprep.subr.bf16.mxu0 %v3767
        %5332 = vmatpush1.bf16.msra.mxu0 %v3766
        %5333 = vmatprep.subr.bf16.mxu0 %v3771
        %5334 = vmatpush1.bf16.msra.mxu0 %v3770
        %5335 = vmatprep.subr.bf16.mxu0 %v3775
        %5336 = vmatpush1.bf16.msra.mxu0 %v3774
        %5337 = vmatprep.subr.bf16.mxu0 %v3779
        %5338 = vmatpush1.bf16.msra.mxu0 %v3778
        %5339 = vmatprep.subr.bf16.mxu0 %v3783
        %5340 = vmatpush1.bf16.msra.mxu0 %v3782
        %5341 = vmatprep.subr.bf16.mxu0 %v3787
        %5342 = vmatpush1.bf16.msra.mxu0 %v3786
        %5343 = vmatprep.subr.bf16.mxu0 %v3791
        %5344 = vmatpush1.bf16.msra.mxu0 %v3790
        %5345 = vmatprep.subr.bf16.mxu0 %v3795
        %5346 = vmatpush1.bf16.msra.mxu0 %v3794
        %5347 = vmatprep.subr.bf16.mxu0 %v3799
        %5348 = vmatpush1.bf16.msra.mxu0 %v3798
        %5349 = vmatprep.subr.bf16.mxu0 %v3803
        %5350 = vmatpush1.bf16.msra.mxu0 %v3802
        %5351 = vmatprep.mubr.bf16.mxu0 %v1139
        %5352 = vmatmul.mubr.bf16.gmra.mrb[0].mxu0 %v1137
        %v5353 = vpop.f32.mrb[0].mxu0
        %v5354 = vadd.f32 %v5313, %v5353
        %v5355 = vpop.f32.mrb[0].mxu0
        %v5356 = vadd.f32 %v5315, %v5355
        %v5357 = vpop.f32.mrb[0].mxu0
        %v5358 = vpop.f32.mrb[0].mxu0
        %5359 = vdwg.mxu0
        %5360 = vmatprep.subr.bf16.mxu0 %v3807
        %5361 = vmatpush1.bf16.msra.mxu0 %v3806
        %5362 = vmatprep.subr.bf16.mxu0 %v3811
        %5363 = vmatpush1.bf16.msra.mxu0 %v3810
        %5364 = vmatprep.subr.bf16.mxu0 %v3815
        %5365 = vmatpush1.bf16.msra.mxu0 %v3814
        %5366 = vmatprep.subr.bf16.mxu0 %v3819
        %5367 = vmatpush1.bf16.msra.mxu0 %v3818
        %5368 = vmatprep.subr.bf16.mxu0 %v3823
        %5369 = vmatpush1.bf16.msra.mxu0 %v3822
        %5370 = vmatprep.subr.bf16.mxu0 %v3827
        %5371 = vmatpush1.bf16.msra.mxu0 %v3826
        %5372 = vmatprep.subr.bf16.mxu0 %v3831
        %5373 = vmatpush1.bf16.msra.mxu0 %v3830
        %5374 = vmatprep.subr.bf16.mxu0 %v3835
        %5375 = vmatpush1.bf16.msra.mxu0 %v3834
        %5376 = vmatprep.subr.bf16.mxu0 %v3839
        %5377 = vmatpush1.bf16.msra.mxu0 %v3838
        %5378 = vmatprep.subr.bf16.mxu0 %v3843
        %5379 = vmatpush1.bf16.msra.mxu0 %v3842
        %5380 = vmatprep.subr.bf16.mxu0 %v3847
        %5381 = vmatpush1.bf16.msra.mxu0 %v3846
        %5382 = vmatprep.subr.bf16.mxu0 %v3851
        %5383 = vmatpush1.bf16.msra.mxu0 %v3850
        %5384 = vmatprep.subr.bf16.mxu0 %v3855
        %5385 = vmatpush1.bf16.msra.mxu0 %v3854
        %5386 = vmatprep.subr.bf16.mxu0 %v3859
        %5387 = vmatpush1.bf16.msra.mxu0 %v3858
        %5388 = vmatprep.subr.bf16.mxu0 %v3863
        %5389 = vmatpush1.bf16.msra.mxu0 %v3862
        %5390 = vmatprep.subr.bf16.mxu0 %v3867
        %5391 = vmatpush1.bf16.msra.mxu0 %v3866
        %5392 = vmatprep.mubr.bf16.mxu0 %v1136
        %5393 = vmatmul.mubr.bf16.gmra.mrb[0].mxu0 %v1122
        %v5394 = vpop.f32.mrb[0].mxu0
        %v5395 = vadd.f32 %v5354, %v5394
        %v5396 = vpop.f32.mrb[0].mxu0
        %v5397 = vadd.f32 %v5356, %v5396
        %v5398 = vpop.f32.mrb[0].mxu0
        %v5399 = vpop.f32.mrb[0].mxu0
        %5400 = vdwg.mxu0
        %5401 = vmatprep.subr.bf16.mxu0 %v3871
        %5402 = vmatpush1.bf16.msra.mxu0 %v3870
        %5403 = vmatprep.subr.bf16.mxu0 %v3875
        %5404 = vmatpush1.bf16.msra.mxu0 %v3874
        %5405 = vmatprep.subr.bf16.mxu0 %v3879
        %5406 = vmatpush1.bf16.msra.mxu0 %v3878
        %5407 = vmatprep.subr.bf16.mxu0 %v3883
        %5408 = vmatpush1.bf16.msra.mxu0 %v3882
        %5409 = vmatprep.subr.bf16.mxu0 %v3887
        %5410 = vmatpush1.bf16.msra.mxu0 %v3886
        %5411 = vmatprep.subr.bf16.mxu0 %v3891
        %5412 = vmatpush1.bf16.msra.mxu0 %v3890
        %5413 = vmatprep.subr.bf16.mxu0 %v3895
        %5414 = vmatpush1.bf16.msra.mxu0 %v3894
        %5415 = vmatprep.subr.bf16.mxu0 %v3899
        %5416 = vmatpush1.bf16.msra.mxu0 %v3898
        %5417 = vmatprep.subr.bf16.mxu0 %v3903
        %5418 = vmatpush1.bf16.msra.mxu0 %v3902
        %5419 = vmatprep.subr.bf16.mxu0 %v3907
        %5420 = vmatpush1.bf16.msra.mxu0 %v3906
        %5421 = vmatprep.subr.bf16.mxu0 %v3911
        %5422 = vmatpush1.bf16.msra.mxu0 %v3910
        %5423 = vmatprep.subr.bf16.mxu0 %v3915
        %5424 = vmatpush1.bf16.msra.mxu0 %v3914
        %5425 = vmatprep.subr.bf16.mxu0 %v3919
        %5426 = vmatpush1.bf16.msra.mxu0 %v3918
        %5427 = vmatprep.subr.bf16.mxu0 %v3923
        %5428 = vmatpush1.bf16.msra.mxu0 %v3922
        %5429 = vmatprep.subr.bf16.mxu0 %v3927
        %5430 = vmatpush1.bf16.msra.mxu0 %v3926
        %5431 = vmatprep.subr.bf16.mxu0 %v3931
        %5432 = vmatpush1.bf16.msra.mxu0 %v3930
        %5433 = vmatprep.mubr.bf16.mxu0 %v1140
        %5434 = vmatmul.mubr.bf16.gmra.mrb[0].mxu0 %v1138
        %v5435 = vpop.f32.mrb[0].mxu0
        %v5436 = vadd.f32 %v5395, %v5435
        %v5437 = vpop.f32.mrb[0].mxu0
        %v5438 = vadd.f32 %v5397, %v5437
        %v5439 = vpop.f32.mrb[0].mxu0
        %v5440 = vpop.f32.mrb[0].mxu0
        %5441 = vdwg.mxu0
        %5442 = vmatprep.subr.bf16.mxu0 %v3935
        %5443 = vmatpush1.bf16.msra.mxu0 %v3934
        %5444 = vmatprep.subr.bf16.mxu0 %v3939
        %5445 = vmatpush1.bf16.msra.mxu0 %v3938
        %5446 = vmatprep.subr.bf16.mxu0 %v3943
        %5447 = vmatpush1.bf16.msra.mxu0 %v3942
        %5448 = vmatprep.subr.bf16.mxu0 %v3947
        %5449 = vmatpush1.bf16.msra.mxu0 %v3946
        %5450 = vmatprep.subr.bf16.mxu0 %v3951
        %5451 = vmatpush1.bf16.msra.mxu0 %v3950
        %5452 = vmatprep.subr.bf16.mxu0 %v3955
        %5453 = vmatpush1.bf16.msra.mxu0 %v3954
        %5454 = vmatprep.subr.bf16.mxu0 %v3959
        %5455 = vmatpush1.bf16.msra.mxu0 %v3958
        %5456 = vmatprep.subr.bf16.mxu0 %v3963
        %5457 = vmatpush1.bf16.msra.mxu0 %v3962
        %5458 = vmatprep.subr.bf16.mxu0 %v3967
        %5459 = vmatpush1.bf16.msra.mxu0 %v3966
        %5460 = vmatprep.subr.bf16.mxu0 %v3971
        %5461 = vmatpush1.bf16.msra.mxu0 %v3970
        %5462 = vmatprep.subr.bf16.mxu0 %v3975
        %5463 = vmatpush1.bf16.msra.mxu0 %v3974
        %5464 = vmatprep.subr.bf16.mxu0 %v3979
        %5465 = vmatpush1.bf16.msra.mxu0 %v3978
        %5466 = vmatprep.subr.bf16.mxu0 %v3983
        %5467 = vmatpush1.bf16.msra.mxu0 %v3982
        %5468 = vmatprep.subr.bf16.mxu0 %v3987
        %5469 = vmatpush1.bf16.msra.mxu0 %v3986
        %5470 = vmatprep.subr.bf16.mxu0 %v3991
        %5471 = vmatpush1.bf16.msra.mxu0 %v3990
        %5472 = vmatprep.subr.bf16.mxu0 %v3995
        %5473 = vmatpush1.bf16.msra.mxu0 %v3994
        %5474 = vmatprep.mubr.bf16.mxu0 %v1178
        %5475 = vmatmul.mubr.bf16.gmra.mrb[0].mxu0 %v1164
        %v5476 = vpop.f32.mrb[0].mxu0
        %v5477 = vadd.f32 %v5436, %v5476
        %v5478 = vpop.f32.mrb[0].mxu0
        %v5479 = vadd.f32 %v5438, %v5478
        %v5480 = vpop.f32.mrb[0].mxu0
        %v5481 = vpop.f32.mrb[0].mxu0
        %5482 = vdwg.mxu0
        %5483 = vmatprep.subr.bf16.mxu0 %v3999
        %5484 = vmatpush1.bf16.msra.mxu0 %v3998
        %5485 = vmatprep.subr.bf16.mxu0 %v4003
        %5486 = vmatpush1.bf16.msra.mxu0 %v4002
        %5487 = vmatprep.subr.bf16.mxu0 %v4007
        %5488 = vmatpush1.bf16.msra.mxu0 %v4006
        %5489 = vmatprep.subr.bf16.mxu0 %v4011
        %5490 = vmatpush1.bf16.msra.mxu0 %v4010
        %5491 = vmatprep.subr.bf16.mxu0 %v4015
        %5492 = vmatpush1.bf16.msra.mxu0 %v4014
        %5493 = vmatprep.subr.bf16.mxu0 %v4019
        %5494 = vmatpush1.bf16.msra.mxu0 %v4018
        %5495 = vmatprep.subr.bf16.mxu0 %v4023
        %5496 = vmatpush1.bf16.msra.mxu0 %v4022
        %5497 = vmatprep.subr.bf16.mxu0 %v4027
        %5498 = vmatpush1.bf16.msra.mxu0 %v4026
        %5499 = vmatprep.subr.bf16.mxu0 %v4031
        %5500 = vmatpush1.bf16.msra.mxu0 %v4030
        %5501 = vmatprep.subr.bf16.mxu0 %v4035
        %5502 = vmatpush1.bf16.msra.mxu0 %v4034
        %5503 = vmatprep.subr.bf16.mxu0 %v4039
        %5504 = vmatpush1.bf16.msra.mxu0 %v4038
        %5505 = vmatprep.subr.bf16.mxu0 %v4043
        %5506 = vmatpush1.bf16.msra.mxu0 %v4042
        %5507 = vmatprep.subr.bf16.mxu0 %v4047
        %5508 = vmatpush1.bf16.msra.mxu0 %v4046
        %5509 = vmatprep.subr.bf16.mxu0 %v4051
        %5510 = vmatpush1.bf16.msra.mxu0 %v4050
        %5511 = vmatprep.subr.bf16.mxu0 %v4055
        %5512 = vmatpush1.bf16.msra.mxu0 %v4054
        %5513 = vmatprep.subr.bf16.mxu0 %v4059
        %5514 = vmatpush1.bf16.msra.mxu0 %v4058
        %5515 = vmatprep.mubr.bf16.mxu0 %v1188
        %5516 = vmatmul.mubr.bf16.gmra.mrb[0].mxu0 %v1186
        %v5517 = vpop.f32.mrb[0].mxu0
        %v5518 = vadd.f32 %v5477, %v5517
        %v5519 = vpop.f32.mrb[0].mxu0
        %v5520 = vadd.f32 %v5479, %v5519
        %v5521 = vpop.f32.mrb[0].mxu0
        %v5522 = vpop.f32.mrb[0].mxu0
        %5523 = vdwg.mxu0
        %5524 = vmatprep.subr.bf16.mxu0 %v4063
        %5525 = vmatpush1.bf16.msra.mxu0 %v4062
        %5526 = vmatprep.subr.bf16.mxu0 %v4067
        %5527 = vmatpush1.bf16.msra.mxu0 %v4066
        %5528 = vmatprep.subr.bf16.mxu0 %v4071
        %5529 = vmatpush1.bf16.msra.mxu0 %v4070
        %5530 = vmatprep.subr.bf16.mxu0 %v4075
        %5531 = vmatpush1.bf16.msra.mxu0 %v4074
        %5532 = vmatprep.subr.bf16.mxu0 %v4079
        %5533 = vmatpush1.bf16.msra.mxu0 %v4078
        %5534 = vmatprep.subr.bf16.mxu0 %v4083
        %5535 = vmatpush1.bf16.msra.mxu0 %v4082
        %5536 = vmatprep.subr.bf16.mxu0 %v4087
        %5537 = vmatpush1.bf16.msra.mxu0 %v4086
        %5538 = vmatprep.subr.bf16.mxu0 %v4091
        %5539 = vmatpush1.bf16.msra.mxu0 %v4090
        %5540 = vmatprep.subr.bf16.mxu0 %v4095
        %5541 = vmatpush1.bf16.msra.mxu0 %v4094
        %5542 = vmatprep.subr.bf16.mxu0 %v4099
        %5543 = vmatpush1.bf16.msra.mxu0 %v4098
        %5544 = vmatprep.subr.bf16.mxu0 %v4103
        %5545 = vmatpush1.bf16.msra.mxu0 %v4102
        %5546 = vmatprep.subr.bf16.mxu0 %v4107
        %5547 = vmatpush1.bf16.msra.mxu0 %v4106
        %5548 = vmatprep.subr.bf16.mxu0 %v4111
        %5549 = vmatpush1.bf16.msra.mxu0 %v4110
        %5550 = vmatprep.subr.bf16.mxu0 %v4115
        %5551 = vmatpush1.bf16.msra.mxu0 %v4114
        %5552 = vmatprep.subr.bf16.mxu0 %v4119
        %5553 = vmatpush1.bf16.msra.mxu0 %v4118
        %5554 = vmatprep.subr.bf16.mxu0 %v4123
        %5555 = vmatpush1.bf16.msra.mxu0 %v4122
        %5556 = vmatprep.mubr.bf16.mxu0 %v1185
        %5557 = vmatmul.mubr.bf16.gmra.mrb[0].mxu0 %v1171
        %v5558 = vpop.f32.mrb[0].mxu0
        %v5559 = vadd.f32 %v5518, %v5558
        %v5560 = vpop.f32.mrb[0].mxu0
        %v5561 = vadd.f32 %v5520, %v5560
        %v5562 = vpop.f32.mrb[0].mxu0
        %v5563 = vpop.f32.mrb[0].mxu0
        %5564 = vdwg.mxu0
        %5565 = vmatprep.subr.bf16.mxu0 %v4127
        %5566 = vmatpush1.bf16.msra.mxu0 %v4126
        %5567 = vmatprep.subr.bf16.mxu0 %v4131
        %5568 = vmatpush1.bf16.msra.mxu0 %v4130
        %5569 = vmatprep.subr.bf16.mxu0 %v4135
        %5570 = vmatpush1.bf16.msra.mxu0 %v4134
        %5571 = vmatprep.subr.bf16.mxu0 %v4139
        %5572 = vmatpush1.bf16.msra.mxu0 %v4138
        %5573 = vmatprep.subr.bf16.mxu0 %v4143
        %5574 = vmatpush1.bf16.msra.mxu0 %v4142
        %5575 = vmatprep.subr.bf16.mxu0 %v4147
        %5576 = vmatpush1.bf16.msra.mxu0 %v4146
        %5577 = vmatprep.subr.bf16.mxu0 %v4151
        %5578 = vmatpush1.bf16.msra.mxu0 %v4150
        %5579 = vmatprep.subr.bf16.mxu0 %v4155
        %5580 = vmatpush1.bf16.msra.mxu0 %v4154
        %5581 = vmatprep.subr.bf16.mxu0 %v4159
        %5582 = vmatpush1.bf16.msra.mxu0 %v4158
        %5583 = vmatprep.subr.bf16.mxu0 %v4163
        %5584 = vmatpush1.bf16.msra.mxu0 %v4162
        %5585 = vmatprep.subr.bf16.mxu0 %v4167
        %5586 = vmatpush1.bf16.msra.mxu0 %v4166
        %5587 = vmatprep.subr.bf16.mxu0 %v4171
        %5588 = vmatpush1.bf16.msra.mxu0 %v4170
        %5589 = vmatprep.subr.bf16.mxu0 %v4175
        %5590 = vmatpush1.bf16.msra.mxu0 %v4174
        %5591 = vmatprep.subr.bf16.mxu0 %v4179
        %5592 = vmatpush1.bf16.msra.mxu0 %v4178
        %5593 = vmatprep.subr.bf16.mxu0 %v4183
        %5594 = vmatpush1.bf16.msra.mxu0 %v4182
        %5595 = vmatprep.subr.bf16.mxu0 %v4187
        %5596 = vmatpush1.bf16.msra.mxu0 %v4186
        %5597 = vmatprep.mubr.bf16.mxu0 %v1189
        %5598 = vmatmul.mubr.bf16.gmra.mrb[0].mxu0 %v1187
        %v5599 = vpop.f32.mrb[0].mxu0
        %v5600 = vadd.f32 %v5559, %v5599
        %v5601 = vpop.f32.mrb[0].mxu0
        %v5602 = vadd.f32 %v5561, %v5601
        %v5603 = vpop.f32.mrb[0].mxu0
        %v5604 = vpop.f32.mrb[0].mxu0
        %5605 = vdwg.mxu0
        %5606 = vmatprep.subr.bf16.mxu0 %v4191
        %5607 = vmatpush1.bf16.msra.mxu0 %v4190
        %5608 = vmatprep.subr.bf16.mxu0 %v4195
        %5609 = vmatpush1.bf16.msra.mxu0 %v4194
        %5610 = vmatprep.subr.bf16.mxu0 %v4199
        %5611 = vmatpush1.bf16.msra.mxu0 %v4198
        %5612 = vmatprep.subr.bf16.mxu0 %v4203
        %5613 = vmatpush1.bf16.msra.mxu0 %v4202
        %5614 = vmatprep.subr.bf16.mxu0 %v4207
        %5615 = vmatpush1.bf16.msra.mxu0 %v4206
        %5616 = vmatprep.subr.bf16.mxu0 %v4211
        %5617 = vmatpush1.bf16.msra.mxu0 %v4210
        %5618 = vmatprep.subr.bf16.mxu0 %v4215
        %5619 = vmatpush1.bf16.msra.mxu0 %v4214
        %5620 = vmatprep.subr.bf16.mxu0 %v4219
        %5621 = vmatpush1.bf16.msra.mxu0 %v4218
        %5622 = vmatprep.subr.bf16.mxu0 %v4223
        %5623 = vmatpush1.bf16.msra.mxu0 %v4222
        %5624 = vmatprep.subr.bf16.mxu0 %v4227
        %5625 = vmatpush1.bf16.msra.mxu0 %v4226
        %5626 = vmatprep.subr.bf16.mxu0 %v4231
        %5627 = vmatpush1.bf16.msra.mxu0 %v4230
        %5628 = vmatprep.subr.bf16.mxu0 %v4235
        %5629 = vmatpush1.bf16.msra.mxu0 %v4234
        %5630 = vmatprep.subr.bf16.mxu0 %v4239
        %5631 = vmatpush1.bf16.msra.mxu0 %v4238
        %5632 = vmatprep.subr.bf16.mxu0 %v4243
        %5633 = vmatpush1.bf16.msra.mxu0 %v4242
        %5634 = vmatprep.subr.bf16.mxu0 %v4247
        %5635 = vmatpush1.bf16.msra.mxu0 %v4246
        %5636 = vmatprep.subr.bf16.mxu0 %v4251
        %5637 = vmatpush1.bf16.msra.mxu0 %v4250
        %5638 = vmatprep.mubr.bf16.mxu0 %v1227
        %5639 = vmatmul.mubr.bf16.gmra.mrb[0].mxu0 %v1213
        %v5640 = vpop.f32.mrb[0].mxu0
        %v5641 = vadd.f32 %v5600, %v5640
        %v5642 = vpop.f32.mrb[0].mxu0
        %v5643 = vadd.f32 %v5602, %v5642
        %v5644 = vpop.f32.mrb[0].mxu0
        %v5645 = vpop.f32.mrb[0].mxu0
        %5646 = vdwg.mxu0
        %5647 = vmatprep.subr.bf16.mxu0 %v4255
        %5648 = vmatpush1.bf16.msra.mxu0 %v4254
        %5649 = vmatprep.subr.bf16.mxu0 %v4259
        %5650 = vmatpush1.bf16.msra.mxu0 %v4258
        %5651 = vmatprep.subr.bf16.mxu0 %v4263
        %5652 = vmatpush1.bf16.msra.mxu0 %v4262
        %5653 = vmatprep.subr.bf16.mxu0 %v4267
        %5654 = vmatpush1.bf16.msra.mxu0 %v4266
        %5655 = vmatprep.subr.bf16.mxu0 %v4271
        %5656 = vmatpush1.bf16.msra.mxu0 %v4270
        %5657 = vmatprep.subr.bf16.mxu0 %v4275
        %5658 = vmatpush1.bf16.msra.mxu0 %v4274
        %5659 = vmatprep.subr.bf16.mxu0 %v4279
        %5660 = vmatpush1.bf16.msra.mxu0 %v4278
        %5661 = vmatprep.subr.bf16.mxu0 %v4283
        %5662 = vmatpush1.bf16.msra.mxu0 %v4282
        %5663 = vmatprep.subr.bf16.mxu0 %v4287
        %5664 = vmatpush1.bf16.msra.mxu0 %v4286
        %5665 = vmatprep.subr.bf16.mxu0 %v4291
        %5666 = vmatpush1.bf16.msra.mxu0 %v4290
        %5667 = vmatprep.subr.bf16.mxu0 %v4295
        %5668 = vmatpush1.bf16.msra.mxu0 %v4294
        %5669 = vmatprep.subr.bf16.mxu0 %v4299
        %5670 = vmatpush1.bf16.msra.mxu0 %v4298
        %5671 = vmatprep.subr.bf16.mxu0 %v4303
        %5672 = vmatpush1.bf16.msra.mxu0 %v4302
        %5673 = vmatprep.subr.bf16.mxu0 %v4307
        %5674 = vmatpush1.bf16.msra.mxu0 %v4306
        %5675 = vmatprep.subr.bf16.mxu0 %v4311
        %5676 = vmatpush1.bf16.msra.mxu0 %v4310
        %5677 = vmatprep.subr.bf16.mxu0 %v4315
        %5678 = vmatpush1.bf16.msra.mxu0 %v4314
        %5679 = vmatprep.mubr.bf16.mxu0 %v1237
        %5680 = vmatmul.mubr.bf16.gmra.mrb[0].mxu0 %v1235
        %v5681 = vpop.f32.mrb[0].mxu0
        %v5682 = vadd.f32 %v5641, %v5681
        %v5683 = vpop.f32.mrb[0].mxu0
        %v5684 = vadd.f32 %v5643, %v5683
        %v5685 = vpop.f32.mrb[0].mxu0
        %v5686 = vpop.f32.mrb[0].mxu0
        %5687 = vdwg.mxu0
        %5688 = vmatprep.subr.bf16.mxu0 %v4319
        %5689 = vmatpush1.bf16.msra.mxu0 %v4318
        %5690 = vmatprep.subr.bf16.mxu0 %v4323
        %5691 = vmatpush1.bf16.msra.mxu0 %v4322
        %5692 = vmatprep.subr.bf16.mxu0 %v4327
        %5693 = vmatpush1.bf16.msra.mxu0 %v4326
        %5694 = vmatprep.subr.bf16.mxu0 %v4331
        %5695 = vmatpush1.bf16.msra.mxu0 %v4330
        %5696 = vmatprep.subr.bf16.mxu0 %v4335
        %5697 = vmatpush1.bf16.msra.mxu0 %v4334
        %5698 = vmatprep.subr.bf16.mxu0 %v4339
        %5699 = vmatpush1.bf16.msra.mxu0 %v4338
        %5700 = vmatprep.subr.bf16.mxu0 %v4343
        %5701 = vmatpush1.bf16.msra.mxu0 %v4342
        %5702 = vmatprep.subr.bf16.mxu0 %v4347
        %5703 = vmatpush1.bf16.msra.mxu0 %v4346
        %5704 = vmatprep.subr.bf16.mxu0 %v4351
        %5705 = vmatpush1.bf16.msra.mxu0 %v4350
        %5706 = vmatprep.subr.bf16.mxu0 %v4355
        %5707 = vmatpush1.bf16.msra.mxu0 %v4354
        %5708 = vmatprep.subr.bf16.mxu0 %v4359
        %5709 = vmatpush1.bf16.msra.mxu0 %v4358
        %5710 = vmatprep.subr.bf16.mxu0 %v4363
        %5711 = vmatpush1.bf16.msra.mxu0 %v4362
        %5712 = vmatprep.subr.bf16.mxu0 %v4367
        %5713 = vmatpush1.bf16.msra.mxu0 %v4366
        %5714 = vmatprep.subr.bf16.mxu0 %v4371
        %5715 = vmatpush1.bf16.msra.mxu0 %v4370
        %5716 = vmatprep.subr.bf16.mxu0 %v4375
        %5717 = vmatpush1.bf16.msra.mxu0 %v4374
        %5718 = vmatprep.subr.bf16.mxu0 %v4379
        %5719 = vmatpush1.bf16.msra.mxu0 %v4378
        %5720 = vmatprep.mubr.bf16.mxu0 %v1234
        %5721 = vmatmul.mubr.bf16.gmra.mrb[0].mxu0 %v1220
        %v5722 = vpop.f32.mrb[0].mxu0
        %v5723 = vadd.f32 %v5682, %v5722
        %v5724 = vpop.f32.mrb[0].mxu0
        %v5725 = vadd.f32 %v5684, %v5724
        %v5726 = vpop.f32.mrb[0].mxu0
        %v5727 = vpop.f32.mrb[0].mxu0
        %5728 = vdwg.mxu0
        %5729 = vmatprep.subr.bf16.mxu0 %v4383
        %5730 = vmatpush1.bf16.msra.mxu0 %v4382
        %5731 = vmatprep.subr.bf16.mxu0 %v4387
        %5732 = vmatpush1.bf16.msra.mxu0 %v4386
        %5733 = vmatprep.subr.bf16.mxu0 %v4391
        %5734 = vmatpush1.bf16.msra.mxu0 %v4390
        %5735 = vmatprep.subr.bf16.mxu0 %v4395
        %5736 = vmatpush1.bf16.msra.mxu0 %v4394
        %5737 = vmatprep.subr.bf16.mxu0 %v4399
        %5738 = vmatpush1.bf16.msra.mxu0 %v4398
        %5739 = vmatprep.subr.bf16.mxu0 %v4403
        %5740 = vmatpush1.bf16.msra.mxu0 %v4402
        %5741 = vmatprep.subr.bf16.mxu0 %v4407
        %5742 = vmatpush1.bf16.msra.mxu0 %v4406
        %5743 = vmatprep.subr.bf16.mxu0 %v4411
        %5744 = vmatpush1.bf16.msra.mxu0 %v4410
        %5745 = vmatprep.subr.bf16.mxu0 %v4415
        %5746 = vmatpush1.bf16.msra.mxu0 %v4414
        %5747 = vmatprep.subr.bf16.mxu0 %v4419
        %5748 = vmatpush1.bf16.msra.mxu0 %v4418
        %5749 = vmatprep.subr.bf16.mxu0 %v4423
        %5750 = vmatpush1.bf16.msra.mxu0 %v4422
        %5751 = vmatprep.subr.bf16.mxu0 %v4427
        %5752 = vmatpush1.bf16.msra.mxu0 %v4426
        %5753 = vmatprep.subr.bf16.mxu0 %v4431
        %5754 = vmatpush1.bf16.msra.mxu0 %v4430
        %5755 = vmatprep.subr.bf16.mxu0 %v4435
        %5756 = vmatpush1.bf16.msra.mxu0 %v4434
        %5757 = vmatprep.subr.bf16.mxu0 %v4439
        %5758 = vmatpush1.bf16.msra.mxu0 %v4438
        %5759 = vmatprep.subr.bf16.mxu0 %v4443
        %5760 = vmatpush1.bf16.msra.mxu0 %v4442
        %5761 = vmatprep.mubr.bf16.mxu0 %v1238
        %5762 = vmatmul.mubr.bf16.gmra.mrb[0].mxu0 %v1236
        %v5763 = vpop.f32.mrb[0].mxu0
        %v5764 = vadd.f32 %v5723, %v5763
        %v5765 = vpop.f32.mrb[0].mxu0
        %v5766 = vadd.f32 %v5725, %v5765
        %v5767 = vpop.f32.mrb[0].mxu0
        %v5768 = vpop.f32.mrb[0].mxu0
        %5769 = vdwg.mxu0
        %5770 = vmatprep.subr.bf16.mxu0 %v4447
        %5771 = vmatpush1.bf16.msra.mxu0 %v4446
        %5772 = vmatprep.subr.bf16.mxu0 %v4451
        %5773 = vmatpush1.bf16.msra.mxu0 %v4450
        %5774 = vmatprep.subr.bf16.mxu0 %v4455
        %5775 = vmatpush1.bf16.msra.mxu0 %v4454
        %5776 = vmatprep.subr.bf16.mxu0 %v4459
        %5777 = vmatpush1.bf16.msra.mxu0 %v4458
        %5778 = vmatprep.subr.bf16.mxu0 %v4463
        %5779 = vmatpush1.bf16.msra.mxu0 %v4462
        %5780 = vmatprep.subr.bf16.mxu0 %v4467
        %5781 = vmatpush1.bf16.msra.mxu0 %v4466
        %5782 = vmatprep.subr.bf16.mxu0 %v4471
        %5783 = vmatpush1.bf16.msra.mxu0 %v4470
        %5784 = vmatprep.subr.bf16.mxu0 %v4475
        %5785 = vmatpush1.bf16.msra.mxu0 %v4474
        %5786 = vmatprep.subr.bf16.mxu0 0
        %5787 = vmatpush1.bf16.msra.mxu0 0
        %5788 = vmatprep.subr.bf16.mxu0 0
        %5789 = vmatpush1.bf16.msra.mxu0 0
        %5790 = vmatprep.subr.bf16.mxu0 0
        %5791 = vmatpush1.bf16.msra.mxu0 0
        %5792 = vmatprep.subr.bf16.mxu0 0
        %5793 = vmatpush1.bf16.msra.mxu0 0
        %5794 = vmatprep.subr.bf16.mxu0 0
        %5795 = vmatpush1.bf16.msra.mxu0 0
        %5796 = vmatprep.subr.bf16.mxu0 0
        %5797 = vmatpush1.bf16.msra.mxu0 0
        %5798 = vmatprep.subr.bf16.mxu0 0
        %5799 = vmatpush1.bf16.msra.mxu0 0
        %5800 = vmatprep.subr.bf16.mxu0 0
        %5801 = vmatpush1.bf16.msra.mxu0 0
        %5802 = vmatprep.mubr.bf16.mxu0 0
        %5803 = vmatmul.mubr.bf16.gmra.mrb[0].mxu0 %v1252
        %v5804 = vpop.f32.mrb[0].mxu0
        %v5805 = vadd.f32 %v5764, %v5804
        %v5806 = vpop.f32.mrb[0].mxu0
        %v5807 = vadd.f32 %v5766, %v5806
        %v5808 = vpop.f32.mrb[0].mxu0
        %v5809 = vpop.f32.mrb[0].mxu0
        %5810 = vdwg.mxu0
        %5811 = vmatprep.subr.bf16.mxu0 %v3681
        %5812 = vmatpush1.bf16.msra.mxu0 %v3680
        %5813 = vmatprep.subr.bf16.mxu0 %v3685
        %5814 = vmatpush1.bf16.msra.mxu0 %v3684
        %5815 = vmatprep.subr.bf16.mxu0 %v3689
        %5816 = vmatpush1.bf16.msra.mxu0 %v3688
        %5817 = vmatprep.subr.bf16.mxu0 %v3693
        %5818 = vmatpush1.bf16.msra.mxu0 %v3692
        %5819 = vmatprep.subr.bf16.mxu0 %v3697
        %5820 = vmatpush1.bf16.msra.mxu0 %v3696
        %5821 = vmatprep.subr.bf16.mxu0 %v3701
        %5822 = vmatpush1.bf16.msra.mxu0 %v3700
        %5823 = vmatprep.subr.bf16.mxu0 %v3705
        %5824 = vmatpush1.bf16.msra.mxu0 %v3704
        %5825 = vmatprep.subr.bf16.mxu0 %v3709
        %5826 = vmatpush1.bf16.msra.mxu0 %v3708
        %5827 = vmatprep.subr.bf16.mxu0 %v3713
        %5828 = vmatpush1.bf16.msra.mxu0 %v3712
        %5829 = vmatprep.subr.bf16.mxu0 %v3717
        %5830 = vmatpush1.bf16.msra.mxu0 %v3716
        %5831 = vmatprep.subr.bf16.mxu0 %v3721
        %5832 = vmatpush1.bf16.msra.mxu0 %v3720
        %5833 = vmatprep.subr.bf16.mxu0 %v3725
        %5834 = vmatpush1.bf16.msra.mxu0 %v3724
        %5835 = vmatprep.subr.bf16.mxu0 %v3729
        %5836 = vmatpush1.bf16.msra.mxu0 %v3728
        %5837 = vmatprep.subr.bf16.mxu0 %v3733
        %5838 = vmatpush1.bf16.msra.mxu0 %v3732
        %5839 = vmatprep.subr.bf16.mxu0 %v3737
        %5840 = vmatpush1.bf16.msra.mxu0 %v3736
        %5841 = vmatprep.subr.bf16.mxu0 %v3741
        %5842 = vmatpush1.bf16.msra.mxu0 %v3740
        %5843 = vmatprep.mubr.bf16.mxu0 %v1129
        %5844 = vmatmul.mubr.bf16.gmra.mrb[0].mxu0 %v1115
        %v5845 = vpop.f32.mrb[0].mxu0
        %v5846 = vadd.f32 0.0, %v5845
        %v5847 = vpop.f32.mrb[0].mxu0
        %v5848 = vadd.f32 0.0, %v5847
        %v5849 = vpop.f32.mrb[0].mxu0
        %v5850 = vpop.f32.mrb[0].mxu0
        %5851 = vdwg.mxu0
        %5852 = vmatprep.subr.bf16.mxu0 %v3745
        %5853 = vmatpush1.bf16.msra.mxu0 %v3744
        %5854 = vmatprep.subr.bf16.mxu0 %v3749
        %5855 = vmatpush1.bf16.msra.mxu0 %v3748
        %5856 = vmatprep.subr.bf16.mxu0 %v3753
        %5857 = vmatpush1.bf16.msra.mxu0 %v3752
        %5858 = vmatprep.subr.bf16.mxu0 %v3757
        %5859 = vmatpush1.bf16.msra.mxu0 %v3756
        %5860 = vmatprep.subr.bf16.mxu0 %v3761
        %5861 = vmatpush1.bf16.msra.mxu0 %v3760
        %5862 = vmatprep.subr.bf16.mxu0 %v3765
        %5863 = vmatpush1.bf16.msra.mxu0 %v3764
        %5864 = vmatprep.subr.bf16.mxu0 %v3769
        %5865 = vmatpush1.bf16.msra.mxu0 %v3768
        %5866 = vmatprep.subr.bf16.mxu0 %v3773
        %5867 = vmatpush1.bf16.msra.mxu0 %v3772
        %5868 = vmatprep.subr.bf16.mxu0 %v3777
        %5869 = vmatpush1.bf16.msra.mxu0 %v3776
        %5870 = vmatprep.subr.bf16.mxu0 %v3781
        %5871 = vmatpush1.bf16.msra.mxu0 %v3780
        %5872 = vmatprep.subr.bf16.mxu0 %v3785
        %5873 = vmatpush1.bf16.msra.mxu0 %v3784
        %5874 = vmatprep.subr.bf16.mxu0 %v3789
        %5875 = vmatpush1.bf16.msra.mxu0 %v3788
        %5876 = vmatprep.subr.bf16.mxu0 %v3793
        %5877 = vmatpush1.bf16.msra.mxu0 %v3792
        %5878 = vmatprep.subr.bf16.mxu0 %v3797
        %5879 = vmatpush1.bf16.msra.mxu0 %v3796
        %5880 = vmatprep.subr.bf16.mxu0 %v3801
        %5881 = vmatpush1.bf16.msra.mxu0 %v3800
        %5882 = vmatprep.subr.bf16.mxu0 %v3805
        %5883 = vmatpush1.bf16.msra.mxu0 %v3804
        %5884 = vmatprep.mubr.bf16.mxu0 %v1139
        %5885 = vmatmul.mubr.bf16.gmra.mrb[0].mxu0 %v1137
        %v5886 = vpop.f32.mrb[0].mxu0
        %v5887 = vadd.f32 %v5846, %v5886
        %v5888 = vpop.f32.mrb[0].mxu0
        %v5889 = vadd.f32 %v5848, %v5888
        %v5890 = vpop.f32.mrb[0].mxu0
        %v5891 = vpop.f32.mrb[0].mxu0
        %5892 = vdwg.mxu0
        %5893 = vmatprep.subr.bf16.mxu0 %v3809
        %5894 = vmatpush1.bf16.msra.mxu0 %v3808
        %5895 = vmatprep.subr.bf16.mxu0 %v3813
        %5896 = vmatpush1.bf16.msra.mxu0 %v3812
        %5897 = vmatprep.subr.bf16.mxu0 %v3817
        %5898 = vmatpush1.bf16.msra.mxu0 %v3816
        %5899 = vmatprep.subr.bf16.mxu0 %v3821
        %5900 = vmatpush1.bf16.msra.mxu0 %v3820
        %5901 = vmatprep.subr.bf16.mxu0 %v3825
        %5902 = vmatpush1.bf16.msra.mxu0 %v3824
        %5903 = vmatprep.subr.bf16.mxu0 %v3829
        %5904 = vmatpush1.bf16.msra.mxu0 %v3828
        %5905 = vmatprep.subr.bf16.mxu0 %v3833
        %5906 = vmatpush1.bf16.msra.mxu0 %v3832
        %5907 = vmatprep.subr.bf16.mxu0 %v3837
        %5908 = vmatpush1.bf16.msra.mxu0 %v3836
        %5909 = vmatprep.subr.bf16.mxu0 %v3841
        %5910 = vmatpush1.bf16.msra.mxu0 %v3840
        %5911 = vmatprep.subr.bf16.mxu0 %v3845
        %5912 = vmatpush1.bf16.msra.mxu0 %v3844
        %5913 = vmatprep.subr.bf16.mxu0 %v3849
        %5914 = vmatpush1.bf16.msra.mxu0 %v3848
        %5915 = vmatprep.subr.bf16.mxu0 %v3853
        %5916 = vmatpush1.bf16.msra.mxu0 %v3852
        %5917 = vmatprep.subr.bf16.mxu0 %v3857
        %5918 = vmatpush1.bf16.msra.mxu0 %v3856
        %5919 = vmatprep.subr.bf16.mxu0 %v3861
        %5920 = vmatpush1.bf16.msra.mxu0 %v3860
        %5921 = vmatprep.subr.bf16.mxu0 %v3865
        %5922 = vmatpush1.bf16.msra.mxu0 %v3864
        %5923 = vmatprep.subr.bf16.mxu0 %v3869
        %5924 = vmatpush1.bf16.msra.mxu0 %v3868
        %5925 = vmatprep.mubr.bf16.mxu0 %v1136
        %5926 = vmatmul.mubr.bf16.gmra.mrb[0].mxu0 %v1122
        %v5927 = vpop.f32.mrb[0].mxu0
        %v5928 = vadd.f32 %v5887, %v5927
        %v5929 = vpop.f32.mrb[0].mxu0
        %v5930 = vadd.f32 %v5889, %v5929
        %v5931 = vpop.f32.mrb[0].mxu0
        %v5932 = vpop.f32.mrb[0].mxu0
        %5933 = vdwg.mxu0
        %5934 = vmatprep.subr.bf16.mxu0 %v3873
        %5935 = vmatpush1.bf16.msra.mxu0 %v3872
        %5936 = vmatprep.subr.bf16.mxu0 %v3877
        %5937 = vmatpush1.bf16.msra.mxu0 %v3876
        %5938 = vmatprep.subr.bf16.mxu0 %v3881
        %5939 = vmatpush1.bf16.msra.mxu0 %v3880
        %5940 = vmatprep.subr.bf16.mxu0 %v3885
        %5941 = vmatpush1.bf16.msra.mxu0 %v3884
        %5942 = vmatprep.subr.bf16.mxu0 %v3889
        %5943 = vmatpush1.bf16.msra.mxu0 %v3888
        %5944 = vmatprep.subr.bf16.mxu0 %v3893
        %5945 = vmatpush1.bf16.msra.mxu0 %v3892
        %5946 = vmatprep.subr.bf16.mxu0 %v3897
        %5947 = vmatpush1.bf16.msra.mxu0 %v3896
        %5948 = vmatprep.subr.bf16.mxu0 %v3901
        %5949 = vmatpush1.bf16.msra.mxu0 %v3900
        %5950 = vmatprep.subr.bf16.mxu0 %v3905
        %5951 = vmatpush1.bf16.msra.mxu0 %v3904
        %5952 = vmatprep.subr.bf16.mxu0 %v3909
        %5953 = vmatpush1.bf16.msra.mxu0 %v3908
        %5954 = vmatprep.subr.bf16.mxu0 %v3913
        %5955 = vmatpush1.bf16.msra.mxu0 %v3912
        %5956 = vmatprep.subr.bf16.mxu0 %v3917
        %5957 = vmatpush1.bf16.msra.mxu0 %v3916
        %5958 = vmatprep.subr.bf16.mxu0 %v3921
        %5959 = vmatpush1.bf16.msra.mxu0 %v3920
        %5960 = vmatprep.subr.bf16.mxu0 %v3925
        %5961 = vmatpush1.bf16.msra.mxu0 %v3924
        %5962 = vmatprep.subr.bf16.mxu0 %v3929
        %5963 = vmatpush1.bf16.msra.mxu0 %v3928
        %5964 = vmatprep.subr.bf16.mxu0 %v3933
        %5965 = vmatpush1.bf16.msra.mxu0 %v3932
        %5966 = vmatprep.mubr.bf16.mxu0 %v1140
        %5967 = vmatmul.mubr.bf16.gmra.mrb[0].mxu0 %v1138
        %v5968 = vpop.f32.mrb[0].mxu0
        %v5969 = vadd.f32 %v5928, %v5968
        %v5970 = vpop.f32.mrb[0].mxu0
        %v5971 = vadd.f32 %v5930, %v5970
        %v5972 = vpop.f32.mrb[0].mxu0
        %v5973 = vpop.f32.mrb[0].mxu0
        %5974 = vdwg.mxu0
        %5975 = vmatprep.subr.bf16.mxu0 %v3937
        %5976 = vmatpush1.bf16.msra.mxu0 %v3936
        %5977 = vmatprep.subr.bf16.mxu0 %v3941
        %5978 = vmatpush1.bf16.msra.mxu0 %v3940
        %5979 = vmatprep.subr.bf16.mxu0 %v3945
        %5980 = vmatpush1.bf16.msra.mxu0 %v3944
        %5981 = vmatprep.subr.bf16.mxu0 %v3949
        %5982 = vmatpush1.bf16.msra.mxu0 %v3948
        %5983 = vmatprep.subr.bf16.mxu0 %v3953
        %5984 = vmatpush1.bf16.msra.mxu0 %v3952
        %5985 = vmatprep.subr.bf16.mxu0 %v3957
        %5986 = vmatpush1.bf16.msra.mxu0 %v3956
        %5987 = vmatprep.subr.bf16.mxu0 %v3961
        %5988 = vmatpush1.bf16.msra.mxu0 %v3960
        %5989 = vmatprep.subr.bf16.mxu0 %v3965
        %5990 = vmatpush1.bf16.msra.mxu0 %v3964
        %5991 = vmatprep.subr.bf16.mxu0 %v3969
        %5992 = vmatpush1.bf16.msra.mxu0 %v3968
        %5993 = vmatprep.subr.bf16.mxu0 %v3973
        %5994 = vmatpush1.bf16.msra.mxu0 %v3972
        %5995 = vmatprep.subr.bf16.mxu0 %v3977
        %5996 = vmatpush1.bf16.msra.mxu0 %v3976
        %5997 = vmatprep.subr.bf16.mxu0 %v3981
        %5998 = vmatpush1.bf16.msra.mxu0 %v3980
        %5999 = vmatprep.subr.bf16.mxu0 %v3985
        %6000 = vmatpush1.bf16.msra.mxu0 %v3984
        %6001 = vmatprep.subr.bf16.mxu0 %v3989
        %6002 = vmatpush1.bf16.msra.mxu0 %v3988
        %6003 = vmatprep.subr.bf16.mxu0 %v3993
        %6004 = vmatpush1.bf16.msra.mxu0 %v3992
        %6005 = vmatprep.subr.bf16.mxu0 %v3997
        %6006 = vmatpush1.bf16.msra.mxu0 %v3996
        %6007 = vmatprep.mubr.bf16.mxu0 %v1178
        %6008 = vmatmul.mubr.bf16.gmra.mrb[0].mxu0 %v1164
        %v6009 = vpop.f32.mrb[0].mxu0
        %v6010 = vadd.f32 %v5969, %v6009
        %v6011 = vpop.f32.mrb[0].mxu0
        %v6012 = vadd.f32 %v5971, %v6011
        %v6013 = vpop.f32.mrb[0].mxu0
        %v6014 = vpop.f32.mrb[0].mxu0
        %6015 = vdwg.mxu0
        %6016 = vmatprep.subr.bf16.mxu0 %v4001
        %6017 = vmatpush1.bf16.msra.mxu0 %v4000
        %6018 = vmatprep.subr.bf16.mxu0 %v4005
        %6019 = vmatpush1.bf16.msra.mxu0 %v4004
        %6020 = vmatprep.subr.bf16.mxu0 %v4009
        %6021 = vmatpush1.bf16.msra.mxu0 %v4008
        %6022 = vmatprep.subr.bf16.mxu0 %v4013
        %6023 = vmatpush1.bf16.msra.mxu0 %v4012
        %6024 = vmatprep.subr.bf16.mxu0 %v4017
        %6025 = vmatpush1.bf16.msra.mxu0 %v4016
        %6026 = vmatprep.subr.bf16.mxu0 %v4021
        %6027 = vmatpush1.bf16.msra.mxu0 %v4020
        %6028 = vmatprep.subr.bf16.mxu0 %v4025
        %6029 = vmatpush1.bf16.msra.mxu0 %v4024
        %6030 = vmatprep.subr.bf16.mxu0 %v4029
        %6031 = vmatpush1.bf16.msra.mxu0 %v4028
        %6032 = vmatprep.subr.bf16.mxu0 %v4033
        %6033 = vmatpush1.bf16.msra.mxu0 %v4032
        %6034 = vmatprep.subr.bf16.mxu0 %v4037
        %6035 = vmatpush1.bf16.msra.mxu0 %v4036
        %6036 = vmatprep.subr.bf16.mxu0 %v4041
        %6037 = vmatpush1.bf16.msra.mxu0 %v4040
        %6038 = vmatprep.subr.bf16.mxu0 %v4045
        %6039 = vmatpush1.bf16.msra.mxu0 %v4044
        %6040 = vmatprep.subr.bf16.mxu0 %v4049
        %6041 = vmatpush1.bf16.msra.mxu0 %v4048
        %6042 = vmatprep.subr.bf16.mxu0 %v4053
        %6043 = vmatpush1.bf16.msra.mxu0 %v4052
        %6044 = vmatprep.subr.bf16.mxu0 %v4057
        %6045 = vmatpush1.bf16.msra.mxu0 %v4056
        %6046 = vmatprep.subr.bf16.mxu0 %v4061
        %6047 = vmatpush1.bf16.msra.mxu0 %v4060
        %6048 = vmatprep.mubr.bf16.mxu0 %v1188
        %6049 = vmatmul.mubr.bf16.gmra.mrb[0].mxu0 %v1186
        %v6050 = vpop.f32.mrb[0].mxu0
        %v6051 = vadd.f32 %v6010, %v6050
        %v6052 = vpop.f32.mrb[0].mxu0
        %v6053 = vadd.f32 %v6012, %v6052
        %v6054 = vpop.f32.mrb[0].mxu0
        %v6055 = vpop.f32.mrb[0].mxu0
        %6056 = vdwg.mxu0
        %6057 = vmatprep.subr.bf16.mxu0 %v4065
        %6058 = vmatpush1.bf16.msra.mxu0 %v4064
        %6059 = vmatprep.subr.bf16.mxu0 %v4069
        %6060 = vmatpush1.bf16.msra.mxu0 %v4068
        %6061 = vmatprep.subr.bf16.mxu0 %v4073
        %6062 = vmatpush1.bf16.msra.mxu0 %v4072
        %6063 = vmatprep.subr.bf16.mxu0 %v4077
        %6064 = vmatpush1.bf16.msra.mxu0 %v4076
        %6065 = vmatprep.subr.bf16.mxu0 %v4081
        %6066 = vmatpush1.bf16.msra.mxu0 %v4080
        %6067 = vmatprep.subr.bf16.mxu0 %v4085
        %6068 = vmatpush1.bf16.msra.mxu0 %v4084
        %6069 = vmatprep.subr.bf16.mxu0 %v4089
        %6070 = vmatpush1.bf16.msra.mxu0 %v4088
        %6071 = vmatprep.subr.bf16.mxu0 %v4093
        %6072 = vmatpush1.bf16.msra.mxu0 %v4092
        %6073 = vmatprep.subr.bf16.mxu0 %v4097
        %6074 = vmatpush1.bf16.msra.mxu0 %v4096
        %6075 = vmatprep.subr.bf16.mxu0 %v4101
        %6076 = vmatpush1.bf16.msra.mxu0 %v4100
        %6077 = vmatprep.subr.bf16.mxu0 %v4105
        %6078 = vmatpush1.bf16.msra.mxu0 %v4104
        %6079 = vmatprep.subr.bf16.mxu0 %v4109
        %6080 = vmatpush1.bf16.msra.mxu0 %v4108
        %6081 = vmatprep.subr.bf16.mxu0 %v4113
        %6082 = vmatpush1.bf16.msra.mxu0 %v4112
        %6083 = vmatprep.subr.bf16.mxu0 %v4117
        %6084 = vmatpush1.bf16.msra.mxu0 %v4116
        %6085 = vmatprep.subr.bf16.mxu0 %v4121
        %6086 = vmatpush1.bf16.msra.mxu0 %v4120
        %6087 = vmatprep.subr.bf16.mxu0 %v4125
        %6088 = vmatpush1.bf16.msra.mxu0 %v4124
        %6089 = vmatprep.mubr.bf16.mxu0 %v1185
        %6090 = vmatmul.mubr.bf16.gmra.mrb[0].mxu0 %v1171
        %v6091 = vpop.f32.mrb[0].mxu0
        %v6092 = vadd.f32 %v6051, %v6091
        %v6093 = vpop.f32.mrb[0].mxu0
        %v6094 = vadd.f32 %v6053, %v6093
        %v6095 = vpop.f32.mrb[0].mxu0
        %v6096 = vpop.f32.mrb[0].mxu0
        %6097 = vdwg.mxu0
        %6098 = vmatprep.subr.bf16.mxu0 %v4129
        %6099 = vmatpush1.bf16.msra.mxu0 %v4128
        %6100 = vmatprep.subr.bf16.mxu0 %v4133
        %6101 = vmatpush1.bf16.msra.mxu0 %v4132
        %6102 = vmatprep.subr.bf16.mxu0 %v4137
        %6103 = vmatpush1.bf16.msra.mxu0 %v4136
        %6104 = vmatprep.subr.bf16.mxu0 %v4141
        %6105 = vmatpush1.bf16.msra.mxu0 %v4140
        %6106 = vmatprep.subr.bf16.mxu0 %v4145
        %6107 = vmatpush1.bf16.msra.mxu0 %v4144
        %6108 = vmatprep.subr.bf16.mxu0 %v4149
        %6109 = vmatpush1.bf16.msra.mxu0 %v4148
        %6110 = vmatprep.subr.bf16.mxu0 %v4153
        %6111 = vmatpush1.bf16.msra.mxu0 %v4152
        %6112 = vmatprep.subr.bf16.mxu0 %v4157
        %6113 = vmatpush1.bf16.msra.mxu0 %v4156
        %6114 = vmatprep.subr.bf16.mxu0 %v4161
        %6115 = vmatpush1.bf16.msra.mxu0 %v4160
        %6116 = vmatprep.subr.bf16.mxu0 %v4165
        %6117 = vmatpush1.bf16.msra.mxu0 %v4164
        %6118 = vmatprep.subr.bf16.mxu0 %v4169
        %6119 = vmatpush1.bf16.msra.mxu0 %v4168
        %6120 = vmatprep.subr.bf16.mxu0 %v4173
        %6121 = vmatpush1.bf16.msra.mxu0 %v4172
        %6122 = vmatprep.subr.bf16.mxu0 %v4177
        %6123 = vmatpush1.bf16.msra.mxu0 %v4176
        %6124 = vmatprep.subr.bf16.mxu0 %v4181
        %6125 = vmatpush1.bf16.msra.mxu0 %v4180
        %6126 = vmatprep.subr.bf16.mxu0 %v4185
        %6127 = vmatpush1.bf16.msra.mxu0 %v4184
        %6128 = vmatprep.subr.bf16.mxu0 %v4189
        %6129 = vmatpush1.bf16.msra.mxu0 %v4188
        %6130 = vmatprep.mubr.bf16.mxu0 %v1189
        %6131 = vmatmul.mubr.bf16.gmra.mrb[0].mxu0 %v1187
        %v6132 = vpop.f32.mrb[0].mxu0
        %v6133 = vadd.f32 %v6092, %v6132
        %v6134 = vpop.f32.mrb[0].mxu0
        %v6135 = vadd.f32 %v6094, %v6134
        %v6136 = vpop.f32.mrb[0].mxu0
        %v6137 = vpop.f32.mrb[0].mxu0
        %6138 = vdwg.mxu0
        %6139 = vmatprep.subr.bf16.mxu0 %v4193
        %6140 = vmatpush1.bf16.msra.mxu0 %v4192
        %6141 = vmatprep.subr.bf16.mxu0 %v4197
        %6142 = vmatpush1.bf16.msra.mxu0 %v4196
        %6143 = vmatprep.subr.bf16.mxu0 %v4201
        %6144 = vmatpush1.bf16.msra.mxu0 %v4200
        %6145 = vmatprep.subr.bf16.mxu0 %v4205
        %6146 = vmatpush1.bf16.msra.mxu0 %v4204
        %6147 = vmatprep.subr.bf16.mxu0 %v4209
        %6148 = vmatpush1.bf16.msra.mxu0 %v4208
        %6149 = vmatprep.subr.bf16.mxu0 %v4213
        %6150 = vmatpush1.bf16.msra.mxu0 %v4212
        %6151 = vmatprep.subr.bf16.mxu0 %v4217
        %6152 = vmatpush1.bf16.msra.mxu0 %v4216
        %6153 = vmatprep.subr.bf16.mxu0 %v4221
        %6154 = vmatpush1.bf16.msra.mxu0 %v4220
        %6155 = vmatprep.subr.bf16.mxu0 %v4225
        %6156 = vmatpush1.bf16.msra.mxu0 %v4224
        %6157 = vmatprep.subr.bf16.mxu0 %v4229
        %6158 = vmatpush1.bf16.msra.mxu0 %v4228
        %6159 = vmatprep.subr.bf16.mxu0 %v4233
        %6160 = vmatpush1.bf16.msra.mxu0 %v4232
        %6161 = vmatprep.subr.bf16.mxu0 %v4237
        %6162 = vmatpush1.bf16.msra.mxu0 %v4236
        %6163 = vmatprep.subr.bf16.mxu0 %v4241
        %6164 = vmatpush1.bf16.msra.mxu0 %v4240
        %6165 = vmatprep.subr.bf16.mxu0 %v4245
        %6166 = vmatpush1.bf16.msra.mxu0 %v4244
        %6167 = vmatprep.subr.bf16.mxu0 %v4249
        %6168 = vmatpush1.bf16.msra.mxu0 %v4248
        %6169 = vmatprep.subr.bf16.mxu0 %v4253
        %6170 = vmatpush1.bf16.msra.mxu0 %v4252
        %6171 = vmatprep.mubr.bf16.mxu0 %v1227
        %6172 = vmatmul.mubr.bf16.gmra.mrb[0].mxu0 %v1213
        %v6173 = vpop.f32.mrb[0].mxu0
        %v6174 = vadd.f32 %v6133, %v6173
        %v6175 = vpop.f32.mrb[0].mxu0
        %v6176 = vadd.f32 %v6135, %v6175
        %v6177 = vpop.f32.mrb[0].mxu0
        %v6178 = vpop.f32.mrb[0].mxu0
        %6179 = vdwg.mxu0
        %6180 = vmatprep.subr.bf16.mxu0 %v4257
        %6181 = vmatpush1.bf16.msra.mxu0 %v4256
        %6182 = vmatprep.subr.bf16.mxu0 %v4261
        %6183 = vmatpush1.bf16.msra.mxu0 %v4260
        %6184 = vmatprep.subr.bf16.mxu0 %v4265
        %6185 = vmatpush1.bf16.msra.mxu0 %v4264
        %6186 = vmatprep.subr.bf16.mxu0 %v4269
        %6187 = vmatpush1.bf16.msra.mxu0 %v4268
        %6188 = vmatprep.subr.bf16.mxu0 %v4273
        %6189 = vmatpush1.bf16.msra.mxu0 %v4272
        %6190 = vmatprep.subr.bf16.mxu0 %v4277
        %6191 = vmatpush1.bf16.msra.mxu0 %v4276
        %6192 = vmatprep.subr.bf16.mxu0 %v4281
        %6193 = vmatpush1.bf16.msra.mxu0 %v4280
        %6194 = vmatprep.subr.bf16.mxu0 %v4285
        %6195 = vmatpush1.bf16.msra.mxu0 %v4284
        %6196 = vmatprep.subr.bf16.mxu0 %v4289
        %6197 = vmatpush1.bf16.msra.mxu0 %v4288
        %6198 = vmatprep.subr.bf16.mxu0 %v4293
        %6199 = vmatpush1.bf16.msra.mxu0 %v4292
        %6200 = vmatprep.subr.bf16.mxu0 %v4297
        %6201 = vmatpush1.bf16.msra.mxu0 %v4296
        %6202 = vmatprep.subr.bf16.mxu0 %v4301
        %6203 = vmatpush1.bf16.msra.mxu0 %v4300
        %6204 = vmatprep.subr.bf16.mxu0 %v4305
        %6205 = vmatpush1.bf16.msra.mxu0 %v4304
        %6206 = vmatprep.subr.bf16.mxu0 %v4309
        %6207 = vmatpush1.bf16.msra.mxu0 %v4308
        %6208 = vmatprep.subr.bf16.mxu0 %v4313
        %6209 = vmatpush1.bf16.msra.mxu0 %v4312
        %6210 = vmatprep.subr.bf16.mxu0 %v4317
        %6211 = vmatpush1.bf16.msra.mxu0 %v4316
        %6212 = vmatprep.mubr.bf16.mxu0 %v1237
        %6213 = vmatmul.mubr.bf16.gmra.mrb[0].mxu0 %v1235
        %v6214 = vpop.f32.mrb[0].mxu0
        %v6215 = vadd.f32 %v6174, %v6214
        %v6216 = vpop.f32.mrb[0].mxu0
        %v6217 = vadd.f32 %v6176, %v6216
        %v6218 = vpop.f32.mrb[0].mxu0
        %v6219 = vpop.f32.mrb[0].mxu0
        %6220 = vdwg.mxu0
        %6221 = vmatprep.subr.bf16.mxu0 %v4321
        %6222 = vmatpush1.bf16.msra.mxu0 %v4320
        %6223 = vmatprep.subr.bf16.mxu0 %v4325
        %6224 = vmatpush1.bf16.msra.mxu0 %v4324
        %6225 = vmatprep.subr.bf16.mxu0 %v4329
        %6226 = vmatpush1.bf16.msra.mxu0 %v4328
        %6227 = vmatprep.subr.bf16.mxu0 %v4333
        %6228 = vmatpush1.bf16.msra.mxu0 %v4332
        %6229 = vmatprep.subr.bf16.mxu0 %v4337
        %6230 = vmatpush1.bf16.msra.mxu0 %v4336
        %6231 = vmatprep.subr.bf16.mxu0 %v4341
        %6232 = vmatpush1.bf16.msra.mxu0 %v4340
        %6233 = vmatprep.subr.bf16.mxu0 %v4345
        %6234 = vmatpush1.bf16.msra.mxu0 %v4344
        %6235 = vmatprep.subr.bf16.mxu0 %v4349
        %6236 = vmatpush1.bf16.msra.mxu0 %v4348
        %6237 = vmatprep.subr.bf16.mxu0 %v4353
        %6238 = vmatpush1.bf16.msra.mxu0 %v4352
        %6239 = vmatprep.subr.bf16.mxu0 %v4357
        %6240 = vmatpush1.bf16.msra.mxu0 %v4356
        %6241 = vmatprep.subr.bf16.mxu0 %v4361
        %6242 = vmatpush1.bf16.msra.mxu0 %v4360
        %6243 = vmatprep.subr.bf16.mxu0 %v4365
        %6244 = vmatpush1.bf16.msra.mxu0 %v4364
        %6245 = vmatprep.subr.bf16.mxu0 %v4369
        %6246 = vmatpush1.bf16.msra.mxu0 %v4368
        %6247 = vmatprep.subr.bf16.mxu0 %v4373
        %6248 = vmatpush1.bf16.msra.mxu0 %v4372
        %6249 = vmatprep.subr.bf16.mxu0 %v4377
        %6250 = vmatpush1.bf16.msra.mxu0 %v4376
        %6251 = vmatprep.subr.bf16.mxu0 %v4381
        %6252 = vmatpush1.bf16.msra.mxu0 %v4380
        %6253 = vmatprep.mubr.bf16.mxu0 %v1234
        %6254 = vmatmul.mubr.bf16.gmra.mrb[0].mxu0 %v1220
        %v6255 = vpop.f32.mrb[0].mxu0
        %v6256 = vadd.f32 %v6215, %v6255
        %v6257 = vpop.f32.mrb[0].mxu0
        %v6258 = vadd.f32 %v6217, %v6257
        %v6259 = vpop.f32.mrb[0].mxu0
        %v6260 = vpop.f32.mrb[0].mxu0
        %6261 = vdwg.mxu0
        %6262 = vmatprep.subr.bf16.mxu0 %v4385
        %6263 = vmatpush1.bf16.msra.mxu0 %v4384
        %6264 = vmatprep.subr.bf16.mxu0 %v4389
        %6265 = vmatpush1.bf16.msra.mxu0 %v4388
        %6266 = vmatprep.subr.bf16.mxu0 %v4393
        %6267 = vmatpush1.bf16.msra.mxu0 %v4392
        %6268 = vmatprep.subr.bf16.mxu0 %v4397
        %6269 = vmatpush1.bf16.msra.mxu0 %v4396
        %6270 = vmatprep.subr.bf16.mxu0 %v4401
        %6271 = vmatpush1.bf16.msra.mxu0 %v4400
        %6272 = vmatprep.subr.bf16.mxu0 %v4405
        %6273 = vmatpush1.bf16.msra.mxu0 %v4404
        %6274 = vmatprep.subr.bf16.mxu0 %v4409
        %6275 = vmatpush1.bf16.msra.mxu0 %v4408
        %6276 = vmatprep.subr.bf16.mxu0 %v4413
        %6277 = vmatpush1.bf16.msra.mxu0 %v4412
        %6278 = vmatprep.subr.bf16.mxu0 %v4417
        %6279 = vmatpush1.bf16.msra.mxu0 %v4416
        %6280 = vmatprep.subr.bf16.mxu0 %v4421
        %6281 = vmatpush1.bf16.msra.mxu0 %v4420
        %6282 = vmatprep.subr.bf16.mxu0 %v4425
        %6283 = vmatpush1.bf16.msra.mxu0 %v4424
        %6284 = vmatprep.subr.bf16.mxu0 %v4429
        %6285 = vmatpush1.bf16.msra.mxu0 %v4428
        %6286 = vmatprep.subr.bf16.mxu0 %v4433
        %6287 = vmatpush1.bf16.msra.mxu0 %v4432
        %6288 = vmatprep.subr.bf16.mxu0 %v4437
        %6289 = vmatpush1.bf16.msra.mxu0 %v4436
        %6290 = vmatprep.subr.bf16.mxu0 %v4441
        %6291 = vmatpush1.bf16.msra.mxu0 %v4440
        %6292 = vmatprep.subr.bf16.mxu0 %v4445
        %6293 = vmatpush1.bf16.msra.mxu0 %v4444
        %6294 = vmatprep.mubr.bf16.mxu0 %v1238
        %6295 = vmatmul.mubr.bf16.gmra.mrb[0].mxu0 %v1236
        %v6296 = vpop.f32.mrb[0].mxu0
        %v6297 = vadd.f32 %v6256, %v6296
        %v6298 = vpop.f32.mrb[0].mxu0
        %v6299 = vadd.f32 %v6258, %v6298
        %v6300 = vpop.f32.mrb[0].mxu0
        %v6301 = vpop.f32.mrb[0].mxu0
        %6302 = vdwg.mxu0
        %6303 = vmatprep.subr.bf16.mxu0 %v4449
        %6304 = vmatpush1.bf16.msra.mxu0 %v4448
        %6305 = vmatprep.subr.bf16.mxu0 %v4453
        %6306 = vmatpush1.bf16.msra.mxu0 %v4452
        %6307 = vmatprep.subr.bf16.mxu0 %v4457
        %6308 = vmatpush1.bf16.msra.mxu0 %v4456
        %6309 = vmatprep.subr.bf16.mxu0 %v4461
        %6310 = vmatpush1.bf16.msra.mxu0 %v4460
        %6311 = vmatprep.subr.bf16.mxu0 %v4465
        %6312 = vmatpush1.bf16.msra.mxu0 %v4464
        %6313 = vmatprep.subr.bf16.mxu0 %v4469
        %6314 = vmatpush1.bf16.msra.mxu0 %v4468
        %6315 = vmatprep.subr.bf16.mxu0 %v4473
        %6316 = vmatpush1.bf16.msra.mxu0 %v4472
        %6317 = vmatprep.subr.bf16.mxu0 %v4477
        %6318 = vmatpush1.bf16.msra.mxu0 %v4476
        %6319 = vmatprep.subr.bf16.mxu0 0
        %6320 = vmatpush1.bf16.msra.mxu0 0
        %6321 = vmatprep.subr.bf16.mxu0 0
        %6322 = vmatpush1.bf16.msra.mxu0 0
        %6323 = vmatprep.subr.bf16.mxu0 0
        %6324 = vmatpush1.bf16.msra.mxu0 0
        %6325 = vmatprep.subr.bf16.mxu0 0
        %6326 = vmatpush1.bf16.msra.mxu0 0
        %6327 = vmatprep.subr.bf16.mxu0 0
        %6328 = vmatpush1.bf16.msra.mxu0 0
        %6329 = vmatprep.subr.bf16.mxu0 0
        %6330 = vmatpush1.bf16.msra.mxu0 0
        %6331 = vmatprep.subr.bf16.mxu0 0
        %6332 = vmatpush1.bf16.msra.mxu0 0
        %6333 = vmatprep.subr.bf16.mxu0 0
        %6334 = vmatpush1.bf16.msra.mxu0 0
        %6335 = vmatprep.mubr.bf16.mxu0 0
        %6336 = vmatmul.mubr.bf16.gmra.mrb[0].mxu0 %v1252
        %v6337 = vpop.f32.mrb[0].mxu0
        %v6338 = vadd.f32 %v6297, %v6337
        %v6339 = vpop.f32.mrb[0].mxu0
        %v6340 = vadd.f32 %v6299, %v6339
        %v6341 = vpop.f32.mrb[0].mxu0
        %v6342 = vpop.f32.mrb[0].mxu0
        %6343 = vdwg.mxu0
        %v6348 = vcombine.low %v5805, %v5807
        %v6349 = vcombine.low %v6338, %v6340
        %v6351 = vunpack.c.l.s4 1983009808
        %v6352 = vunpack.c.0.s8 %v6351
        %v6353 = vlaneseq
        %v6354 = vshrl.u32 %v6353, 7
        %v6355 = vsub.s32 %v6352, %v6354
        %v6356 = vrot.slane %v6348, %v6355
        %v6358 = vunpack.c.l.s4 1983009808
        %v6359 = vunpack.c.0.s8 %v6358
        %v6360 = vlaneseq
        %v6361 = vshrl.u32 %v6360, 7
        %v6362 = vsub.s32 %v6359, %v6361
        %v6363 = vrot.slane %v6349, %v6362
        %v6364 = vcombine.low %v6356, %v6363
        %v6366 = vadd.f32 %v281, %v6364
        %6367 = vst [vmem:[#allocation2] sm:$0xff] %v6366
        %p6368 = scmp.eq.s32.totalorder %s23, 4
        // Predicated region
        $region45: #{simple_cnn_forward.5} parent=35 // pred_check
          %p6369 = pneg %p6368
        $region46: #{simple_cnn_forward.5} parent=35 // pred_check_branch
          %6371 = sbr.rel (%p6369) target = $region48
        $region47: #{simple_cnn_forward.5} parent=35 // pred_region
          %v6372 = vld [vmem:[#allocation2] sm:$0xff]
          %v6373 = vld [vmem:[%s263] sm:$0xf]
          %v6375 = vlaneseq
          %v6376 = vshrl.u32 %v6375, 7
          %v6377 = vsub.s32 0, %v6376
          %v6378 = vrot.slane %v6373, %v6377
          %v6379 = vlaneseq
          %v6380 = vshrl.u32 %v6379, 7
          %v6381 = vsub.s32 1, %v6380
          %v6382 = vrot.slane %v6373, %v6381
          %v6383 = vlaneseq
          %v6384 = vshrl.u32 %v6383, 7
          %v6385 = vsub.s32 2, %v6384
          %v6386 = vrot.slane %v6373, %v6385
          %v6387 = vlaneseq
          %v6388 = vshrl.u32 %v6387, 7
          %v6389 = vsub.s32 3, %v6388
          %v6390 = vrot.slane %v6373, %v6389
          %v6391 = vcombine.low %v6378, %v6382
          %v6392 = vcombine.low %v6386, %v6390
          %v6394 = vunpack.c.l.s4 1983009808
          %v6395 = vunpack.c.0.s8 %v6394
          %v6396 = vlaneseq
          %v6397 = vshrl.u32 %v6396, 7
          %v6398 = vsub.s32 %v6395, %v6397
          %v6399 = vrot.slane %v6391, %v6398
          %v6401 = vunpack.c.l.s4 1983009808
          %v6402 = vunpack.c.0.s8 %v6401
          %v6403 = vlaneseq
          %v6404 = vshrl.u32 %v6403, 7
          %v6405 = vsub.s32 %v6402, %v6404
          %v6406 = vrot.slane %v6392, %v6405
          %v6407 = vcombine.low %v6399, %v6406
          %v6409 = vadd.f32 %v6372, %v6407
          %v6410 = vmax.f32 %v6409, 0.0
          %v6411 = vld [vmem:[%s269] sm:$0xff]
          %v6412 = vld [vmem:[%s269 + $0x8] sm:$0xff]
          %v6413 = vld [vmem:[%s269 + $0x10] sm:$0xff]
          %v6414 = vld [vmem:[%s269 + $0x18] sm:$0xff]
          %v6415 = vld [vmem:[%s269 + $0x20] sm:$0xff]
          %v6416 = vld [vmem:[%s269 + $0x28] sm:$0xff]
          %v6417 = vld [vmem:[%s269 + $0x30] sm:$0xff]
          %v6418 = vld [vmem:[%s269 + $0x38] sm:$0xff]
          %v6419 = vld [vmem:[%s269 + $0x40] sm:$0xff]
          %v6420 = vld [vmem:[%s269 + $0x48] sm:$0xff]
          %v6421 = vld [vmem:[%s269 + $0x50] sm:$0xff]
          %v6422 = vld [vmem:[%s269 + $0x58] sm:$0xff]
          %v6423 = vld [vmem:[%s269 + $0x60] sm:$0xff]
          %v6424 = vld [vmem:[%s269 + $0x68] sm:$0xff]
          %v6425 = vld [vmem:[%s269 + $0x70] sm:$0xff]
          %v6426 = vld [vmem:[%s269 + $0x78] sm:$0xff]
          %v6427 = vld [vmem:[%s269 + $0x80] sm:$0xff]
          %v6428 = vld [vmem:[%s269 + $0x88] sm:$0xff]
          %v6429 = vld [vmem:[%s269 + $0x90] sm:$0xff]
          %v6430 = vld [vmem:[%s269 + $0x98] sm:$0xff]
          %v6431 = vld [vmem:[%s269 + $0xa0] sm:$0xff]
          %v6432 = vld [vmem:[%s269 + $0xa8] sm:$0xff]
          %v6433 = vld [vmem:[%s269 + $0xb0] sm:$0xff]
          %v6434 = vld [vmem:[%s269 + $0xb8] sm:$0xff]
          %v6435 = vld [vmem:[%s269 + $0xc0] sm:$0xff]
          %v6436 = vld [vmem:[%s269 + $0xc8] sm:$0xff]
          %v6437 = vld [vmem:[%s269 + $0xd0] sm:$0xff]
          %v6438 = vld [vmem:[%s269 + $0xd8] sm:$0xff]
          %v6439 = vld [vmem:[%s269 + $0xe0] sm:$0xff]
          %v6440 = vld [vmem:[%s269 + $0xe8] sm:$0xff]
          %v6441 = vld [vmem:[%s269 + $0xf0] sm:$0xff]
          %v6442 = vld [vmem:[%s269 + $0xf8] sm:$0xff]
          %v6443 = vld [vmem:[%s269 + $0x100] sm:$0xff]
          %v6444 = vld [vmem:[%s269 + $0x108] sm:$0xff]
          %v6445 = vld [vmem:[%s269 + $0x110] sm:$0xff]
          %v6446 = vld [vmem:[%s269 + $0x118] sm:$0xff]
          %v6447 = vld [vmem:[%s269 + $0x120] sm:$0xff]
          %v6448 = vld [vmem:[%s269 + $0x128] sm:$0xff]
          %v6449 = vld [vmem:[%s269 + $0x130] sm:$0xff]
          %v6450 = vld [vmem:[%s269 + $0x138] sm:$0xff]
          %v6451 = vld [vmem:[%s269 + $0x140] sm:$0xff]
          %v6452 = vld [vmem:[%s269 + $0x148] sm:$0xff]
          %v6453 = vld [vmem:[%s269 + $0x150] sm:$0xff]
          %v6454 = vld [vmem:[%s269 + $0x158] sm:$0xff]
          %v6455 = vld [vmem:[%s269 + $0x160] sm:$0xff]
          %v6456 = vld [vmem:[%s269 + $0x168] sm:$0xff]
          %v6457 = vld [vmem:[%s269 + $0x170] sm:$0xff]
          %v6458 = vld [vmem:[%s269 + $0x178] sm:$0xff]
          %v6459 = vld [vmem:[%s269 + $0x180] sm:$0xff]
          %v6460 = vld [vmem:[%s269 + $0x188] sm:$0xff]
          %v6461 = vld [vmem:[%s269 + $0x190] sm:$0xff]
          %v6462 = vld [vmem:[%s269 + $0x198] sm:$0xff]
          %v6463 = vld [vmem:[%s269 + $0x1a0] sm:$0xff]
          %v6464 = vld [vmem:[%s269 + $0x1a8] sm:$0xff]
          %v6465 = vld [vmem:[%s269 + $0x1b0] sm:$0xff]
          %v6466 = vld [vmem:[%s269 + $0x1b8] sm:$0xff]
          %v6467 = vld [vmem:[%s269 + $0x1c0] sm:$0xff]
          %v6468 = vld [vmem:[%s269 + $0x1c8] sm:$0xff]
          %v6469 = vld [vmem:[%s269 + $0x1d0] sm:$0xff]
          %v6470 = vld [vmem:[%s269 + $0x1d8] sm:$0xff]
          %v6471 = vld [vmem:[%s269 + $0x1e0] sm:$0xff]
          %v6472 = vld [vmem:[%s269 + $0x1e8] sm:$0xff]
          %v6473 = vld [vmem:[%s269 + $0x1f0] sm:$0xff]
          %v6474 = vld [vmem:[%s269 + $0x1f8] sm:$0xff]
          %v6476 = vcombine.high %v6410, %v6410
          %v6478 = vunpack.c.l.s4 1983009808
          %v6479 = vunpack.c.0.s8 %v6478
          %v6480 = vlaneseq
          %v6481 = vshrl.u32 %v6480, 7
          %v6482 = vsub.s32 %v6479, %v6481
          %v6483 = vrot.slane %v6410, %v6482
          %v6485 = vunpack.c.l.s4 1983009808
          %v6486 = vunpack.c.0.s8 %v6485
          %v6487 = vlaneseq
          %v6488 = vshrl.u32 %v6487, 7
          %v6489 = vsub.s32 %v6486, %v6488
          %v6490 = vrot.slane %v6476, %v6489
          %v6491 = vcombine.high %v6483, %v6483
          %v6492 = vcombine.high %v6490, %v6490
          %6497 = vmatprep.subr.mxu0 0.0
          %6498 = vmatpush1.msra.mxu0 %v6411
          %6499 = vmatprep.subr.mxu0 0.0
          %6500 = vmatpush1.msra.mxu0 %v6412
          %6501 = vmatprep.subr.mxu0 0.0
          %6502 = vmatpush1.msra.mxu0 %v6413
          %6503 = vmatprep.subr.mxu0 0.0
          %6504 = vmatpush1.msra.mxu0 %v6414
          %6505 = vmatprep.subr.mxu0 0.0
          %6506 = vmatpush1.msra.mxu0 %v6415
          %6507 = vmatprep.subr.mxu0 0.0
          %6508 = vmatpush1.msra.mxu0 %v6416
          %6509 = vmatprep.subr.mxu0 0.0
          %6510 = vmatpush1.msra.mxu0 %v6417
          %6511 = vmatprep.subr.mxu0 0.0
          %6512 = vmatpush1.msra.mxu0 %v6418
          %6513 = vmatprep.subr.mxu0 0.0
          %6514 = vmatpush1.msra.mxu0 %v6419
          %6515 = vmatprep.subr.mxu0 0.0
          %6516 = vmatpush1.msra.mxu0 %v6420
          %6517 = vmatprep.subr.mxu0 0.0
          %6518 = vmatpush1.msra.mxu0 %v6421
          %6519 = vmatprep.subr.mxu0 0.0
          %6520 = vmatpush1.msra.mxu0 %v6422
          %6521 = vmatprep.subr.mxu0 0.0
          %6522 = vmatpush1.msra.mxu0 %v6423
          %6523 = vmatprep.subr.mxu0 0.0
          %6524 = vmatpush1.msra.mxu0 %v6424
          %6525 = vmatprep.subr.mxu0 0.0
          %6526 = vmatpush1.msra.mxu0 %v6425
          %6527 = vmatprep.subr.mxu0 0.0
          %6528 = vmatpush1.msra.mxu0 %v6426
          %6529 = vmatprep.subr.mxu0 0.0
          %6530 = vmatpush1.msra.mxu0 %v6427
          %6531 = vmatprep.subr.mxu0 0.0
          %6532 = vmatpush1.msra.mxu0 %v6428
          %6533 = vmatprep.subr.mxu0 0.0
          %6534 = vmatpush1.msra.mxu0 %v6429
          %6535 = vmatprep.subr.mxu0 0.0
          %6536 = vmatpush1.msra.mxu0 %v6430
          %6537 = vmatprep.subr.mxu0 0.0
          %6538 = vmatpush1.msra.mxu0 %v6431
          %6539 = vmatprep.subr.mxu0 0.0
          %6540 = vmatpush1.msra.mxu0 %v6432
          %6541 = vmatprep.subr.mxu0 0.0
          %6542 = vmatpush1.msra.mxu0 %v6433
          %6543 = vmatprep.subr.mxu0 0.0
          %6544 = vmatpush1.msra.mxu0 %v6434
          %6545 = vmatprep.subr.mxu0 0.0
          %6546 = vmatpush1.msra.mxu0 %v6435
          %6547 = vmatprep.subr.mxu0 0.0
          %6548 = vmatpush1.msra.mxu0 %v6436
          %6549 = vmatprep.subr.mxu0 0.0
          %6550 = vmatpush1.msra.mxu0 %v6437
          %6551 = vmatprep.subr.mxu0 0.0
          %6552 = vmatpush1.msra.mxu0 %v6438
          %6553 = vmatprep.subr.mxu0 0.0
          %6554 = vmatpush1.msra.mxu0 %v6439
          %6555 = vmatprep.subr.mxu0 0.0
          %6556 = vmatpush1.msra.mxu0 %v6440
          %6557 = vmatprep.subr.mxu0 0.0
          %6558 = vmatpush1.msra.mxu0 %v6441
          %6559 = vmatprep.subr.mxu0 0.0
          %6560 = vmatpush1.msra.mxu0 %v6442
          %6561 = vmatprep.mubr.f32.mxu0 %v6491
          %6562 = vmatmul.mubr.f32.gmra.mrb[0].mxu0 %v6483
          %v6563 = vpop.f32.mrb[0].mxu0
          %v6564 = vadd.f32 0.0, %v6563
          %v6565 = vpop.f32.mrb[0].mxu0
          %6566 = vdwg.mxu0
          %6567 = vmatprep.subr.mxu0 0.0
          %6568 = vmatpush1.msra.mxu0 %v6443
          %6569 = vmatprep.subr.mxu0 0.0
          %6570 = vmatpush1.msra.mxu0 %v6444
          %6571 = vmatprep.subr.mxu0 0.0
          %6572 = vmatpush1.msra.mxu0 %v6445
          %6573 = vmatprep.subr.mxu0 0.0
          %6574 = vmatpush1.msra.mxu0 %v6446
          %6575 = vmatprep.subr.mxu0 0.0
          %6576 = vmatpush1.msra.mxu0 %v6447
          %6577 = vmatprep.subr.mxu0 0.0
          %6578 = vmatpush1.msra.mxu0 %v6448
          %6579 = vmatprep.subr.mxu0 0.0
          %6580 = vmatpush1.msra.mxu0 %v6449
          %6581 = vmatprep.subr.mxu0 0.0
          %6582 = vmatpush1.msra.mxu0 %v6450
          %6583 = vmatprep.subr.mxu0 0.0
          %6584 = vmatpush1.msra.mxu0 %v6451
          %6585 = vmatprep.subr.mxu0 0.0
          %6586 = vmatpush1.msra.mxu0 %v6452
          %6587 = vmatprep.subr.mxu0 0.0
          %6588 = vmatpush1.msra.mxu0 %v6453
          %6589 = vmatprep.subr.mxu0 0.0
          %6590 = vmatpush1.msra.mxu0 %v6454
          %6591 = vmatprep.subr.mxu0 0.0
          %6592 = vmatpush1.msra.mxu0 %v6455
          %6593 = vmatprep.subr.mxu0 0.0
          %6594 = vmatpush1.msra.mxu0 %v6456
          %6595 = vmatprep.subr.mxu0 0.0
          %6596 = vmatpush1.msra.mxu0 %v6457
          %6597 = vmatprep.subr.mxu0 0.0
          %6598 = vmatpush1.msra.mxu0 %v6458
          %6599 = vmatprep.subr.mxu0 0.0
          %6600 = vmatpush1.msra.mxu0 %v6459
          %6601 = vmatprep.subr.mxu0 0.0
          %6602 = vmatpush1.msra.mxu0 %v6460
          %6603 = vmatprep.subr.mxu0 0.0
          %6604 = vmatpush1.msra.mxu0 %v6461
          %6605 = vmatprep.subr.mxu0 0.0
          %6606 = vmatpush1.msra.mxu0 %v6462
          %6607 = vmatprep.subr.mxu0 0.0
          %6608 = vmatpush1.msra.mxu0 %v6463
          %6609 = vmatprep.subr.mxu0 0.0
          %6610 = vmatpush1.msra.mxu0 %v6464
          %6611 = vmatprep.subr.mxu0 0.0
          %6612 = vmatpush1.msra.mxu0 %v6465
          %6613 = vmatprep.subr.mxu0 0.0
          %6614 = vmatpush1.msra.mxu0 %v6466
          %6615 = vmatprep.subr.mxu0 0.0
          %6616 = vmatpush1.msra.mxu0 %v6467
          %6617 = vmatprep.subr.mxu0 0.0
          %6618 = vmatpush1.msra.mxu0 %v6468
          %6619 = vmatprep.subr.mxu0 0.0
          %6620 = vmatpush1.msra.mxu0 %v6469
          %6621 = vmatprep.subr.mxu0 0.0
          %6622 = vmatpush1.msra.mxu0 %v6470
          %6623 = vmatprep.subr.mxu0 0.0
          %6624 = vmatpush1.msra.mxu0 %v6471
          %6625 = vmatprep.subr.mxu0 0.0
          %6626 = vmatpush1.msra.mxu0 %v6472
          %6627 = vmatprep.subr.mxu0 0.0
          %6628 = vmatpush1.msra.mxu0 %v6473
          %6629 = vmatprep.subr.mxu0 0.0
          %6630 = vmatpush1.msra.mxu0 %v6474
          %6631 = vmatprep.mubr.f32.mxu0 %v6492
          %6632 = vmatmul.mubr.f32.gmra.mrb[0].mxu0 %v6490
          %v6633 = vpop.f32.mrb[0].mxu0
          %v6634 = vadd.f32 %v6564, %v6633
          %v6635 = vpop.f32.mrb[0].mxu0
          %6636 = vdwg.mxu0
          %vm6637 = vcmask 17408
          %6638 = vst.msk [vmem:[%s274] sm:$0x3] %vm6637, %v6634
        $region48: #{simple_cnn_forward.5} parent=35 // pred_fallthru
          _
        %p6639 = scmp.lt.s32.totalorder %s22, 1
        %s6640 = scalar_select %p6639, %s22, 1
        %s6641 = smul.addr %s6640, 2
        %s6642 = scalar_lea.vmem %s4, %s6641
        // Predicated region
        $region49: #{simple_cnn_forward.5} parent=35 // pred_check
          %p6643 = pneg %p149
        $region50: #{simple_cnn_forward.5} parent=35 // pred_check_branch
          %6645 = sbr.rel (%p6643) target = $region52
        $region51: #{simple_cnn_forward.5} parent=35 // pred_region
          _
        $region52: #{simple_cnn_forward.5} parent=35 // pred_fallthru
          _
      $region36: #{simple_cnn_forward.5} parent=5 // pred_fallthru
        _
      %p6646 = scmp.le.s32.totalorder 2, %s13
      // Predicated region
      $region53: #{simple_cnn_forward.5} parent=5 // pred_check
        %p6647 = pneg %p6646
      $region54: #{simple_cnn_forward.5} parent=5 // pred_check_branch
        %6649 = sbr.rel (%p6647) target = $region56
      $region55: #{simple_cnn_forward.5} parent=5 // pred_region
        %s6650 = ssub.s32 %s13, 2
        // Predicated region
        $region57: #{simple_cnn_forward.5} parent=55 // pred_check
          %p6651 = pneg %p155
        $region58: #{simple_cnn_forward.5} parent=55 // pred_check_branch
          %6653 = sbr.rel (%p6651) target = $region60
        $region59: #{simple_cnn_forward.5} parent=55 // pred_region
          %p6654 = scmp.lt.s32.totalorder %s24, 1
          %s6655 = scalar_select %p6654, %s24, 1
          %s6656 = smul.addr %s6655, 2
          %s6657 = scalar_lea.vmem %s4, %s6656
        $region60: #{simple_cnn_forward.5} parent=55 // pred_fallthru
          _
      $region56: #{simple_cnn_forward.5} parent=5 // pred_fallthru
        _
    $region6: #{simple_cnn_forward.5} parent=1 // loop_footer
      %s17 = sadd.s32 1, %s13
    $region7: #{simple_cnn_forward.5} parent=1 // loop_footer_branch
      %12 = sbr.rel target = $region3
    $region8: #{simple_cnn_forward.5} parent=1 // loop_exit
      _
    %6658 = vsyncpa [#allocation4], 1
    %s6659 = scalar_lea.sflag [#allocation4], 1
    %6660 = vsyncpa %s6659, 1

</llo_original>
